<compile_context>
chip_gen: v6e
topology: v6e:2x2x1
jax: 0.10.0
libtpu: 0.0.40
codegen_flags: <defaults>
</compile_context>

<pallas_src>
import functools

import jax
import jax.numpy as jnp
import numpy as np
from jax.experimental import pallas as pl
from jax.experimental.pallas import tpu as pltpu

_BN_EPS = 1e-5
_ROWS = 32          # polyphase row count = L/8 = length of d3 (for L = 256)
_L_IN = 256         # only length for which AdaptiveMaxPool1d(512) is the identity


# ----------------------------------------------------------------------------
# Fused kernel
# ----------------------------------------------------------------------------
def _zero_row(ref, r):
    ref[r:r + 1, :] = jnp.zeros((1, ref.shape[1]), jnp.float32)


def _store_padded(ref, y):
    """Write a (32, n) activation into rows 1..32 of a (34, n) halo-padded ref."""
    _zero_row(ref, 0)
    ref[1:_ROWS + 1, :] = y
    _zero_row(ref, _ROWS + 1)


def _poly_conv(in_ref, cin, p_in, wa_ref, wb_ref, wc_ref):
    """One operand of a polyphase conv layer -> pre-activation (32, n) f32.

    in_ref: (34, p_in*cin) halo-padded activation (rows 1..32 valid, rows 0/33
    zero), lanes phase-major (lane = phase*cin + channel).
      A = prev row / last phase, B = current rows, C = next row / first phase.
    wa/wb/wc are the pre-packed halo weights; wc is None for strided Conv1d
    layers (they never look one row ahead).
    """
    a = in_ref[0:_ROWS, (p_in - 1) * cin:p_in * cin]
    b = in_ref[1:_ROWS + 1, :]
    if cin == 1:
        y = a * wa_ref[...].astype(jnp.float32)          # K=1 dot == broadcast mul
    else:
        y = jnp.dot(a.astype(jnp.bfloat16), wa_ref[...],
                    preferred_element_type=jnp.float32)
    y = y + jnp.dot(b.astype(jnp.bfloat16), wb_ref[...],
                    preferred_element_type=jnp.float32)
    if wc_ref is not None:
        c = in_ref[2:_ROWS + 2, 0:cin]
        y = y + jnp.dot(c.astype(jnp.bfloat16), wc_ref[...],
                        preferred_element_type=jnp.float32)
    return y


def _bn_prelu(y, aff_ref):
    """Folded-BN shift then PReLU (scalar slope broadcast across lanes)."""
    y = y + aff_ref[0:1, :]
    return jnp.where(y >= 0.0, y, aff_ref[1:2, :] * y)


def _unet_kernel(num_w, x_ref, *refs):
    w = refs[:num_w]
    o_ref = refs[num_w]
    xs, d1s, d2s, d3s, u3s, u2s, u1s = refs[num_w + 1:]
    it = iter(w)
    nxt = lambda: next(it)  # noqa: E731

    # stage this batch element's polyphase input (32, 8) into the padded scratch
    _store_padded(xs, x_ref[0].astype(jnp.float32))

    # ------------------ down path: Conv1d(k3,s2,p1) + BN + PReLU ------------------
    wa, wb, aff = nxt(), nxt(), nxt()
    _store_padded(d1s, _bn_prelu(_poly_conv(xs, 1, 8, wa, wb, None), aff))
    wa, wb, aff = nxt(), nxt(), nxt()
    _store_padded(d2s, _bn_prelu(_poly_conv(d1s, 64, 4, wa, wb, None), aff))
    wa, wb, aff = nxt(), nxt(), nxt()
    _store_padded(d3s, _bn_prelu(_poly_conv(d2s, 128, 2, wa, wb, None), aff))

    # ------- up path: ConvT(k4,s2,p1) + BN + PReLU; skips as second-operand dots -------
    wa, wb, wc, aff = nxt(), nxt(), nxt(), nxt()
    _store_padded(u3s, _bn_prelu(_poly_conv(d3s, 256, 1, wa, wb, wc), aff))

    ua, ub, uc, sa, sb, sc, aff = (nxt() for _ in range(7))
    y = _poly_conv(u3s, 128, 2, ua, ub, uc) + _poly_conv(d2s, 128, 2, sa, sb, sc)
    _store_padded(u2s, _bn_prelu(y, aff))

    ua, ub, uc, sa, sb, sc, aff = (nxt() for _ in range(7))
    y = _poly_conv(u2s, 64, 4, ua, ub, uc) + _poly_conv(d1s, 64, 4, sa, sb, sc)
    _store_padded(u1s, _bn_prelu(y, aff))

    wa, wb, wc, aff = nxt(), nxt(), nxt(), nxt()
    u0 = _bn_prelu(_poly_conv(u1s, 32, 8, wa, wb, wc), aff)      # (32, 16): u0[16j + q]

    # --------- AdaptiveMaxPool1d(512) == identity at this length; fc head ---------
    w1r, aff1 = nxt(), nxt()                                      # w1r: (16, 32, 512)
    acc = u0[:, 0:1] * w1r[0]
    for p in range(1, 16):                                        # fc1 over the 16 phases
        acc = acc + u0[:, p:p + 1] * w1r[p]
    h = jnp.sum(acc, axis=0, keepdims=True) + aff1[0:1, :]        # + over the 32 rows
    h = jnp.where(h >= 0.0, h, aff1[1:2, :] * h)

    w2, aff2 = nxt(), nxt()
    h = jnp.dot(h.astype(jnp.bfloat16), w2[...],
                preferred_element_type=jnp.float32) + aff2[0:1, :]
    h = jnp.where(h >= 0.0, h, aff2[1:2, :] * h)

    w3, aff3 = nxt(), nxt()
    h = jnp.dot(h.astype(jnp.bfloat16), w3[...],
                preferred_element_type=jnp.float32) + aff3[0:1, :]
    o_ref[...] = jax.nn.sigmoid(h)[None]                          # (1, 1, outdim)


# ----------------------------------------------------------------------------
# Wrapper
# ----------------------------------------------------------------------------
def _const_index_map(ndim):
    return lambda b: (0,) * ndim


def forward(ws, x):
    """x: (B, 256) -> (B, 1, outdim); one fused Pallas call, grid over batch."""
    B, L = x.shape
    if L != _L_IN:
        # TODO(synk): AdaptiveMaxPool1d with non-identity windows (L != 256) not
        # implemented in the fused kernel.
        raise NotImplementedError("fused kernel supports input length 256 only")
    outdim = ws[-1].shape[1]
    x_poly = x.reshape(B, _ROWS, L // _ROWS).astype(jnp.float32)   # free reshape
    kernel = functools.partial(_unet_kernel, len(ws))
    scratch = [pltpu.VMEM((_ROWS + 2, 8), jnp.float32)] + \
              [pltpu.VMEM((_ROWS + 2, 256), jnp.float32) for _ in range(6)]
    return pl.pallas_call(
        kernel,
        out_shape=jax.ShapeDtypeStruct((B, 1, outdim), jnp.float32),
        grid=(B,),
        in_specs=[pl.BlockSpec((1, _ROWS, L // _ROWS), lambda b: (b, 0, 0))]
                 + [pl.BlockSpec(a.shape, _const_index_map(a.ndim)) for a in ws],
        out_specs=pl.BlockSpec((1, 1, outdim), lambda b: (b, 0, 0)),
        scratch_shapes=scratch,
        compiler_params=pltpu.CompilerParams(
            dimension_semantics=("parallel",),
            vmem_limit_bytes=32 * 1024 * 1024),
    )(x_poly, *ws)


# ----------------------------------------------------------------------------
# Host-side weight packing (BN folding + polyphase halo-matmul layout)
# ----------------------------------------------------------------------------
def _pack_down_w(w, scale, p_in):
    """Conv1d(k=3,s=2,p=1) -> (wa (cin,n), wb (p_in*cin,n)), n = (p_in/2)*cout."""
    cout, cin, _ = w.shape
    p_out = p_in // 2
    ws = (w * scale[:, None, None]).astype(np.float32)
    n = p_out * cout
    wa = np.zeros((cin, n), np.float32)
    wb = np.zeros((p_in * cin, n), np.float32)
    for q in range(p_out):
        cols = slice(q * cout, (q + 1) * cout)
        for k in range(3):
            phi = 2 * q + k - 1                 # input phase of x[p_in*j + phi]
            blk = ws[:, :, k].T                 # (cin, cout)
            if phi < 0:
                wa[:, cols] += blk              # previous row, last phase
            else:
                wb[phi * cin:(phi + 1) * cin, cols] += blk
    return wa, wb


def _pack_up_w(w, scale, p_in):
    """ConvTranspose1d(k=4,s=2,p=1) -> (wa, wb, wc), n = 2*p_in*cout.

    out[2t]   = w1*x[t] + w3*x[t-1];  out[2t+1] = w2*x[t] + w0*x[t+1].
    """
    cin, cout, _ = w.shape
    p_out = 2 * p_in
    ws = (w * scale[None, :, None]).astype(np.float32)
    n = p_out * cout
    wa = np.zeros((cin, n), np.float32)
    wb = np.zeros((p_in * cin, n), np.float32)
    wc = np.zeros((cin, n), np.float32)
    for p in range(p_in):
        ce = slice(2 * p * cout, (2 * p + 1) * cout)        # even output phase 2p
        co = slice((2 * p + 1) * cout, (2 * p + 2) * cout)  # odd output phase 2p+1
        wb[p * cin:(p + 1) * cin, ce] += ws[:, :, 1]
        if p >= 1:
            wb[(p - 1) * cin:p * cin, ce] += ws[:, :, 3]
        else:
            wa[:, ce] += ws[:, :, 3]                        # previous row, last phase
        wb[p * cin:(p + 1) * cin, co] += ws[:, :, 2]
        if p + 1 < p_in:
            wb[(p + 1) * cin:(p + 2) * cin, co] += ws[:, :, 0]
        else:
            wc[:, co] += ws[:, :, 0]                        # next row, first phase
    return wa, wb, wc


def prepare_params(raw):
    """Fold BN (eval) into the conv weights and pre-pack the fused-kernel layout."""
    npf = lambda a: np.asarray(a, np.float32)  # noqa: E731
    bf16 = lambda a: jnp.asarray(a, jnp.bfloat16)  # noqa: E731
    f32 = lambda a: jnp.asarray(a, jnp.float32)  # noqa: E731

    def fold(p):
        w, b, g, be, m, v, al = (npf(t) for t in p)
        s = g / np.sqrt(v + _BN_EPS)
        return w, s, be + s * (b - m), float(al[0])

    def aff(shift, alpha, reps):
        sl = np.tile(shift, reps)
        return f32(np.stack([sl, np.full_like(sl, alpha)]))

    ws = []
    for name, p_in in (("down1", 8), ("down2", 4), ("down3", 2)):
        w, s, shift, al = fold(raw[name])
        wa, wb = _pack_down_w(w, s, p_in)
        ws += [bf16(wa), bf16(wb), aff(shift, al, p_in // 2)]

    w, s, shift, al = fold(raw["up3"])
    wa, wb, wc = _pack_up_w(w, s, 1)
    ws += [bf16(wa), bf16(wb), bf16(wc), aff(shift, al, 2)]

    # up2 / up1: input = cat([u, skip], channels) -> pack the two halves separately
    for name, p_in, c_split in (("up2", 2, 128), ("up1", 4, 64)):
        w, s, shift, al = fold(raw[name])
        for part in (w[:c_split], w[c_split:]):
            wa, wb, wc = _pack_up_w(part, s, p_in)
            ws += [bf16(wa), bf16(wb), bf16(wc)]
        ws += [aff(shift, al, 2 * p_in)]

    w, s, shift, al = fold(raw["up0"])
    wa, wb, wc = _pack_up_w(w, s, 8)
    ws += [bf16(wa), bf16(wb), bf16(wc), aff(shift, al, 16)]

    # fc head; fc1 re-laid out over the (phase, row) split of the pooled vector:
    # w1r[p, j, n] = fc1_w[n, 16*j + p]
    w1r = npf(raw["fc1_w"]).T.reshape(_ROWS, 16, 512).transpose(1, 0, 2)
    a1 = float(npf(raw["fc1_a"])[0])
    a2 = float(npf(raw["fc2_a"])[0])
    outdim = npf(raw["fc3_b"]).shape[0]
    ws += [f32(np.ascontiguousarray(w1r)),
           f32(np.stack([npf(raw["fc1_b"]), np.full((512,), a1, np.float32)]))]
    ws += [bf16(npf(raw["fc2_w"]).T),
           f32(np.stack([npf(raw["fc2_b"]), np.full((512,), a2, np.float32)]))]
    ws += [bf16(npf(raw["fc3_w"]).T),
           f32(np.stack([npf(raw["fc3_b"]), np.zeros((outdim,), np.float32)]))]
    return ws


# ----------------------------------------------------------------------------
# Deterministic init mirroring the torch module (eval-mode defaults)
# ----------------------------------------------------------------------------
def init_params(key, outdim):
    keys = iter(jax.random.split(key, 32))

    def nrm(shape, s=0.05):
        return jax.random.normal(next(keys), shape, jnp.float32) * s

    def bn(c):  # torch defaults: gamma=1, beta=0, running_mean=0, running_var=1
        return (jnp.ones((c,), jnp.float32), jnp.zeros((c,), jnp.float32),
                jnp.zeros((c,), jnp.float32), jnp.ones((c,), jnp.float32))

    alpha = jnp.full((1,), 0.25, jnp.float32)   # torch PReLU default

    def down(cin, cout):
        g, b, m, v = bn(cout)
        return (nrm((cout, cin, 3)), nrm((cout,)), g, b, m, v, alpha)

    def up(cin, cout):
        g, b, m, v = bn(cout)
        return (nrm((cin, cout, 4)), nrm((cout,)), g, b, m, v, alpha)

    return {
        "down1": down(1, 64), "down2": down(64, 128), "down3": down(128, 256),
        "up3": up(256, 128), "up2": up(256, 64), "up1": up(128, 32), "up0": up(32, 1),
        "fc1_w": nrm((512, 512)), "fc1_b": nrm((512,)), "fc1_a": alpha,
        "fc2_w": nrm((512, 512)), "fc2_b": nrm((512,)), "fc2_a": alpha,
        "fc3_w": nrm((outdim, 512)), "fc3_b": nrm((outdim,)),
    }


# ----------------------------------------------------------------------------
# Pure NumPy reference (textbook conv / conv-transpose, eval mode)
# ----------------------------------------------------------------------------
def reference_forward(raw, x):
    f = lambda a: np.asarray(a, np.float64)  # noqa: E731
    x = np.asarray(x, np.float64)

    def bn_prelu(y, g, b, m, v, a):
        y = (y - m) / np.sqrt(v + _BN_EPS) * g + b
        return np.where(y >= 0.0, y, a * y)

    def down(xcl, p):
        w, bias, g, bt, m, v, al = (f(t) for t in p)
        bsz, lin, _ = xcl.shape
        xp = np.pad(xcl, ((0, 0), (1, 1), (0, 0)))
        lout = lin // 2
        y = np.zeros((bsz, lout, w.shape[0]))
        for j in range(lout):
            y[:, j, :] = np.einsum("bkc,ock->bo", xp[:, 2 * j:2 * j + 3, :], w)
        return bn_prelu(y + bias, g, bt, m, v, al[0])

    def up(xcl, p):
        w, bias, g, bt, m, v, al = (f(t) for t in p)
        bsz, lin, _ = xcl.shape
        cout = w.shape[1]
        y = np.zeros((bsz, 2 * lin + 2, cout))          # index n+1, n in [-1, 2*lin]
        for k in range(4):
            y[:, k:k + 2 * lin:2, :] += np.einsum("blc,co->blo", xcl, w[:, :, k])
        return bn_prelu(y[:, 1:2 * lin + 1, :] + bias, g, bt, m, v, al[0])

    def prelu(y, a):
        return np.where(y >= 0.0, y, a * y)

    h = x[:, :, None]
    d1 = down(h, raw["down1"])
    d2 = down(d1, raw["down2"])
    d3 = down(d2, raw["down3"])
    u3 = up(d3, raw["up3"])
    u3 = np.concatenate([u3[:, :d2.shape[1], :], d2], axis=-1)
    u2 = np.concatenate([up(u3, raw["up2"]), d1], axis=-1)
    u1 = up(u2, raw["up1"])
    u0 = up(u1, raw["up0"])[:, :, 0]                    # (B, 512); pool(512) == identity
    h1 = prelu(u0 @ f(raw["fc1_w"]).T + f(raw["fc1_b"]), f(raw["fc1_a"])[0])
    h2 = prelu(h1 @ f(raw["fc2_w"]).T + f(raw["fc2_b"]), f(raw["fc2_a"])[0])
    out = 1.0 / (1.0 + np.exp(-(h2 @ f(raw["fc3_w"]).T + f(raw["fc3_b"]))))
    return out[:, None, :]


# ----------------------------------------------------------------------------
if __name__ == "__main__":
    B, L, OUTDIM = 2, 256, 10
    key = jax.random.PRNGKey(0)
    pkey, xkey = jax.random.split(key)
    raw = init_params(pkey, OUTDIM)
    ws = prepare_params(raw)
    x = jax.random.normal(xkey, (B, L), jnp.float32)

    out = jax.jit(forward)(ws, x)
    out = jax.block_until_ready(out)
    assert out.shape == (B, 1, OUTDIM), out.shape
    assert bool(jnp.all(jnp.isfinite(out)))
    assert bool(jnp.all((out >= 0.0) & (out <= 1.0)))   # sigmoid range

    ref = reference_forward(raw, np.asarray(x))
    max_err = float(np.max(np.abs(np.asarray(out, np.float64) - ref)))
    assert max_err < 2e-2, f"kernel vs reference mismatch: {max_err}"
    print("KERNEL_OK")
</pallas_src>

<mosaic_0001>
module attributes {stable_mosaic.version = 11 : i64} {
  func.func @_unet_kernel(%arg0: i32, %arg1: memref<1x32x8xf32, #tpu.memory_space<vmem>>, %arg2: memref<1x256xbf16, #tpu.memory_space<vmem>>, %arg3: memref<8x256xbf16, #tpu.memory_space<vmem>>, %arg4: memref<2x256xf32, #tpu.memory_space<vmem>>, %arg5: memref<64x256xbf16, #tpu.memory_space<vmem>>, %arg6: memref<256x256xbf16, #tpu.memory_space<vmem>>, %arg7: memref<2x256xf32, #tpu.memory_space<vmem>>, %arg8: memref<128x256xbf16, #tpu.memory_space<vmem>>, %arg9: memref<256x256xbf16, #tpu.memory_space<vmem>>, %arg10: memref<2x256xf32, #tpu.memory_space<vmem>>, %arg11: memref<256x256xbf16, #tpu.memory_space<vmem>>, %arg12: memref<256x256xbf16, #tpu.memory_space<vmem>>, %arg13: memref<256x256xbf16, #tpu.memory_space<vmem>>, %arg14: memref<2x256xf32, #tpu.memory_space<vmem>>, %arg15: memref<128x256xbf16, #tpu.memory_space<vmem>>, %arg16: memref<256x256xbf16, #tpu.memory_space<vmem>>, %arg17: memref<128x256xbf16, #tpu.memory_space<vmem>>, %arg18: memref<128x256xbf16, #tpu.memory_space<vmem>>, %arg19: memref<256x256xbf16, #tpu.memory_space<vmem>>, %arg20: memref<128x256xbf16, #tpu.memory_space<vmem>>, %arg21: memref<2x256xf32, #tpu.memory_space<vmem>>, %arg22: memref<64x256xbf16, #tpu.memory_space<vmem>>, %arg23: memref<256x256xbf16, #tpu.memory_space<vmem>>, %arg24: memref<64x256xbf16, #tpu.memory_space<vmem>>, %arg25: memref<64x256xbf16, #tpu.memory_space<vmem>>, %arg26: memref<256x256xbf16, #tpu.memory_space<vmem>>, %arg27: memref<64x256xbf16, #tpu.memory_space<vmem>>, %arg28: memref<2x256xf32, #tpu.memory_space<vmem>>, %arg29: memref<32x16xbf16, #tpu.memory_space<vmem>>, %arg30: memref<256x16xbf16, #tpu.memory_space<vmem>>, %arg31: memref<32x16xbf16, #tpu.memory_space<vmem>>, %arg32: memref<2x16xf32, #tpu.memory_space<vmem>>, %arg33: memref<16x32x512xf32, #tpu.memory_space<vmem>>, %arg34: memref<2x512xf32, #tpu.memory_space<vmem>>, %arg35: memref<512x512xbf16, #tpu.memory_space<vmem>>, %arg36: memref<2x512xf32, #tpu.memory_space<vmem>>, %arg37: memref<512x10xbf16, #tpu.memory_space<vmem>>, %arg38: memref<2x10xf32, #tpu.memory_space<vmem>>, %arg39: memref<1x1x10xf32, #tpu.memory_space<vmem>>, %arg40: memref<34x8xf32, #tpu.memory_space<vmem>>, %arg41: memref<34x256xf32, #tpu.memory_space<vmem>>, %arg42: memref<34x256xf32, #tpu.memory_space<vmem>>, %arg43: memref<34x256xf32, #tpu.memory_space<vmem>>, %arg44: memref<34x256xf32, #tpu.memory_space<vmem>>, %arg45: memref<34x256xf32, #tpu.memory_space<vmem>>, %arg46: memref<34x256xf32, #tpu.memory_space<vmem>>) attributes {dimension_semantics = [#tpu.dimension_semantics<parallel>], iteration_bounds = array<i64: 2>, scalar_prefetch = 0 : i64, scratch_operands = 7 : i64, tpu.core_type = #tpu.core_type<tc>, window_params = [{transform_indices = @transform_0, window_bounds = array<i64: 1, 32, 8>}, {pipeline_mode = #tpu.pipeline_mode<synchronous>, transform_indices = @transform_1, window_bounds = array<i64: 1, 256>}, {pipeline_mode = #tpu.pipeline_mode<synchronous>, transform_indices = @transform_2, window_bounds = array<i64: 8, 256>}, {pipeline_mode = #tpu.pipeline_mode<synchronous>, transform_indices = @transform_3, window_bounds = array<i64: 2, 256>}, {pipeline_mode = #tpu.pipeline_mode<synchronous>, transform_indices = @transform_4, window_bounds = array<i64: 64, 256>}, {pipeline_mode = #tpu.pipeline_mode<synchronous>, transform_indices = @transform_5, window_bounds = array<i64: 256, 256>}, {pipeline_mode = #tpu.pipeline_mode<synchronous>, transform_indices = @transform_6, window_bounds = array<i64: 2, 256>}, {pipeline_mode = #tpu.pipeline_mode<synchronous>, transform_indices = @transform_7, window_bounds = array<i64: 128, 256>}, {pipeline_mode = #tpu.pipeline_mode<synchronous>, transform_indices = @transform_8, window_bounds = array<i64: 256, 256>}, {pipeline_mode = #tpu.pipeline_mode<synchronous>, transform_indices = @transform_9, window_bounds = array<i64: 2, 256>}, {pipeline_mode = #tpu.pipeline_mode<synchronous>, transform_indices = @transform_10, window_bounds = array<i64: 256, 256>}, {pipeline_mode = #tpu.pipeline_mode<synchronous>, transform_indices = @transform_11, window_bounds = array<i64: 256, 256>}, {pipeline_mode = #tpu.pipeline_mode<synchronous>, transform_indices = @transform_12, window_bounds = array<i64: 256, 256>}, {pipeline_mode = #tpu.pipeline_mode<synchronous>, transform_indices = @transform_13, window_bounds = array<i64: 2, 256>}, {pipeline_mode = #tpu.pipeline_mode<synchronous>, transform_indices = @transform_14, window_bounds = array<i64: 128, 256>}, {pipeline_mode = #tpu.pipeline_mode<synchronous>, transform_indices = @transform_15, window_bounds = array<i64: 256, 256>}, {pipeline_mode = #tpu.pipeline_mode<synchronous>, transform_indices = @transform_16, window_bounds = array<i64: 128, 256>}, {pipeline_mode = #tpu.pipeline_mode<synchronous>, transform_indices = @transform_17, window_bounds = array<i64: 128, 256>}, {pipeline_mode = #tpu.pipeline_mode<synchronous>, transform_indices = @transform_18, window_bounds = array<i64: 256, 256>}, {pipeline_mode = #tpu.pipeline_mode<synchronous>, transform_indices = @transform_19, window_bounds = array<i64: 128, 256>}, {pipeline_mode = #tpu.pipeline_mode<synchronous>, transform_indices = @transform_20, window_bounds = array<i64: 2, 256>}, {pipeline_mode = #tpu.pipeline_mode<synchronous>, transform_indices = @transform_21, window_bounds = array<i64: 64, 256>}, {pipeline_mode = #tpu.pipeline_mode<synchronous>, transform_indices = @transform_22, window_bounds = array<i64: 256, 256>}, {pipeline_mode = #tpu.pipeline_mode<synchronous>, transform_indices = @transform_23, window_bounds = array<i64: 64, 256>}, {pipeline_mode = #tpu.pipeline_mode<synchronous>, transform_indices = @transform_24, window_bounds = array<i64: 64, 256>}, {pipeline_mode = #tpu.pipeline_mode<synchronous>, transform_indices = @transform_25, window_bounds = array<i64: 256, 256>}, {pipeline_mode = #tpu.pipeline_mode<synchronous>, transform_indices = @transform_26, window_bounds = array<i64: 64, 256>}, {pipeline_mode = #tpu.pipeline_mode<synchronous>, transform_indices = @transform_27, window_bounds = array<i64: 2, 256>}, {pipeline_mode = #tpu.pipeline_mode<synchronous>, transform_indices = @transform_28, window_bounds = array<i64: 32, 16>}, {pipeline_mode = #tpu.pipeline_mode<synchronous>, transform_indices = @transform_29, window_bounds = array<i64: 256, 16>}, {pipeline_mode = #tpu.pipeline_mode<synchronous>, transform_indices = @transform_30, window_bounds = array<i64: 32, 16>}, {pipeline_mode = #tpu.pipeline_mode<synchronous>, transform_indices = @transform_31, window_bounds = array<i64: 2, 16>}, {pipeline_mode = #tpu.pipeline_mode<synchronous>, transform_indices = @transform_32, window_bounds = array<i64: 16, 32, 512>}, {pipeline_mode = #tpu.pipeline_mode<synchronous>, transform_indices = @transform_33, window_bounds = array<i64: 2, 512>}, {pipeline_mode = #tpu.pipeline_mode<synchronous>, transform_indices = @transform_34, window_bounds = array<i64: 512, 512>}, {pipeline_mode = #tpu.pipeline_mode<synchronous>, transform_indices = @transform_35, window_bounds = array<i64: 2, 512>}, {pipeline_mode = #tpu.pipeline_mode<synchronous>, transform_indices = @transform_36, window_bounds = array<i64: 512, 10>}, {pipeline_mode = #tpu.pipeline_mode<synchronous>, transform_indices = @transform_37, window_bounds = array<i64: 2, 10>}, {transform_indices = @transform_38, window_bounds = array<i64: 1, 1, 10>}]} {
    %c0 = arith.constant 0 : index
    %c0_0 = arith.constant 0 : index
    %c0_1 = arith.constant 0 : index
    %0 = vector.load %arg1[%c0, %c0_0, %c0_1] : memref<1x32x8xf32, #tpu.memory_space<vmem>>, vector<1x32x8xf32>
    %1 = vector.shape_cast %0 : vector<1x32x8xf32> to vector<32x8xf32>
    %cst = arith.constant 0.000000e+00 : f32
    %2 = vector.broadcast %cst : f32 to vector<1x8xf32>
    %c0_2 = arith.constant 0 : index
    %c0_3 = arith.constant 0 : index
    %3 = vector.load %arg40[%c0_2, %c0_3] : memref<34x8xf32, #tpu.memory_space<vmem>>, vector<1x8xf32>
    tpu.vector_store %arg40[%c0_2, %c0_3], %2 {strides = array<i32>} : memref<34x8xf32, #tpu.memory_space<vmem>>, vector<1x8xf32>,
    %c1 = arith.constant 1 : index
    %c0_4 = arith.constant 0 : index
    %4 = vector.load %arg40[%c1, %c0_4] : memref<34x8xf32, #tpu.memory_space<vmem>>, vector<32x8xf32>
    tpu.vector_store %arg40[%c1, %c0_4], %1 {strides = array<i32>} : memref<34x8xf32, #tpu.memory_space<vmem>>, vector<32x8xf32>,
    %cst_5 = arith.constant 0.000000e+00 : f32
    %5 = vector.broadcast %cst_5 : f32 to vector<1x8xf32>
    %c33 = arith.constant 33 : index
    %c0_6 = arith.constant 0 : index
    %6 = vector.load %arg40[%c33, %c0_6] : memref<34x8xf32, #tpu.memory_space<vmem>>, vector<1x8xf32>
    tpu.vector_store %arg40[%c33, %c0_6], %5 {strides = array<i32>} : memref<34x8xf32, #tpu.memory_space<vmem>>, vector<1x8xf32>,
    %c0_7 = arith.constant 0 : index
    %c7 = arith.constant 7 : index
    %7 = vector.load %arg40[%c0_7, %c7] : memref<34x8xf32, #tpu.memory_space<vmem>>, vector<32x1xf32>
    %c1_8 = arith.constant 1 : index
    %c0_9 = arith.constant 0 : index
    %8 = vector.load %arg40[%c1_8, %c0_9] : memref<34x8xf32, #tpu.memory_space<vmem>>, vector<32x8xf32>
    %c0_10 = arith.constant 0 : index
    %c0_11 = arith.constant 0 : index
    %9 = vector.load %arg2[%c0_10, %c0_11] : memref<1x256xbf16, #tpu.memory_space<vmem>>, vector<1x256xbf16>
    %10 = arith.extf %9 : vector<1x256xbf16> to vector<1x256xf32>
    %11 = vector.broadcast %7 : vector<32x1xf32> to vector<32x256xf32>
    %12 = vector.broadcast %10 : vector<1x256xf32> to vector<32x256xf32>
    %13 = arith.mulf %11, %12 : vector<32x256xf32>
    %14 = arith.truncf %8 : vector<32x8xf32> to vector<32x8xbf16>
    %c0_12 = arith.constant 0 : index
    %c0_13 = arith.constant 0 : index
    %15 = vector.load %arg3[%c0_12, %c0_13] : memref<8x256xbf16, #tpu.memory_space<vmem>>, vector<8x256xbf16>
    %cst_14 = arith.constant dense<0.000000e+00> : vector<32x256xf32>
    %16 = tpu.matmul %14, %15, %cst_14 {dimension_numbers = #tpu.dot_dimension_numbers<[1], [0], [0], [1], [0, 0, 1, 1], [], []>} : vector<32x8xbf16>, vector<8x256xbf16>, vector<32x256xf32> -> vector<32x256xf32>
    %17 = arith.addf %13, %16 : vector<32x256xf32>
    %c0_15 = arith.constant 0 : index
    %c0_16 = arith.constant 0 : index
    %18 = vector.load %arg4[%c0_15, %c0_16] : memref<2x256xf32, #tpu.memory_space<vmem>>, vector<1x256xf32>
    %19 = vector.broadcast %18 : vector<1x256xf32> to vector<32x256xf32>
    %20 = arith.addf %17, %19 : vector<32x256xf32>
    %cst_17 = arith.constant 0.000000e+00 : f32
    %21 = vector.broadcast %cst_17 : f32 to vector<32x256xf32>
    %22 = arith.cmpf oge, %20, %21 : vector<32x256xf32>
    %c1_18 = arith.constant 1 : index
    %c0_19 = arith.constant 0 : index
    %23 = vector.load %arg4[%c1_18, %c0_19] : memref<2x256xf32, #tpu.memory_space<vmem>>, vector<1x256xf32>
    %24 = vector.broadcast %23 : vector<1x256xf32> to vector<32x256xf32>
    %25 = arith.mulf %24, %20 : vector<32x256xf32>
    %26 = arith.select %22, %20, %25 : vector<32x256xi1>, vector<32x256xf32>
    %cst_20 = arith.constant 0.000000e+00 : f32
    %27 = vector.broadcast %cst_20 : f32 to vector<1x256xf32>
    %c0_21 = arith.constant 0 : index
    %c0_22 = arith.constant 0 : index
    %28 = vector.load %arg41[%c0_21, %c0_22] : memref<34x256xf32, #tpu.memory_space<vmem>>, vector<1x256xf32>
    tpu.vector_store %arg41[%c0_21, %c0_22], %27 {strides = array<i32>} : memref<34x256xf32, #tpu.memory_space<vmem>>, vector<1x256xf32>,
    %c1_23 = arith.constant 1 : index
    %c0_24 = arith.constant 0 : index
    %29 = vector.load %arg41[%c1_23, %c0_24] : memref<34x256xf32, #tpu.memory_space<vmem>>, vector<32x256xf32>
    tpu.vector_store %arg41[%c1_23, %c0_24], %26 {strides = array<i32>} : memref<34x256xf32, #tpu.memory_space<vmem>>, vector<32x256xf32>,
    %cst_25 = arith.constant 0.000000e+00 : f32
    %30 = vector.broadcast %cst_25 : f32 to vector<1x256xf32>
    %c33_26 = arith.constant 33 : index
    %c0_27 = arith.constant 0 : index
    %31 = vector.load %arg41[%c33_26, %c0_27] : memref<34x256xf32, #tpu.memory_space<vmem>>, vector<1x256xf32>
    tpu.vector_store %arg41[%c33_26, %c0_27], %30 {strides = array<i32>} : memref<34x256xf32, #tpu.memory_space<vmem>>, vector<1x256xf32>,
    %c0_28 = arith.constant 0 : index
    %c192 = arith.constant 192 : index
    %32 = vector.load %arg41[%c0_28, %c192] : memref<34x256xf32, #tpu.memory_space<vmem>>, vector<32x64xf32>
    %c1_29 = arith.constant 1 : index
    %c0_30 = arith.constant 0 : index
    %33 = vector.load %arg41[%c1_29, %c0_30] : memref<34x256xf32, #tpu.memory_space<vmem>>, vector<32x256xf32>
    %34 = arith.truncf %32 : vector<32x64xf32> to vector<32x64xbf16>
    %c0_31 = arith.constant 0 : index
    %c0_32 = arith.constant 0 : index
    %35 = vector.load %arg5[%c0_31, %c0_32] : memref<64x256xbf16, #tpu.memory_space<vmem>>, vector<64x256xbf16>
    %cst_33 = arith.constant dense<0.000000e+00> : vector<32x256xf32>
    %36 = tpu.matmul %34, %35, %cst_33 {dimension_numbers = #tpu.dot_dimension_numbers<[1], [0], [0], [1], [0, 0, 1, 1], [], []>} : vector<32x64xbf16>, vector<64x256xbf16>, vector<32x256xf32> -> vector<32x256xf32>
    %37 = arith.truncf %33 : vector<32x256xf32> to vector<32x256xbf16>
    %c0_34 = arith.constant 0 : index
    %c0_35 = arith.constant 0 : index
    %38 = vector.load %arg6[%c0_34, %c0_35] : memref<256x256xbf16, #tpu.memory_space<vmem>>, vector<256x256xbf16>
    %cst_36 = arith.constant dense<0.000000e+00> : vector<32x256xf32>
    %39 = tpu.matmul %37, %38, %cst_36 {dimension_numbers = #tpu.dot_dimension_numbers<[1], [0], [0], [1], [0, 0, 1, 1], [], []>} : vector<32x256xbf16>, vector<256x256xbf16>, vector<32x256xf32> -> vector<32x256xf32>
    %40 = arith.addf %36, %39 : vector<32x256xf32>
    %c0_37 = arith.constant 0 : index
    %c0_38 = arith.constant 0 : index
    %41 = vector.load %arg7[%c0_37, %c0_38] : memref<2x256xf32, #tpu.memory_space<vmem>>, vector<1x256xf32>
    %42 = vector.broadcast %41 : vector<1x256xf32> to vector<32x256xf32>
    %43 = arith.addf %40, %42 : vector<32x256xf32>
    %cst_39 = arith.constant 0.000000e+00 : f32
    %44 = vector.broadcast %cst_39 : f32 to vector<32x256xf32>
    %45 = arith.cmpf oge, %43, %44 : vector<32x256xf32>
    %c1_40 = arith.constant 1 : index
    %c0_41 = arith.constant 0 : index
    %46 = vector.load %arg7[%c1_40, %c0_41] : memref<2x256xf32, #tpu.memory_space<vmem>>, vector<1x256xf32>
    %47 = vector.broadcast %46 : vector<1x256xf32> to vector<32x256xf32>
    %48 = arith.mulf %47, %43 : vector<32x256xf32>
    %49 = arith.select %45, %43, %48 : vector<32x256xi1>, vector<32x256xf32>
    %cst_42 = arith.constant 0.000000e+00 : f32
    %50 = vector.broadcast %cst_42 : f32 to vector<1x256xf32>
    %c0_43 = arith.constant 0 : index
    %c0_44 = arith.constant 0 : index
    %51 = vector.load %arg42[%c0_43, %c0_44] : memref<34x256xf32, #tpu.memory_space<vmem>>, vector<1x256xf32>
    tpu.vector_store %arg42[%c0_43, %c0_44], %50 {strides = array<i32>} : memref<34x256xf32, #tpu.memory_space<vmem>>, vector<1x256xf32>,
    %c1_45 = arith.constant 1 : index
    %c0_46 = arith.constant 0 : index
    %52 = vector.load %arg42[%c1_45, %c0_46] : memref<34x256xf32, #tpu.memory_space<vmem>>, vector<32x256xf32>
    tpu.vector_store %arg42[%c1_45, %c0_46], %49 {strides = array<i32>} : memref<34x256xf32, #tpu.memory_space<vmem>>, vector<32x256xf32>,
    %cst_47 = arith.constant 0.000000e+00 : f32
    %53 = vector.broadcast %cst_47 : f32 to vector<1x256xf32>
    %c33_48 = arith.constant 33 : index
    %c0_49 = arith.constant 0 : index
    %54 = vector.load %arg42[%c33_48, %c0_49] : memref<34x256xf32, #tpu.memory_space<vmem>>, vector<1x256xf32>
    tpu.vector_store %arg42[%c33_48, %c0_49], %53 {strides = array<i32>} : memref<34x256xf32, #tpu.memory_space<vmem>>, vector<1x256xf32>,
    %c0_50 = arith.constant 0 : index
    %c128 = arith.constant 128 : index
    %55 = vector.load %arg42[%c0_50, %c128] : memref<34x256xf32, #tpu.memory_space<vmem>>, vector<32x128xf32>
    %c1_51 = arith.constant 1 : index
    %c0_52 = arith.constant 0 : index
    %56 = vector.load %arg42[%c1_51, %c0_52] : memref<34x256xf32, #tpu.memory_space<vmem>>, vector<32x256xf32>
    %57 = arith.truncf %55 : vector<32x128xf32> to vector<32x128xbf16>
    %c0_53 = arith.constant 0 : index
    %c0_54 = arith.constant 0 : index
    %58 = vector.load %arg8[%c0_53, %c0_54] : memref<128x256xbf16, #tpu.memory_space<vmem>>, vector<128x256xbf16>
    %cst_55 = arith.constant dense<0.000000e+00> : vector<32x256xf32>
    %59 = tpu.matmul %57, %58, %cst_55 {dimension_numbers = #tpu.dot_dimension_numbers<[1], [0], [0], [1], [0, 0, 1, 1], [], []>} : vector<32x128xbf16>, vector<128x256xbf16>, vector<32x256xf32> -> vector<32x256xf32>
    %60 = arith.truncf %56 : vector<32x256xf32> to vector<32x256xbf16>
    %c0_56 = arith.constant 0 : index
    %c0_57 = arith.constant 0 : index
    %61 = vector.load %arg9[%c0_56, %c0_57] : memref<256x256xbf16, #tpu.memory_space<vmem>>, vector<256x256xbf16>
    %cst_58 = arith.constant dense<0.000000e+00> : vector<32x256xf32>
    %62 = tpu.matmul %60, %61, %cst_58 {dimension_numbers = #tpu.dot_dimension_numbers<[1], [0], [0], [1], [0, 0, 1, 1], [], []>} : vector<32x256xbf16>, vector<256x256xbf16>, vector<32x256xf32> -> vector<32x256xf32>
    %63 = arith.addf %59, %62 : vector<32x256xf32>
    %c0_59 = arith.constant 0 : index
    %c0_60 = arith.constant 0 : index
    %64 = vector.load %arg10[%c0_59, %c0_60] : memref<2x256xf32, #tpu.memory_space<vmem>>, vector<1x256xf32>
    %65 = vector.broadcast %64 : vector<1x256xf32> to vector<32x256xf32>
    %66 = arith.addf %63, %65 : vector<32x256xf32>
    %cst_61 = arith.constant 0.000000e+00 : f32
    %67 = vector.broadcast %cst_61 : f32 to vector<32x256xf32>
    %68 = arith.cmpf oge, %66, %67 : vector<32x256xf32>
    %c1_62 = arith.constant 1 : index
    %c0_63 = arith.constant 0 : index
    %69 = vector.load %arg10[%c1_62, %c0_63] : memref<2x256xf32, #tpu.memory_space<vmem>>, vector<1x256xf32>
    %70 = vector.broadcast %69 : vector<1x256xf32> to vector<32x256xf32>
    %71 = arith.mulf %70, %66 : vector<32x256xf32>
    %72 = arith.select %68, %66, %71 : vector<32x256xi1>, vector<32x256xf32>
    %cst_64 = arith.constant 0.000000e+00 : f32
    %73 = vector.broadcast %cst_64 : f32 to vector<1x256xf32>
    %c0_65 = arith.constant 0 : index
    %c0_66 = arith.constant 0 : index
    %74 = vector.load %arg43[%c0_65, %c0_66] : memref<34x256xf32, #tpu.memory_space<vmem>>, vector<1x256xf32>
    tpu.vector_store %arg43[%c0_65, %c0_66], %73 {strides = array<i32>} : memref<34x256xf32, #tpu.memory_space<vmem>>, vector<1x256xf32>,
    %c1_67 = arith.constant 1 : index
    %c0_68 = arith.constant 0 : index
    %75 = vector.load %arg43[%c1_67, %c0_68] : memref<34x256xf32, #tpu.memory_space<vmem>>, vector<32x256xf32>
    tpu.vector_store %arg43[%c1_67, %c0_68], %72 {strides = array<i32>} : memref<34x256xf32, #tpu.memory_space<vmem>>, vector<32x256xf32>,
    %cst_69 = arith.constant 0.000000e+00 : f32
    %76 = vector.broadcast %cst_69 : f32 to vector<1x256xf32>
    %c33_70 = arith.constant 33 : index
    %c0_71 = arith.constant 0 : index
    %77 = vector.load %arg43[%c33_70, %c0_71] : memref<34x256xf32, #tpu.memory_space<vmem>>, vector<1x256xf32>
    tpu.vector_store %arg43[%c33_70, %c0_71], %76 {strides = array<i32>} : memref<34x256xf32, #tpu.memory_space<vmem>>, vector<1x256xf32>,
    %c0_72 = arith.constant 0 : index
    %c0_73 = arith.constant 0 : index
    %78 = vector.load %arg43[%c0_72, %c0_73] : memref<34x256xf32, #tpu.memory_space<vmem>>, vector<32x256xf32>
    %c1_74 = arith.constant 1 : index
    %c0_75 = arith.constant 0 : index
    %79 = vector.load %arg43[%c1_74, %c0_75] : memref<34x256xf32, #tpu.memory_space<vmem>>, vector<32x256xf32>
    %80 = arith.truncf %78 : vector<32x256xf32> to vector<32x256xbf16>
    %c0_76 = arith.constant 0 : index
    %c0_77 = arith.constant 0 : index
    %81 = vector.load %arg11[%c0_76, %c0_77] : memref<256x256xbf16, #tpu.memory_space<vmem>>, vector<256x256xbf16>
    %cst_78 = arith.constant dense<0.000000e+00> : vector<32x256xf32>
    %82 = tpu.matmul %80, %81, %cst_78 {dimension_numbers = #tpu.dot_dimension_numbers<[1], [0], [0], [1], [0, 0, 1, 1], [], []>} : vector<32x256xbf16>, vector<256x256xbf16>, vector<32x256xf32> -> vector<32x256xf32>
    %83 = arith.truncf %79 : vector<32x256xf32> to vector<32x256xbf16>
    %c0_79 = arith.constant 0 : index
    %c0_80 = arith.constant 0 : index
    %84 = vector.load %arg12[%c0_79, %c0_80] : memref<256x256xbf16, #tpu.memory_space<vmem>>, vector<256x256xbf16>
    %cst_81 = arith.constant dense<0.000000e+00> : vector<32x256xf32>
    %85 = tpu.matmul %83, %84, %cst_81 {dimension_numbers = #tpu.dot_dimension_numbers<[1], [0], [0], [1], [0, 0, 1, 1], [], []>} : vector<32x256xbf16>, vector<256x256xbf16>, vector<32x256xf32> -> vector<32x256xf32>
    %86 = arith.addf %82, %85 : vector<32x256xf32>
    %c2 = arith.constant 2 : index
    %c0_82 = arith.constant 0 : index
    %87 = vector.load %arg43[%c2, %c0_82] : memref<34x256xf32, #tpu.memory_space<vmem>>, vector<32x256xf32>
    %88 = arith.truncf %87 : vector<32x256xf32> to vector<32x256xbf16>
    %c0_83 = arith.constant 0 : index
    %c0_84 = arith.constant 0 : index
    %89 = vector.load %arg13[%c0_83, %c0_84] : memref<256x256xbf16, #tpu.memory_space<vmem>>, vector<256x256xbf16>
    %cst_85 = arith.constant dense<0.000000e+00> : vector<32x256xf32>
    %90 = tpu.matmul %88, %89, %cst_85 {dimension_numbers = #tpu.dot_dimension_numbers<[1], [0], [0], [1], [0, 0, 1, 1], [], []>} : vector<32x256xbf16>, vector<256x256xbf16>, vector<32x256xf32> -> vector<32x256xf32>
    %91 = arith.addf %86, %90 : vector<32x256xf32>
    %c0_86 = arith.constant 0 : index
    %c0_87 = arith.constant 0 : index
    %92 = vector.load %arg14[%c0_86, %c0_87] : memref<2x256xf32, #tpu.memory_space<vmem>>, vector<1x256xf32>
    %93 = vector.broadcast %92 : vector<1x256xf32> to vector<32x256xf32>
    %94 = arith.addf %91, %93 : vector<32x256xf32>
    %cst_88 = arith.constant 0.000000e+00 : f32
    %95 = vector.broadcast %cst_88 : f32 to vector<32x256xf32>
    %96 = arith.cmpf oge, %94, %95 : vector<32x256xf32>
    %c1_89 = arith.constant 1 : index
    %c0_90 = arith.constant 0 : index
    %97 = vector.load %arg14[%c1_89, %c0_90] : memref<2x256xf32, #tpu.memory_space<vmem>>, vector<1x256xf32>
    %98 = vector.broadcast %97 : vector<1x256xf32> to vector<32x256xf32>
    %99 = arith.mulf %98, %94 : vector<32x256xf32>
    %100 = arith.select %96, %94, %99 : vector<32x256xi1>, vector<32x256xf32>
    %cst_91 = arith.constant 0.000000e+00 : f32
    %101 = vector.broadcast %cst_91 : f32 to vector<1x256xf32>
    %c0_92 = arith.constant 0 : index
    %c0_93 = arith.constant 0 : index
    %102 = vector.load %arg44[%c0_92, %c0_93] : memref<34x256xf32, #tpu.memory_space<vmem>>, vector<1x256xf32>
    tpu.vector_store %arg44[%c0_92, %c0_93], %101 {strides = array<i32>} : memref<34x256xf32, #tpu.memory_space<vmem>>, vector<1x256xf32>,
    %c1_94 = arith.constant 1 : index
    %c0_95 = arith.constant 0 : index
    %103 = vector.load %arg44[%c1_94, %c0_95] : memref<34x256xf32, #tpu.memory_space<vmem>>, vector<32x256xf32>
    tpu.vector_store %arg44[%c1_94, %c0_95], %100 {strides = array<i32>} : memref<34x256xf32, #tpu.memory_space<vmem>>, vector<32x256xf32>,
    %cst_96 = arith.constant 0.000000e+00 : f32
    %104 = vector.broadcast %cst_96 : f32 to vector<1x256xf32>
    %c33_97 = arith.constant 33 : index
    %c0_98 = arith.constant 0 : index
    %105 = vector.load %arg44[%c33_97, %c0_98] : memref<34x256xf32, #tpu.memory_space<vmem>>, vector<1x256xf32>
    tpu.vector_store %arg44[%c33_97, %c0_98], %104 {strides = array<i32>} : memref<34x256xf32, #tpu.memory_space<vmem>>, vector<1x256xf32>,
    %c0_99 = arith.constant 0 : index
    %c128_100 = arith.constant 128 : index
    %106 = vector.load %arg44[%c0_99, %c128_100] : memref<34x256xf32, #tpu.memory_space<vmem>>, vector<32x128xf32>
    %c1_101 = arith.constant 1 : index
    %c0_102 = arith.constant 0 : index
    %107 = vector.load %arg44[%c1_101, %c0_102] : memref<34x256xf32, #tpu.memory_space<vmem>>, vector<32x256xf32>
    %108 = arith.truncf %106 : vector<32x128xf32> to vector<32x128xbf16>
    %c0_103 = arith.constant 0 : index
    %c0_104 = arith.constant 0 : index
    %109 = vector.load %arg15[%c0_103, %c0_104] : memref<128x256xbf16, #tpu.memory_space<vmem>>, vector<128x256xbf16>
    %cst_105 = arith.constant dense<0.000000e+00> : vector<32x256xf32>
    %110 = tpu.matmul %108, %109, %cst_105 {dimension_numbers = #tpu.dot_dimension_numbers<[1], [0], [0], [1], [0, 0, 1, 1], [], []>} : vector<32x128xbf16>, vector<128x256xbf16>, vector<32x256xf32> -> vector<32x256xf32>
    %111 = arith.truncf %107 : vector<32x256xf32> to vector<32x256xbf16>
    %c0_106 = arith.constant 0 : index
    %c0_107 = arith.constant 0 : index
    %112 = vector.load %arg16[%c0_106, %c0_107] : memref<256x256xbf16, #tpu.memory_space<vmem>>, vector<256x256xbf16>
    %cst_108 = arith.constant dense<0.000000e+00> : vector<32x256xf32>
    %113 = tpu.matmul %111, %112, %cst_108 {dimension_numbers = #tpu.dot_dimension_numbers<[1], [0], [0], [1], [0, 0, 1, 1], [], []>} : vector<32x256xbf16>, vector<256x256xbf16>, vector<32x256xf32> -> vector<32x256xf32>
    %114 = arith.addf %110, %113 : vector<32x256xf32>
    %c2_109 = arith.constant 2 : index
    %c0_110 = arith.constant 0 : index
    %115 = vector.load %arg44[%c2_109, %c0_110] : memref<34x256xf32, #tpu.memory_space<vmem>>, vector<32x128xf32>
    %116 = arith.truncf %115 : vector<32x128xf32> to vector<32x128xbf16>
    %c0_111 = arith.constant 0 : index
    %c0_112 = arith.constant 0 : index
    %117 = vector.load %arg17[%c0_111, %c0_112] : memref<128x256xbf16, #tpu.memory_space<vmem>>, vector<128x256xbf16>
    %cst_113 = arith.constant dense<0.000000e+00> : vector<32x256xf32>
    %118 = tpu.matmul %116, %117, %cst_113 {dimension_numbers = #tpu.dot_dimension_numbers<[1], [0], [0], [1], [0, 0, 1, 1], [], []>} : vector<32x128xbf16>, vector<128x256xbf16>, vector<32x256xf32> -> vector<32x256xf32>
    %119 = arith.addf %114, %118 : vector<32x256xf32>
    %c0_114 = arith.constant 0 : index
    %c128_115 = arith.constant 128 : index
    %120 = vector.load %arg42[%c0_114, %c128_115] : memref<34x256xf32, #tpu.memory_space<vmem>>, vector<32x128xf32>
    %c1_116 = arith.constant 1 : index
    %c0_117 = arith.constant 0 : index
    %121 = vector.load %arg42[%c1_116, %c0_117] : memref<34x256xf32, #tpu.memory_space<vmem>>, vector<32x256xf32>
    %122 = arith.truncf %120 : vector<32x128xf32> to vector<32x128xbf16>
    %c0_118 = arith.constant 0 : index
    %c0_119 = arith.constant 0 : index
    %123 = vector.load %arg18[%c0_118, %c0_119] : memref<128x256xbf16, #tpu.memory_space<vmem>>, vector<128x256xbf16>
    %cst_120 = arith.constant dense<0.000000e+00> : vector<32x256xf32>
    %124 = tpu.matmul %122, %123, %cst_120 {dimension_numbers = #tpu.dot_dimension_numbers<[1], [0], [0], [1], [0, 0, 1, 1], [], []>} : vector<32x128xbf16>, vector<128x256xbf16>, vector<32x256xf32> -> vector<32x256xf32>
    %125 = arith.truncf %121 : vector<32x256xf32> to vector<32x256xbf16>
    %c0_121 = arith.constant 0 : index
    %c0_122 = arith.constant 0 : index
    %126 = vector.load %arg19[%c0_121, %c0_122] : memref<256x256xbf16, #tpu.memory_space<vmem>>, vector<256x256xbf16>
    %cst_123 = arith.constant dense<0.000000e+00> : vector<32x256xf32>
    %127 = tpu.matmul %125, %126, %cst_123 {dimension_numbers = #tpu.dot_dimension_numbers<[1], [0], [0], [1], [0, 0, 1, 1], [], []>} : vector<32x256xbf16>, vector<256x256xbf16>, vector<32x256xf32> -> vector<32x256xf32>
    %128 = arith.addf %124, %127 : vector<32x256xf32>
    %c2_124 = arith.constant 2 : index
    %c0_125 = arith.constant 0 : index
    %129 = vector.load %arg42[%c2_124, %c0_125] : memref<34x256xf32, #tpu.memory_space<vmem>>, vector<32x128xf32>
    %130 = arith.truncf %129 : vector<32x128xf32> to vector<32x128xbf16>
    %c0_126 = arith.constant 0 : index
    %c0_127 = arith.constant 0 : index
    %131 = vector.load %arg20[%c0_126, %c0_127] : memref<128x256xbf16, #tpu.memory_space<vmem>>, vector<128x256xbf16>
    %cst_128 = arith.constant dense<0.000000e+00> : vector<32x256xf32>
    %132 = tpu.matmul %130, %131, %cst_128 {dimension_numbers = #tpu.dot_dimension_numbers<[1], [0], [0], [1], [0, 0, 1, 1], [], []>} : vector<32x128xbf16>, vector<128x256xbf16>, vector<32x256xf32> -> vector<32x256xf32>
    %133 = arith.addf %128, %132 : vector<32x256xf32>
    %134 = arith.addf %119, %133 : vector<32x256xf32>
    %c0_129 = arith.constant 0 : index
    %c0_130 = arith.constant 0 : index
    %135 = vector.load %arg21[%c0_129, %c0_130] : memref<2x256xf32, #tpu.memory_space<vmem>>, vector<1x256xf32>
    %136 = vector.broadcast %135 : vector<1x256xf32> to vector<32x256xf32>
    %137 = arith.addf %134, %136 : vector<32x256xf32>
    %cst_131 = arith.constant 0.000000e+00 : f32
    %138 = vector.broadcast %cst_131 : f32 to vector<32x256xf32>
    %139 = arith.cmpf oge, %137, %138 : vector<32x256xf32>
    %c1_132 = arith.constant 1 : index
    %c0_133 = arith.constant 0 : index
    %140 = vector.load %arg21[%c1_132, %c0_133] : memref<2x256xf32, #tpu.memory_space<vmem>>, vector<1x256xf32>
    %141 = vector.broadcast %140 : vector<1x256xf32> to vector<32x256xf32>
    %142 = arith.mulf %141, %137 : vector<32x256xf32>
    %143 = arith.select %139, %137, %142 : vector<32x256xi1>, vector<32x256xf32>
    %cst_134 = arith.constant 0.000000e+00 : f32
    %144 = vector.broadcast %cst_134 : f32 to vector<1x256xf32>
    %c0_135 = arith.constant 0 : index
    %c0_136 = arith.constant 0 : index
    %145 = vector.load %arg45[%c0_135, %c0_136] : memref<34x256xf32, #tpu.memory_space<vmem>>, vector<1x256xf32>
    tpu.vector_store %arg45[%c0_135, %c0_136], %144 {strides = array<i32>} : memref<34x256xf32, #tpu.memory_space<vmem>>, vector<1x256xf32>,
    %c1_137 = arith.constant 1 : index
    %c0_138 = arith.constant 0 : index
    %146 = vector.load %arg45[%c1_137, %c0_138] : memref<34x256xf32, #tpu.memory_space<vmem>>, vector<32x256xf32>
    tpu.vector_store %arg45[%c1_137, %c0_138], %143 {strides = array<i32>} : memref<34x256xf32, #tpu.memory_space<vmem>>, vector<32x256xf32>,
    %cst_139 = arith.constant 0.000000e+00 : f32
    %147 = vector.broadcast %cst_139 : f32 to vector<1x256xf32>
    %c33_140 = arith.constant 33 : index
    %c0_141 = arith.constant 0 : index
    %148 = vector.load %arg45[%c33_140, %c0_141] : memref<34x256xf32, #tpu.memory_space<vmem>>, vector<1x256xf32>
    tpu.vector_store %arg45[%c33_140, %c0_141], %147 {strides = array<i32>} : memref<34x256xf32, #tpu.memory_space<vmem>>, vector<1x256xf32>,
    %c0_142 = arith.constant 0 : index
    %c192_143 = arith.constant 192 : index
    %149 = vector.load %arg45[%c0_142, %c192_143] : memref<34x256xf32, #tpu.memory_space<vmem>>, vector<32x64xf32>
    %c1_144 = arith.constant 1 : index
    %c0_145 = arith.constant 0 : index
    %150 = vector.load %arg45[%c1_144, %c0_145] : memref<34x256xf32, #tpu.memory_space<vmem>>, vector<32x256xf32>
    %151 = arith.truncf %149 : vector<32x64xf32> to vector<32x64xbf16>
    %c0_146 = arith.constant 0 : index
    %c0_147 = arith.constant 0 : index
    %152 = vector.load %arg22[%c0_146, %c0_147] : memref<64x256xbf16, #tpu.memory_space<vmem>>, vector<64x256xbf16>
    %cst_148 = arith.constant dense<0.000000e+00> : vector<32x256xf32>
    %153 = tpu.matmul %151, %152, %cst_148 {dimension_numbers = #tpu.dot_dimension_numbers<[1], [0], [0], [1], [0, 0, 1, 1], [], []>} : vector<32x64xbf16>, vector<64x256xbf16>, vector<32x256xf32> -> vector<32x256xf32>
    %154 = arith.truncf %150 : vector<32x256xf32> to vector<32x256xbf16>
    %c0_149 = arith.constant 0 : index
    %c0_150 = arith.constant 0 : index
    %155 = vector.load %arg23[%c0_149, %c0_150] : memref<256x256xbf16, #tpu.memory_space<vmem>>, vector<256x256xbf16>
    %cst_151 = arith.constant dense<0.000000e+00> : vector<32x256xf32>
    %156 = tpu.matmul %154, %155, %cst_151 {dimension_numbers = #tpu.dot_dimension_numbers<[1], [0], [0], [1], [0, 0, 1, 1], [], []>} : vector<32x256xbf16>, vector<256x256xbf16>, vector<32x256xf32> -> vector<32x256xf32>
    %157 = arith.addf %153, %156 : vector<32x256xf32>
    %c2_152 = arith.constant 2 : index
    %c0_153 = arith.constant 0 : index
    %158 = vector.load %arg45[%c2_152, %c0_153] : memref<34x256xf32, #tpu.memory_space<vmem>>, vector<32x64xf32>
    %159 = arith.truncf %158 : vector<32x64xf32> to vector<32x64xbf16>
    %c0_154 = arith.constant 0 : index
    %c0_155 = arith.constant 0 : index
    %160 = vector.load %arg24[%c0_154, %c0_155] : memref<64x256xbf16, #tpu.memory_space<vmem>>, vector<64x256xbf16>
    %cst_156 = arith.constant dense<0.000000e+00> : vector<32x256xf32>
    %161 = tpu.matmul %159, %160, %cst_156 {dimension_numbers = #tpu.dot_dimension_numbers<[1], [0], [0], [1], [0, 0, 1, 1], [], []>} : vector<32x64xbf16>, vector<64x256xbf16>, vector<32x256xf32> -> vector<32x256xf32>
    %162 = arith.addf %157, %161 : vector<32x256xf32>
    %c0_157 = arith.constant 0 : index
    %c192_158 = arith.constant 192 : index
    %163 = vector.load %arg41[%c0_157, %c192_158] : memref<34x256xf32, #tpu.memory_space<vmem>>, vector<32x64xf32>
    %c1_159 = arith.constant 1 : index
    %c0_160 = arith.constant 0 : index
    %164 = vector.load %arg41[%c1_159, %c0_160] : memref<34x256xf32, #tpu.memory_space<vmem>>, vector<32x256xf32>
    %165 = arith.truncf %163 : vector<32x64xf32> to vector<32x64xbf16>
    %c0_161 = arith.constant 0 : index
    %c0_162 = arith.constant 0 : index
    %166 = vector.load %arg25[%c0_161, %c0_162] : memref<64x256xbf16, #tpu.memory_space<vmem>>, vector<64x256xbf16>
    %cst_163 = arith.constant dense<0.000000e+00> : vector<32x256xf32>
    %167 = tpu.matmul %165, %166, %cst_163 {dimension_numbers = #tpu.dot_dimension_numbers<[1], [0], [0], [1], [0, 0, 1, 1], [], []>} : vector<32x64xbf16>, vector<64x256xbf16>, vector<32x256xf32> -> vector<32x256xf32>
    %168 = arith.truncf %164 : vector<32x256xf32> to vector<32x256xbf16>
    %c0_164 = arith.constant 0 : index
    %c0_165 = arith.constant 0 : index
    %169 = vector.load %arg26[%c0_164, %c0_165] : memref<256x256xbf16, #tpu.memory_space<vmem>>, vector<256x256xbf16>
    %cst_166 = arith.constant dense<0.000000e+00> : vector<32x256xf32>
    %170 = tpu.matmul %168, %169, %cst_166 {dimension_numbers = #tpu.dot_dimension_numbers<[1], [0], [0], [1], [0, 0, 1, 1], [], []>} : vector<32x256xbf16>, vector<256x256xbf16>, vector<32x256xf32> -> vector<32x256xf32>
    %171 = arith.addf %167, %170 : vector<32x256xf32>
    %c2_167 = arith.constant 2 : index
    %c0_168 = arith.constant 0 : index
    %172 = vector.load %arg41[%c2_167, %c0_168] : memref<34x256xf32, #tpu.memory_space<vmem>>, vector<32x64xf32>
    %173 = arith.truncf %172 : vector<32x64xf32> to vector<32x64xbf16>
    %c0_169 = arith.constant 0 : index
    %c0_170 = arith.constant 0 : index
    %174 = vector.load %arg27[%c0_169, %c0_170] : memref<64x256xbf16, #tpu.memory_space<vmem>>, vector<64x256xbf16>
    %cst_171 = arith.constant dense<0.000000e+00> : vector<32x256xf32>
    %175 = tpu.matmul %173, %174, %cst_171 {dimension_numbers = #tpu.dot_dimension_numbers<[1], [0], [0], [1], [0, 0, 1, 1], [], []>} : vector<32x64xbf16>, vector<64x256xbf16>, vector<32x256xf32> -> vector<32x256xf32>
    %176 = arith.addf %171, %175 : vector<32x256xf32>
    %177 = arith.addf %162, %176 : vector<32x256xf32>
    %c0_172 = arith.constant 0 : index
    %c0_173 = arith.constant 0 : index
    %178 = vector.load %arg28[%c0_172, %c0_173] : memref<2x256xf32, #tpu.memory_space<vmem>>, vector<1x256xf32>
    %179 = vector.broadcast %178 : vector<1x256xf32> to vector<32x256xf32>
    %180 = arith.addf %177, %179 : vector<32x256xf32>
    %cst_174 = arith.constant 0.000000e+00 : f32
    %181 = vector.broadcast %cst_174 : f32 to vector<32x256xf32>
    %182 = arith.cmpf oge, %180, %181 : vector<32x256xf32>
    %c1_175 = arith.constant 1 : index
    %c0_176 = arith.constant 0 : index
    %183 = vector.load %arg28[%c1_175, %c0_176] : memref<2x256xf32, #tpu.memory_space<vmem>>, vector<1x256xf32>
    %184 = vector.broadcast %183 : vector<1x256xf32> to vector<32x256xf32>
    %185 = arith.mulf %184, %180 : vector<32x256xf32>
    %186 = arith.select %182, %180, %185 : vector<32x256xi1>, vector<32x256xf32>
    %cst_177 = arith.constant 0.000000e+00 : f32
    %187 = vector.broadcast %cst_177 : f32 to vector<1x256xf32>
    %c0_178 = arith.constant 0 : index
    %c0_179 = arith.constant 0 : index
    %188 = vector.load %arg46[%c0_178, %c0_179] : memref<34x256xf32, #tpu.memory_space<vmem>>, vector<1x256xf32>
    tpu.vector_store %arg46[%c0_178, %c0_179], %187 {strides = array<i32>} : memref<34x256xf32, #tpu.memory_space<vmem>>, vector<1x256xf32>,
    %c1_180 = arith.constant 1 : index
    %c0_181 = arith.constant 0 : index
    %189 = vector.load %arg46[%c1_180, %c0_181] : memref<34x256xf32, #tpu.memory_space<vmem>>, vector<32x256xf32>
    tpu.vector_store %arg46[%c1_180, %c0_181], %186 {strides = array<i32>} : memref<34x256xf32, #tpu.memory_space<vmem>>, vector<32x256xf32>,
    %cst_182 = arith.constant 0.000000e+00 : f32
    %190 = vector.broadcast %cst_182 : f32 to vector<1x256xf32>
    %c33_183 = arith.constant 33 : index
    %c0_184 = arith.constant 0 : index
    %191 = vector.load %arg46[%c33_183, %c0_184] : memref<34x256xf32, #tpu.memory_space<vmem>>, vector<1x256xf32>
    tpu.vector_store %arg46[%c33_183, %c0_184], %190 {strides = array<i32>} : memref<34x256xf32, #tpu.memory_space<vmem>>, vector<1x256xf32>,
    %c0_185 = arith.constant 0 : index
    %c224 = arith.constant 224 : index
    %192 = vector.load %arg46[%c0_185, %c224] : memref<34x256xf32, #tpu.memory_space<vmem>>, vector<32x32xf32>
    %c1_186 = arith.constant 1 : index
    %c0_187 = arith.constant 0 : index
    %193 = vector.load %arg46[%c1_186, %c0_187] : memref<34x256xf32, #tpu.memory_space<vmem>>, vector<32x256xf32>
    %194 = arith.truncf %192 : vector<32x32xf32> to vector<32x32xbf16>
    %c0_188 = arith.constant 0 : index
    %c0_189 = arith.constant 0 : index
    %195 = vector.load %arg29[%c0_188, %c0_189] : memref<32x16xbf16, #tpu.memory_space<vmem>>, vector<32x16xbf16>
    %cst_190 = arith.constant dense<0.000000e+00> : vector<32x16xf32>
    %196 = tpu.matmul %194, %195, %cst_190 {dimension_numbers = #tpu.dot_dimension_numbers<[1], [0], [0], [1], [0, 0, 1, 1], [], []>} : vector<32x32xbf16>, vector<32x16xbf16>, vector<32x16xf32> -> vector<32x16xf32>
    %197 = arith.truncf %193 : vector<32x256xf32> to vector<32x256xbf16>
    %c0_191 = arith.constant 0 : index
    %c0_192 = arith.constant 0 : index
    %198 = vector.load %arg30[%c0_191, %c0_192] : memref<256x16xbf16, #tpu.memory_space<vmem>>, vector<256x16xbf16>
    %cst_193 = arith.constant dense<0.000000e+00> : vector<32x16xf32>
    %199 = tpu.matmul %197, %198, %cst_193 {dimension_numbers = #tpu.dot_dimension_numbers<[1], [0], [0], [1], [0, 0, 1, 1], [], []>} : vector<32x256xbf16>, vector<256x16xbf16>, vector<32x16xf32> -> vector<32x16xf32>
    %200 = arith.addf %196, %199 : vector<32x16xf32>
    %c2_194 = arith.constant 2 : index
    %c0_195 = arith.constant 0 : index
    %201 = vector.load %arg46[%c2_194, %c0_195] : memref<34x256xf32, #tpu.memory_space<vmem>>, vector<32x32xf32>
    %202 = arith.truncf %201 : vector<32x32xf32> to vector<32x32xbf16>
    %c0_196 = arith.constant 0 : index
    %c0_197 = arith.constant 0 : index
    %203 = vector.load %arg31[%c0_196, %c0_197] : memref<32x16xbf16, #tpu.memory_space<vmem>>, vector<32x16xbf16>
    %cst_198 = arith.constant dense<0.000000e+00> : vector<32x16xf32>
    %204 = tpu.matmul %202, %203, %cst_198 {dimension_numbers = #tpu.dot_dimension_numbers<[1], [0], [0], [1], [0, 0, 1, 1], [], []>} : vector<32x32xbf16>, vector<32x16xbf16>, vector<32x16xf32> -> vector<32x16xf32>
    %205 = arith.addf %200, %204 : vector<32x16xf32>
    %c0_199 = arith.constant 0 : index
    %c0_200 = arith.constant 0 : index
    %206 = vector.load %arg32[%c0_199, %c0_200] : memref<2x16xf32, #tpu.memory_space<vmem>>, vector<1x16xf32>
    %207 = vector.broadcast %206 : vector<1x16xf32> to vector<32x16xf32>
    %208 = arith.addf %205, %207 : vector<32x16xf32>
    %cst_201 = arith.constant 0.000000e+00 : f32
    %209 = vector.broadcast %cst_201 : f32 to vector<32x16xf32>
    %210 = arith.cmpf oge, %208, %209 : vector<32x16xf32>
    %c1_202 = arith.constant 1 : index
    %c0_203 = arith.constant 0 : index
    %211 = vector.load %arg32[%c1_202, %c0_203] : memref<2x16xf32, #tpu.memory_space<vmem>>, vector<1x16xf32>
    %212 = vector.broadcast %211 : vector<1x16xf32> to vector<32x16xf32>
    %213 = arith.mulf %212, %208 : vector<32x16xf32>
    %214 = arith.select %210, %208, %213 : vector<32x16xi1>, vector<32x16xf32>
    %215 = vector.extract_strided_slice %214 {offsets = [0, 0], sizes = [32, 1], strides = [1, 1]} : vector<32x16xf32> to vector<32x1xf32>
    %c0_204 = arith.constant 0 : index
    %c0_205 = arith.constant 0 : index
    %c0_206 = arith.constant 0 : index
    %216 = vector.load %arg33[%c0_204, %c0_205, %c0_206] : memref<16x32x512xf32, #tpu.memory_space<vmem>>, vector<1x32x512xf32>
    %217 = vector.shape_cast %216 : vector<1x32x512xf32> to vector<32x512xf32>
    %218 = vector.broadcast %215 : vector<32x1xf32> to vector<32x512xf32>
    %219 = arith.mulf %218, %217 : vector<32x512xf32>
    %220 = vector.extract_strided_slice %214 {offsets = [0, 1], sizes = [32, 1], strides = [1, 1]} : vector<32x16xf32> to vector<32x1xf32>
    %c1_207 = arith.constant 1 : index
    %c0_208 = arith.constant 0 : index
    %c0_209 = arith.constant 0 : index
    %221 = vector.load %arg33[%c1_207, %c0_208, %c0_209] : memref<16x32x512xf32, #tpu.memory_space<vmem>>, vector<1x32x512xf32>
    %222 = vector.shape_cast %221 : vector<1x32x512xf32> to vector<32x512xf32>
    %223 = vector.broadcast %220 : vector<32x1xf32> to vector<32x512xf32>
    %224 = arith.mulf %223, %222 : vector<32x512xf32>
    %225 = arith.addf %219, %224 : vector<32x512xf32>
    %226 = vector.extract_strided_slice %214 {offsets = [0, 2], sizes = [32, 1], strides = [1, 1]} : vector<32x16xf32> to vector<32x1xf32>
    %c2_210 = arith.constant 2 : index
    %c0_211 = arith.constant 0 : index
    %c0_212 = arith.constant 0 : index
    %227 = vector.load %arg33[%c2_210, %c0_211, %c0_212] : memref<16x32x512xf32, #tpu.memory_space<vmem>>, vector<1x32x512xf32>
    %228 = vector.shape_cast %227 : vector<1x32x512xf32> to vector<32x512xf32>
    %229 = vector.broadcast %226 : vector<32x1xf32> to vector<32x512xf32>
    %230 = arith.mulf %229, %228 : vector<32x512xf32>
    %231 = arith.addf %225, %230 : vector<32x512xf32>
    %232 = vector.extract_strided_slice %214 {offsets = [0, 3], sizes = [32, 1], strides = [1, 1]} : vector<32x16xf32> to vector<32x1xf32>
    %c3 = arith.constant 3 : index
    %c0_213 = arith.constant 0 : index
    %c0_214 = arith.constant 0 : index
    %233 = vector.load %arg33[%c3, %c0_213, %c0_214] : memref<16x32x512xf32, #tpu.memory_space<vmem>>, vector<1x32x512xf32>
    %234 = vector.shape_cast %233 : vector<1x32x512xf32> to vector<32x512xf32>
    %235 = vector.broadcast %232 : vector<32x1xf32> to vector<32x512xf32>
    %236 = arith.mulf %235, %234 : vector<32x512xf32>
    %237 = arith.addf %231, %236 : vector<32x512xf32>
    %238 = vector.extract_strided_slice %214 {offsets = [0, 4], sizes = [32, 1], strides = [1, 1]} : vector<32x16xf32> to vector<32x1xf32>
    %c4 = arith.constant 4 : index
    %c0_215 = arith.constant 0 : index
    %c0_216 = arith.constant 0 : index
    %239 = vector.load %arg33[%c4, %c0_215, %c0_216] : memref<16x32x512xf32, #tpu.memory_space<vmem>>, vector<1x32x512xf32>
    %240 = vector.shape_cast %239 : vector<1x32x512xf32> to vector<32x512xf32>
    %241 = vector.broadcast %238 : vector<32x1xf32> to vector<32x512xf32>
    %242 = arith.mulf %241, %240 : vector<32x512xf32>
    %243 = arith.addf %237, %242 : vector<32x512xf32>
    %244 = vector.extract_strided_slice %214 {offsets = [0, 5], sizes = [32, 1], strides = [1, 1]} : vector<32x16xf32> to vector<32x1xf32>
    %c5 = arith.constant 5 : index
    %c0_217 = arith.constant 0 : index
    %c0_218 = arith.constant 0 : index
    %245 = vector.load %arg33[%c5, %c0_217, %c0_218] : memref<16x32x512xf32, #tpu.memory_space<vmem>>, vector<1x32x512xf32>
    %246 = vector.shape_cast %245 : vector<1x32x512xf32> to vector<32x512xf32>
    %247 = vector.broadcast %244 : vector<32x1xf32> to vector<32x512xf32>
    %248 = arith.mulf %247, %246 : vector<32x512xf32>
    %249 = arith.addf %243, %248 : vector<32x512xf32>
    %250 = vector.extract_strided_slice %214 {offsets = [0, 6], sizes = [32, 1], strides = [1, 1]} : vector<32x16xf32> to vector<32x1xf32>
    %c6 = arith.constant 6 : index
    %c0_219 = arith.constant 0 : index
    %c0_220 = arith.constant 0 : index
    %251 = vector.load %arg33[%c6, %c0_219, %c0_220] : memref<16x32x512xf32, #tpu.memory_space<vmem>>, vector<1x32x512xf32>
    %252 = vector.shape_cast %251 : vector<1x32x512xf32> to vector<32x512xf32>
    %253 = vector.broadcast %250 : vector<32x1xf32> to vector<32x512xf32>
    %254 = arith.mulf %253, %252 : vector<32x512xf32>
    %255 = arith.addf %249, %254 : vector<32x512xf32>
    %256 = vector.extract_strided_slice %214 {offsets = [0, 7], sizes = [32, 1], strides = [1, 1]} : vector<32x16xf32> to vector<32x1xf32>
    %c7_221 = arith.constant 7 : index
    %c0_222 = arith.constant 0 : index
    %c0_223 = arith.constant 0 : index
    %257 = vector.load %arg33[%c7_221, %c0_222, %c0_223] : memref<16x32x512xf32, #tpu.memory_space<vmem>>, vector<1x32x512xf32>
    %258 = vector.shape_cast %257 : vector<1x32x512xf32> to vector<32x512xf32>
    %259 = vector.broadcast %256 : vector<32x1xf32> to vector<32x512xf32>
    %260 = arith.mulf %259, %258 : vector<32x512xf32>
    %261 = arith.addf %255, %260 : vector<32x512xf32>
    %262 = vector.extract_strided_slice %214 {offsets = [0, 8], sizes = [32, 1], strides = [1, 1]} : vector<32x16xf32> to vector<32x1xf32>
    %c8 = arith.constant 8 : index
    %c0_224 = arith.constant 0 : index
    %c0_225 = arith.constant 0 : index
    %263 = vector.load %arg33[%c8, %c0_224, %c0_225] : memref<16x32x512xf32, #tpu.memory_space<vmem>>, vector<1x32x512xf32>
    %264 = vector.shape_cast %263 : vector<1x32x512xf32> to vector<32x512xf32>
    %265 = vector.broadcast %262 : vector<32x1xf32> to vector<32x512xf32>
    %266 = arith.mulf %265, %264 : vector<32x512xf32>
    %267 = arith.addf %261, %266 : vector<32x512xf32>
    %268 = vector.extract_strided_slice %214 {offsets = [0, 9], sizes = [32, 1], strides = [1, 1]} : vector<32x16xf32> to vector<32x1xf32>
    %c9 = arith.constant 9 : index
    %c0_226 = arith.constant 0 : index
    %c0_227 = arith.constant 0 : index
    %269 = vector.load %arg33[%c9, %c0_226, %c0_227] : memref<16x32x512xf32, #tpu.memory_space<vmem>>, vector<1x32x512xf32>
    %270 = vector.shape_cast %269 : vector<1x32x512xf32> to vector<32x512xf32>
    %271 = vector.broadcast %268 : vector<32x1xf32> to vector<32x512xf32>
    %272 = arith.mulf %271, %270 : vector<32x512xf32>
    %273 = arith.addf %267, %272 : vector<32x512xf32>
    %274 = vector.extract_strided_slice %214 {offsets = [0, 10], sizes = [32, 1], strides = [1, 1]} : vector<32x16xf32> to vector<32x1xf32>
    %c10 = arith.constant 10 : index
    %c0_228 = arith.constant 0 : index
    %c0_229 = arith.constant 0 : index
    %275 = vector.load %arg33[%c10, %c0_228, %c0_229] : memref<16x32x512xf32, #tpu.memory_space<vmem>>, vector<1x32x512xf32>
    %276 = vector.shape_cast %275 : vector<1x32x512xf32> to vector<32x512xf32>
    %277 = vector.broadcast %274 : vector<32x1xf32> to vector<32x512xf32>
    %278 = arith.mulf %277, %276 : vector<32x512xf32>
    %279 = arith.addf %273, %278 : vector<32x512xf32>
    %280 = vector.extract_strided_slice %214 {offsets = [0, 11], sizes = [32, 1], strides = [1, 1]} : vector<32x16xf32> to vector<32x1xf32>
    %c11 = arith.constant 11 : index
    %c0_230 = arith.constant 0 : index
    %c0_231 = arith.constant 0 : index
    %281 = vector.load %arg33[%c11, %c0_230, %c0_231] : memref<16x32x512xf32, #tpu.memory_space<vmem>>, vector<1x32x512xf32>
    %282 = vector.shape_cast %281 : vector<1x32x512xf32> to vector<32x512xf32>
    %283 = vector.broadcast %280 : vector<32x1xf32> to vector<32x512xf32>
    %284 = arith.mulf %283, %282 : vector<32x512xf32>
    %285 = arith.addf %279, %284 : vector<32x512xf32>
    %286 = vector.extract_strided_slice %214 {offsets = [0, 12], sizes = [32, 1], strides = [1, 1]} : vector<32x16xf32> to vector<32x1xf32>
    %c12 = arith.constant 12 : index
    %c0_232 = arith.constant 0 : index
    %c0_233 = arith.constant 0 : index
    %287 = vector.load %arg33[%c12, %c0_232, %c0_233] : memref<16x32x512xf32, #tpu.memory_space<vmem>>, vector<1x32x512xf32>
    %288 = vector.shape_cast %287 : vector<1x32x512xf32> to vector<32x512xf32>
    %289 = vector.broadcast %286 : vector<32x1xf32> to vector<32x512xf32>
    %290 = arith.mulf %289, %288 : vector<32x512xf32>
    %291 = arith.addf %285, %290 : vector<32x512xf32>
    %292 = vector.extract_strided_slice %214 {offsets = [0, 13], sizes = [32, 1], strides = [1, 1]} : vector<32x16xf32> to vector<32x1xf32>
    %c13 = arith.constant 13 : index
    %c0_234 = arith.constant 0 : index
    %c0_235 = arith.constant 0 : index
    %293 = vector.load %arg33[%c13, %c0_234, %c0_235] : memref<16x32x512xf32, #tpu.memory_space<vmem>>, vector<1x32x512xf32>
    %294 = vector.shape_cast %293 : vector<1x32x512xf32> to vector<32x512xf32>
    %295 = vector.broadcast %292 : vector<32x1xf32> to vector<32x512xf32>
    %296 = arith.mulf %295, %294 : vector<32x512xf32>
    %297 = arith.addf %291, %296 : vector<32x512xf32>
    %298 = vector.extract_strided_slice %214 {offsets = [0, 14], sizes = [32, 1], strides = [1, 1]} : vector<32x16xf32> to vector<32x1xf32>
    %c14 = arith.constant 14 : index
    %c0_236 = arith.constant 0 : index
    %c0_237 = arith.constant 0 : index
    %299 = vector.load %arg33[%c14, %c0_236, %c0_237] : memref<16x32x512xf32, #tpu.memory_space<vmem>>, vector<1x32x512xf32>
    %300 = vector.shape_cast %299 : vector<1x32x512xf32> to vector<32x512xf32>
    %301 = vector.broadcast %298 : vector<32x1xf32> to vector<32x512xf32>
    %302 = arith.mulf %301, %300 : vector<32x512xf32>
    %303 = arith.addf %297, %302 : vector<32x512xf32>
    %304 = vector.extract_strided_slice %214 {offsets = [0, 15], sizes = [32, 1], strides = [1, 1]} : vector<32x16xf32> to vector<32x1xf32>
    %c15 = arith.constant 15 : index
    %c0_238 = arith.constant 0 : index
    %c0_239 = arith.constant 0 : index
    %305 = vector.load %arg33[%c15, %c0_238, %c0_239] : memref<16x32x512xf32, #tpu.memory_space<vmem>>, vector<1x32x512xf32>
    %306 = vector.shape_cast %305 : vector<1x32x512xf32> to vector<32x512xf32>
    %307 = vector.broadcast %304 : vector<32x1xf32> to vector<32x512xf32>
    %308 = arith.mulf %307, %306 : vector<32x512xf32>
    %309 = arith.addf %303, %308 : vector<32x512xf32>
    %cst_240 = arith.constant dense<0.000000e+00> : vector<512xf32>
    %310 = vector.multi_reduction <add>, %309, %cst_240 [0] : vector<32x512xf32> to vector<512xf32>
    %311 = vector.shape_cast %310 : vector<512xf32> to vector<1x512xf32>
    %c0_241 = arith.constant 0 : index
    %c0_242 = arith.constant 0 : index
    %312 = vector.load %arg34[%c0_241, %c0_242] : memref<2x512xf32, #tpu.memory_space<vmem>>, vector<1x512xf32>
    %313 = arith.addf %311, %312 : vector<1x512xf32>
    %cst_243 = arith.constant 0.000000e+00 : f32
    %314 = vector.broadcast %cst_243 : f32 to vector<1x512xf32>
    %315 = arith.cmpf oge, %313, %314 : vector<1x512xf32>
    %c1_244 = arith.constant 1 : index
    %c0_245 = arith.constant 0 : index
    %316 = vector.load %arg34[%c1_244, %c0_245] : memref<2x512xf32, #tpu.memory_space<vmem>>, vector<1x512xf32>
    %317 = arith.mulf %316, %313 : vector<1x512xf32>
    %318 = arith.select %315, %313, %317 : vector<1x512xi1>, vector<1x512xf32>
    %319 = arith.truncf %318 : vector<1x512xf32> to vector<1x512xbf16>
    %c0_246 = arith.constant 0 : index
    %c0_247 = arith.constant 0 : index
    %320 = vector.load %arg35[%c0_246, %c0_247] : memref<512x512xbf16, #tpu.memory_space<vmem>>, vector<512x512xbf16>
    %cst_248 = arith.constant dense<0.000000e+00> : vector<1x512xf32>
    %321 = tpu.matmul %319, %320, %cst_248 {dimension_numbers = #tpu.dot_dimension_numbers<[1], [0], [0], [1], [0, 0, 1, 1], [], []>} : vector<1x512xbf16>, vector<512x512xbf16>, vector<1x512xf32> -> vector<1x512xf32>
    %c0_249 = arith.constant 0 : index
    %c0_250 = arith.constant 0 : index
    %322 = vector.load %arg36[%c0_249, %c0_250] : memref<2x512xf32, #tpu.memory_space<vmem>>, vector<1x512xf32>
    %323 = arith.addf %321, %322 : vector<1x512xf32>
    %cst_251 = arith.constant 0.000000e+00 : f32
    %324 = vector.broadcast %cst_251 : f32 to vector<1x512xf32>
    %325 = arith.cmpf oge, %323, %324 : vector<1x512xf32>
    %c1_252 = arith.constant 1 : index
    %c0_253 = arith.constant 0 : index
    %326 = vector.load %arg36[%c1_252, %c0_253] : memref<2x512xf32, #tpu.memory_space<vmem>>, vector<1x512xf32>
    %327 = arith.mulf %326, %323 : vector<1x512xf32>
    %328 = arith.select %325, %323, %327 : vector<1x512xi1>, vector<1x512xf32>
    %329 = arith.truncf %328 : vector<1x512xf32> to vector<1x512xbf16>
    %c0_254 = arith.constant 0 : index
    %c0_255 = arith.constant 0 : index
    %330 = vector.load %arg37[%c0_254, %c0_255] : memref<512x10xbf16, #tpu.memory_space<vmem>>, vector<512x10xbf16>
    %cst_256 = arith.constant dense<0.000000e+00> : vector<1x10xf32>
    %331 = tpu.matmul %329, %330, %cst_256 {dimension_numbers = #tpu.dot_dimension_numbers<[1], [0], [0], [1], [0, 0, 1, 1], [], []>} : vector<1x512xbf16>, vector<512x10xbf16>, vector<1x10xf32> -> vector<1x10xf32>
    %c0_257 = arith.constant 0 : index
    %c0_258 = arith.constant 0 : index
    %332 = vector.load %arg38[%c0_257, %c0_258] : memref<2x10xf32, #tpu.memory_space<vmem>>, vector<1x10xf32>
    %333 = arith.addf %331, %332 : vector<1x10xf32>
    %334 = arith.negf %333 : vector<1x10xf32>
    %335 = math.exp %334 : vector<1x10xf32>
    %cst_259 = arith.constant 1.000000e+00 : f32
    %336 = vector.broadcast %cst_259 : f32 to vector<1x10xf32>
    %337 = arith.addf %336, %335 : vector<1x10xf32>
    %338 = arith.divf %336, %337 : vector<1x10xf32>
    %339 = vector.shape_cast %338 : vector<1x10xf32> to vector<1x1x10xf32>
    %c0_260 = arith.constant 0 : index
    %c0_261 = arith.constant 0 : index
    %c0_262 = arith.constant 0 : index
    %340 = vector.load %arg39[%c0_260, %c0_261, %c0_262] : memref<1x1x10xf32, #tpu.memory_space<vmem>>, vector<1x1x10xf32>
    tpu.vector_store %arg39[%c0_260, %c0_261, %c0_262], %339 {strides = array<i32>} : memref<1x1x10xf32, #tpu.memory_space<vmem>>, vector<1x1x10xf32>,
    return
  }
  func.func @transform_0(%arg0: i32) -> (i32, i32, i32) {
    %c0_i32 = arith.constant 0 : i32
    %c0_i32_0 = arith.constant 0 : i32
    %c0_i32_1 = arith.constant 0 : i32
    return %arg0, %c0_i32, %c0_i32_0 : i32, i32, i32
  }
  func.func @transform_1(%arg0: i32) -> (i32, i32) {
    %c0_i32 = arith.constant 0 : i32
    %c0_i32_0 = arith.constant 0 : i32
    %c0_i32_1 = arith.constant 0 : i32
    return %c0_i32, %c0_i32_0 : i32, i32
  }
  func.func @transform_2(%arg0: i32) -> (i32, i32) {
    %c0_i32 = arith.constant 0 : i32
    %c0_i32_0 = arith.constant 0 : i32
    %c0_i32_1 = arith.constant 0 : i32
    return %c0_i32, %c0_i32_0 : i32, i32
  }
  func.func @transform_3(%arg0: i32) -> (i32, i32) {
    %c0_i32 = arith.constant 0 : i32
    %c0_i32_0 = arith.constant 0 : i32
    %c0_i32_1 = arith.constant 0 : i32
    return %c0_i32, %c0_i32_0 : i32, i32
  }
  func.func @transform_4(%arg0: i32) -> (i32, i32) {
    %c0_i32 = arith.constant 0 : i32
    %c0_i32_0 = arith.constant 0 : i32
    %c0_i32_1 = arith.constant 0 : i32
    return %c0_i32, %c0_i32_0 : i32, i32
  }
  func.func @transform_5(%arg0: i32) -> (i32, i32) {
    %c0_i32 = arith.constant 0 : i32
    %c0_i32_0 = arith.constant 0 : i32
    %c0_i32_1 = arith.constant 0 : i32
    return %c0_i32, %c0_i32_0 : i32, i32
  }
  func.func @transform_6(%arg0: i32) -> (i32, i32) {
    %c0_i32 = arith.constant 0 : i32
    %c0_i32_0 = arith.constant 0 : i32
    %c0_i32_1 = arith.constant 0 : i32
    return %c0_i32, %c0_i32_0 : i32, i32
  }
  func.func @transform_7(%arg0: i32) -> (i32, i32) {
    %c0_i32 = arith.constant 0 : i32
    %c0_i32_0 = arith.constant 0 : i32
    %c0_i32_1 = arith.constant 0 : i32
    return %c0_i32, %c0_i32_0 : i32, i32
  }
  func.func @transform_8(%arg0: i32) -> (i32, i32) {
    %c0_i32 = arith.constant 0 : i32
    %c0_i32_0 = arith.constant 0 : i32
    %c0_i32_1 = arith.constant 0 : i32
    return %c0_i32, %c0_i32_0 : i32, i32
  }
  func.func @transform_9(%arg0: i32) -> (i32, i32) {
    %c0_i32 = arith.constant 0 : i32
    %c0_i32_0 = arith.constant 0 : i32
    %c0_i32_1 = arith.constant 0 : i32
    return %c0_i32, %c0_i32_0 : i32, i32
  }
  func.func @transform_10(%arg0: i32) -> (i32, i32) {
    %c0_i32 = arith.constant 0 : i32
    %c0_i32_0 = arith.constant 0 : i32
    %c0_i32_1 = arith.constant 0 : i32
    return %c0_i32, %c0_i32_0 : i32, i32
  }
  func.func @transform_11(%arg0: i32) -> (i32, i32) {
    %c0_i32 = arith.constant 0 : i32
    %c0_i32_0 = arith.constant 0 : i32
    %c0_i32_1 = arith.constant 0 : i32
    return %c0_i32, %c0_i32_0 : i32, i32
  }
  func.func @transform_12(%arg0: i32) -> (i32, i32) {
    %c0_i32 = arith.constant 0 : i32
    %c0_i32_0 = arith.constant 0 : i32
    %c0_i32_1 = arith.constant 0 : i32
    return %c0_i32, %c0_i32_0 : i32, i32
  }
  func.func @transform_13(%arg0: i32) -> (i32, i32) {
    %c0_i32 = arith.constant 0 : i32
    %c0_i32_0 = arith.constant 0 : i32
    %c0_i32_1 = arith.constant 0 : i32
    return %c0_i32, %c0_i32_0 : i32, i32
  }
  func.func @transform_14(%arg0: i32) -> (i32, i32) {
    %c0_i32 = arith.constant 0 : i32
    %c0_i32_0 = arith.constant 0 : i32
    %c0_i32_1 = arith.constant 0 : i32
    return %c0_i32, %c0_i32_0 : i32, i32
  }
  func.func @transform_15(%arg0: i32) -> (i32, i32) {
    %c0_i32 = arith.constant 0 : i32
    %c0_i32_0 = arith.constant 0 : i32
    %c0_i32_1 = arith.constant 0 : i32
    return %c0_i32, %c0_i32_0 : i32, i32
  }
  func.func @transform_16(%arg0: i32) -> (i32, i32) {
    %c0_i32 = arith.constant 0 : i32
    %c0_i32_0 = arith.constant 0 : i32
    %c0_i32_1 = arith.constant 0 : i32
    return %c0_i32, %c0_i32_0 : i32, i32
  }
  func.func @transform_17(%arg0: i32) -> (i32, i32) {
    %c0_i32 = arith.constant 0 : i32
    %c0_i32_0 = arith.constant 0 : i32
    %c0_i32_1 = arith.constant 0 : i32
    return %c0_i32, %c0_i32_0 : i32, i32
  }
  func.func @transform_18(%arg0: i32) -> (i32, i32) {
    %c0_i32 = arith.constant 0 : i32
    %c0_i32_0 = arith.constant 0 : i32
    %c0_i32_1 = arith.constant 0 : i32
    return %c0_i32, %c0_i32_0 : i32, i32
  }
  func.func @transform_19(%arg0: i32) -> (i32, i32) {
    %c0_i32 = arith.constant 0 : i32
    %c0_i32_0 = arith.constant 0 : i32
    %c0_i32_1 = arith.constant 0 : i32
    return %c0_i32, %c0_i32_0 : i32, i32
  }
  func.func @transform_20(%arg0: i32) -> (i32, i32) {
    %c0_i32 = arith.constant 0 : i32
    %c0_i32_0 = arith.constant 0 : i32
    %c0_i32_1 = arith.constant 0 : i32
    return %c0_i32, %c0_i32_0 : i32, i32
  }
  func.func @transform_21(%arg0: i32) -> (i32, i32) {
    %c0_i32 = arith.constant 0 : i32
    %c0_i32_0 = arith.constant 0 : i32
    %c0_i32_1 = arith.constant 0 : i32
    return %c0_i32, %c0_i32_0 : i32, i32
  }
  func.func @transform_22(%arg0: i32) -> (i32, i32) {
    %c0_i32 = arith.constant 0 : i32
    %c0_i32_0 = arith.constant 0 : i32
    %c0_i32_1 = arith.constant 0 : i32
    return %c0_i32, %c0_i32_0 : i32, i32
  }
  func.func @transform_23(%arg0: i32) -> (i32, i32) {
    %c0_i32 = arith.constant 0 : i32
    %c0_i32_0 = arith.constant 0 : i32
    %c0_i32_1 = arith.constant 0 : i32
    return %c0_i32, %c0_i32_0 : i32, i32
  }
  func.func @transform_24(%arg0: i32) -> (i32, i32) {
    %c0_i32 = arith.constant 0 : i32
    %c0_i32_0 = arith.constant 0 : i32
    %c0_i32_1 = arith.constant 0 : i32
    return %c0_i32, %c0_i32_0 : i32, i32
  }
  func.func @transform_25(%arg0: i32) -> (i32, i32) {
    %c0_i32 = arith.constant 0 : i32
    %c0_i32_0 = arith.constant 0 : i32
    %c0_i32_1 = arith.constant 0 : i32
    return %c0_i32, %c0_i32_0 : i32, i32
  }
  func.func @transform_26(%arg0: i32) -> (i32, i32) {
    %c0_i32 = arith.constant 0 : i32
    %c0_i32_0 = arith.constant 0 : i32
    %c0_i32_1 = arith.constant 0 : i32
    return %c0_i32, %c0_i32_0 : i32, i32
  }
  func.func @transform_27(%arg0: i32) -> (i32, i32) {
    %c0_i32 = arith.constant 0 : i32
    %c0_i32_0 = arith.constant 0 : i32
    %c0_i32_1 = arith.constant 0 : i32
    return %c0_i32, %c0_i32_0 : i32, i32
  }
  func.func @transform_28(%arg0: i32) -> (i32, i32) {
    %c0_i32 = arith.constant 0 : i32
    %c0_i32_0 = arith.constant 0 : i32
    %c0_i32_1 = arith.constant 0 : i32
    return %c0_i32, %c0_i32_0 : i32, i32
  }
  func.func @transform_29(%arg0: i32) -> (i32, i32) {
    %c0_i32 = arith.constant 0 : i32
    %c0_i32_0 = arith.constant 0 : i32
    %c0_i32_1 = arith.constant 0 : i32
    return %c0_i32, %c0_i32_0 : i32, i32
  }
  func.func @transform_30(%arg0: i32) -> (i32, i32) {
    %c0_i32 = arith.constant 0 : i32
    %c0_i32_0 = arith.constant 0 : i32
    %c0_i32_1 = arith.constant 0 : i32
    return %c0_i32, %c0_i32_0 : i32, i32
  }
  func.func @transform_31(%arg0: i32) -> (i32, i32) {
    %c0_i32 = arith.constant 0 : i32
    %c0_i32_0 = arith.constant 0 : i32
    %c0_i32_1 = arith.constant 0 : i32
    return %c0_i32, %c0_i32_0 : i32, i32
  }
  func.func @transform_32(%arg0: i32) -> (i32, i32, i32) {
    %c0_i32 = arith.constant 0 : i32
    %c0_i32_0 = arith.constant 0 : i32
    %c0_i32_1 = arith.constant 0 : i32
    %c0_i32_2 = arith.constant 0 : i32
    return %c0_i32, %c0_i32_0, %c0_i32_1 : i32, i32, i32
  }
  func.func @transform_33(%arg0: i32) -> (i32, i32) {
    %c0_i32 = arith.constant 0 : i32
    %c0_i32_0 = arith.constant 0 : i32
    %c0_i32_1 = arith.constant 0 : i32
    return %c0_i32, %c0_i32_0 : i32, i32
  }
  func.func @transform_34(%arg0: i32) -> (i32, i32) {
    %c0_i32 = arith.constant 0 : i32
    %c0_i32_0 = arith.constant 0 : i32
    %c0_i32_1 = arith.constant 0 : i32
    return %c0_i32, %c0_i32_0 : i32, i32
  }
  func.func @transform_35(%arg0: i32) -> (i32, i32) {
    %c0_i32 = arith.constant 0 : i32
    %c0_i32_0 = arith.constant 0 : i32
    %c0_i32_1 = arith.constant 0 : i32
    return %c0_i32, %c0_i32_0 : i32, i32
  }
  func.func @transform_36(%arg0: i32) -> (i32, i32) {
    %c0_i32 = arith.constant 0 : i32
    %c0_i32_0 = arith.constant 0 : i32
    %c0_i32_1 = arith.constant 0 : i32
    return %c0_i32, %c0_i32_0 : i32, i32
  }
  func.func @transform_37(%arg0: i32) -> (i32, i32) {
    %c0_i32 = arith.constant 0 : i32
    %c0_i32_0 = arith.constant 0 : i32
    %c0_i32_1 = arith.constant 0 : i32
    return %c0_i32, %c0_i32_0 : i32, i32
  }
  func.func @transform_38(%arg0: i32) -> (i32, i32, i32) {
    %c0_i32 = arith.constant 0 : i32
    %c0_i32_0 = arith.constant 0 : i32
    %c0_i32_1 = arith.constant 0 : i32
    return %arg0, %c0_i32, %c0_i32_0 : i32, i32, i32
  }
}

</mosaic_0001>

<llo_original>
// kernel: forward.1
$region0: #{forward.1}
  #allocation0 [shape = 'u32[]', space=smem, size = 0x4, offset = 0x4, fixed_abs, tag = 'smem constant byte address 0x4 - core index']
  #allocation1 [shape = 'u32[144,128]{1,0:T(1,128)}', space=vmem, size = 0x12000, scoped, tag = 'internal scratch']
  #allocation2 [shape = 'f32[34,8]{1,0:T(8,128)}', space=vmem, size = 0x5000, scoped, tag = 'scratch operand']
  #allocation3 [shape = 'f32[34,256]{1,0:T(8,128)}', space=vmem, size = 0xa000, scoped, tag = 'scratch operand']
  #allocation4 [shape = 'f32[34,256]{1,0:T(8,128)}', space=vmem, size = 0xa000, scoped, tag = 'scratch operand']
  #allocation5 [shape = 'f32[34,256]{1,0:T(8,128)}', space=vmem, size = 0xa000, scoped, tag = 'scratch operand']
  #allocation6 [shape = 'f32[34,256]{1,0:T(8,128)}', space=vmem, size = 0xa000, scoped, tag = 'scratch operand']
  #allocation7 [shape = 'f32[34,256]{1,0:T(8,128)}', space=vmem, size = 0xa000, scoped, tag = 'scratch operand']
  #allocation8 [shape = 'f32[34,256]{1,0:T(8,128)}', space=vmem, size = 0xa000, scoped, tag = 'scratch operand']
  %s0 = inlined_call_operand.smem [shape: u32[39], index: -1, kind: input, shape index: {}]
  %s1 = sld [smem:[%s0]]
  %s2 = scalar_lea.smem %s0, 1
  %s3 = sld [smem:[%s2]]
  %s4 = scalar_lea.smem %s0, 2
  %s5 = sld [smem:[%s4]]
  %s6 = scalar_lea.smem %s0, 3
  %s7 = sld [smem:[%s6]]
  %s8 = scalar_lea.smem %s0, 4
  %s9 = sld [smem:[%s8]]
  %s10 = scalar_lea.smem %s0, 5
  %s11 = sld [smem:[%s10]]
  %s12 = scalar_lea.smem %s0, 6
  %s13 = sld [smem:[%s12]]
  %s14 = scalar_lea.smem %s0, 7
  %s15 = sld [smem:[%s14]]
  %s16 = scalar_lea.smem %s0, 8
  %s17 = sld [smem:[%s16]]
  %s18 = scalar_lea.smem %s0, 9
  %s19 = sld [smem:[%s18]]
  %s20 = scalar_lea.smem %s0, 10
  %s21 = sld [smem:[%s20]]
  %s22 = scalar_lea.smem %s0, 11
  %s23 = sld [smem:[%s22]]
  %s24 = scalar_lea.smem %s0, 12
  %s25 = sld [smem:[%s24]]
  %s26 = scalar_lea.smem %s0, 13
  %s27 = sld [smem:[%s26]]
  %s28 = scalar_lea.smem %s0, 14
  %s29 = sld [smem:[%s28]]
  %s30 = scalar_lea.smem %s0, 15
  %s31 = sld [smem:[%s30]]
  %s32 = scalar_lea.smem %s0, 16
  %s33 = sld [smem:[%s32]]
  %s34 = scalar_lea.smem %s0, 17
  %s35 = sld [smem:[%s34]]
  %s36 = scalar_lea.smem %s0, 18
  %s37 = sld [smem:[%s36]]
  %s38 = scalar_lea.smem %s0, 19
  %s39 = sld [smem:[%s38]]
  %s40 = scalar_lea.smem %s0, 20
  %s41 = sld [smem:[%s40]]
  %s42 = scalar_lea.smem %s0, 21
  %s43 = sld [smem:[%s42]]
  %s44 = scalar_lea.smem %s0, 22
  %s45 = sld [smem:[%s44]]
  %s46 = scalar_lea.smem %s0, 23
  %s47 = sld [smem:[%s46]]
  %s48 = scalar_lea.smem %s0, 24
  %s49 = sld [smem:[%s48]]
  %s50 = scalar_lea.smem %s0, 25
  %s51 = sld [smem:[%s50]]
  %s52 = scalar_lea.smem %s0, 26
  %s53 = sld [smem:[%s52]]
  %s54 = scalar_lea.smem %s0, 27
  %s55 = sld [smem:[%s54]]
  %s56 = scalar_lea.smem %s0, 28
  %s57 = sld [smem:[%s56]]
  %s58 = scalar_lea.smem %s0, 29
  %s59 = sld [smem:[%s58]]
  %s60 = scalar_lea.smem %s0, 30
  %s61 = sld [smem:[%s60]]
  %s62 = scalar_lea.smem %s0, 31
  %s63 = sld [smem:[%s62]]
  %s64 = scalar_lea.smem %s0, 32
  %s65 = sld [smem:[%s64]]
  %s66 = scalar_lea.smem %s0, 33
  %s67 = sld [smem:[%s66]]
  %s68 = scalar_lea.smem %s0, 34
  %s69 = sld [smem:[%s68]]
  %s70 = scalar_lea.smem %s0, 35
  %s71 = sld [smem:[%s70]]
  %s72 = scalar_lea.smem %s0, 36
  %s73 = sld [smem:[%s72]]
  %s74 = scalar_lea.smem %s0, 37
  %s75 = sld [smem:[%s74]]
  %s76 = scalar_lea.smem %s0, 38
  %s77 = sld [smem:[%s76]]
  %s78 = sld [smem:[#allocation0]]
  $region305: #{forward.1} parent=0
    _
  %s80 = ssub.s32 1, %s78
  %s81 = scalar_select 0, %s80, %s78
  $region1: #{forward.1} parent=0
    #allocation9 [shape = 'u8[1024]{0}', space=vmem, size = 0x400, scoped, tag = 'input window, operand 1, single buffered']
    #allocation10 [shape = 's32[2]{0}', space=sflag, size = 0x8, scoped, tag = 'scoped memory for forward.1']
    #allocation11 [shape = 's32[2]{0}', space=sflag, size = 0x8, scoped, tag = 'scoped memory for forward.1']
    #allocation12 [shape = 'u8[4096]{0}', space=vmem, size = 0x1000, scoped, tag = 'input window, operand 2, single buffered']
    #allocation13 [shape = 's32[1]{0}', space=sflag, size = 0x4, scoped, tag = 'scoped memory for forward.1']
    #allocation14 [shape = 'u8[2048]{0}', space=vmem, size = 0x800, scoped, tag = 'input window, operand 3, single buffered']
    #allocation15 [shape = 'u8[32768]{0}', space=vmem, size = 0x8000, scoped, tag = 'input window, operand 4, single buffered']
    #allocation16 [shape = 's32[1]{0}', space=sflag, size = 0x4, scoped, tag = 'scoped memory for forward.1']
    #allocation17 [shape = 'u8[2048]{0}', space=vmem, size = 0x800, scoped, tag = 'input window, operand 6, single buffered']
    #allocation18 [shape = 'u8[65536]{0}', space=vmem, size = 0x10000, scoped, tag = 'input window, operand 7, single buffered']
    #allocation19 [shape = 's32[1]{0}', space=sflag, size = 0x4, scoped, tag = 'scoped memory for forward.1']
    #allocation20 [shape = 'u8[2048]{0}', space=vmem, size = 0x800, scoped, tag = 'input window, operand 9, single buffered']
    #allocation21 [shape = 'u8[131072]{0}', space=vmem, size = 0x20000, scoped, tag = 'input window, operand 10, single buffered']
    #allocation22 [shape = 's32[1]{0}', space=sflag, size = 0x4, scoped, tag = 'scoped memory for forward.1']
    #allocation23 [shape = 'u8[131072]{0}', space=vmem, size = 0x20000, scoped, tag = 'input window, operand 11, single buffered']
    #allocation24 [shape = 'u8[131072]{0}', space=vmem, size = 0x20000, scoped, tag = 'input window, operand 12, single buffered']
    #allocation25 [shape = 's32[1]{0}', space=sflag, size = 0x4, scoped, tag = 'scoped memory for forward.1']
    #allocation26 [shape = 'u8[2048]{0}', space=vmem, size = 0x800, scoped, tag = 'input window, operand 13, single buffered']
    #allocation27 [shape = 'u8[65536]{0}', space=vmem, size = 0x10000, scoped, tag = 'input window, operand 14, single buffered']
    #allocation28 [shape = 's32[1]{0}', space=sflag, size = 0x4, scoped, tag = 'scoped memory for forward.1']
    #allocation29 [shape = 'u8[131072]{0}', space=vmem, size = 0x20000, scoped, tag = 'input window, operand 15, single buffered']
    #allocation30 [shape = 'u8[65536]{0}', space=vmem, size = 0x10000, scoped, tag = 'input window, operand 16, single buffered']
    #allocation31 [shape = 's32[1]{0}', space=sflag, size = 0x4, scoped, tag = 'scoped memory for forward.1']
    #allocation32 [shape = 'u8[65536]{0}', space=vmem, size = 0x10000, scoped, tag = 'input window, operand 17, single buffered']
    #allocation33 [shape = 'u8[131072]{0}', space=vmem, size = 0x20000, scoped, tag = 'input window, operand 18, single buffered']
    #allocation34 [shape = 's32[1]{0}', space=sflag, size = 0x4, scoped, tag = 'scoped memory for forward.1']
    #allocation35 [shape = 'u8[65536]{0}', space=vmem, size = 0x10000, scoped, tag = 'input window, operand 19, single buffered']
    #allocation36 [shape = 'u8[2048]{0}', space=vmem, size = 0x800, scoped, tag = 'input window, operand 20, single buffered']
    #allocation37 [shape = 's32[1]{0}', space=sflag, size = 0x4, scoped, tag = 'scoped memory for forward.1']
    #allocation38 [shape = 'u8[131072]{0}', space=vmem, size = 0x20000, scoped, tag = 'input window, operand 22, single buffered']
    #allocation39 [shape = 'u8[32768]{0}', space=vmem, size = 0x8000, scoped, tag = 'input window, operand 23, single buffered']
    #allocation40 [shape = 's32[1]{0}', space=sflag, size = 0x4, scoped, tag = 'scoped memory for forward.1']
    #allocation41 [shape = 'u8[32768]{0}', space=vmem, size = 0x8000, scoped, tag = 'input window, operand 24, single buffered']
    #allocation42 [shape = 'u8[131072]{0}', space=vmem, size = 0x20000, scoped, tag = 'input window, operand 25, single buffered']
    #allocation43 [shape = 's32[1]{0}', space=sflag, size = 0x4, scoped, tag = 'scoped memory for forward.1']
    #allocation44 [shape = 'u8[32768]{0}', space=vmem, size = 0x8000, scoped, tag = 'input window, operand 26, single buffered']
    #allocation45 [shape = 'u8[2048]{0}', space=vmem, size = 0x800, scoped, tag = 'input window, operand 27, single buffered']
    #allocation46 [shape = 's32[1]{0}', space=sflag, size = 0x4, scoped, tag = 'scoped memory for forward.1']
    #allocation47 [shape = 'u8[1024]{0}', space=vmem, size = 0x400, scoped, tag = 'input window, operand 31, single buffered']
    #allocation48 [shape = 'u8[1048576]{0}', space=vmem, size = 0x100000, scoped, tag = 'input window, operand 32, single buffered']
    #allocation49 [shape = 's32[1]{0}', space=sflag, size = 0x4, scoped, tag = 'scoped memory for forward.1']
    #allocation50 [shape = 'u8[4096]{0}', space=vmem, size = 0x1000, scoped, tag = 'input window, operand 33, single buffered']
    #allocation51 [shape = 'u8[524288]{0}', space=vmem, size = 0x80000, scoped, tag = 'input window, operand 34, single buffered']
    #allocation52 [shape = 's32[1]{0}', space=sflag, size = 0x4, scoped, tag = 'scoped memory for forward.1']
    #allocation53 [shape = 'u8[4096]{0}', space=vmem, size = 0x1000, scoped, tag = 'input window, operand 35, single buffered']
    #allocation54 [shape = 'u8[1024]{0}', space=vmem, size = 0x400, scoped, tag = 'input window, operand 37, single buffered']
    #allocation55 [shape = 's32[1]{0}', space=sflag, size = 0x4, scoped, tag = 'scoped memory for forward.1']
    #allocation56 [shape = 'u8[1024]{0}', space=vmem, size = 0x400, scoped, tag = 'output window, operand 0']
    %82 = vsyncpa [#allocation10], 0
    %83 = vsyncpa [#allocation13], 0
    %84 = vsyncpa [#allocation16], 0
    %85 = vsyncpa [#allocation19], 0
    %86 = vsyncpa [#allocation22], 0
    %87 = vsyncpa [#allocation25], 0
    %88 = vsyncpa [#allocation28], 0
    %89 = vsyncpa [#allocation31], 0
    %90 = vsyncpa [#allocation34], 0
    %91 = vsyncpa [#allocation37], 0
    %92 = vsyncpa [#allocation40], 0
    %93 = vsyncpa [#allocation43], 0
    %94 = vsyncpa [#allocation46], 0
    %95 = vsyncpa [#allocation49], 0
    %96 = vsyncpa [#allocation52], 0
    %97 = vsyncpa [#allocation55], 0
    %98 = vsyncpa [#allocation11], 0
    %s99 = scalar_lea.sflag [#allocation11], 1
    %100 = vsyncpa %s99, 0
    loop: start=0, step=1, limit=4
    $region2: #{forward.1} parent=1 // loop_pre_header
      _
    $region3: #{forward.1} parent=1 // loop_header
      %s102 = sphi 0, %s106
      %p103 = scmp.ge.s32.totalorder %s102, 4
      %s112 = sphi 0, %s114
      %s115 = sphi 0, %s112
      %s116 = sphi 0, %s115
      %s132 = sphi 0, %s116
      %s136 = sphi 0, %s136
      %s138 = sphi 0, %s136
      %s139 = sphi 0, %s138
      %s153 = sphi 0, %s139
      %s157 = sphi 0, %s157
      %s159 = sphi 0, %s157
      %s160 = sphi 0, %s159
      %s174 = sphi 0, %s160
      %s178 = sphi 0, %s178
      %s180 = sphi 0, %s178
      %s181 = sphi 0, %s180
      %s195 = sphi 0, %s181
      %s199 = sphi 0, %s199
      %s201 = sphi 0, %s199
      %s202 = sphi 0, %s201
      %s216 = sphi 0, %s202
      %s220 = sphi 0, %s220
      %s222 = sphi 0, %s220
      %s223 = sphi 0, %s222
      %s237 = sphi 0, %s223
      %s241 = sphi 0, %s241
      %s243 = sphi 0, %s241
      %s244 = sphi 0, %s243
      %s258 = sphi 0, %s244
      %s262 = sphi 0, %s262
      %s264 = sphi 0, %s262
      %s265 = sphi 0, %s264
      %s279 = sphi 0, %s265
      %s283 = sphi 0, %s283
      %s285 = sphi 0, %s283
      %s286 = sphi 0, %s285
      %s300 = sphi 0, %s286
      %s304 = sphi 0, %s304
      %s306 = sphi 0, %s304
      %s307 = sphi 0, %s306
      %s321 = sphi 0, %s307
      %s325 = sphi 0, %s325
      %s327 = sphi 0, %s325
      %s328 = sphi 0, %s327
      %s342 = sphi 0, %s328
      %s346 = sphi 0, %s346
      %s348 = sphi 0, %s346
      %s349 = sphi 0, %s348
      %s363 = sphi 0, %s349
      %s367 = sphi 0, %s367
      %s369 = sphi 0, %s367
      %s370 = sphi 0, %s369
      %s384 = sphi 0, %s370
      %s388 = sphi 0, %s388
      %s390 = sphi 0, %s388
      %s391 = sphi 0, %s390
      %s405 = sphi 0, %s391
      %s409 = sphi 0, %s409
      %s411 = sphi 0, %s409
      %s412 = sphi 0, %s411
      %s426 = sphi 0, %s412
      %s430 = sphi 0, %s430
      %s432 = sphi 0, %s430
      %s433 = sphi 0, %s432
      %s447 = sphi 0, %s433
      %s451 = sphi 0, %s451
      %s453 = sphi 0, %s451
      %s454 = sphi 0, %s453
      %s468 = sphi 0, %s454
      %s472 = sphi 0, %s472
      %s474 = sphi 0, %s472
      %s475 = sphi 0, %s474
      %s489 = sphi 0, %s475
      %s493 = sphi 0, %s493
      %s495 = sphi 0, %s493
      %s496 = sphi 0, %s495
      %s510 = sphi 0, %s496
      %s514 = sphi 0, %s514
      %s516 = sphi 0, %s514
      %s517 = sphi 0, %s516
      %s531 = sphi 0, %s517
      %s535 = sphi 0, %s535
      %s537 = sphi 0, %s535
      %s538 = sphi 0, %s537
      %s552 = sphi 0, %s538
      %s556 = sphi 0, %s556
      %s558 = sphi 0, %s556
      %s559 = sphi 0, %s558
      %s573 = sphi 0, %s559
      %s577 = sphi 0, %s577
      %s579 = sphi 0, %s577
      %s580 = sphi 0, %s579
      %s594 = sphi 0, %s580
      %s598 = sphi 0, %s598
      %s600 = sphi 0, %s598
      %s601 = sphi 0, %s600
      %s615 = sphi 0, %s601
      %s619 = sphi 0, %s619
      %s621 = sphi 0, %s619
      %s622 = sphi 0, %s621
      %s636 = sphi 0, %s622
      %s640 = sphi 0, %s640
      %s642 = sphi 0, %s640
      %s643 = sphi 0, %s642
      %s657 = sphi 0, %s643
      %s661 = sphi 0, %s661
      %s663 = sphi 0, %s661
      %s664 = sphi 0, %s663
      %s678 = sphi 0, %s664
      %s682 = sphi 0, %s682
      %s684 = sphi 0, %s682
      %s685 = sphi 0, %s684
      %s699 = sphi 0, %s685
      %s703 = sphi 0, %s703
      %s705 = sphi 0, %s703
      %s706 = sphi 0, %s705
      %s720 = sphi 0, %s706
      %s724 = sphi 0, %s724
      %s726 = sphi 0, %s724
      %s727 = sphi 0, %s726
      %s741 = sphi 0, %s727
      %s745 = sphi 0, %s745
      %s747 = sphi 0, %s745
      %s748 = sphi 0, %s747
      %s762 = sphi 0, %s748
      %s766 = sphi 0, %s766
      %s768 = sphi 0, %s766
      %s769 = sphi 0, %s768
      %s783 = sphi 0, %s769
      %s787 = sphi 0, %s787
      %s789 = sphi 0, %s787
      %s790 = sphi 0, %s789
      %s804 = sphi 0, %s790
      %s808 = sphi 0, %s808
      %s810 = sphi 0, %s808
      %s811 = sphi 0, %s810
      %s825 = sphi 0, %s811
      %s829 = sphi 0, %s829
      %s831 = sphi 0, %s829
      %s832 = sphi 0, %s831
      %s846 = sphi 0, %s832
      %s850 = sphi 0, %s850
      %s852 = sphi 0, %s850
      %s853 = sphi 0, %s852
      %s867 = sphi 0, %s853
      %s871 = sphi 0, %s871
      %s873 = sphi 0, %s871
      %s874 = sphi 0, %s873
      %s888 = sphi 0, %s874
      %s892 = sphi 0, %s892
      %s894 = sphi 0, %s892
      %s895 = sphi 0, %s894
      %s909 = sphi 0, %s895
      %s915 = sphi 0, %s917
      %s918 = sphi 0, %s915
      %s919 = sphi 0, %s918
      %s935 = sphi 0, %s919
    $region4: #{forward.1} parent=1 // loop_header_branch
      %105 = sbr.rel (%p103) target = $region8
    $region5: #{forward.1} parent=1 // loop_body
      %s107 = ssub.s32 %s102, 1
      %s108 = ssub.s32 %s102, 2
      %s109 = sadd.s32 %s102, 1
      %s110 = ssub.s32 %s102, %s109
      %p111 = scmp.eq.s32.totalorder %s110, 0
      %s113 = sadd.s32 %s112, 1
      %s114 = scalar_select %p111, %s112, %s113
      %p117 = pneg %p111
      %p118 = scmp.eq.s32.totalorder %s102, 1
      %p119 = por %p117, %p118
      %p120 = scmp.ne.s32.totalorder %s112, %s115
      %p121 = scmp.eq.s32.totalorder %s102, 0
      %p122 = por %p120, %p121
      %p123 = scmp.ne.s32.totalorder %s112, %s115
      %p124 = scmp.eq.s32.totalorder %s107, 1
      %p125 = por %p123, %p124
      %p126 = scmp.ne.s32.totalorder %s115, %s116
      %p127 = scmp.eq.s32.totalorder %s107, 0
      %p128 = por %p126, %p127
      %p129 = scmp.ne.s32.totalorder %s115, %s116
      %p130 = scmp.eq.s32.totalorder %s108, 1
      %p131 = por %p129, %p130
      %p133 = scmp.ne.s32.totalorder %s116, %s132
      %p134 = scmp.eq.s32.totalorder %s108, 0
      %p135 = por %p133, %p134
      %s137 = sadd.s32 %s136, 1
      %p140 = scmp.eq.s32.totalorder %s102, 1
      %p141 = scmp.ne.s32.totalorder %s136, %s138
      %p142 = scmp.eq.s32.totalorder %s102, 0
      %p143 = por %p141, %p142
      %p144 = scmp.ne.s32.totalorder %s136, %s138
      %p145 = scmp.eq.s32.totalorder %s107, 1
      %p146 = por %p144, %p145
      %p147 = scmp.ne.s32.totalorder %s138, %s139
      %p148 = scmp.eq.s32.totalorder %s107, 0
      %p149 = por %p147, %p148
      %p150 = scmp.ne.s32.totalorder %s138, %s139
      %p151 = scmp.eq.s32.totalorder %s108, 1
      %p152 = por %p150, %p151
      %p154 = scmp.ne.s32.totalorder %s139, %s153
      %p155 = scmp.eq.s32.totalorder %s108, 0
      %p156 = por %p154, %p155
      %s158 = sadd.s32 %s157, 1
      %p161 = scmp.eq.s32.totalorder %s102, 1
      %p162 = scmp.ne.s32.totalorder %s157, %s159
      %p163 = scmp.eq.s32.totalorder %s102, 0
      %p164 = por %p162, %p163
      %p165 = scmp.ne.s32.totalorder %s157, %s159
      %p166 = scmp.eq.s32.totalorder %s107, 1
      %p167 = por %p165, %p166
      %p168 = scmp.ne.s32.totalorder %s159, %s160
      %p169 = scmp.eq.s32.totalorder %s107, 0
      %p170 = por %p168, %p169
      %p171 = scmp.ne.s32.totalorder %s159, %s160
      %p172 = scmp.eq.s32.totalorder %s108, 1
      %p173 = por %p171, %p172
      %p175 = scmp.ne.s32.totalorder %s160, %s174
      %p176 = scmp.eq.s32.totalorder %s108, 0
      %p177 = por %p175, %p176
      %s179 = sadd.s32 %s178, 1
      %p182 = scmp.eq.s32.totalorder %s102, 1
      %p183 = scmp.ne.s32.totalorder %s178, %s180
      %p184 = scmp.eq.s32.totalorder %s102, 0
      %p185 = por %p183, %p184
      %p186 = scmp.ne.s32.totalorder %s178, %s180
      %p187 = scmp.eq.s32.totalorder %s107, 1
      %p188 = por %p186, %p187
      %p189 = scmp.ne.s32.totalorder %s180, %s181
      %p190 = scmp.eq.s32.totalorder %s107, 0
      %p191 = por %p189, %p190
      %p192 = scmp.ne.s32.totalorder %s180, %s181
      %p193 = scmp.eq.s32.totalorder %s108, 1
      %p194 = por %p192, %p193
      %p196 = scmp.ne.s32.totalorder %s181, %s195
      %p197 = scmp.eq.s32.totalorder %s108, 0
      %p198 = por %p196, %p197
      %s200 = sadd.s32 %s199, 1
      %p203 = scmp.eq.s32.totalorder %s102, 1
      %p204 = scmp.ne.s32.totalorder %s199, %s201
      %p205 = scmp.eq.s32.totalorder %s102, 0
      %p206 = por %p204, %p205
      %p207 = scmp.ne.s32.totalorder %s199, %s201
      %p208 = scmp.eq.s32.totalorder %s107, 1
      %p209 = por %p207, %p208
      %p210 = scmp.ne.s32.totalorder %s201, %s202
      %p211 = scmp.eq.s32.totalorder %s107, 0
      %p212 = por %p210, %p211
      %p213 = scmp.ne.s32.totalorder %s201, %s202
      %p214 = scmp.eq.s32.totalorder %s108, 1
      %p215 = por %p213, %p214
      %p217 = scmp.ne.s32.totalorder %s202, %s216
      %p218 = scmp.eq.s32.totalorder %s108, 0
      %p219 = por %p217, %p218
      %s221 = sadd.s32 %s220, 1
      %p224 = scmp.eq.s32.totalorder %s102, 1
      %p225 = scmp.ne.s32.totalorder %s220, %s222
      %p226 = scmp.eq.s32.totalorder %s102, 0
      %p227 = por %p225, %p226
      %p228 = scmp.ne.s32.totalorder %s220, %s222
      %p229 = scmp.eq.s32.totalorder %s107, 1
      %p230 = por %p228, %p229
      %p231 = scmp.ne.s32.totalorder %s222, %s223
      %p232 = scmp.eq.s32.totalorder %s107, 0
      %p233 = por %p231, %p232
      %p234 = scmp.ne.s32.totalorder %s222, %s223
      %p235 = scmp.eq.s32.totalorder %s108, 1
      %p236 = por %p234, %p235
      %p238 = scmp.ne.s32.totalorder %s223, %s237
      %p239 = scmp.eq.s32.totalorder %s108, 0
      %p240 = por %p238, %p239
      %s242 = sadd.s32 %s241, 1
      %p245 = scmp.eq.s32.totalorder %s102, 1
      %p246 = scmp.ne.s32.totalorder %s241, %s243
      %p247 = scmp.eq.s32.totalorder %s102, 0
      %p248 = por %p246, %p247
      %p249 = scmp.ne.s32.totalorder %s241, %s243
      %p250 = scmp.eq.s32.totalorder %s107, 1
      %p251 = por %p249, %p250
      %p252 = scmp.ne.s32.totalorder %s243, %s244
      %p253 = scmp.eq.s32.totalorder %s107, 0
      %p254 = por %p252, %p253
      %p255 = scmp.ne.s32.totalorder %s243, %s244
      %p256 = scmp.eq.s32.totalorder %s108, 1
      %p257 = por %p255, %p256
      %p259 = scmp.ne.s32.totalorder %s244, %s258
      %p260 = scmp.eq.s32.totalorder %s108, 0
      %p261 = por %p259, %p260
      %s263 = sadd.s32 %s262, 1
      %p266 = scmp.eq.s32.totalorder %s102, 1
      %p267 = scmp.ne.s32.totalorder %s262, %s264
      %p268 = scmp.eq.s32.totalorder %s102, 0
      %p269 = por %p267, %p268
      %p270 = scmp.ne.s32.totalorder %s262, %s264
      %p271 = scmp.eq.s32.totalorder %s107, 1
      %p272 = por %p270, %p271
      %p273 = scmp.ne.s32.totalorder %s264, %s265
      %p274 = scmp.eq.s32.totalorder %s107, 0
      %p275 = por %p273, %p274
      %p276 = scmp.ne.s32.totalorder %s264, %s265
      %p277 = scmp.eq.s32.totalorder %s108, 1
      %p278 = por %p276, %p277
      %p280 = scmp.ne.s32.totalorder %s265, %s279
      %p281 = scmp.eq.s32.totalorder %s108, 0
      %p282 = por %p280, %p281
      %s284 = sadd.s32 %s283, 1
      %p287 = scmp.eq.s32.totalorder %s102, 1
      %p288 = scmp.ne.s32.totalorder %s283, %s285
      %p289 = scmp.eq.s32.totalorder %s102, 0
      %p290 = por %p288, %p289
      %p291 = scmp.ne.s32.totalorder %s283, %s285
      %p292 = scmp.eq.s32.totalorder %s107, 1
      %p293 = por %p291, %p292
      %p294 = scmp.ne.s32.totalorder %s285, %s286
      %p295 = scmp.eq.s32.totalorder %s107, 0
      %p296 = por %p294, %p295
      %p297 = scmp.ne.s32.totalorder %s285, %s286
      %p298 = scmp.eq.s32.totalorder %s108, 1
      %p299 = por %p297, %p298
      %p301 = scmp.ne.s32.totalorder %s286, %s300
      %p302 = scmp.eq.s32.totalorder %s108, 0
      %p303 = por %p301, %p302
      %s305 = sadd.s32 %s304, 1
      %p308 = scmp.eq.s32.totalorder %s102, 1
      %p309 = scmp.ne.s32.totalorder %s304, %s306
      %p310 = scmp.eq.s32.totalorder %s102, 0
      %p311 = por %p309, %p310
      %p312 = scmp.ne.s32.totalorder %s304, %s306
      %p313 = scmp.eq.s32.totalorder %s107, 1
      %p314 = por %p312, %p313
      %p315 = scmp.ne.s32.totalorder %s306, %s307
      %p316 = scmp.eq.s32.totalorder %s107, 0
      %p317 = por %p315, %p316
      %p318 = scmp.ne.s32.totalorder %s306, %s307
      %p319 = scmp.eq.s32.totalorder %s108, 1
      %p320 = por %p318, %p319
      %p322 = scmp.ne.s32.totalorder %s307, %s321
      %p323 = scmp.eq.s32.totalorder %s108, 0
      %p324 = por %p322, %p323
      %s326 = sadd.s32 %s325, 1
      %p329 = scmp.eq.s32.totalorder %s102, 1
      %p330 = scmp.ne.s32.totalorder %s325, %s327
      %p331 = scmp.eq.s32.totalorder %s102, 0
      %p332 = por %p330, %p331
      %p333 = scmp.ne.s32.totalorder %s325, %s327
      %p334 = scmp.eq.s32.totalorder %s107, 1
      %p335 = por %p333, %p334
      %p336 = scmp.ne.s32.totalorder %s327, %s328
      %p337 = scmp.eq.s32.totalorder %s107, 0
      %p338 = por %p336, %p337
      %p339 = scmp.ne.s32.totalorder %s327, %s328
      %p340 = scmp.eq.s32.totalorder %s108, 1
      %p341 = por %p339, %p340
      %p343 = scmp.ne.s32.totalorder %s328, %s342
      %p344 = scmp.eq.s32.totalorder %s108, 0
      %p345 = por %p343, %p344
      %s347 = sadd.s32 %s346, 1
      %p350 = scmp.eq.s32.totalorder %s102, 1
      %p351 = scmp.ne.s32.totalorder %s346, %s348
      %p352 = scmp.eq.s32.totalorder %s102, 0
      %p353 = por %p351, %p352
      %p354 = scmp.ne.s32.totalorder %s346, %s348
      %p355 = scmp.eq.s32.totalorder %s107, 1
      %p356 = por %p354, %p355
      %p357 = scmp.ne.s32.totalorder %s348, %s349
      %p358 = scmp.eq.s32.totalorder %s107, 0
      %p359 = por %p357, %p358
      %p360 = scmp.ne.s32.totalorder %s348, %s349
      %p361 = scmp.eq.s32.totalorder %s108, 1
      %p362 = por %p360, %p361
      %p364 = scmp.ne.s32.totalorder %s349, %s363
      %p365 = scmp.eq.s32.totalorder %s108, 0
      %p366 = por %p364, %p365
      %s368 = sadd.s32 %s367, 1
      %p371 = scmp.eq.s32.totalorder %s102, 1
      %p372 = scmp.ne.s32.totalorder %s367, %s369
      %p373 = scmp.eq.s32.totalorder %s102, 0
      %p374 = por %p372, %p373
      %p375 = scmp.ne.s32.totalorder %s367, %s369
      %p376 = scmp.eq.s32.totalorder %s107, 1
      %p377 = por %p375, %p376
      %p378 = scmp.ne.s32.totalorder %s369, %s370
      %p379 = scmp.eq.s32.totalorder %s107, 0
      %p380 = por %p378, %p379
      %p381 = scmp.ne.s32.totalorder %s369, %s370
      %p382 = scmp.eq.s32.totalorder %s108, 1
      %p383 = por %p381, %p382
      %p385 = scmp.ne.s32.totalorder %s370, %s384
      %p386 = scmp.eq.s32.totalorder %s108, 0
      %p387 = por %p385, %p386
      %s389 = sadd.s32 %s388, 1
      %p392 = scmp.eq.s32.totalorder %s102, 1
      %p393 = scmp.ne.s32.totalorder %s388, %s390
      %p394 = scmp.eq.s32.totalorder %s102, 0
      %p395 = por %p393, %p394
      %p396 = scmp.ne.s32.totalorder %s388, %s390
      %p397 = scmp.eq.s32.totalorder %s107, 1
      %p398 = por %p396, %p397
      %p399 = scmp.ne.s32.totalorder %s390, %s391
      %p400 = scmp.eq.s32.totalorder %s107, 0
      %p401 = por %p399, %p400
      %p402 = scmp.ne.s32.totalorder %s390, %s391
      %p403 = scmp.eq.s32.totalorder %s108, 1
      %p404 = por %p402, %p403
      %p406 = scmp.ne.s32.totalorder %s391, %s405
      %p407 = scmp.eq.s32.totalorder %s108, 0
      %p408 = por %p406, %p407
      %s410 = sadd.s32 %s409, 1
      %p413 = scmp.eq.s32.totalorder %s102, 1
      %p414 = scmp.ne.s32.totalorder %s409, %s411
      %p415 = scmp.eq.s32.totalorder %s102, 0
      %p416 = por %p414, %p415
      %p417 = scmp.ne.s32.totalorder %s409, %s411
      %p418 = scmp.eq.s32.totalorder %s107, 1
      %p419 = por %p417, %p418
      %p420 = scmp.ne.s32.totalorder %s411, %s412
      %p421 = scmp.eq.s32.totalorder %s107, 0
      %p422 = por %p420, %p421
      %p423 = scmp.ne.s32.totalorder %s411, %s412
      %p424 = scmp.eq.s32.totalorder %s108, 1
      %p425 = por %p423, %p424
      %p427 = scmp.ne.s32.totalorder %s412, %s426
      %p428 = scmp.eq.s32.totalorder %s108, 0
      %p429 = por %p427, %p428
      %s431 = sadd.s32 %s430, 1
      %p434 = scmp.eq.s32.totalorder %s102, 1
      %p435 = scmp.ne.s32.totalorder %s430, %s432
      %p436 = scmp.eq.s32.totalorder %s102, 0
      %p437 = por %p435, %p436
      %p438 = scmp.ne.s32.totalorder %s430, %s432
      %p439 = scmp.eq.s32.totalorder %s107, 1
      %p440 = por %p438, %p439
      %p441 = scmp.ne.s32.totalorder %s432, %s433
      %p442 = scmp.eq.s32.totalorder %s107, 0
      %p443 = por %p441, %p442
      %p444 = scmp.ne.s32.totalorder %s432, %s433
      %p445 = scmp.eq.s32.totalorder %s108, 1
      %p446 = por %p444, %p445
      %p448 = scmp.ne.s32.totalorder %s433, %s447
      %p449 = scmp.eq.s32.totalorder %s108, 0
      %p450 = por %p448, %p449
      %s452 = sadd.s32 %s451, 1
      %p455 = scmp.eq.s32.totalorder %s102, 1
      %p456 = scmp.ne.s32.totalorder %s451, %s453
      %p457 = scmp.eq.s32.totalorder %s102, 0
      %p458 = por %p456, %p457
      %p459 = scmp.ne.s32.totalorder %s451, %s453
      %p460 = scmp.eq.s32.totalorder %s107, 1
      %p461 = por %p459, %p460
      %p462 = scmp.ne.s32.totalorder %s453, %s454
      %p463 = scmp.eq.s32.totalorder %s107, 0
      %p464 = por %p462, %p463
      %p465 = scmp.ne.s32.totalorder %s453, %s454
      %p466 = scmp.eq.s32.totalorder %s108, 1
      %p467 = por %p465, %p466
      %p469 = scmp.ne.s32.totalorder %s454, %s468
      %p470 = scmp.eq.s32.totalorder %s108, 0
      %p471 = por %p469, %p470
      %s473 = sadd.s32 %s472, 1
      %p476 = scmp.eq.s32.totalorder %s102, 1
      %p477 = scmp.ne.s32.totalorder %s472, %s474
      %p478 = scmp.eq.s32.totalorder %s102, 0
      %p479 = por %p477, %p478
      %p480 = scmp.ne.s32.totalorder %s472, %s474
      %p481 = scmp.eq.s32.totalorder %s107, 1
      %p482 = por %p480, %p481
      %p483 = scmp.ne.s32.totalorder %s474, %s475
      %p484 = scmp.eq.s32.totalorder %s107, 0
      %p485 = por %p483, %p484
      %p486 = scmp.ne.s32.totalorder %s474, %s475
      %p487 = scmp.eq.s32.totalorder %s108, 1
      %p488 = por %p486, %p487
      %p490 = scmp.ne.s32.totalorder %s475, %s489
      %p491 = scmp.eq.s32.totalorder %s108, 0
      %p492 = por %p490, %p491
      %s494 = sadd.s32 %s493, 1
      %p497 = scmp.eq.s32.totalorder %s102, 1
      %p498 = scmp.ne.s32.totalorder %s493, %s495
      %p499 = scmp.eq.s32.totalorder %s102, 0
      %p500 = por %p498, %p499
      %p501 = scmp.ne.s32.totalorder %s493, %s495
      %p502 = scmp.eq.s32.totalorder %s107, 1
      %p503 = por %p501, %p502
      %p504 = scmp.ne.s32.totalorder %s495, %s496
      %p505 = scmp.eq.s32.totalorder %s107, 0
      %p506 = por %p504, %p505
      %p507 = scmp.ne.s32.totalorder %s495, %s496
      %p508 = scmp.eq.s32.totalorder %s108, 1
      %p509 = por %p507, %p508
      %p511 = scmp.ne.s32.totalorder %s496, %s510
      %p512 = scmp.eq.s32.totalorder %s108, 0
      %p513 = por %p511, %p512
      %s515 = sadd.s32 %s514, 1
      %p518 = scmp.eq.s32.totalorder %s102, 1
      %p519 = scmp.ne.s32.totalorder %s514, %s516
      %p520 = scmp.eq.s32.totalorder %s102, 0
      %p521 = por %p519, %p520
      %p522 = scmp.ne.s32.totalorder %s514, %s516
      %p523 = scmp.eq.s32.totalorder %s107, 1
      %p524 = por %p522, %p523
      %p525 = scmp.ne.s32.totalorder %s516, %s517
      %p526 = scmp.eq.s32.totalorder %s107, 0
      %p527 = por %p525, %p526
      %p528 = scmp.ne.s32.totalorder %s516, %s517
      %p529 = scmp.eq.s32.totalorder %s108, 1
      %p530 = por %p528, %p529
      %p532 = scmp.ne.s32.totalorder %s517, %s531
      %p533 = scmp.eq.s32.totalorder %s108, 0
      %p534 = por %p532, %p533
      %s536 = sadd.s32 %s535, 1
      %p539 = scmp.eq.s32.totalorder %s102, 1
      %p540 = scmp.ne.s32.totalorder %s535, %s537
      %p541 = scmp.eq.s32.totalorder %s102, 0
      %p542 = por %p540, %p541
      %p543 = scmp.ne.s32.totalorder %s535, %s537
      %p544 = scmp.eq.s32.totalorder %s107, 1
      %p545 = por %p543, %p544
      %p546 = scmp.ne.s32.totalorder %s537, %s538
      %p547 = scmp.eq.s32.totalorder %s107, 0
      %p548 = por %p546, %p547
      %p549 = scmp.ne.s32.totalorder %s537, %s538
      %p550 = scmp.eq.s32.totalorder %s108, 1
      %p551 = por %p549, %p550
      %p553 = scmp.ne.s32.totalorder %s538, %s552
      %p554 = scmp.eq.s32.totalorder %s108, 0
      %p555 = por %p553, %p554
      %s557 = sadd.s32 %s556, 1
      %p560 = scmp.eq.s32.totalorder %s102, 1
      %p561 = scmp.ne.s32.totalorder %s556, %s558
      %p562 = scmp.eq.s32.totalorder %s102, 0
      %p563 = por %p561, %p562
      %p564 = scmp.ne.s32.totalorder %s556, %s558
      %p565 = scmp.eq.s32.totalorder %s107, 1
      %p566 = por %p564, %p565
      %p567 = scmp.ne.s32.totalorder %s558, %s559
      %p568 = scmp.eq.s32.totalorder %s107, 0
      %p569 = por %p567, %p568
      %p570 = scmp.ne.s32.totalorder %s558, %s559
      %p571 = scmp.eq.s32.totalorder %s108, 1
      %p572 = por %p570, %p571
      %p574 = scmp.ne.s32.totalorder %s559, %s573
      %p575 = scmp.eq.s32.totalorder %s108, 0
      %p576 = por %p574, %p575
      %s578 = sadd.s32 %s577, 1
      %p581 = scmp.eq.s32.totalorder %s102, 1
      %p582 = scmp.ne.s32.totalorder %s577, %s579
      %p583 = scmp.eq.s32.totalorder %s102, 0
      %p584 = por %p582, %p583
      %p585 = scmp.ne.s32.totalorder %s577, %s579
      %p586 = scmp.eq.s32.totalorder %s107, 1
      %p587 = por %p585, %p586
      %p588 = scmp.ne.s32.totalorder %s579, %s580
      %p589 = scmp.eq.s32.totalorder %s107, 0
      %p590 = por %p588, %p589
      %p591 = scmp.ne.s32.totalorder %s579, %s580
      %p592 = scmp.eq.s32.totalorder %s108, 1
      %p593 = por %p591, %p592
      %p595 = scmp.ne.s32.totalorder %s580, %s594
      %p596 = scmp.eq.s32.totalorder %s108, 0
      %p597 = por %p595, %p596
      %s599 = sadd.s32 %s598, 1
      %p602 = scmp.eq.s32.totalorder %s102, 1
      %p603 = scmp.ne.s32.totalorder %s598, %s600
      %p604 = scmp.eq.s32.totalorder %s102, 0
      %p605 = por %p603, %p604
      %p606 = scmp.ne.s32.totalorder %s598, %s600
      %p607 = scmp.eq.s32.totalorder %s107, 1
      %p608 = por %p606, %p607
      %p609 = scmp.ne.s32.totalorder %s600, %s601
      %p610 = scmp.eq.s32.totalorder %s107, 0
      %p611 = por %p609, %p610
      %p612 = scmp.ne.s32.totalorder %s600, %s601
      %p613 = scmp.eq.s32.totalorder %s108, 1
      %p614 = por %p612, %p613
      %p616 = scmp.ne.s32.totalorder %s601, %s615
      %p617 = scmp.eq.s32.totalorder %s108, 0
      %p618 = por %p616, %p617
      %s620 = sadd.s32 %s619, 1
      %p623 = scmp.eq.s32.totalorder %s102, 1
      %p624 = scmp.ne.s32.totalorder %s619, %s621
      %p625 = scmp.eq.s32.totalorder %s102, 0
      %p626 = por %p624, %p625
      %p627 = scmp.ne.s32.totalorder %s619, %s621
      %p628 = scmp.eq.s32.totalorder %s107, 1
      %p629 = por %p627, %p628
      %p630 = scmp.ne.s32.totalorder %s621, %s622
      %p631 = scmp.eq.s32.totalorder %s107, 0
      %p632 = por %p630, %p631
      %p633 = scmp.ne.s32.totalorder %s621, %s622
      %p634 = scmp.eq.s32.totalorder %s108, 1
      %p635 = por %p633, %p634
      %p637 = scmp.ne.s32.totalorder %s622, %s636
      %p638 = scmp.eq.s32.totalorder %s108, 0
      %p639 = por %p637, %p638
      %s641 = sadd.s32 %s640, 1
      %p644 = scmp.eq.s32.totalorder %s102, 1
      %p645 = scmp.ne.s32.totalorder %s640, %s642
      %p646 = scmp.eq.s32.totalorder %s102, 0
      %p647 = por %p645, %p646
      %p648 = scmp.ne.s32.totalorder %s640, %s642
      %p649 = scmp.eq.s32.totalorder %s107, 1
      %p650 = por %p648, %p649
      %p651 = scmp.ne.s32.totalorder %s642, %s643
      %p652 = scmp.eq.s32.totalorder %s107, 0
      %p653 = por %p651, %p652
      %p654 = scmp.ne.s32.totalorder %s642, %s643
      %p655 = scmp.eq.s32.totalorder %s108, 1
      %p656 = por %p654, %p655
      %p658 = scmp.ne.s32.totalorder %s643, %s657
      %p659 = scmp.eq.s32.totalorder %s108, 0
      %p660 = por %p658, %p659
      %s662 = sadd.s32 %s661, 1
      %p665 = scmp.eq.s32.totalorder %s102, 1
      %p666 = scmp.ne.s32.totalorder %s661, %s663
      %p667 = scmp.eq.s32.totalorder %s102, 0
      %p668 = por %p666, %p667
      %p669 = scmp.ne.s32.totalorder %s661, %s663
      %p670 = scmp.eq.s32.totalorder %s107, 1
      %p671 = por %p669, %p670
      %p672 = scmp.ne.s32.totalorder %s663, %s664
      %p673 = scmp.eq.s32.totalorder %s107, 0
      %p674 = por %p672, %p673
      %p675 = scmp.ne.s32.totalorder %s663, %s664
      %p676 = scmp.eq.s32.totalorder %s108, 1
      %p677 = por %p675, %p676
      %p679 = scmp.ne.s32.totalorder %s664, %s678
      %p680 = scmp.eq.s32.totalorder %s108, 0
      %p681 = por %p679, %p680
      %s683 = sadd.s32 %s682, 1
      %p686 = scmp.eq.s32.totalorder %s102, 1
      %p687 = scmp.ne.s32.totalorder %s682, %s684
      %p688 = scmp.eq.s32.totalorder %s102, 0
      %p689 = por %p687, %p688
      %p690 = scmp.ne.s32.totalorder %s682, %s684
      %p691 = scmp.eq.s32.totalorder %s107, 1
      %p692 = por %p690, %p691
      %p693 = scmp.ne.s32.totalorder %s684, %s685
      %p694 = scmp.eq.s32.totalorder %s107, 0
      %p695 = por %p693, %p694
      %p696 = scmp.ne.s32.totalorder %s684, %s685
      %p697 = scmp.eq.s32.totalorder %s108, 1
      %p698 = por %p696, %p697
      %p700 = scmp.ne.s32.totalorder %s685, %s699
      %p701 = scmp.eq.s32.totalorder %s108, 0
      %p702 = por %p700, %p701
      %s704 = sadd.s32 %s703, 1
      %p707 = scmp.eq.s32.totalorder %s102, 1
      %p708 = scmp.ne.s32.totalorder %s703, %s705
      %p709 = scmp.eq.s32.totalorder %s102, 0
      %p710 = por %p708, %p709
      %p711 = scmp.ne.s32.totalorder %s703, %s705
      %p712 = scmp.eq.s32.totalorder %s107, 1
      %p713 = por %p711, %p712
      %p714 = scmp.ne.s32.totalorder %s705, %s706
      %p715 = scmp.eq.s32.totalorder %s107, 0
      %p716 = por %p714, %p715
      %p717 = scmp.ne.s32.totalorder %s705, %s706
      %p718 = scmp.eq.s32.totalorder %s108, 1
      %p719 = por %p717, %p718
      %p721 = scmp.ne.s32.totalorder %s706, %s720
      %p722 = scmp.eq.s32.totalorder %s108, 0
      %p723 = por %p721, %p722
      %s725 = sadd.s32 %s724, 1
      %p728 = scmp.eq.s32.totalorder %s102, 1
      %p729 = scmp.ne.s32.totalorder %s724, %s726
      %p730 = scmp.eq.s32.totalorder %s102, 0
      %p731 = por %p729, %p730
      %p732 = scmp.ne.s32.totalorder %s724, %s726
      %p733 = scmp.eq.s32.totalorder %s107, 1
      %p734 = por %p732, %p733
      %p735 = scmp.ne.s32.totalorder %s726, %s727
      %p736 = scmp.eq.s32.totalorder %s107, 0
      %p737 = por %p735, %p736
      %p738 = scmp.ne.s32.totalorder %s726, %s727
      %p739 = scmp.eq.s32.totalorder %s108, 1
      %p740 = por %p738, %p739
      %p742 = scmp.ne.s32.totalorder %s727, %s741
      %p743 = scmp.eq.s32.totalorder %s108, 0
      %p744 = por %p742, %p743
      %s746 = sadd.s32 %s745, 1
      %p749 = scmp.eq.s32.totalorder %s102, 1
      %p750 = scmp.ne.s32.totalorder %s745, %s747
      %p751 = scmp.eq.s32.totalorder %s102, 0
      %p752 = por %p750, %p751
      %p753 = scmp.ne.s32.totalorder %s745, %s747
      %p754 = scmp.eq.s32.totalorder %s107, 1
      %p755 = por %p753, %p754
      %p756 = scmp.ne.s32.totalorder %s747, %s748
      %p757 = scmp.eq.s32.totalorder %s107, 0
      %p758 = por %p756, %p757
      %p759 = scmp.ne.s32.totalorder %s747, %s748
      %p760 = scmp.eq.s32.totalorder %s108, 1
      %p761 = por %p759, %p760
      %p763 = scmp.ne.s32.totalorder %s748, %s762
      %p764 = scmp.eq.s32.totalorder %s108, 0
      %p765 = por %p763, %p764
      %s767 = sadd.s32 %s766, 1
      %p770 = scmp.eq.s32.totalorder %s102, 1
      %p771 = scmp.ne.s32.totalorder %s766, %s768
      %p772 = scmp.eq.s32.totalorder %s102, 0
      %p773 = por %p771, %p772
      %p774 = scmp.ne.s32.totalorder %s766, %s768
      %p775 = scmp.eq.s32.totalorder %s107, 1
      %p776 = por %p774, %p775
      %p777 = scmp.ne.s32.totalorder %s768, %s769
      %p778 = scmp.eq.s32.totalorder %s107, 0
      %p779 = por %p777, %p778
      %p780 = scmp.ne.s32.totalorder %s768, %s769
      %p781 = scmp.eq.s32.totalorder %s108, 1
      %p782 = por %p780, %p781
      %p784 = scmp.ne.s32.totalorder %s769, %s783
      %p785 = scmp.eq.s32.totalorder %s108, 0
      %p786 = por %p784, %p785
      %s788 = sadd.s32 %s787, 1
      %p791 = scmp.eq.s32.totalorder %s102, 1
      %p792 = scmp.ne.s32.totalorder %s787, %s789
      %p793 = scmp.eq.s32.totalorder %s102, 0
      %p794 = por %p792, %p793
      %p795 = scmp.ne.s32.totalorder %s787, %s789
      %p796 = scmp.eq.s32.totalorder %s107, 1
      %p797 = por %p795, %p796
      %p798 = scmp.ne.s32.totalorder %s789, %s790
      %p799 = scmp.eq.s32.totalorder %s107, 0
      %p800 = por %p798, %p799
      %p801 = scmp.ne.s32.totalorder %s789, %s790
      %p802 = scmp.eq.s32.totalorder %s108, 1
      %p803 = por %p801, %p802
      %p805 = scmp.ne.s32.totalorder %s790, %s804
      %p806 = scmp.eq.s32.totalorder %s108, 0
      %p807 = por %p805, %p806
      %s809 = sadd.s32 %s808, 1
      %p812 = scmp.eq.s32.totalorder %s102, 1
      %p813 = scmp.ne.s32.totalorder %s808, %s810
      %p814 = scmp.eq.s32.totalorder %s102, 0
      %p815 = por %p813, %p814
      %p816 = scmp.ne.s32.totalorder %s808, %s810
      %p817 = scmp.eq.s32.totalorder %s107, 1
      %p818 = por %p816, %p817
      %p819 = scmp.ne.s32.totalorder %s810, %s811
      %p820 = scmp.eq.s32.totalorder %s107, 0
      %p821 = por %p819, %p820
      %p822 = scmp.ne.s32.totalorder %s810, %s811
      %p823 = scmp.eq.s32.totalorder %s108, 1
      %p824 = por %p822, %p823
      %p826 = scmp.ne.s32.totalorder %s811, %s825
      %p827 = scmp.eq.s32.totalorder %s108, 0
      %p828 = por %p826, %p827
      %s830 = sadd.s32 %s829, 1
      %p833 = scmp.eq.s32.totalorder %s102, 1
      %p834 = scmp.ne.s32.totalorder %s829, %s831
      %p835 = scmp.eq.s32.totalorder %s102, 0
      %p836 = por %p834, %p835
      %p837 = scmp.ne.s32.totalorder %s829, %s831
      %p838 = scmp.eq.s32.totalorder %s107, 1
      %p839 = por %p837, %p838
      %p840 = scmp.ne.s32.totalorder %s831, %s832
      %p841 = scmp.eq.s32.totalorder %s107, 0
      %p842 = por %p840, %p841
      %p843 = scmp.ne.s32.totalorder %s831, %s832
      %p844 = scmp.eq.s32.totalorder %s108, 1
      %p845 = por %p843, %p844
      %p847 = scmp.ne.s32.totalorder %s832, %s846
      %p848 = scmp.eq.s32.totalorder %s108, 0
      %p849 = por %p847, %p848
      %s851 = sadd.s32 %s850, 1
      %p854 = scmp.eq.s32.totalorder %s102, 1
      %p855 = scmp.ne.s32.totalorder %s850, %s852
      %p856 = scmp.eq.s32.totalorder %s102, 0
      %p857 = por %p855, %p856
      %p858 = scmp.ne.s32.totalorder %s850, %s852
      %p859 = scmp.eq.s32.totalorder %s107, 1
      %p860 = por %p858, %p859
      %p861 = scmp.ne.s32.totalorder %s852, %s853
      %p862 = scmp.eq.s32.totalorder %s107, 0
      %p863 = por %p861, %p862
      %p864 = scmp.ne.s32.totalorder %s852, %s853
      %p865 = scmp.eq.s32.totalorder %s108, 1
      %p866 = por %p864, %p865
      %p868 = scmp.ne.s32.totalorder %s853, %s867
      %p869 = scmp.eq.s32.totalorder %s108, 0
      %p870 = por %p868, %p869
      %s872 = sadd.s32 %s871, 1
      %p875 = scmp.eq.s32.totalorder %s102, 1
      %p876 = scmp.ne.s32.totalorder %s871, %s873
      %p877 = scmp.eq.s32.totalorder %s102, 0
      %p878 = por %p876, %p877
      %p879 = scmp.ne.s32.totalorder %s871, %s873
      %p880 = scmp.eq.s32.totalorder %s107, 1
      %p881 = por %p879, %p880
      %p882 = scmp.ne.s32.totalorder %s873, %s874
      %p883 = scmp.eq.s32.totalorder %s107, 0
      %p884 = por %p882, %p883
      %p885 = scmp.ne.s32.totalorder %s873, %s874
      %p886 = scmp.eq.s32.totalorder %s108, 1
      %p887 = por %p885, %p886
      %p889 = scmp.ne.s32.totalorder %s874, %s888
      %p890 = scmp.eq.s32.totalorder %s108, 0
      %p891 = por %p889, %p890
      %s893 = sadd.s32 %s892, 1
      %p896 = scmp.eq.s32.totalorder %s102, 1
      %p897 = scmp.ne.s32.totalorder %s892, %s894
      %p898 = scmp.eq.s32.totalorder %s102, 0
      %p899 = por %p897, %p898
      %p900 = scmp.ne.s32.totalorder %s892, %s894
      %p901 = scmp.eq.s32.totalorder %s107, 1
      %p902 = por %p900, %p901
      %p903 = scmp.ne.s32.totalorder %s894, %s895
      %p904 = scmp.eq.s32.totalorder %s107, 0
      %p905 = por %p903, %p904
      %p906 = scmp.ne.s32.totalorder %s894, %s895
      %p907 = scmp.eq.s32.totalorder %s108, 1
      %p908 = por %p906, %p907
      %p910 = scmp.ne.s32.totalorder %s895, %s909
      %p911 = scmp.eq.s32.totalorder %s108, 0
      %p912 = por %p910, %p911
      %s913 = ssub.s32 %s102, %s109
      %p914 = scmp.eq.s32.totalorder %s913, 0
      %s916 = sadd.s32 %s915, 1
      %s917 = scalar_select %p914, %s915, %s916
      %p920 = pneg %p914
      %p921 = scmp.eq.s32.totalorder %s102, 1
      %p922 = por %p920, %p921
      %p923 = scmp.ne.s32.totalorder %s915, %s918
      %p924 = scmp.eq.s32.totalorder %s102, 0
      %p925 = por %p923, %p924
      %p926 = scmp.ne.s32.totalorder %s915, %s918
      %p927 = scmp.eq.s32.totalorder %s107, 1
      %p928 = por %p926, %p927
      %p929 = scmp.ne.s32.totalorder %s918, %s919
      %p930 = scmp.eq.s32.totalorder %s107, 0
      %p931 = por %p929, %p930
      %p932 = scmp.ne.s32.totalorder %s918, %s919
      %p933 = scmp.eq.s32.totalorder %s108, 1
      %p934 = por %p932, %p933
      %p936 = scmp.ne.s32.totalorder %s919, %s935
      %p937 = scmp.eq.s32.totalorder %s108, 0
      %p938 = por %p936, %p937
      %p939 = scmp.le.s32.totalorder 1, %s102
      %p940 = scmp.lt.s32.totalorder %s102, 3
      %p941 = pnand %p939, %p940
      %p942 = pneg %p941
      // Predicated region
      $region9: #{forward.1} parent=5 // pred_check
        _
      $region10: #{forward.1} parent=5 // pred_check_branch
        %944 = sbr.rel (%p941) target = $region12
      $region11: #{forward.1} parent=5 // pred_region
        %s945 = ssub.s32 %s102, 1
        // Predicated region
        $region13: #{forward.1} parent=11 // pred_check
          %p946 = pneg %p149
        $region14: #{forward.1} parent=11 // pred_check_branch
          %948 = sbr.rel (%p946) target = $region16
        $region15: #{forward.1} parent=11 // pred_region
          %s950 = ssub.s32 32, 32
          %951 = vsyncadd [#allocation10], %s950
          %s953 = sshll.u32 [#allocation9], 4
          %s954 = int_to_ptr.vmem [resolvable:$true] %s953
          %956 = dma.hbm_to_vmem [thread:$0]  %s3, 32, %s954, [#allocation10]
        $region16: #{forward.1} parent=11 // pred_fallthru
          _
        // Predicated region
        $region17: #{forward.1} parent=11 // pred_check
          %p957 = pneg %p170
        $region18: #{forward.1} parent=11 // pred_check_branch
          %959 = sbr.rel (%p957) target = $region20
        $region19: #{forward.1} parent=11 // pred_region
          %s961 = ssub.s32 128, 128
          %962 = vsyncadd [#allocation13], %s961
          %s964 = sshll.u32 [#allocation12], 4
          %s965 = int_to_ptr.vmem [resolvable:$true] %s964
          %967 = dma.hbm_to_vmem [thread:$0]  %s5, 128, %s965, [#allocation13]
        $region20: #{forward.1} parent=11 // pred_fallthru
          _
        // Predicated region
        $region21: #{forward.1} parent=11 // pred_check
          %p968 = pneg %p191
        $region22: #{forward.1} parent=11 // pred_check_branch
          %970 = sbr.rel (%p968) target = $region24
        $region23: #{forward.1} parent=11 // pred_region
          %s972 = ssub.s32 64, 64
          %973 = vsyncadd [#allocation13], %s972
          %s975 = sshll.u32 [#allocation14], 4
          %s976 = int_to_ptr.vmem [resolvable:$true] %s975
          %978 = dma.hbm_to_vmem [thread:$0]  %s7, 64, %s976, [#allocation13]
        $region24: #{forward.1} parent=11 // pred_fallthru
          _
        // Predicated region
        $region25: #{forward.1} parent=11 // pred_check
          %p979 = pneg %p212
        $region26: #{forward.1} parent=11 // pred_check_branch
          %981 = sbr.rel (%p979) target = $region28
        $region27: #{forward.1} parent=11 // pred_region
          %s983 = ssub.s32 1024, 1024
          %984 = vsyncadd [#allocation16], %s983
          %s985 = sshll.u32 [#allocation15], 4
          %s986 = int_to_ptr.vmem [resolvable:$true] %s985
          %991 = dma.hbm_to_vmem [thread:$0]  %s9, 1024, %s986, [#allocation16], 128, 128, 8
        $region28: #{forward.1} parent=11 // pred_fallthru
          _
        // Predicated region
        $region29: #{forward.1} parent=11 // pred_check
          %p992 = pneg %p233
        $region30: #{forward.1} parent=11 // pred_check_branch
          %994 = sbr.rel (%p992) target = $region32
        $region31: #{forward.1} parent=11 // pred_region
          _
        $region32: #{forward.1} parent=11 // pred_fallthru
          _
        // Predicated region
        $region33: #{forward.1} parent=11 // pred_check
          %p995 = pneg %p254
        $region34: #{forward.1} parent=11 // pred_check_branch
          %997 = sbr.rel (%p995) target = $region36
        $region35: #{forward.1} parent=11 // pred_region
          %s999 = ssub.s32 64, 64
          %1000 = vsyncadd [#allocation16], %s999
          %s1002 = sshll.u32 [#allocation17], 4
          %s1003 = int_to_ptr.vmem [resolvable:$true] %s1002
          %1005 = dma.hbm_to_vmem [thread:$0]  %s13, 64, %s1003, [#allocation16]
        $region36: #{forward.1} parent=11 // pred_fallthru
          _
        // Predicated region
        $region37: #{forward.1} parent=11 // pred_check
          %p1006 = pneg %p275
        $region38: #{forward.1} parent=11 // pred_check_branch
          %1008 = sbr.rel (%p1006) target = $region40
        $region39: #{forward.1} parent=11 // pred_region
          %s1010 = ssub.s32 2048, 2048
          %1011 = vsyncadd [#allocation19], %s1010
          %s1012 = sshll.u32 [#allocation18], 4
          %s1013 = int_to_ptr.vmem [resolvable:$true] %s1012
          %1018 = dma.hbm_to_vmem [thread:$0]  %s15, 2048, %s1013, [#allocation19], 128, 128, 8
        $region40: #{forward.1} parent=11 // pred_fallthru
          _
        // Predicated region
        $region41: #{forward.1} parent=11 // pred_check
          %p1019 = pneg %p296
        $region42: #{forward.1} parent=11 // pred_check_branch
          %1021 = sbr.rel (%p1019) target = $region44
        $region43: #{forward.1} parent=11 // pred_region
          _
        $region44: #{forward.1} parent=11 // pred_fallthru
          _
        // Predicated region
        $region45: #{forward.1} parent=11 // pred_check
          %p1022 = pneg %p317
        $region46: #{forward.1} parent=11 // pred_check_branch
          %1024 = sbr.rel (%p1022) target = $region48
        $region47: #{forward.1} parent=11 // pred_region
          %s1026 = ssub.s32 64, 64
          %1027 = vsyncadd [#allocation19], %s1026
          %s1029 = sshll.u32 [#allocation20], 4
          %s1030 = int_to_ptr.vmem [resolvable:$true] %s1029
          %1032 = dma.hbm_to_vmem [thread:$0]  %s19, 64, %s1030, [#allocation19]
        $region48: #{forward.1} parent=11 // pred_fallthru
          _
        // Predicated region
        $region49: #{forward.1} parent=11 // pred_check
          %p1033 = pneg %p338
        $region50: #{forward.1} parent=11 // pred_check_branch
          %1035 = sbr.rel (%p1033) target = $region52
        $region51: #{forward.1} parent=11 // pred_region
          %s1037 = ssub.s32 4096, 4096
          %1038 = vsyncadd [#allocation22], %s1037
          %s1039 = sshll.u32 [#allocation21], 4
          %s1040 = int_to_ptr.vmem [resolvable:$true] %s1039
          %1045 = dma.hbm_to_vmem [thread:$0]  %s21, 4096, %s1040, [#allocation22], 128, 128, 8
        $region52: #{forward.1} parent=11 // pred_fallthru
          _
        // Predicated region
        $region53: #{forward.1} parent=11 // pred_check
          %p1046 = pneg %p359
        $region54: #{forward.1} parent=11 // pred_check_branch
          %1048 = sbr.rel (%p1046) target = $region56
        $region55: #{forward.1} parent=11 // pred_region
          %s1050 = ssub.s32 4096, 4096
          %1051 = vsyncadd [#allocation22], %s1050
          %s1052 = sshll.u32 [#allocation23], 4
          %s1053 = int_to_ptr.vmem [resolvable:$true] %s1052
          %1058 = dma.hbm_to_vmem [thread:$0]  %s23, 4096, %s1053, [#allocation22], 128, 128, 8
        $region56: #{forward.1} parent=11 // pred_fallthru
          _
        // Predicated region
        $region57: #{forward.1} parent=11 // pred_check
          %p1059 = pneg %p380
        $region58: #{forward.1} parent=11 // pred_check_branch
          %1061 = sbr.rel (%p1059) target = $region60
        $region59: #{forward.1} parent=11 // pred_region
          %s1063 = ssub.s32 4096, 4096
          %1064 = vsyncadd [#allocation25], %s1063
          %s1065 = sshll.u32 [#allocation24], 4
          %s1066 = int_to_ptr.vmem [resolvable:$true] %s1065
          %1071 = dma.hbm_to_vmem [thread:$0]  %s25, 4096, %s1066, [#allocation25], 128, 128, 8
        $region60: #{forward.1} parent=11 // pred_fallthru
          _
        // Predicated region
        $region61: #{forward.1} parent=11 // pred_check
          %p1072 = pneg %p401
        $region62: #{forward.1} parent=11 // pred_check_branch
          %1074 = sbr.rel (%p1072) target = $region64
        $region63: #{forward.1} parent=11 // pred_region
          %s1076 = ssub.s32 64, 64
          %1077 = vsyncadd [#allocation25], %s1076
          %s1079 = sshll.u32 [#allocation26], 4
          %s1080 = int_to_ptr.vmem [resolvable:$true] %s1079
          %1082 = dma.hbm_to_vmem [thread:$0]  %s27, 64, %s1080, [#allocation25]
        $region64: #{forward.1} parent=11 // pred_fallthru
          _
        // Predicated region
        $region65: #{forward.1} parent=11 // pred_check
          %p1083 = pneg %p422
        $region66: #{forward.1} parent=11 // pred_check_branch
          %1085 = sbr.rel (%p1083) target = $region68
        $region67: #{forward.1} parent=11 // pred_region
          %s1087 = ssub.s32 2048, 2048
          %1088 = vsyncadd [#allocation28], %s1087
          %s1089 = sshll.u32 [#allocation27], 4
          %s1090 = int_to_ptr.vmem [resolvable:$true] %s1089
          %1095 = dma.hbm_to_vmem [thread:$0]  %s29, 2048, %s1090, [#allocation28], 128, 128, 8
        $region68: #{forward.1} parent=11 // pred_fallthru
          _
        // Predicated region
        $region69: #{forward.1} parent=11 // pred_check
          %p1096 = pneg %p443
        $region70: #{forward.1} parent=11 // pred_check_branch
          %1098 = sbr.rel (%p1096) target = $region72
        $region71: #{forward.1} parent=11 // pred_region
          %s1100 = ssub.s32 4096, 4096
          %1101 = vsyncadd [#allocation28], %s1100
          %s1102 = sshll.u32 [#allocation29], 4
          %s1103 = int_to_ptr.vmem [resolvable:$true] %s1102
          %1108 = dma.hbm_to_vmem [thread:$0]  %s31, 4096, %s1103, [#allocation28], 128, 128, 8
        $region72: #{forward.1} parent=11 // pred_fallthru
          _
        // Predicated region
        $region73: #{forward.1} parent=11 // pred_check
          %p1109 = pneg %p464
        $region74: #{forward.1} parent=11 // pred_check_branch
          %1111 = sbr.rel (%p1109) target = $region76
        $region75: #{forward.1} parent=11 // pred_region
          %s1113 = ssub.s32 2048, 2048
          %1114 = vsyncadd [#allocation31], %s1113
          %s1115 = sshll.u32 [#allocation30], 4
          %s1116 = int_to_ptr.vmem [resolvable:$true] %s1115
          %1121 = dma.hbm_to_vmem [thread:$0]  %s33, 2048, %s1116, [#allocation31], 128, 128, 8
        $region76: #{forward.1} parent=11 // pred_fallthru
          _
        // Predicated region
        $region77: #{forward.1} parent=11 // pred_check
          %p1122 = pneg %p485
        $region78: #{forward.1} parent=11 // pred_check_branch
          %1124 = sbr.rel (%p1122) target = $region80
        $region79: #{forward.1} parent=11 // pred_region
          %s1126 = ssub.s32 2048, 2048
          %1127 = vsyncadd [#allocation31], %s1126
          %s1128 = sshll.u32 [#allocation32], 4
          %s1129 = int_to_ptr.vmem [resolvable:$true] %s1128
          %1134 = dma.hbm_to_vmem [thread:$0]  %s35, 2048, %s1129, [#allocation31], 128, 128, 8
        $region80: #{forward.1} parent=11 // pred_fallthru
          _
        // Predicated region
        $region81: #{forward.1} parent=11 // pred_check
          %p1135 = pneg %p506
        $region82: #{forward.1} parent=11 // pred_check_branch
          %1137 = sbr.rel (%p1135) target = $region84
        $region83: #{forward.1} parent=11 // pred_region
          %s1139 = ssub.s32 4096, 4096
          %1140 = vsyncadd [#allocation34], %s1139
          %s1141 = sshll.u32 [#allocation33], 4
          %s1142 = int_to_ptr.vmem [resolvable:$true] %s1141
          %1147 = dma.hbm_to_vmem [thread:$0]  %s37, 4096, %s1142, [#allocation34], 128, 128, 8
        $region84: #{forward.1} parent=11 // pred_fallthru
          _
        // Predicated region
        $region85: #{forward.1} parent=11 // pred_check
          %p1148 = pneg %p527
        $region86: #{forward.1} parent=11 // pred_check_branch
          %1150 = sbr.rel (%p1148) target = $region88
        $region87: #{forward.1} parent=11 // pred_region
          %s1152 = ssub.s32 2048, 2048
          %1153 = vsyncadd [#allocation34], %s1152
          %s1154 = sshll.u32 [#allocation35], 4
          %s1155 = int_to_ptr.vmem [resolvable:$true] %s1154
          %1160 = dma.hbm_to_vmem [thread:$0]  %s39, 2048, %s1155, [#allocation34], 128, 128, 8
        $region88: #{forward.1} parent=11 // pred_fallthru
          _
        // Predicated region
        $region89: #{forward.1} parent=11 // pred_check
          %p1161 = pneg %p548
        $region90: #{forward.1} parent=11 // pred_check_branch
          %1163 = sbr.rel (%p1161) target = $region92
        $region91: #{forward.1} parent=11 // pred_region
          %s1165 = ssub.s32 64, 64
          %1166 = vsyncadd [#allocation37], %s1165
          %s1168 = sshll.u32 [#allocation36], 4
          %s1169 = int_to_ptr.vmem [resolvable:$true] %s1168
          %1171 = dma.hbm_to_vmem [thread:$0]  %s41, 64, %s1169, [#allocation37]
        $region92: #{forward.1} parent=11 // pred_fallthru
          _
        // Predicated region
        $region93: #{forward.1} parent=11 // pred_check
          %p1172 = pneg %p569
        $region94: #{forward.1} parent=11 // pred_check_branch
          %1174 = sbr.rel (%p1172) target = $region96
        $region95: #{forward.1} parent=11 // pred_region
          _
        $region96: #{forward.1} parent=11 // pred_fallthru
          _
        // Predicated region
        $region97: #{forward.1} parent=11 // pred_check
          %p1175 = pneg %p590
        $region98: #{forward.1} parent=11 // pred_check_branch
          %1177 = sbr.rel (%p1175) target = $region100
        $region99: #{forward.1} parent=11 // pred_region
          %s1179 = ssub.s32 4096, 4096
          %1180 = vsyncadd [#allocation37], %s1179
          %s1181 = sshll.u32 [#allocation38], 4
          %s1182 = int_to_ptr.vmem [resolvable:$true] %s1181
          %1187 = dma.hbm_to_vmem [thread:$0]  %s45, 4096, %s1182, [#allocation37], 128, 128, 8
        $region100: #{forward.1} parent=11 // pred_fallthru
          _
        // Predicated region
        $region101: #{forward.1} parent=11 // pred_check
          %p1188 = pneg %p611
        $region102: #{forward.1} parent=11 // pred_check_branch
          %1190 = sbr.rel (%p1188) target = $region104
        $region103: #{forward.1} parent=11 // pred_region
          %s1192 = ssub.s32 1024, 1024
          %1193 = vsyncadd [#allocation40], %s1192
          %s1194 = sshll.u32 [#allocation39], 4
          %s1195 = int_to_ptr.vmem [resolvable:$true] %s1194
          %1200 = dma.hbm_to_vmem [thread:$0]  %s47, 1024, %s1195, [#allocation40], 128, 128, 8
        $region104: #{forward.1} parent=11 // pred_fallthru
          _
        // Predicated region
        $region105: #{forward.1} parent=11 // pred_check
          %p1201 = pneg %p632
        $region106: #{forward.1} parent=11 // pred_check_branch
          %1203 = sbr.rel (%p1201) target = $region108
        $region107: #{forward.1} parent=11 // pred_region
          %s1205 = ssub.s32 1024, 1024
          %1206 = vsyncadd [#allocation40], %s1205
          %s1207 = sshll.u32 [#allocation41], 4
          %s1208 = int_to_ptr.vmem [resolvable:$true] %s1207
          %1213 = dma.hbm_to_vmem [thread:$0]  %s49, 1024, %s1208, [#allocation40], 128, 128, 8
        $region108: #{forward.1} parent=11 // pred_fallthru
          _
        // Predicated region
        $region109: #{forward.1} parent=11 // pred_check
          %p1214 = pneg %p653
        $region110: #{forward.1} parent=11 // pred_check_branch
          %1216 = sbr.rel (%p1214) target = $region112
        $region111: #{forward.1} parent=11 // pred_region
          %s1218 = ssub.s32 4096, 4096
          %1219 = vsyncadd [#allocation43], %s1218
          %s1220 = sshll.u32 [#allocation42], 4
          %s1221 = int_to_ptr.vmem [resolvable:$true] %s1220
          %1226 = dma.hbm_to_vmem [thread:$0]  %s51, 4096, %s1221, [#allocation43], 128, 128, 8
        $region112: #{forward.1} parent=11 // pred_fallthru
          _
        // Predicated region
        $region113: #{forward.1} parent=11 // pred_check
          %p1227 = pneg %p674
        $region114: #{forward.1} parent=11 // pred_check_branch
          %1229 = sbr.rel (%p1227) target = $region116
        $region115: #{forward.1} parent=11 // pred_region
          %s1231 = ssub.s32 1024, 1024
          %1232 = vsyncadd [#allocation43], %s1231
          %s1233 = sshll.u32 [#allocation44], 4
          %s1234 = int_to_ptr.vmem [resolvable:$true] %s1233
          %1239 = dma.hbm_to_vmem [thread:$0]  %s53, 1024, %s1234, [#allocation43], 128, 128, 8
        $region116: #{forward.1} parent=11 // pred_fallthru
          _
        // Predicated region
        $region117: #{forward.1} parent=11 // pred_check
          %p1240 = pneg %p695
        $region118: #{forward.1} parent=11 // pred_check_branch
          %1242 = sbr.rel (%p1240) target = $region120
        $region119: #{forward.1} parent=11 // pred_region
          %s1244 = ssub.s32 64, 64
          %1245 = vsyncadd [#allocation46], %s1244
          %s1247 = sshll.u32 [#allocation45], 4
          %s1248 = int_to_ptr.vmem [resolvable:$true] %s1247
          %1250 = dma.hbm_to_vmem [thread:$0]  %s55, 64, %s1248, [#allocation46]
        $region120: #{forward.1} parent=11 // pred_fallthru
          _
        // Predicated region
        $region121: #{forward.1} parent=11 // pred_check
          %p1251 = pneg %p716
        $region122: #{forward.1} parent=11 // pred_check_branch
          %1253 = sbr.rel (%p1251) target = $region124
        $region123: #{forward.1} parent=11 // pred_region
          _
        $region124: #{forward.1} parent=11 // pred_fallthru
          _
        // Predicated region
        $region125: #{forward.1} parent=11 // pred_check
          %p1254 = pneg %p737
        $region126: #{forward.1} parent=11 // pred_check_branch
          %1256 = sbr.rel (%p1254) target = $region128
        $region127: #{forward.1} parent=11 // pred_region
          _
        $region128: #{forward.1} parent=11 // pred_fallthru
          _
        // Predicated region
        $region129: #{forward.1} parent=11 // pred_check
          %p1257 = pneg %p758
        $region130: #{forward.1} parent=11 // pred_check_branch
          %1259 = sbr.rel (%p1257) target = $region132
        $region131: #{forward.1} parent=11 // pred_region
          _
        $region132: #{forward.1} parent=11 // pred_fallthru
          _
        // Predicated region
        $region133: #{forward.1} parent=11 // pred_check
          %p1260 = pneg %p779
        $region134: #{forward.1} parent=11 // pred_check_branch
          %1262 = sbr.rel (%p1260) target = $region136
        $region135: #{forward.1} parent=11 // pred_region
          %s1264 = ssub.s32 32, 32
          %1265 = vsyncadd [#allocation46], %s1264
          %s1267 = sshll.u32 [#allocation47], 4
          %s1268 = int_to_ptr.vmem [resolvable:$true] %s1267
          %1270 = dma.hbm_to_vmem [thread:$0]  %s63, 32, %s1268, [#allocation46]
        $region136: #{forward.1} parent=11 // pred_fallthru
          _
        // Predicated region
        $region137: #{forward.1} parent=11 // pred_check
          %p1271 = pneg %p800
        $region138: #{forward.1} parent=11 // pred_check_branch
          %1273 = sbr.rel (%p1271) target = $region140
        $region139: #{forward.1} parent=11 // pred_region
          %s1275 = ssub.s32 32768, 32768
          %1276 = vsyncadd [#allocation49], %s1275
          %s1277 = sshll.u32 [#allocation48], 4
          %s1278 = int_to_ptr.vmem [resolvable:$true] %s1277
          %1283 = dma.hbm_to_vmem [thread:$0]  %s65, 32768, %s1278, [#allocation49], 512, 512, 32
        $region140: #{forward.1} parent=11 // pred_fallthru
          _
        // Predicated region
        $region141: #{forward.1} parent=11 // pred_check
          %p1284 = pneg %p821
        $region142: #{forward.1} parent=11 // pred_check_branch
          %1286 = sbr.rel (%p1284) target = $region144
        $region143: #{forward.1} parent=11 // pred_region
          %s1288 = ssub.s32 128, 128
          %1289 = vsyncadd [#allocation49], %s1288
          %s1291 = sshll.u32 [#allocation50], 4
          %s1292 = int_to_ptr.vmem [resolvable:$true] %s1291
          %1294 = dma.hbm_to_vmem [thread:$0]  %s67, 128, %s1292, [#allocation49]
        $region144: #{forward.1} parent=11 // pred_fallthru
          _
        // Predicated region
        $region145: #{forward.1} parent=11 // pred_check
          %p1295 = pneg %p842
        $region146: #{forward.1} parent=11 // pred_check_branch
          %1297 = sbr.rel (%p1295) target = $region148
        $region147: #{forward.1} parent=11 // pred_region
          %s1299 = ssub.s32 16384, 16384
          %1300 = vsyncadd [#allocation52], %s1299
          %s1301 = sshll.u32 [#allocation51], 4
          %s1302 = int_to_ptr.vmem [resolvable:$true] %s1301
          %1307 = dma.hbm_to_vmem [thread:$0]  %s69, 16384, %s1302, [#allocation52], 256, 256, 16
        $region148: #{forward.1} parent=11 // pred_fallthru
          _
        // Predicated region
        $region149: #{forward.1} parent=11 // pred_check
          %p1308 = pneg %p863
        $region150: #{forward.1} parent=11 // pred_check_branch
          %1310 = sbr.rel (%p1308) target = $region152
        $region151: #{forward.1} parent=11 // pred_region
          %s1312 = ssub.s32 128, 128
          %1313 = vsyncadd [#allocation52], %s1312
          %s1315 = sshll.u32 [#allocation53], 4
          %s1316 = int_to_ptr.vmem [resolvable:$true] %s1315
          %1318 = dma.hbm_to_vmem [thread:$0]  %s71, 128, %s1316, [#allocation52]
        $region152: #{forward.1} parent=11 // pred_fallthru
          _
        // Predicated region
        $region153: #{forward.1} parent=11 // pred_check
          %p1319 = pneg %p884
        $region154: #{forward.1} parent=11 // pred_check_branch
          %1321 = sbr.rel (%p1319) target = $region156
        $region155: #{forward.1} parent=11 // pred_region
          _
        $region156: #{forward.1} parent=11 // pred_fallthru
          _
        // Predicated region
        $region157: #{forward.1} parent=11 // pred_check
          %p1322 = pneg %p905
        $region158: #{forward.1} parent=11 // pred_check_branch
          %1324 = sbr.rel (%p1322) target = $region160
        $region159: #{forward.1} parent=11 // pred_region
          %s1326 = ssub.s32 32, 32
          %1327 = vsyncadd [#allocation55], %s1326
          %s1329 = sshll.u32 [#allocation54], 4
          %s1330 = int_to_ptr.vmem [resolvable:$true] %s1329
          %1332 = dma.hbm_to_vmem [thread:$0]  %s75, 32, %s1330, [#allocation55]
        $region160: #{forward.1} parent=11 // pred_fallthru
          _
      $region12: #{forward.1} parent=5 // pred_fallthru
        _
      %p1333 = scmp.lt.s32.totalorder %s102, 2
      // Predicated region
      $region161: #{forward.1} parent=5 // pred_check
        %p1334 = pneg %p1333
      $region162: #{forward.1} parent=5 // pred_check_branch
        %1336 = sbr.rel (%p1334) target = $region164
      $region163: #{forward.1} parent=5 // pred_region
        // Predicated region
        $region165: #{forward.1} parent=163 // pred_check
          %p1337 = pneg %p122
        $region166: #{forward.1} parent=163 // pred_check_branch
          %1339 = sbr.rel (%p1337) target = $region168
        $region167: #{forward.1} parent=163 // pred_region
          %p1340 = scmp.lt.s32.totalorder %s102, 1
          %s1341 = scalar_select %p1340, %s102, 1
          %s1342 = smul.addr %s1341, 4
          %s1343 = smul.addr %s1342, 8
          %s1344 = scalar_lea.vmem %s1, %s1343
        $region168: #{forward.1} parent=163 // pred_fallthru
          _
      $region164: #{forward.1} parent=5 // pred_fallthru
        _
      %p1345 = scmp.le.s32.totalorder 1, %s102
      %p1346 = scmp.lt.s32.totalorder %s102, 3
      %p1347 = pnand %p1345, %p1346
      %p1348 = pneg %p1347
      // Predicated region
      $region169: #{forward.1} parent=5 // pred_check
        _
      $region170: #{forward.1} parent=5 // pred_check_branch
        %1350 = sbr.rel (%p1347) target = $region172
      $region171: #{forward.1} parent=5 // pred_region
        %s1351 = ssub.s32 %s102, 1
        // Predicated region
        $region173: #{forward.1} parent=171 // pred_check
          %p1352 = pneg %p149
        $region174: #{forward.1} parent=171 // pred_check_branch
          %1354 = sbr.rel (%p1352) target = $region176
        $region175: #{forward.1} parent=171 // pred_region
          %1355 = dma.done [#allocation10], 32
        $region176: #{forward.1} parent=171 // pred_fallthru
          _
        // Predicated region
        $region177: #{forward.1} parent=171 // pred_check
          %p1356 = pneg %p170
        $region178: #{forward.1} parent=171 // pred_check_branch
          %1358 = sbr.rel (%p1356) target = $region180
        $region179: #{forward.1} parent=171 // pred_region
          %1359 = dma.done [#allocation13], 128
        $region180: #{forward.1} parent=171 // pred_fallthru
          _
        // Predicated region
        $region181: #{forward.1} parent=171 // pred_check
          %p1360 = pneg %p191
        $region182: #{forward.1} parent=171 // pred_check_branch
          %1362 = sbr.rel (%p1360) target = $region184
        $region183: #{forward.1} parent=171 // pred_region
          %1363 = dma.done [#allocation13], 64
        $region184: #{forward.1} parent=171 // pred_fallthru
          _
        // Predicated region
        $region185: #{forward.1} parent=171 // pred_check
          %p1364 = pneg %p212
        $region186: #{forward.1} parent=171 // pred_check_branch
          %1366 = sbr.rel (%p1364) target = $region188
        $region187: #{forward.1} parent=171 // pred_region
          %1367 = dma.done [#allocation16], 1024
        $region188: #{forward.1} parent=171 // pred_fallthru
          _
        // Predicated region
        $region189: #{forward.1} parent=171 // pred_check
          %p1368 = pneg %p254
        $region190: #{forward.1} parent=171 // pred_check_branch
          %1370 = sbr.rel (%p1368) target = $region192
        $region191: #{forward.1} parent=171 // pred_region
          %1371 = dma.done [#allocation16], 64
        $region192: #{forward.1} parent=171 // pred_fallthru
          _
        // Predicated region
        $region193: #{forward.1} parent=171 // pred_check
          %p1372 = pneg %p275
        $region194: #{forward.1} parent=171 // pred_check_branch
          %1374 = sbr.rel (%p1372) target = $region196
        $region195: #{forward.1} parent=171 // pred_region
          %1375 = dma.done [#allocation19], 2048
        $region196: #{forward.1} parent=171 // pred_fallthru
          _
        // Predicated region
        $region197: #{forward.1} parent=171 // pred_check
          %p1376 = pneg %p317
        $region198: #{forward.1} parent=171 // pred_check_branch
          %1378 = sbr.rel (%p1376) target = $region200
        $region199: #{forward.1} parent=171 // pred_region
          %1379 = dma.done [#allocation19], 64
        $region200: #{forward.1} parent=171 // pred_fallthru
          _
        // Predicated region
        $region201: #{forward.1} parent=171 // pred_check
          %p1380 = pneg %p338
        $region202: #{forward.1} parent=171 // pred_check_branch
          %1382 = sbr.rel (%p1380) target = $region204
        $region203: #{forward.1} parent=171 // pred_region
          %1383 = dma.done [#allocation22], 4096
        $region204: #{forward.1} parent=171 // pred_fallthru
          _
        // Predicated region
        $region205: #{forward.1} parent=171 // pred_check
          %p1384 = pneg %p359
        $region206: #{forward.1} parent=171 // pred_check_branch
          %1386 = sbr.rel (%p1384) target = $region208
        $region207: #{forward.1} parent=171 // pred_region
          %1387 = dma.done [#allocation22], 4096
        $region208: #{forward.1} parent=171 // pred_fallthru
          _
        // Predicated region
        $region209: #{forward.1} parent=171 // pred_check
          %p1388 = pneg %p380
        $region210: #{forward.1} parent=171 // pred_check_branch
          %1390 = sbr.rel (%p1388) target = $region212
        $region211: #{forward.1} parent=171 // pred_region
          %1391 = dma.done [#allocation25], 4096
        $region212: #{forward.1} parent=171 // pred_fallthru
          _
        // Predicated region
        $region213: #{forward.1} parent=171 // pred_check
          %p1392 = pneg %p401
        $region214: #{forward.1} parent=171 // pred_check_branch
          %1394 = sbr.rel (%p1392) target = $region216
        $region215: #{forward.1} parent=171 // pred_region
          %1395 = dma.done [#allocation25], 64
        $region216: #{forward.1} parent=171 // pred_fallthru
          _
        // Predicated region
        $region217: #{forward.1} parent=171 // pred_check
          %p1396 = pneg %p422
        $region218: #{forward.1} parent=171 // pred_check_branch
          %1398 = sbr.rel (%p1396) target = $region220
        $region219: #{forward.1} parent=171 // pred_region
          %1399 = dma.done [#allocation28], 2048
        $region220: #{forward.1} parent=171 // pred_fallthru
          _
        // Predicated region
        $region221: #{forward.1} parent=171 // pred_check
          %p1400 = pneg %p443
        $region222: #{forward.1} parent=171 // pred_check_branch
          %1402 = sbr.rel (%p1400) target = $region224
        $region223: #{forward.1} parent=171 // pred_region
          %1403 = dma.done [#allocation28], 4096
        $region224: #{forward.1} parent=171 // pred_fallthru
          _
        // Predicated region
        $region225: #{forward.1} parent=171 // pred_check
          %p1404 = pneg %p464
        $region226: #{forward.1} parent=171 // pred_check_branch
          %1406 = sbr.rel (%p1404) target = $region228
        $region227: #{forward.1} parent=171 // pred_region
          %1407 = dma.done [#allocation31], 2048
        $region228: #{forward.1} parent=171 // pred_fallthru
          _
        // Predicated region
        $region229: #{forward.1} parent=171 // pred_check
          %p1408 = pneg %p485
        $region230: #{forward.1} parent=171 // pred_check_branch
          %1410 = sbr.rel (%p1408) target = $region232
        $region231: #{forward.1} parent=171 // pred_region
          %1411 = dma.done [#allocation31], 2048
        $region232: #{forward.1} parent=171 // pred_fallthru
          _
        // Predicated region
        $region233: #{forward.1} parent=171 // pred_check
          %p1412 = pneg %p506
        $region234: #{forward.1} parent=171 // pred_check_branch
          %1414 = sbr.rel (%p1412) target = $region236
        $region235: #{forward.1} parent=171 // pred_region
          %1415 = dma.done [#allocation34], 4096
        $region236: #{forward.1} parent=171 // pred_fallthru
          _
        // Predicated region
        $region237: #{forward.1} parent=171 // pred_check
          %p1416 = pneg %p527
        $region238: #{forward.1} parent=171 // pred_check_branch
          %1418 = sbr.rel (%p1416) target = $region240
        $region239: #{forward.1} parent=171 // pred_region
          %1419 = dma.done [#allocation34], 2048
        $region240: #{forward.1} parent=171 // pred_fallthru
          _
        // Predicated region
        $region241: #{forward.1} parent=171 // pred_check
          %p1420 = pneg %p548
        $region242: #{forward.1} parent=171 // pred_check_branch
          %1422 = sbr.rel (%p1420) target = $region244
        $region243: #{forward.1} parent=171 // pred_region
          %1423 = dma.done [#allocation37], 64
        $region244: #{forward.1} parent=171 // pred_fallthru
          _
        // Predicated region
        $region245: #{forward.1} parent=171 // pred_check
          %p1424 = pneg %p590
        $region246: #{forward.1} parent=171 // pred_check_branch
          %1426 = sbr.rel (%p1424) target = $region248
        $region247: #{forward.1} parent=171 // pred_region
          %1427 = dma.done [#allocation37], 4096
        $region248: #{forward.1} parent=171 // pred_fallthru
          _
        // Predicated region
        $region249: #{forward.1} parent=171 // pred_check
          %p1428 = pneg %p611
        $region250: #{forward.1} parent=171 // pred_check_branch
          %1430 = sbr.rel (%p1428) target = $region252
        $region251: #{forward.1} parent=171 // pred_region
          %1431 = dma.done [#allocation40], 1024
        $region252: #{forward.1} parent=171 // pred_fallthru
          _
        // Predicated region
        $region253: #{forward.1} parent=171 // pred_check
          %p1432 = pneg %p632
        $region254: #{forward.1} parent=171 // pred_check_branch
          %1434 = sbr.rel (%p1432) target = $region256
        $region255: #{forward.1} parent=171 // pred_region
          %1435 = dma.done [#allocation40], 1024
        $region256: #{forward.1} parent=171 // pred_fallthru
          _
        // Predicated region
        $region257: #{forward.1} parent=171 // pred_check
          %p1436 = pneg %p653
        $region258: #{forward.1} parent=171 // pred_check_branch
          %1438 = sbr.rel (%p1436) target = $region260
        $region259: #{forward.1} parent=171 // pred_region
          %1439 = dma.done [#allocation43], 4096
        $region260: #{forward.1} parent=171 // pred_fallthru
          _
        // Predicated region
        $region261: #{forward.1} parent=171 // pred_check
          %p1440 = pneg %p674
        $region262: #{forward.1} parent=171 // pred_check_branch
          %1442 = sbr.rel (%p1440) target = $region264
        $region263: #{forward.1} parent=171 // pred_region
          %1443 = dma.done [#allocation43], 1024
        $region264: #{forward.1} parent=171 // pred_fallthru
          _
        // Predicated region
        $region265: #{forward.1} parent=171 // pred_check
          %p1444 = pneg %p695
        $region266: #{forward.1} parent=171 // pred_check_branch
          %1446 = sbr.rel (%p1444) target = $region268
        $region267: #{forward.1} parent=171 // pred_region
          %1447 = dma.done [#allocation46], 64
        $region268: #{forward.1} parent=171 // pred_fallthru
          _
        // Predicated region
        $region269: #{forward.1} parent=171 // pred_check
          %p1448 = pneg %p779
        $region270: #{forward.1} parent=171 // pred_check_branch
          %1450 = sbr.rel (%p1448) target = $region272
        $region271: #{forward.1} parent=171 // pred_region
          %1451 = dma.done [#allocation46], 32
        $region272: #{forward.1} parent=171 // pred_fallthru
          _
        // Predicated region
        $region273: #{forward.1} parent=171 // pred_check
          %p1452 = pneg %p800
        $region274: #{forward.1} parent=171 // pred_check_branch
          %1454 = sbr.rel (%p1452) target = $region276
        $region275: #{forward.1} parent=171 // pred_region
          %1455 = dma.done [#allocation49], 32768
        $region276: #{forward.1} parent=171 // pred_fallthru
          _
        // Predicated region
        $region277: #{forward.1} parent=171 // pred_check
          %p1456 = pneg %p821
        $region278: #{forward.1} parent=171 // pred_check_branch
          %1458 = sbr.rel (%p1456) target = $region280
        $region279: #{forward.1} parent=171 // pred_region
          %1459 = dma.done [#allocation49], 128
        $region280: #{forward.1} parent=171 // pred_fallthru
          _
        // Predicated region
        $region281: #{forward.1} parent=171 // pred_check
          %p1460 = pneg %p842
        $region282: #{forward.1} parent=171 // pred_check_branch
          %1462 = sbr.rel (%p1460) target = $region284
        $region283: #{forward.1} parent=171 // pred_region
          %1463 = dma.done [#allocation52], 16384
        $region284: #{forward.1} parent=171 // pred_fallthru
          _
        // Predicated region
        $region285: #{forward.1} parent=171 // pred_check
          %p1464 = pneg %p863
        $region286: #{forward.1} parent=171 // pred_check_branch
          %1466 = sbr.rel (%p1464) target = $region288
        $region287: #{forward.1} parent=171 // pred_region
          %1467 = dma.done [#allocation52], 128
        $region288: #{forward.1} parent=171 // pred_fallthru
          _
        // Predicated region
        $region289: #{forward.1} parent=171 // pred_check
          %p1468 = pneg %p905
        $region290: #{forward.1} parent=171 // pred_check_branch
          %1470 = sbr.rel (%p1468) target = $region292
        $region291: #{forward.1} parent=171 // pred_region
          %1471 = dma.done [#allocation55], 32
        $region292: #{forward.1} parent=171 // pred_fallthru
          _
        %p1472 = scmp.lt.s32.totalorder %s107, 1
        %s1473 = scalar_select %p1472, %s107, 1
        %s1474 = smul.addr %s1473, 4
        %s1475 = smul.addr %s1474, 8
        %s1476 = scalar_lea.vmem %s1, %s1475
        %p1477 = pneg %p128
        %p1478 = pneg %p125
        %p1479 = pneg %p149
        %p1480 = pneg %p146
        %p1481 = pneg %p170
        %p1482 = pneg %p167
        %p1483 = pneg %p191
        %p1484 = pneg %p188
        %p1485 = pneg %p212
        %p1486 = pneg %p209
        %p1487 = pneg %p233
        %p1488 = pneg %p230
        %p1489 = pneg %p254
        %p1490 = pneg %p251
        %p1491 = pneg %p275
        %p1492 = pneg %p272
        %p1493 = pneg %p296
        %p1494 = pneg %p293
        %p1495 = pneg %p317
        %p1496 = pneg %p314
        %p1497 = pneg %p338
        %p1498 = pneg %p335
        %p1499 = pneg %p359
        %p1500 = pneg %p356
        %p1501 = pneg %p380
        %p1502 = pneg %p377
        %p1503 = pneg %p401
        %p1504 = pneg %p398
        %p1505 = pneg %p422
        %p1506 = pneg %p419
        %p1507 = pneg %p443
        %p1508 = pneg %p440
        %p1509 = pneg %p464
        %p1510 = pneg %p461
        %p1511 = pneg %p485
        %p1512 = pneg %p482
        %p1513 = pneg %p506
        %p1514 = pneg %p503
        %p1515 = pneg %p527
        %p1516 = pneg %p524
        %p1517 = pneg %p548
        %p1518 = pneg %p545
        %p1519 = pneg %p569
        %p1520 = pneg %p566
        %p1521 = pneg %p590
        %p1522 = pneg %p587
        %p1523 = pneg %p611
        %p1524 = pneg %p608
        %p1525 = pneg %p632
        %p1526 = pneg %p629
        %p1527 = pneg %p653
        %p1528 = pneg %p650
        %p1529 = pneg %p674
        %p1530 = pneg %p671
        %p1531 = pneg %p695
        %p1532 = pneg %p692
        %p1533 = pneg %p716
        %p1534 = pneg %p713
        %p1535 = pneg %p737
        %p1536 = pneg %p734
        %p1537 = pneg %p758
        %p1538 = pneg %p755
        %p1539 = pneg %p779
        %p1540 = pneg %p776
        %p1541 = pneg %p800
        %p1542 = pneg %p797
        %p1543 = pneg %p821
        %p1544 = pneg %p818
        %p1545 = pneg %p842
        %p1546 = pneg %p839
        %p1547 = pneg %p863
        %p1548 = pneg %p860
        %p1549 = pneg %p884
        %p1550 = pneg %p881
        %p1551 = pneg %p905
        %p1552 = pneg %p902
        %p1553 = pneg %p931
        %p1554 = pneg %p928
        %s1555 = sand.u32 %s918, 1
        %s1556 = scalar_lea.sflag [#allocation11], %s1555
        %s1557 = sand.u32 %s918, 1
        %s1558 = scalar_lea.vmem [#allocation56], %s1557
        %p1559 = scmp.lt.s32.totalorder %s107, 1
        %s1560 = scalar_select %p1559, %s107, 1
        %s1561 = smul.addr %s1560, 4
        %s1562 = smul.addr %s1561, 8
        %s1563 = scalar_lea.vmem %s1, %s1562
        %v1565 = vld [vmem:[%s1563] sm:$0xff]
        %v1566 = vld [vmem:[%s1563 + $0x8] sm:$0xff]
        %v1567 = vld [vmem:[%s1563 + $0x10] sm:$0xff]
        %v1568 = vld [vmem:[%s1563 + $0x18] sm:$0xff]
        %vm1569 = vcmask 57344
        %1570 = vst.msk [vmem:[#allocation2] sm:$0x1] %vm1569, 0.0
        %vm1571 = vcmask 64512
        %1572 = vst.msk [vmem:[#allocation2 + $0x1] sm:$0xff] %vm1571, %v1565
        %1573 = vst.msk [vmem:[#allocation2 + $0x9] sm:$0xff] %vm1571, %v1566
        %1574 = vst.msk [vmem:[#allocation2 + $0x11] sm:$0xff] %vm1571, %v1567
        %1575 = vst.msk [vmem:[#allocation2 + $0x19] sm:$0xff] %vm1571, %v1568
        %1576 = vst.msk [vmem:[#allocation2 + $0x21] sm:$0x1] %vm1569, 0.0
        %v1577 = vld [vmem:[#allocation2] sm:$0xff]
        %v1578 = vld [vmem:[#allocation2 + $0x8] sm:$0xff]
        %v1579 = vld [vmem:[#allocation2 + $0x10] sm:$0xff]
        %v1580 = vld [vmem:[#allocation2 + $0x18] sm:$0xff]
        %v1581 = vld [vmem:[#allocation2 + $0x1] sm:$0xff]
        %v1582 = vld [vmem:[#allocation2 + $0x9] sm:$0xff]
        %v1583 = vld [vmem:[#allocation2 + $0x11] sm:$0xff]
        %v1584 = vld [vmem:[#allocation2 + $0x19] sm:$0xff]
        %v1585 = vld [vmem:[#allocation9] sm:$0x3]
        %v1586 = vunpack.c.l.bf16 %v1585
        %1588 = vset.pattern.permute.xlu0 7
        %1589 = vperm.xlu0 %1588, %v1577
        %v1590 = vpop.permute.xlu0 %1589
        %1593 = vset.pattern.permute.xlu0 7
        %1594 = vperm.xlu0 %1593, %v1578
        %v1595 = vpop.permute.xlu0 %1594
        %1598 = vset.pattern.permute.xlu0 7
        %1599 = vperm.xlu0 %1598, %v1579
        %v1600 = vpop.permute.xlu0 %1599
        %1603 = vset.pattern.permute.xlu0 7
        %1604 = vperm.xlu0 %1603, %v1580
        %v1605 = vpop.permute.xlu0 %1604
        %v1608 = vlaneseq
        %v1609 = vshrl.u32 %v1608, 7
        %v1610 = vsub.s32 0, %v1609
        %v1611 = vrot.slane %v1586, %v1610
        %v1612 = vlaneseq
        %v1613 = vshrl.u32 %v1612, 7
        %v1614 = vsub.s32 2, %v1613
        %v1615 = vrot.slane %v1586, %v1614
        %v1618 = vlaneseq
        %v1619 = vshrl.u32 %v1618, 7
        %v1620 = vsub.s32 0, %v1619
        %v1621 = vrot.slane %v1611, %v1620
        %v1622 = vlaneseq
        %v1623 = vshrl.u32 %v1622, 7
        %v1624 = vsub.s32 0, %v1623
        %v1625 = vrot.slane %v1615, %v1624
        %v1626 = vmul.f32 %v1590, %v1621
        %v1627 = vmul.f32 %v1590, %v1625
        %v1628 = vmul.f32 %v1595, %v1621
        %v1629 = vmul.f32 %v1595, %v1625
        %v1630 = vmul.f32 %v1600, %v1621
        %v1631 = vmul.f32 %v1600, %v1625
        %v1632 = vmul.f32 %v1605, %v1621
        %v1633 = vmul.f32 %v1605, %v1625
        %v1634 = vpack.c.bf16 %v1582, %v1581
        %v1635 = vpack.c.bf16 %v1584, %v1583
        %v1636 = vld [vmem:[#allocation12] sm:$0xff]
        %v1638 = vunpack.c.l.b16 %v1636
        %v1639 = vunpack.c.h.b16 %v1636
        %v1640 = vpack.c.b16 %v1638, %v1638
        %v1641 = vpack.c.b16 %v1639, %v1639
        %v1643 = vsel %vm1571, %v1634, 0
        %v1646 = vsel %vm1571, %v1635, 0
        %vm1648 = vcmask 1043456
        %v1650 = vsel %vm1648, %v1640, 0
        %v1653 = vsel %vm1648, %v1641, 0
        %1655 = vmatprep.subr.bf16.mxu0 0
        %1656 = vmatpush1.bf16.msra.mxu0 0
        %1657 = vmatprep.subr.bf16.mxu0 0
        %1658 = vmatpush1.bf16.msra.mxu0 0
        %1659 = vmatprep.subr.bf16.mxu0 0
        %1660 = vmatpush1.bf16.msra.mxu0 0
        %1661 = vmatprep.subr.bf16.mxu0 0
        %1662 = vmatpush1.bf16.msra.mxu0 0
        %1663 = vmatprep.subr.bf16.mxu0 0
        %1664 = vmatpush1.bf16.msra.mxu0 0
        %1665 = vmatprep.subr.bf16.mxu0 0
        %1666 = vmatpush1.bf16.msra.mxu0 0
        %1667 = vmatprep.subr.bf16.mxu0 0
        %1668 = vmatpush1.bf16.msra.mxu0 0
        %1669 = vmatprep.subr.bf16.mxu0 %v1653
        %1670 = vmatpush1.bf16.msra.mxu0 %v1650
        %1671 = vmatprep.subr.bf16.mxu0 0
        %1672 = vmatpush2.bf16.msra.mxu0 0
        %1673 = vmatprep.subr.bf16.mxu0 0
        %1674 = vmatpush2.bf16.msra.mxu0 0
        %1675 = vmatprep.subr.bf16.mxu0 0
        %1676 = vmatpush2.bf16.msra.mxu0 0
        %1677 = vmatprep.subr.bf16.mxu0 0
        %1678 = vmatpush2.bf16.msra.mxu0 0
        %1679 = vmatprep.subr.bf16.mxu0 0
        %1680 = vmatpush2.bf16.msra.mxu0 0
        %1681 = vmatprep.subr.bf16.mxu0 0
        %1682 = vmatpush2.bf16.msra.mxu0 0
        %1683 = vmatprep.subr.bf16.mxu0 0
        %1684 = vmatpush2.bf16.msra.mxu0 0
        %1685 = vmatprep.subr.bf16.mxu0 0
        %1686 = vmatpush2.bf16.msra.mxu0 0
        %1687 = vmatprep.mubr.bf16.mxu0 0
        %1688 = vmatmul.mubr.bf16.gmra.mxu0 %v1643
        %v1689 = vpop.f32.mrf.mxu0
        %v1690 = vadd.f32 0.0, %v1689
        %v1691 = vpop.f32.mrf.mxu0
        %v1692 = vadd.f32 0.0, %v1691
        %v1693 = vpop.f32.mrf.mxu0
        %v1694 = vadd.f32 0.0, %v1693
        %v1695 = vpop.f32.mrf.mxu0
        %v1696 = vadd.f32 0.0, %v1695
        %1697 = vmatprep.mubr.bf16.mxu0 0
        %1698 = vmatmul.mubr.bf16.gmra.mxu0 %v1646
        %v1699 = vpop.f32.mrf.mxu0
        %v1700 = vadd.f32 0.0, %v1699
        %v1701 = vpop.f32.mrf.mxu0
        %v1702 = vadd.f32 0.0, %v1701
        %v1703 = vpop.f32.mrf.mxu0
        %v1704 = vadd.f32 0.0, %v1703
        %v1705 = vpop.f32.mrf.mxu0
        %v1706 = vadd.f32 0.0, %v1705
        %1707 = vdwg.mxu0
        %v1708 = vadd.f32 %v1626, %v1690
        %v1709 = vadd.f32 %v1627, %v1692
        %v1710 = vadd.f32 %v1628, %v1694
        %v1711 = vadd.f32 %v1629, %v1696
        %v1712 = vadd.f32 %v1630, %v1700
        %v1713 = vadd.f32 %v1631, %v1702
        %v1714 = vadd.f32 %v1632, %v1704
        %v1715 = vadd.f32 %v1633, %v1706
        %v1716 = vld [vmem:[#allocation14] ss:$2 sm:$0x3]
        %v1718 = vlaneseq
        %v1719 = vshrl.u32 %v1718, 7
        %v1720 = vsub.s32 0, %v1719
        %v1721 = vrot.slane %v1716, %v1720
        %v1722 = vlaneseq
        %v1723 = vshrl.u32 %v1722, 7
        %v1724 = vsub.s32 1, %v1723
        %v1725 = vrot.slane %v1716, %v1724
        %v1728 = vadd.f32 %v1708, %v1721
        %v1729 = vadd.f32 %v1709, %v1725
        %v1730 = vadd.f32 %v1710, %v1721
        %v1731 = vadd.f32 %v1711, %v1725
        %v1732 = vadd.f32 %v1712, %v1721
        %v1733 = vadd.f32 %v1713, %v1725
        %v1734 = vadd.f32 %v1714, %v1721
        %v1735 = vadd.f32 %v1715, %v1725
        %vm1736 = vcmp.ge.f32.partialorder %v1728, 0.0
        %vm1737 = vcmp.ge.f32.partialorder %v1729, 0.0
        %vm1738 = vcmp.ge.f32.partialorder %v1730, 0.0
        %vm1739 = vcmp.ge.f32.partialorder %v1731, 0.0
        %vm1740 = vcmp.ge.f32.partialorder %v1732, 0.0
        %vm1741 = vcmp.ge.f32.partialorder %v1733, 0.0
        %vm1742 = vcmp.ge.f32.partialorder %v1734, 0.0
        %vm1743 = vcmp.ge.f32.partialorder %v1735, 0.0
        %s1744 = scalar_lea.vmem [#allocation14], 1
        %v1745 = vld [vmem:[%s1744] ss:$2 sm:$0x3]
        %v1747 = vlaneseq
        %v1748 = vshrl.u32 %v1747, 7
        %v1749 = vsub.s32 0, %v1748
        %v1750 = vrot.slane %v1745, %v1749
        %v1751 = vlaneseq
        %v1752 = vshrl.u32 %v1751, 7
        %v1753 = vsub.s32 1, %v1752
        %v1754 = vrot.slane %v1745, %v1753
        %v1757 = vmul.f32 %v1750, %v1728
        %v1758 = vmul.f32 %v1754, %v1729
        %v1759 = vmul.f32 %v1750, %v1730
        %v1760 = vmul.f32 %v1754, %v1731
        %v1761 = vmul.f32 %v1750, %v1732
        %v1762 = vmul.f32 %v1754, %v1733
        %v1763 = vmul.f32 %v1750, %v1734
        %v1764 = vmul.f32 %v1754, %v1735
        %v1765 = vsel %vm1736, %v1728, %v1757
        %v1766 = vsel %vm1737, %v1729, %v1758
        %v1767 = vsel %vm1738, %v1730, %v1759
        %v1768 = vsel %vm1739, %v1731, %v1760
        %v1769 = vsel %vm1740, %v1732, %v1761
        %v1770 = vsel %vm1741, %v1733, %v1762
        %v1771 = vsel %vm1742, %v1734, %v1763
        %v1772 = vsel %vm1743, %v1735, %v1764
        %v1773 = vlaneseq
        %vm1774 = vcmp.ge.s32.totalorder %v1773, 0
        %vm1775 = vcmp.lt.s32.totalorder %v1773, 256
        %vm1776 = vmand %vm1774, %vm1775
        %1777 = vst.msk [vmem:[#allocation3] ss:$8 sm:$0x3] %vm1776, 0.0
        %1778 = vst.msk [vmem:[#allocation3] ss:$8 sm:$0x0] %vm1776, 0.0
        %vm1787 = vcmask 1040384
        %v1788 = vrot.slane %v1765, 7
        %v1789 = vrot.slane %v1766, 7
        %v1790 = vrot.slane %v1767, 7
        %v1791 = vsel %vm1787, %v1788, %v1790
        %v1792 = vrot.slane %v1768, 7
        %v1793 = vsel %vm1787, %v1789, %v1792
        %v1794 = vrot.slane %v1769, 7
        %v1795 = vsel %vm1787, %v1790, %v1794
        %v1796 = vrot.slane %v1770, 7
        %v1797 = vsel %vm1787, %v1792, %v1796
        %v1798 = vrot.slane %v1771, 7
        %v1799 = vsel %vm1787, %v1794, %v1798
        %v1800 = vrot.slane %v1772, 7
        %v1801 = vsel %vm1787, %v1796, %v1800
        %1812 = vst [vmem:[#allocation3] sm:$0xfe] %v1788
        %1813 = vst [vmem:[#allocation3 + $0x8] sm:$0xfe] %v1789
        %1814 = vst [vmem:[#allocation3 + $0x10] sm:$0xff] %v1791
        %1815 = vst [vmem:[#allocation3 + $0x18] sm:$0xff] %v1793
        %1816 = vst [vmem:[#allocation3 + $0x20] sm:$0xff] %v1795
        %1817 = vst [vmem:[#allocation3 + $0x28] sm:$0xff] %v1797
        %1818 = vst [vmem:[#allocation3 + $0x30] sm:$0xff] %v1799
        %1819 = vst [vmem:[#allocation3 + $0x38] sm:$0xff] %v1801
        %1820 = vst [vmem:[#allocation3 + $0x40] sm:$0x1] %v1798
        %1821 = vst [vmem:[#allocation3 + $0x48] sm:$0x1] %v1800
        %s1822 = scalar_lea.vmem [#allocation3], 65
        %1823 = vst.msk [vmem:[%s1822] ss:$8 sm:$0x3] %vm1776, 0.0
        %1824 = vst.msk [vmem:[%s1822] ss:$8 sm:$0x0] %vm1776, 0.0
        %v1825 = vld [vmem:[#allocation3 + $0x8] sm:$0xff]
        %v1826 = vld [vmem:[#allocation3 + $0x18] sm:$0xff]
        %v1827 = vld [vmem:[#allocation3 + $0x28] sm:$0xff]
        %v1828 = vld [vmem:[#allocation3 + $0x38] sm:$0xff]
        %v1829 = vld [vmem:[#allocation3] sm:$0xfe]
        %v1830 = vld [vmem:[#allocation3 + $0x8] sm:$0xfe]
        %v1831 = vld [vmem:[#allocation3 + $0x10] sm:$0xff]
        %v1832 = vld [vmem:[#allocation3 + $0x20] sm:$0xff]
        %v1833 = vld [vmem:[#allocation3 + $0x30] sm:$0xff]
        %v1834 = vld [vmem:[#allocation3 + $0x40] sm:$0x1]
        %v1835 = vld [vmem:[#allocation3 + $0x48] sm:$0x1]
        %v1836 = vpack.c.bf16 %v1826, %v1825
        %v1837 = vpack.c.bf16 %v1828, %v1827
        %v1838 = vld [vmem:[#allocation15] sm:$0xff]
        %v1839 = vld [vmem:[#allocation15 + $0x8] sm:$0xff]
        %v1840 = vld [vmem:[#allocation15 + $0x10] sm:$0xff]
        %v1841 = vld [vmem:[#allocation15 + $0x18] sm:$0xff]
        %v1842 = vld [vmem:[#allocation15 + $0x20] sm:$0xff]
        %v1843 = vld [vmem:[#allocation15 + $0x28] sm:$0xff]
        %v1844 = vld [vmem:[#allocation15 + $0x30] sm:$0xff]
        %v1845 = vld [vmem:[#allocation15 + $0x38] sm:$0xff]
        %v1846 = vpack.c.bf16 %v1831, %v1829
        %v1847 = vpack.c.bf16 %v1826, %v1830
        %v1848 = vpack.c.bf16 %v1833, %v1832
        %v1849 = vpack.c.bf16 %v1834, %v1834
        %v1850 = vpack.c.bf16 %v1835, %v1835
        %v1851 = vld [vmem:[%s11] sm:$0xff]
        %v1852 = vld [vmem:[%s11 + $0x8] sm:$0xff]
        %v1853 = vld [vmem:[%s11 + $0x10] sm:$0xff]
        %v1854 = vld [vmem:[%s11 + $0x18] sm:$0xff]
        %v1855 = vld [vmem:[%s11 + $0x20] sm:$0xff]
        %v1856 = vld [vmem:[%s11 + $0x28] sm:$0xff]
        %v1857 = vld [vmem:[%s11 + $0x30] sm:$0xff]
        %v1858 = vld [vmem:[%s11 + $0x38] sm:$0xff]
        %v1859 = vld [vmem:[%s11 + $0x40] sm:$0xff]
        %v1860 = vld [vmem:[%s11 + $0x48] sm:$0xff]
        %v1861 = vld [vmem:[%s11 + $0x50] sm:$0xff]
        %v1862 = vld [vmem:[%s11 + $0x58] sm:$0xff]
        %v1863 = vld [vmem:[%s11 + $0x60] sm:$0xff]
        %v1864 = vld [vmem:[%s11 + $0x68] sm:$0xff]
        %v1865 = vld [vmem:[%s11 + $0x70] sm:$0xff]
        %v1866 = vld [vmem:[%s11 + $0x78] sm:$0xff]
        %v1867 = vld [vmem:[%s11 + $0x80] sm:$0xff]
        %v1868 = vld [vmem:[%s11 + $0x88] sm:$0xff]
        %v1869 = vld [vmem:[%s11 + $0x90] sm:$0xff]
        %v1870 = vld [vmem:[%s11 + $0x98] sm:$0xff]
        %v1871 = vld [vmem:[%s11 + $0xa0] sm:$0xff]
        %v1872 = vld [vmem:[%s11 + $0xa8] sm:$0xff]
        %v1873 = vld [vmem:[%s11 + $0xb0] sm:$0xff]
        %v1874 = vld [vmem:[%s11 + $0xb8] sm:$0xff]
        %v1875 = vld [vmem:[%s11 + $0xc0] sm:$0xff]
        %v1876 = vld [vmem:[%s11 + $0xc8] sm:$0xff]
        %v1877 = vld [vmem:[%s11 + $0xd0] sm:$0xff]
        %v1878 = vld [vmem:[%s11 + $0xd8] sm:$0xff]
        %v1879 = vld [vmem:[%s11 + $0xe0] sm:$0xff]
        %v1880 = vld [vmem:[%s11 + $0xe8] sm:$0xff]
        %v1881 = vld [vmem:[%s11 + $0xf0] sm:$0xff]
        %v1882 = vld [vmem:[%s11 + $0xf8] sm:$0xff]
        %vm1883 = vsmask.f32 7424
        %v1885 = vshrl.u32 %v1846, 16
        %v1887 = vshll.u32 %v1846, 16
        %v1889 = vrot.slane %v1887, 1
        %v1890 = vor.u32 %v1885, %v1889
        %v1892 = vshll.u32 %v1848, 16
        %v1894 = vrot.slane %v1892, 1
        %v1895 = vsel %vm1883, %v1890, %v1894
        %v1897 = vshrl.u32 %v1847, 16
        %v1899 = vshll.u32 %v1847, 16
        %v1901 = vrot.slane %v1899, 1
        %v1902 = vor.u32 %v1897, %v1901
        %v1904 = vshll.u32 %v1837, 16
        %v1906 = vrot.slane %v1904, 1
        %v1907 = vsel %vm1883, %v1902, %v1906
        %v1908 = vshrl.u32 %v1848, 16
        %v1910 = vor.u32 %v1908, %v1894
        %v1912 = vshll.u32 %v1849, 16
        %v1914 = vrot.slane %v1912, 1
        %v1915 = vsel %vm1883, %v1910, %v1914
        %v1916 = vshrl.u32 %v1837, 16
        %v1918 = vor.u32 %v1916, %v1906
        %v1920 = vshll.u32 %v1850, 16
        %v1922 = vrot.slane %v1920, 1
        %v1923 = vsel %vm1883, %v1918, %v1922
        %v1960 = vunpack.c.l.b16 %v1851
        %v1961 = vunpack.c.h.b16 %v1851
        %v1962 = vunpack.c.l.b16 %v1852
        %v1963 = vunpack.c.h.b16 %v1852
        %v1964 = vunpack.c.l.b16 %v1853
        %v1965 = vunpack.c.h.b16 %v1853
        %v1966 = vunpack.c.l.b16 %v1854
        %v1967 = vunpack.c.h.b16 %v1854
        %v1968 = vunpack.c.l.b16 %v1855
        %v1969 = vunpack.c.h.b16 %v1855
        %v1970 = vunpack.c.l.b16 %v1856
        %v1971 = vunpack.c.h.b16 %v1856
        %v1972 = vunpack.c.l.b16 %v1857
        %v1973 = vunpack.c.h.b16 %v1857
        %v1974 = vunpack.c.l.b16 %v1858
        %v1975 = vunpack.c.h.b16 %v1858
        %v1976 = vunpack.c.l.b16 %v1859
        %v1977 = vunpack.c.h.b16 %v1859
        %v1978 = vunpack.c.l.b16 %v1860
        %v1979 = vunpack.c.h.b16 %v1860
        %v1980 = vunpack.c.l.b16 %v1861
        %v1981 = vunpack.c.h.b16 %v1861
        %v1982 = vunpack.c.l.b16 %v1862
        %v1983 = vunpack.c.h.b16 %v1862
        %v1984 = vunpack.c.l.b16 %v1863
        %v1985 = vunpack.c.h.b16 %v1863
        %v1986 = vunpack.c.l.b16 %v1864
        %v1987 = vunpack.c.h.b16 %v1864
        %v1988 = vunpack.c.l.b16 %v1865
        %v1989 = vunpack.c.h.b16 %v1865
        %v1990 = vunpack.c.l.b16 %v1866
        %v1991 = vunpack.c.h.b16 %v1866
        %v1992 = vunpack.c.l.b16 %v1867
        %v1993 = vunpack.c.h.b16 %v1867
        %v1994 = vunpack.c.l.b16 %v1868
        %v1995 = vunpack.c.h.b16 %v1868
        %v1996 = vunpack.c.l.b16 %v1869
        %v1997 = vunpack.c.h.b16 %v1869
        %v1998 = vunpack.c.l.b16 %v1870
        %v1999 = vunpack.c.h.b16 %v1870
        %v2000 = vunpack.c.l.b16 %v1871
        %v2001 = vunpack.c.h.b16 %v1871
        %v2002 = vunpack.c.l.b16 %v1872
        %v2003 = vunpack.c.h.b16 %v1872
        %v2004 = vunpack.c.l.b16 %v1873
        %v2005 = vunpack.c.h.b16 %v1873
        %v2006 = vunpack.c.l.b16 %v1874
        %v2007 = vunpack.c.h.b16 %v1874
        %v2008 = vunpack.c.l.b16 %v1875
        %v2009 = vunpack.c.h.b16 %v1875
        %v2010 = vunpack.c.l.b16 %v1876
        %v2011 = vunpack.c.h.b16 %v1876
        %v2012 = vunpack.c.l.b16 %v1877
        %v2013 = vunpack.c.h.b16 %v1877
        %v2014 = vunpack.c.l.b16 %v1878
        %v2015 = vunpack.c.h.b16 %v1878
        %v2016 = vunpack.c.l.b16 %v1879
        %v2017 = vunpack.c.h.b16 %v1879
        %v2018 = vunpack.c.l.b16 %v1880
        %v2019 = vunpack.c.h.b16 %v1880
        %v2020 = vunpack.c.l.b16 %v1881
        %v2021 = vunpack.c.h.b16 %v1881
        %v2022 = vunpack.c.l.b16 %v1882
        %v2023 = vunpack.c.h.b16 %v1882
        %v2024 = vpack.c.b16 %v1962, %v1960
        %v2025 = vpack.c.b16 %v1963, %v1961
        %v2026 = vpack.c.b16 %v1966, %v1964
        %v2027 = vpack.c.b16 %v1967, %v1965
        %v2028 = vpack.c.b16 %v1970, %v1968
        %v2029 = vpack.c.b16 %v1971, %v1969
        %v2030 = vpack.c.b16 %v1974, %v1972
        %v2031 = vpack.c.b16 %v1975, %v1973
        %v2032 = vpack.c.b16 %v1978, %v1976
        %v2033 = vpack.c.b16 %v1979, %v1977
        %v2034 = vpack.c.b16 %v1982, %v1980
        %v2035 = vpack.c.b16 %v1983, %v1981
        %v2036 = vpack.c.b16 %v1986, %v1984
        %v2037 = vpack.c.b16 %v1987, %v1985
        %v2038 = vpack.c.b16 %v1990, %v1988
        %v2039 = vpack.c.b16 %v1991, %v1989
        %v2040 = vpack.c.b16 %v1994, %v1992
        %v2041 = vpack.c.b16 %v1995, %v1993
        %v2042 = vpack.c.b16 %v1998, %v1996
        %v2043 = vpack.c.b16 %v1999, %v1997
        %v2044 = vpack.c.b16 %v2002, %v2000
        %v2045 = vpack.c.b16 %v2003, %v2001
        %v2046 = vpack.c.b16 %v2006, %v2004
        %v2047 = vpack.c.b16 %v2007, %v2005
        %v2048 = vpack.c.b16 %v2010, %v2008
        %v2049 = vpack.c.b16 %v2011, %v2009
        %v2050 = vpack.c.b16 %v2014, %v2012
        %v2051 = vpack.c.b16 %v2015, %v2013
        %v2052 = vpack.c.b16 %v2018, %v2016
        %v2053 = vpack.c.b16 %v2019, %v2017
        %v2054 = vpack.c.b16 %v2022, %v2020
        %v2055 = vpack.c.b16 %v2023, %v2021
        %2088 = vmatprep.subr.bf16.mxu0 %v2039
        %2089 = vmatpush1.bf16.msra.mxu0 %v2038
        %2090 = vmatprep.subr.bf16.mxu0 %v2037
        %2091 = vmatpush1.bf16.msra.mxu0 %v2036
        %2092 = vmatprep.subr.bf16.mxu0 %v2035
        %2093 = vmatpush1.bf16.msra.mxu0 %v2034
        %2094 = vmatprep.subr.bf16.mxu0 %v2033
        %2095 = vmatpush1.bf16.msra.mxu0 %v2032
        %2096 = vmatprep.subr.bf16.mxu0 %v2031
        %2097 = vmatpush1.bf16.msra.mxu0 %v2030
        %2098 = vmatprep.subr.bf16.mxu0 %v2029
        %2099 = vmatpush1.bf16.msra.mxu0 %v2028
        %2100 = vmatprep.subr.bf16.mxu0 %v2027
        %2101 = vmatpush1.bf16.msra.mxu0 %v2026
        %2102 = vmatprep.subr.bf16.mxu0 %v2025
        %2103 = vmatpush1.bf16.msra.mxu0 %v2024
        %2104 = vmatprep.subr.bf16.mxu0 %v2055
        %2105 = vmatpush2.bf16.msra.mxu0 %v2054
        %2106 = vmatprep.subr.bf16.mxu0 %v2053
        %2107 = vmatpush2.bf16.msra.mxu0 %v2052
        %2108 = vmatprep.subr.bf16.mxu0 %v2051
        %2109 = vmatpush2.bf16.msra.mxu0 %v2050
        %2110 = vmatprep.subr.bf16.mxu0 %v2049
        %2111 = vmatpush2.bf16.msra.mxu0 %v2048
        %2112 = vmatprep.subr.bf16.mxu0 %v2047
        %2113 = vmatpush2.bf16.msra.mxu0 %v2046
        %2114 = vmatprep.subr.bf16.mxu0 %v2045
        %2115 = vmatpush2.bf16.msra.mxu0 %v2044
        %2116 = vmatprep.subr.bf16.mxu0 %v2043
        %2117 = vmatpush2.bf16.msra.mxu0 %v2042
        %2118 = vmatprep.subr.bf16.mxu0 %v2041
        %2119 = vmatpush2.bf16.msra.mxu0 %v2040
        %2120 = vmatprep.mubr.bf16.mxu0 %v1907
        %2121 = vmatmul.mubr.bf16.gmra.mxu0 %v1895
        %v2122 = vpop.f32.mrf.mxu0
        %v2123 = vadd.f32 0.0, %v2122
        %v2124 = vpop.f32.mrf.mxu0
        %v2125 = vadd.f32 0.0, %v2124
        %v2126 = vpop.f32.mrf.mxu0
        %v2127 = vadd.f32 0.0, %v2126
        %v2128 = vpop.f32.mrf.mxu0
        %v2129 = vadd.f32 0.0, %v2128
        %2130 = vmatprep.mubr.bf16.mxu0 %v1923
        %2131 = vmatmul.mubr.bf16.gmra.mxu0 %v1915
        %v2132 = vpop.f32.mrf.mxu0
        %v2133 = vadd.f32 0.0, %v2132
        %v2134 = vpop.f32.mrf.mxu0
        %v2135 = vadd.f32 0.0, %v2134
        %v2136 = vpop.f32.mrf.mxu0
        %v2137 = vadd.f32 0.0, %v2136
        %v2138 = vpop.f32.mrf.mxu0
        %v2139 = vadd.f32 0.0, %v2138
        %2140 = vdwg.mxu0
        %2143 = vrot.lane.b32.xlu0 %v1836, 64
        %v2144 = vpop.permute.xlu0 %2143
        %2145 = vrot.lane.b32.xlu0 %v1837, 64
        %v2146 = vpop.permute.xlu0 %2145
        %v2155 = vunpack.c.l.b16 %v1838
        %v2156 = vunpack.c.h.b16 %v1838
        %v2157 = vunpack.c.l.b16 %v1839
        %v2158 = vunpack.c.h.b16 %v1839
        %v2159 = vunpack.c.l.b16 %v1840
        %v2160 = vunpack.c.h.b16 %v1840
        %v2161 = vunpack.c.l.b16 %v1841
        %v2162 = vunpack.c.h.b16 %v1841
        %v2163 = vunpack.c.l.b16 %v1842
        %v2164 = vunpack.c.h.b16 %v1842
        %v2165 = vunpack.c.l.b16 %v1843
        %v2166 = vunpack.c.h.b16 %v1843
        %v2167 = vunpack.c.l.b16 %v1844
        %v2168 = vunpack.c.h.b16 %v1844
        %v2169 = vunpack.c.l.b16 %v1845
        %v2170 = vunpack.c.h.b16 %v1845
        %v2171 = vpack.c.b16 %v2157, %v2155
        %v2172 = vpack.c.b16 %v2158, %v2156
        %v2173 = vpack.c.b16 %v2161, %v2159
        %v2174 = vpack.c.b16 %v2162, %v2160
        %v2175 = vpack.c.b16 %v2165, %v2163
        %v2176 = vpack.c.b16 %v2166, %v2164
        %v2177 = vpack.c.b16 %v2169, %v2167
        %v2178 = vpack.c.b16 %v2170, %v2168
        %vm2187 = vcmask 523264
        %v2189 = vsel %vm2187, %v2144, 0
        %v2192 = vsel %vm2187, %v2146, 0
        %2194 = vmatprep.subr.bf16.mxu0 0
        %2195 = vmatpush1.bf16.msra.mxu0 0
        %2196 = vmatprep.subr.bf16.mxu0 0
        %2197 = vmatpush1.bf16.msra.mxu0 0
        %2198 = vmatprep.subr.bf16.mxu0 0
        %2199 = vmatpush1.bf16.msra.mxu0 0
        %2200 = vmatprep.subr.bf16.mxu0 0
        %2201 = vmatpush1.bf16.msra.mxu0 0
        %2202 = vmatprep.subr.bf16.mxu0 %v2178
        %2203 = vmatpush1.bf16.msra.mxu0 %v2177
        %2204 = vmatprep.subr.bf16.mxu0 %v2176
        %2205 = vmatpush1.bf16.msra.mxu0 %v2175
        %2206 = vmatprep.subr.bf16.mxu0 %v2174
        %2207 = vmatpush1.bf16.msra.mxu0 %v2173
        %2208 = vmatprep.subr.bf16.mxu0 %v2172
        %2209 = vmatpush1.bf16.msra.mxu0 %v2171
        %2210 = vmatprep.subr.bf16.mxu0 0
        %2211 = vmatpush2.bf16.msra.mxu0 0
        %2212 = vmatprep.subr.bf16.mxu0 0
        %2213 = vmatpush2.bf16.msra.mxu0 0
        %2214 = vmatprep.subr.bf16.mxu0 0
        %2215 = vmatpush2.bf16.msra.mxu0 0
        %2216 = vmatprep.subr.bf16.mxu0 0
        %2217 = vmatpush2.bf16.msra.mxu0 0
        %2218 = vmatprep.subr.bf16.mxu0 0
        %2219 = vmatpush2.bf16.msra.mxu0 0
        %2220 = vmatprep.subr.bf16.mxu0 0
        %2221 = vmatpush2.bf16.msra.mxu0 0
        %2222 = vmatprep.subr.bf16.mxu0 0
        %2223 = vmatpush2.bf16.msra.mxu0 0
        %2224 = vmatprep.subr.bf16.mxu0 0
        %2225 = vmatpush2.bf16.msra.mxu0 0
        %2226 = vmatprep.mubr.bf16.mxu0 0
        %2227 = vmatmul.mubr.bf16.gmra.mxu0 %v2189
        %v2228 = vpop.f32.mrf.mxu0
        %v2229 = vadd.f32 %v2123, %v2228
        %v2230 = vpop.f32.mrf.mxu0
        %v2231 = vadd.f32 %v2125, %v2230
        %v2232 = vpop.f32.mrf.mxu0
        %v2233 = vadd.f32 %v2127, %v2232
        %v2234 = vpop.f32.mrf.mxu0
        %v2235 = vadd.f32 %v2129, %v2234
        %2236 = vmatprep.mubr.bf16.mxu0 0
        %2237 = vmatmul.mubr.bf16.gmra.mxu0 %v2192
        %v2238 = vpop.f32.mrf.mxu0
        %v2239 = vadd.f32 %v2133, %v2238
        %v2240 = vpop.f32.mrf.mxu0
        %v2241 = vadd.f32 %v2135, %v2240
        %v2242 = vpop.f32.mrf.mxu0
        %v2243 = vadd.f32 %v2137, %v2242
        %v2244 = vpop.f32.mrf.mxu0
        %v2245 = vadd.f32 %v2139, %v2244
        %2246 = vdwg.mxu0
        %v2247 = vld [vmem:[#allocation17] ss:$2 sm:$0x3]
        %v2249 = vlaneseq
        %v2250 = vshrl.u32 %v2249, 7
        %v2251 = vsub.s32 0, %v2250
        %v2252 = vrot.slane %v2247, %v2251
        %v2253 = vlaneseq
        %v2254 = vshrl.u32 %v2253, 7
        %v2255 = vsub.s32 1, %v2254
        %v2256 = vrot.slane %v2247, %v2255
        %v2259 = vadd.f32 %v2229, %v2252
        %v2260 = vadd.f32 %v2231, %v2256
        %v2261 = vadd.f32 %v2233, %v2252
        %v2262 = vadd.f32 %v2235, %v2256
        %v2263 = vadd.f32 %v2239, %v2252
        %v2264 = vadd.f32 %v2241, %v2256
        %v2265 = vadd.f32 %v2243, %v2252
        %v2266 = vadd.f32 %v2245, %v2256
        %vm2267 = vcmp.ge.f32.partialorder %v2259, 0.0
        %vm2268 = vcmp.ge.f32.partialorder %v2260, 0.0
        %vm2269 = vcmp.ge.f32.partialorder %v2261, 0.0
        %vm2270 = vcmp.ge.f32.partialorder %v2262, 0.0
        %vm2271 = vcmp.ge.f32.partialorder %v2263, 0.0
        %vm2272 = vcmp.ge.f32.partialorder %v2264, 0.0
        %vm2273 = vcmp.ge.f32.partialorder %v2265, 0.0
        %vm2274 = vcmp.ge.f32.partialorder %v2266, 0.0
        %s2275 = scalar_lea.vmem [#allocation17], 1
        %v2276 = vld [vmem:[%s2275] ss:$2 sm:$0x3]
        %v2278 = vlaneseq
        %v2279 = vshrl.u32 %v2278, 7
        %v2280 = vsub.s32 0, %v2279
        %v2281 = vrot.slane %v2276, %v2280
        %v2282 = vlaneseq
        %v2283 = vshrl.u32 %v2282, 7
        %v2284 = vsub.s32 1, %v2283
        %v2285 = vrot.slane %v2276, %v2284
        %v2288 = vmul.f32 %v2281, %v2259
        %v2289 = vmul.f32 %v2285, %v2260
        %v2290 = vmul.f32 %v2281, %v2261
        %v2291 = vmul.f32 %v2285, %v2262
        %v2292 = vmul.f32 %v2281, %v2263
        %v2293 = vmul.f32 %v2285, %v2264
        %v2294 = vmul.f32 %v2281, %v2265
        %v2295 = vmul.f32 %v2285, %v2266
        %v2296 = vsel %vm2267, %v2259, %v2288
        %v2297 = vsel %vm2268, %v2260, %v2289
        %v2298 = vsel %vm2269, %v2261, %v2290
        %v2299 = vsel %vm2270, %v2262, %v2291
        %v2300 = vsel %vm2271, %v2263, %v2292
        %v2301 = vsel %vm2272, %v2264, %v2293
        %v2302 = vsel %vm2273, %v2265, %v2294
        %v2303 = vsel %vm2274, %v2266, %v2295
        %2304 = vst.msk [vmem:[#allocation4] ss:$8 sm:$0x3] %vm1776, 0.0
        %2305 = vst.msk [vmem:[#allocation4] ss:$8 sm:$0x0] %vm1776, 0.0
        %v2314 = vrot.slane %v2296, 7
        %v2315 = vrot.slane %v2297, 7
        %v2316 = vrot.slane %v2298, 7
        %v2317 = vsel %vm1787, %v2314, %v2316
        %v2318 = vrot.slane %v2299, 7
        %v2319 = vsel %vm1787, %v2315, %v2318
        %v2320 = vrot.slane %v2300, 7
        %v2321 = vsel %vm1787, %v2316, %v2320
        %v2322 = vrot.slane %v2301, 7
        %v2323 = vsel %vm1787, %v2318, %v2322
        %v2324 = vrot.slane %v2302, 7
        %v2325 = vsel %vm1787, %v2320, %v2324
        %v2326 = vrot.slane %v2303, 7
        %v2327 = vsel %vm1787, %v2322, %v2326
        %2338 = vst [vmem:[#allocation4] sm:$0xfe] %v2314
        %2339 = vst [vmem:[#allocation4 + $0x8] sm:$0xfe] %v2315
        %2340 = vst [vmem:[#allocation4 + $0x10] sm:$0xff] %v2317
        %2341 = vst [vmem:[#allocation4 + $0x18] sm:$0xff] %v2319
        %2342 = vst [vmem:[#allocation4 + $0x20] sm:$0xff] %v2321
        %2343 = vst [vmem:[#allocation4 + $0x28] sm:$0xff] %v2323
        %2344 = vst [vmem:[#allocation4 + $0x30] sm:$0xff] %v2325
        %2345 = vst [vmem:[#allocation4 + $0x38] sm:$0xff] %v2327
        %2346 = vst [vmem:[#allocation4 + $0x40] sm:$0x1] %v2324
        %2347 = vst [vmem:[#allocation4 + $0x48] sm:$0x1] %v2326
        %s2348 = scalar_lea.vmem [#allocation4], 65
        %2349 = vst.msk [vmem:[%s2348] ss:$8 sm:$0x3] %vm1776, 0.0
        %2350 = vst.msk [vmem:[%s2348] ss:$8 sm:$0x0] %vm1776, 0.0
        %v2351 = vld [vmem:[#allocation4 + $0x8] sm:$0xff]
        %v2352 = vld [vmem:[#allocation4 + $0x18] sm:$0xff]
        %v2353 = vld [vmem:[#allocation4 + $0x28] sm:$0xff]
        %v2354 = vld [vmem:[#allocation4 + $0x38] sm:$0xff]
        %v2355 = vld [vmem:[#allocation4] sm:$0xfe]
        %v2356 = vld [vmem:[#allocation4 + $0x8] sm:$0xfe]
        %v2357 = vld [vmem:[#allocation4 + $0x10] sm:$0xff]
        %v2358 = vld [vmem:[#allocation4 + $0x20] sm:$0xff]
        %v2359 = vld [vmem:[#allocation4 + $0x30] sm:$0xff]
        %v2360 = vld [vmem:[#allocation4 + $0x40] sm:$0x1]
        %v2361 = vld [vmem:[#allocation4 + $0x48] sm:$0x1]
        %v2362 = vpack.c.bf16 %v2352, %v2351
        %v2363 = vpack.c.bf16 %v2354, %v2353
        %v2364 = vld [vmem:[#allocation18] sm:$0xff]
        %v2365 = vld [vmem:[#allocation18 + $0x8] sm:$0xff]
        %v2366 = vld [vmem:[#allocation18 + $0x10] sm:$0xff]
        %v2367 = vld [vmem:[#allocation18 + $0x18] sm:$0xff]
        %v2368 = vld [vmem:[#allocation18 + $0x20] sm:$0xff]
        %v2369 = vld [vmem:[#allocation18 + $0x28] sm:$0xff]
        %v2370 = vld [vmem:[#allocation18 + $0x30] sm:$0xff]
        %v2371 = vld [vmem:[#allocation18 + $0x38] sm:$0xff]
        %v2372 = vld [vmem:[#allocation18 + $0x40] sm:$0xff]
        %v2373 = vld [vmem:[#allocation18 + $0x48] sm:$0xff]
        %v2374 = vld [vmem:[#allocation18 + $0x50] sm:$0xff]
        %v2375 = vld [vmem:[#allocation18 + $0x58] sm:$0xff]
        %v2376 = vld [vmem:[#allocation18 + $0x60] sm:$0xff]
        %v2377 = vld [vmem:[#allocation18 + $0x68] sm:$0xff]
        %v2378 = vld [vmem:[#allocation18 + $0x70] sm:$0xff]
        %v2379 = vld [vmem:[#allocation18 + $0x78] sm:$0xff]
        %v2380 = vpack.c.bf16 %v2357, %v2355
        %v2381 = vpack.c.bf16 %v2352, %v2356
        %v2382 = vpack.c.bf16 %v2359, %v2358
        %v2383 = vpack.c.bf16 %v2360, %v2360
        %v2384 = vpack.c.bf16 %v2361, %v2361
        %v2385 = vld [vmem:[%s17] sm:$0xff]
        %v2386 = vld [vmem:[%s17 + $0x8] sm:$0xff]
        %v2387 = vld [vmem:[%s17 + $0x10] sm:$0xff]
        %v2388 = vld [vmem:[%s17 + $0x18] sm:$0xff]
        %v2389 = vld [vmem:[%s17 + $0x20] sm:$0xff]
        %v2390 = vld [vmem:[%s17 + $0x28] sm:$0xff]
        %v2391 = vld [vmem:[%s17 + $0x30] sm:$0xff]
        %v2392 = vld [vmem:[%s17 + $0x38] sm:$0xff]
        %v2393 = vld [vmem:[%s17 + $0x40] sm:$0xff]
        %v2394 = vld [vmem:[%s17 + $0x48] sm:$0xff]
        %v2395 = vld [vmem:[%s17 + $0x50] sm:$0xff]
        %v2396 = vld [vmem:[%s17 + $0x58] sm:$0xff]
        %v2397 = vld [vmem:[%s17 + $0x60] sm:$0xff]
        %v2398 = vld [vmem:[%s17 + $0x68] sm:$0xff]
        %v2399 = vld [vmem:[%s17 + $0x70] sm:$0xff]
        %v2400 = vld [vmem:[%s17 + $0x78] sm:$0xff]
        %v2401 = vld [vmem:[%s17 + $0x80] sm:$0xff]
        %v2402 = vld [vmem:[%s17 + $0x88] sm:$0xff]
        %v2403 = vld [vmem:[%s17 + $0x90] sm:$0xff]
        %v2404 = vld [vmem:[%s17 + $0x98] sm:$0xff]
        %v2405 = vld [vmem:[%s17 + $0xa0] sm:$0xff]
        %v2406 = vld [vmem:[%s17 + $0xa8] sm:$0xff]
        %v2407 = vld [vmem:[%s17 + $0xb0] sm:$0xff]
        %v2408 = vld [vmem:[%s17 + $0xb8] sm:$0xff]
        %v2409 = vld [vmem:[%s17 + $0xc0] sm:$0xff]
        %v2410 = vld [vmem:[%s17 + $0xc8] sm:$0xff]
        %v2411 = vld [vmem:[%s17 + $0xd0] sm:$0xff]
        %v2412 = vld [vmem:[%s17 + $0xd8] sm:$0xff]
        %v2413 = vld [vmem:[%s17 + $0xe0] sm:$0xff]
        %v2414 = vld [vmem:[%s17 + $0xe8] sm:$0xff]
        %v2415 = vld [vmem:[%s17 + $0xf0] sm:$0xff]
        %v2416 = vld [vmem:[%s17 + $0xf8] sm:$0xff]
        %v2418 = vshrl.u32 %v2380, 16
        %v2420 = vshll.u32 %v2380, 16
        %v2422 = vrot.slane %v2420, 1
        %v2423 = vor.u32 %v2418, %v2422
        %v2425 = vshll.u32 %v2382, 16
        %v2427 = vrot.slane %v2425, 1
        %v2428 = vsel %vm1883, %v2423, %v2427
        %v2430 = vshrl.u32 %v2381, 16
        %v2432 = vshll.u32 %v2381, 16
        %v2434 = vrot.slane %v2432, 1
        %v2435 = vor.u32 %v2430, %v2434
        %v2437 = vshll.u32 %v2363, 16
        %v2439 = vrot.slane %v2437, 1
        %v2440 = vsel %vm1883, %v2435, %v2439
        %v2441 = vshrl.u32 %v2382, 16
        %v2443 = vor.u32 %v2441, %v2427
        %v2445 = vshll.u32 %v2383, 16
        %v2447 = vrot.slane %v2445, 1
        %v2448 = vsel %vm1883, %v2443, %v2447
        %v2449 = vshrl.u32 %v2363, 16
        %v2451 = vor.u32 %v2449, %v2439
        %v2453 = vshll.u32 %v2384, 16
        %v2455 = vrot.slane %v2453, 1
        %v2456 = vsel %vm1883, %v2451, %v2455
        %v2493 = vunpack.c.l.b16 %v2385
        %v2494 = vunpack.c.h.b16 %v2385
        %v2495 = vunpack.c.l.b16 %v2386
        %v2496 = vunpack.c.h.b16 %v2386
        %v2497 = vunpack.c.l.b16 %v2387
        %v2498 = vunpack.c.h.b16 %v2387
        %v2499 = vunpack.c.l.b16 %v2388
        %v2500 = vunpack.c.h.b16 %v2388
        %v2501 = vunpack.c.l.b16 %v2389
        %v2502 = vunpack.c.h.b16 %v2389
        %v2503 = vunpack.c.l.b16 %v2390
        %v2504 = vunpack.c.h.b16 %v2390
        %v2505 = vunpack.c.l.b16 %v2391
        %v2506 = vunpack.c.h.b16 %v2391
        %v2507 = vunpack.c.l.b16 %v2392
        %v2508 = vunpack.c.h.b16 %v2392
        %v2509 = vunpack.c.l.b16 %v2393
        %v2510 = vunpack.c.h.b16 %v2393
        %v2511 = vunpack.c.l.b16 %v2394
        %v2512 = vunpack.c.h.b16 %v2394
        %v2513 = vunpack.c.l.b16 %v2395
        %v2514 = vunpack.c.h.b16 %v2395
        %v2515 = vunpack.c.l.b16 %v2396
        %v2516 = vunpack.c.h.b16 %v2396
        %v2517 = vunpack.c.l.b16 %v2397
        %v2518 = vunpack.c.h.b16 %v2397
        %v2519 = vunpack.c.l.b16 %v2398
        %v2520 = vunpack.c.h.b16 %v2398
        %v2521 = vunpack.c.l.b16 %v2399
        %v2522 = vunpack.c.h.b16 %v2399
        %v2523 = vunpack.c.l.b16 %v2400
        %v2524 = vunpack.c.h.b16 %v2400
        %v2525 = vunpack.c.l.b16 %v2401
        %v2526 = vunpack.c.h.b16 %v2401
        %v2527 = vunpack.c.l.b16 %v2402
        %v2528 = vunpack.c.h.b16 %v2402
        %v2529 = vunpack.c.l.b16 %v2403
        %v2530 = vunpack.c.h.b16 %v2403
        %v2531 = vunpack.c.l.b16 %v2404
        %v2532 = vunpack.c.h.b16 %v2404
        %v2533 = vunpack.c.l.b16 %v2405
        %v2534 = vunpack.c.h.b16 %v2405
        %v2535 = vunpack.c.l.b16 %v2406
        %v2536 = vunpack.c.h.b16 %v2406
        %v2537 = vunpack.c.l.b16 %v2407
        %v2538 = vunpack.c.h.b16 %v2407
        %v2539 = vunpack.c.l.b16 %v2408
        %v2540 = vunpack.c.h.b16 %v2408
        %v2541 = vunpack.c.l.b16 %v2409
        %v2542 = vunpack.c.h.b16 %v2409
        %v2543 = vunpack.c.l.b16 %v2410
        %v2544 = vunpack.c.h.b16 %v2410
        %v2545 = vunpack.c.l.b16 %v2411
        %v2546 = vunpack.c.h.b16 %v2411
        %v2547 = vunpack.c.l.b16 %v2412
        %v2548 = vunpack.c.h.b16 %v2412
        %v2549 = vunpack.c.l.b16 %v2413
        %v2550 = vunpack.c.h.b16 %v2413
        %v2551 = vunpack.c.l.b16 %v2414
        %v2552 = vunpack.c.h.b16 %v2414
        %v2553 = vunpack.c.l.b16 %v2415
        %v2554 = vunpack.c.h.b16 %v2415
        %v2555 = vunpack.c.l.b16 %v2416
        %v2556 = vunpack.c.h.b16 %v2416
        %v2557 = vpack.c.b16 %v2495, %v2493
        %v2558 = vpack.c.b16 %v2496, %v2494
        %v2559 = vpack.c.b16 %v2499, %v2497
        %v2560 = vpack.c.b16 %v2500, %v2498
        %v2561 = vpack.c.b16 %v2503, %v2501
        %v2562 = vpack.c.b16 %v2504, %v2502
        %v2563 = vpack.c.b16 %v2507, %v2505
        %v2564 = vpack.c.b16 %v2508, %v2506
        %v2565 = vpack.c.b16 %v2511, %v2509
        %v2566 = vpack.c.b16 %v2512, %v2510
        %v2567 = vpack.c.b16 %v2515, %v2513
        %v2568 = vpack.c.b16 %v2516, %v2514
        %v2569 = vpack.c.b16 %v2519, %v2517
        %v2570 = vpack.c.b16 %v2520, %v2518
        %v2571 = vpack.c.b16 %v2523, %v2521
        %v2572 = vpack.c.b16 %v2524, %v2522
        %v2573 = vpack.c.b16 %v2527, %v2525
        %v2574 = vpack.c.b16 %v2528, %v2526
        %v2575 = vpack.c.b16 %v2531, %v2529
        %v2576 = vpack.c.b16 %v2532, %v2530
        %v2577 = vpack.c.b16 %v2535, %v2533
        %v2578 = vpack.c.b16 %v2536, %v2534
        %v2579 = vpack.c.b16 %v2539, %v2537
        %v2580 = vpack.c.b16 %v2540, %v2538
        %v2581 = vpack.c.b16 %v2543, %v2541
        %v2582 = vpack.c.b16 %v2544, %v2542
        %v2583 = vpack.c.b16 %v2547, %v2545
        %v2584 = vpack.c.b16 %v2548, %v2546
        %v2585 = vpack.c.b16 %v2551, %v2549
        %v2586 = vpack.c.b16 %v2552, %v2550
        %v2587 = vpack.c.b16 %v2555, %v2553
        %v2588 = vpack.c.b16 %v2556, %v2554
        %2621 = vmatprep.subr.bf16.mxu0 %v2572
        %2622 = vmatpush1.bf16.msra.mxu0 %v2571
        %2623 = vmatprep.subr.bf16.mxu0 %v2570
        %2624 = vmatpush1.bf16.msra.mxu0 %v2569
        %2625 = vmatprep.subr.bf16.mxu0 %v2568
        %2626 = vmatpush1.bf16.msra.mxu0 %v2567
        %2627 = vmatprep.subr.bf16.mxu0 %v2566
        %2628 = vmatpush1.bf16.msra.mxu0 %v2565
        %2629 = vmatprep.subr.bf16.mxu0 %v2564
        %2630 = vmatpush1.bf16.msra.mxu0 %v2563
        %2631 = vmatprep.subr.bf16.mxu0 %v2562
        %2632 = vmatpush1.bf16.msra.mxu0 %v2561
        %2633 = vmatprep.subr.bf16.mxu0 %v2560
        %2634 = vmatpush1.bf16.msra.mxu0 %v2559
        %2635 = vmatprep.subr.bf16.mxu0 %v2558
        %2636 = vmatpush1.bf16.msra.mxu0 %v2557
        %2637 = vmatprep.subr.bf16.mxu0 %v2588
        %2638 = vmatpush2.bf16.msra.mxu0 %v2587
        %2639 = vmatprep.subr.bf16.mxu0 %v2586
        %2640 = vmatpush2.bf16.msra.mxu0 %v2585
        %2641 = vmatprep.subr.bf16.mxu0 %v2584
        %2642 = vmatpush2.bf16.msra.mxu0 %v2583
        %2643 = vmatprep.subr.bf16.mxu0 %v2582
        %2644 = vmatpush2.bf16.msra.mxu0 %v2581
        %2645 = vmatprep.subr.bf16.mxu0 %v2580
        %2646 = vmatpush2.bf16.msra.mxu0 %v2579
        %2647 = vmatprep.subr.bf16.mxu0 %v2578
        %2648 = vmatpush2.bf16.msra.mxu0 %v2577
        %2649 = vmatprep.subr.bf16.mxu0 %v2576
        %2650 = vmatpush2.bf16.msra.mxu0 %v2575
        %2651 = vmatprep.subr.bf16.mxu0 %v2574
        %2652 = vmatpush2.bf16.msra.mxu0 %v2573
        %2653 = vmatprep.mubr.bf16.mxu0 %v2440
        %2654 = vmatmul.mubr.bf16.gmra.mxu0 %v2428
        %v2655 = vpop.f32.mrf.mxu0
        %v2656 = vadd.f32 0.0, %v2655
        %v2657 = vpop.f32.mrf.mxu0
        %v2658 = vadd.f32 0.0, %v2657
        %v2659 = vpop.f32.mrf.mxu0
        %v2660 = vadd.f32 0.0, %v2659
        %v2661 = vpop.f32.mrf.mxu0
        %v2662 = vadd.f32 0.0, %v2661
        %2663 = vmatprep.mubr.bf16.mxu0 %v2456
        %2664 = vmatmul.mubr.bf16.gmra.mxu0 %v2448
        %v2665 = vpop.f32.mrf.mxu0
        %v2666 = vadd.f32 0.0, %v2665
        %v2667 = vpop.f32.mrf.mxu0
        %v2668 = vadd.f32 0.0, %v2667
        %v2669 = vpop.f32.mrf.mxu0
        %v2670 = vadd.f32 0.0, %v2669
        %v2671 = vpop.f32.mrf.mxu0
        %v2672 = vadd.f32 0.0, %v2671
        %2673 = vdwg.mxu0
        %v2690 = vunpack.c.l.b16 %v2364
        %v2691 = vunpack.c.h.b16 %v2364
        %v2692 = vunpack.c.l.b16 %v2365
        %v2693 = vunpack.c.h.b16 %v2365
        %v2694 = vunpack.c.l.b16 %v2366
        %v2695 = vunpack.c.h.b16 %v2366
        %v2696 = vunpack.c.l.b16 %v2367
        %v2697 = vunpack.c.h.b16 %v2367
        %v2698 = vunpack.c.l.b16 %v2368
        %v2699 = vunpack.c.h.b16 %v2368
        %v2700 = vunpack.c.l.b16 %v2369
        %v2701 = vunpack.c.h.b16 %v2369
        %v2702 = vunpack.c.l.b16 %v2370
        %v2703 = vunpack.c.h.b16 %v2370
        %v2704 = vunpack.c.l.b16 %v2371
        %v2705 = vunpack.c.h.b16 %v2371
        %v2706 = vunpack.c.l.b16 %v2372
        %v2707 = vunpack.c.h.b16 %v2372
        %v2708 = vunpack.c.l.b16 %v2373
        %v2709 = vunpack.c.h.b16 %v2373
        %v2710 = vunpack.c.l.b16 %v2374
        %v2711 = vunpack.c.h.b16 %v2374
        %v2712 = vunpack.c.l.b16 %v2375
        %v2713 = vunpack.c.h.b16 %v2375
        %v2714 = vunpack.c.l.b16 %v2376
        %v2715 = vunpack.c.h.b16 %v2376
        %v2716 = vunpack.c.l.b16 %v2377
        %v2717 = vunpack.c.h.b16 %v2377
        %v2718 = vunpack.c.l.b16 %v2378
        %v2719 = vunpack.c.h.b16 %v2378
        %v2720 = vunpack.c.l.b16 %v2379
        %v2721 = vunpack.c.h.b16 %v2379
        %v2722 = vpack.c.b16 %v2692, %v2690
        %v2723 = vpack.c.b16 %v2693, %v2691
        %v2724 = vpack.c.b16 %v2696, %v2694
        %v2725 = vpack.c.b16 %v2697, %v2695
        %v2726 = vpack.c.b16 %v2700, %v2698
        %v2727 = vpack.c.b16 %v2701, %v2699
        %v2728 = vpack.c.b16 %v2704, %v2702
        %v2729 = vpack.c.b16 %v2705, %v2703
        %v2730 = vpack.c.b16 %v2708, %v2706
        %v2731 = vpack.c.b16 %v2709, %v2707
        %v2732 = vpack.c.b16 %v2712, %v2710
        %v2733 = vpack.c.b16 %v2713, %v2711
        %v2734 = vpack.c.b16 %v2716, %v2714
        %v2735 = vpack.c.b16 %v2717, %v2715
        %v2736 = vpack.c.b16 %v2720, %v2718
        %v2737 = vpack.c.b16 %v2721, %v2719
        %2754 = vmatprep.subr.bf16.mxu0 %v2737
        %2755 = vmatpush1.bf16.msra.mxu0 %v2736
        %2756 = vmatprep.subr.bf16.mxu0 %v2735
        %2757 = vmatpush1.bf16.msra.mxu0 %v2734
        %2758 = vmatprep.subr.bf16.mxu0 %v2733
        %2759 = vmatpush1.bf16.msra.mxu0 %v2732
        %2760 = vmatprep.subr.bf16.mxu0 %v2731
        %2761 = vmatpush1.bf16.msra.mxu0 %v2730
        %2762 = vmatprep.subr.bf16.mxu0 %v2729
        %2763 = vmatpush1.bf16.msra.mxu0 %v2728
        %2764 = vmatprep.subr.bf16.mxu0 %v2727
        %2765 = vmatpush1.bf16.msra.mxu0 %v2726
        %2766 = vmatprep.subr.bf16.mxu0 %v2725
        %2767 = vmatpush1.bf16.msra.mxu0 %v2724
        %2768 = vmatprep.subr.bf16.mxu0 %v2723
        %2769 = vmatpush1.bf16.msra.mxu0 %v2722
        %2770 = vmatprep.subr.bf16.mxu0 0
        %2771 = vmatpush2.bf16.msra.mxu0 0
        %2772 = vmatprep.subr.bf16.mxu0 0
        %2773 = vmatpush2.bf16.msra.mxu0 0
        %2774 = vmatprep.subr.bf16.mxu0 0
        %2775 = vmatpush2.bf16.msra.mxu0 0
        %2776 = vmatprep.subr.bf16.mxu0 0
        %2777 = vmatpush2.bf16.msra.mxu0 0
        %2778 = vmatprep.subr.bf16.mxu0 0
        %2779 = vmatpush2.bf16.msra.mxu0 0
        %2780 = vmatprep.subr.bf16.mxu0 0
        %2781 = vmatpush2.bf16.msra.mxu0 0
        %2782 = vmatprep.subr.bf16.mxu0 0
        %2783 = vmatpush2.bf16.msra.mxu0 0
        %2784 = vmatprep.subr.bf16.mxu0 0
        %2785 = vmatpush2.bf16.msra.mxu0 0
        %2786 = vmatprep.mubr.bf16.mxu0 0
        %2787 = vmatmul.mubr.bf16.gmra.mxu0 %v2362
        %v2788 = vpop.f32.mrf.mxu0
        %v2789 = vadd.f32 %v2656, %v2788
        %v2790 = vpop.f32.mrf.mxu0
        %v2791 = vadd.f32 %v2658, %v2790
        %v2792 = vpop.f32.mrf.mxu0
        %v2793 = vadd.f32 %v2660, %v2792
        %v2794 = vpop.f32.mrf.mxu0
        %v2795 = vadd.f32 %v2662, %v2794
        %2796 = vmatprep.mubr.bf16.mxu0 0
        %2797 = vmatmul.mubr.bf16.gmra.mxu0 %v2363
        %v2798 = vpop.f32.mrf.mxu0
        %v2799 = vadd.f32 %v2666, %v2798
        %v2800 = vpop.f32.mrf.mxu0
        %v2801 = vadd.f32 %v2668, %v2800
        %v2802 = vpop.f32.mrf.mxu0
        %v2803 = vadd.f32 %v2670, %v2802
        %v2804 = vpop.f32.mrf.mxu0
        %v2805 = vadd.f32 %v2672, %v2804
        %2806 = vdwg.mxu0
        %v2807 = vld [vmem:[#allocation20] ss:$2 sm:$0x3]
        %v2809 = vlaneseq
        %v2810 = vshrl.u32 %v2809, 7
        %v2811 = vsub.s32 0, %v2810
        %v2812 = vrot.slane %v2807, %v2811
        %v2813 = vlaneseq
        %v2814 = vshrl.u32 %v2813, 7
        %v2815 = vsub.s32 1, %v2814
        %v2816 = vrot.slane %v2807, %v2815
        %v2819 = vadd.f32 %v2789, %v2812
        %v2820 = vadd.f32 %v2791, %v2816
        %v2821 = vadd.f32 %v2793, %v2812
        %v2822 = vadd.f32 %v2795, %v2816
        %v2823 = vadd.f32 %v2799, %v2812
        %v2824 = vadd.f32 %v2801, %v2816
        %v2825 = vadd.f32 %v2803, %v2812
        %v2826 = vadd.f32 %v2805, %v2816
        %vm2827 = vcmp.ge.f32.partialorder %v2819, 0.0
        %vm2828 = vcmp.ge.f32.partialorder %v2820, 0.0
        %vm2829 = vcmp.ge.f32.partialorder %v2821, 0.0
        %vm2830 = vcmp.ge.f32.partialorder %v2822, 0.0
        %vm2831 = vcmp.ge.f32.partialorder %v2823, 0.0
        %vm2832 = vcmp.ge.f32.partialorder %v2824, 0.0
        %vm2833 = vcmp.ge.f32.partialorder %v2825, 0.0
        %vm2834 = vcmp.ge.f32.partialorder %v2826, 0.0
        %s2835 = scalar_lea.vmem [#allocation20], 1
        %v2836 = vld [vmem:[%s2835] ss:$2 sm:$0x3]
        %v2838 = vlaneseq
        %v2839 = vshrl.u32 %v2838, 7
        %v2840 = vsub.s32 0, %v2839
        %v2841 = vrot.slane %v2836, %v2840
        %v2842 = vlaneseq
        %v2843 = vshrl.u32 %v2842, 7
        %v2844 = vsub.s32 1, %v2843
        %v2845 = vrot.slane %v2836, %v2844
        %v2848 = vmul.f32 %v2841, %v2819
        %v2849 = vmul.f32 %v2845, %v2820
        %v2850 = vmul.f32 %v2841, %v2821
        %v2851 = vmul.f32 %v2845, %v2822
        %v2852 = vmul.f32 %v2841, %v2823
        %v2853 = vmul.f32 %v2845, %v2824
        %v2854 = vmul.f32 %v2841, %v2825
        %v2855 = vmul.f32 %v2845, %v2826
        %v2856 = vsel %vm2827, %v2819, %v2848
        %v2857 = vsel %vm2828, %v2820, %v2849
        %v2858 = vsel %vm2829, %v2821, %v2850
        %v2859 = vsel %vm2830, %v2822, %v2851
        %v2860 = vsel %vm2831, %v2823, %v2852
        %v2861 = vsel %vm2832, %v2824, %v2853
        %v2862 = vsel %vm2833, %v2825, %v2854
        %v2863 = vsel %vm2834, %v2826, %v2855
        %2864 = vst.msk [vmem:[#allocation5] ss:$8 sm:$0x3] %vm1776, 0.0
        %2865 = vst.msk [vmem:[#allocation5] ss:$8 sm:$0x0] %vm1776, 0.0
        %v2874 = vrot.slane %v2856, 7
        %v2875 = vrot.slane %v2857, 7
        %v2876 = vrot.slane %v2858, 7
        %v2877 = vsel %vm1787, %v2874, %v2876
        %v2878 = vrot.slane %v2859, 7
        %v2879 = vsel %vm1787, %v2875, %v2878
        %v2880 = vrot.slane %v2860, 7
        %v2881 = vsel %vm1787, %v2876, %v2880
        %v2882 = vrot.slane %v2861, 7
        %v2883 = vsel %vm1787, %v2878, %v2882
        %v2884 = vrot.slane %v2862, 7
        %v2885 = vsel %vm1787, %v2880, %v2884
        %v2886 = vrot.slane %v2863, 7
        %v2887 = vsel %vm1787, %v2882, %v2886
        %2898 = vst [vmem:[#allocation5] sm:$0xfe] %v2874
        %2899 = vst [vmem:[#allocation5 + $0x8] sm:$0xfe] %v2875
        %2900 = vst [vmem:[#allocation5 + $0x10] sm:$0xff] %v2877
        %2901 = vst [vmem:[#allocation5 + $0x18] sm:$0xff] %v2879
        %2902 = vst [vmem:[#allocation5 + $0x20] sm:$0xff] %v2881
        %2903 = vst [vmem:[#allocation5 + $0x28] sm:$0xff] %v2883
        %2904 = vst [vmem:[#allocation5 + $0x30] sm:$0xff] %v2885
        %2905 = vst [vmem:[#allocation5 + $0x38] sm:$0xff] %v2887
        %2906 = vst [vmem:[#allocation5 + $0x40] sm:$0x1] %v2884
        %2907 = vst [vmem:[#allocation5 + $0x48] sm:$0x1] %v2886
        %s2908 = scalar_lea.vmem [#allocation5], 65
        %2909 = vst.msk [vmem:[%s2908] ss:$8 sm:$0x3] %vm1776, 0.0
        %2910 = vst.msk [vmem:[%s2908] ss:$8 sm:$0x0] %vm1776, 0.0
        %v2911 = vld [vmem:[#allocation5] sm:$0xff]
        %v2912 = vld [vmem:[#allocation5 + $0x8] sm:$0xff]
        %v2913 = vld [vmem:[#allocation5 + $0x10] sm:$0xff]
        %v2914 = vld [vmem:[#allocation5 + $0x18] sm:$0xff]
        %v2915 = vld [vmem:[#allocation5 + $0x20] sm:$0xff]
        %v2916 = vld [vmem:[#allocation5 + $0x28] sm:$0xff]
        %v2917 = vld [vmem:[#allocation5 + $0x30] sm:$0xff]
        %v2918 = vld [vmem:[#allocation5 + $0x38] sm:$0xff]
        %v2919 = vld [vmem:[#allocation5] sm:$0xfe]
        %v2920 = vld [vmem:[#allocation5 + $0x8] sm:$0xfe]
        %v2921 = vld [vmem:[#allocation5 + $0x40] sm:$0x1]
        %v2922 = vld [vmem:[#allocation5 + $0x48] sm:$0x1]
        %v2923 = vpack.c.bf16 %v2913, %v2911
        %v2924 = vpack.c.bf16 %v2914, %v2912
        %v2925 = vpack.c.bf16 %v2917, %v2915
        %v2926 = vpack.c.bf16 %v2918, %v2916
        %v2927 = vld [vmem:[#allocation21] sm:$0xff]
        %v2928 = vld [vmem:[#allocation21 + $0x8] sm:$0xff]
        %v2929 = vld [vmem:[#allocation21 + $0x10] sm:$0xff]
        %v2930 = vld [vmem:[#allocation21 + $0x18] sm:$0xff]
        %v2931 = vld [vmem:[#allocation21 + $0x20] sm:$0xff]
        %v2932 = vld [vmem:[#allocation21 + $0x28] sm:$0xff]
        %v2933 = vld [vmem:[#allocation21 + $0x30] sm:$0xff]
        %v2934 = vld [vmem:[#allocation21 + $0x38] sm:$0xff]
        %v2935 = vld [vmem:[#allocation21 + $0x40] sm:$0xff]
        %v2936 = vld [vmem:[#allocation21 + $0x48] sm:$0xff]
        %v2937 = vld [vmem:[#allocation21 + $0x50] sm:$0xff]
        %v2938 = vld [vmem:[#allocation21 + $0x58] sm:$0xff]
        %v2939 = vld [vmem:[#allocation21 + $0x60] sm:$0xff]
        %v2940 = vld [vmem:[#allocation21 + $0x68] sm:$0xff]
        %v2941 = vld [vmem:[#allocation21 + $0x70] sm:$0xff]
        %v2942 = vld [vmem:[#allocation21 + $0x78] sm:$0xff]
        %v2943 = vld [vmem:[#allocation21 + $0x80] sm:$0xff]
        %v2944 = vld [vmem:[#allocation21 + $0x88] sm:$0xff]
        %v2945 = vld [vmem:[#allocation21 + $0x90] sm:$0xff]
        %v2946 = vld [vmem:[#allocation21 + $0x98] sm:$0xff]
        %v2947 = vld [vmem:[#allocation21 + $0xa0] sm:$0xff]
        %v2948 = vld [vmem:[#allocation21 + $0xa8] sm:$0xff]
        %v2949 = vld [vmem:[#allocation21 + $0xb0] sm:$0xff]
        %v2950 = vld [vmem:[#allocation21 + $0xb8] sm:$0xff]
        %v2951 = vld [vmem:[#allocation21 + $0xc0] sm:$0xff]
        %v2952 = vld [vmem:[#allocation21 + $0xc8] sm:$0xff]
        %v2953 = vld [vmem:[#allocation21 + $0xd0] sm:$0xff]
        %v2954 = vld [vmem:[#allocation21 + $0xd8] sm:$0xff]
        %v2955 = vld [vmem:[#allocation21 + $0xe0] sm:$0xff]
        %v2956 = vld [vmem:[#allocation21 + $0xe8] sm:$0xff]
        %v2957 = vld [vmem:[#allocation21 + $0xf0] sm:$0xff]
        %v2958 = vld [vmem:[#allocation21 + $0xf8] sm:$0xff]
        %v2959 = vpack.c.bf16 %v2913, %v2919
        %v2960 = vpack.c.bf16 %v2914, %v2920
        %v2961 = vpack.c.bf16 %v2921, %v2921
        %v2962 = vpack.c.bf16 %v2922, %v2922
        %v2963 = vld [vmem:[#allocation23] sm:$0xff]
        %v2964 = vld [vmem:[#allocation23 + $0x8] sm:$0xff]
        %v2965 = vld [vmem:[#allocation23 + $0x10] sm:$0xff]
        %v2966 = vld [vmem:[#allocation23 + $0x18] sm:$0xff]
        %v2967 = vld [vmem:[#allocation23 + $0x20] sm:$0xff]
        %v2968 = vld [vmem:[#allocation23 + $0x28] sm:$0xff]
        %v2969 = vld [vmem:[#allocation23 + $0x30] sm:$0xff]
        %v2970 = vld [vmem:[#allocation23 + $0x38] sm:$0xff]
        %v2971 = vld [vmem:[#allocation23 + $0x40] sm:$0xff]
        %v2972 = vld [vmem:[#allocation23 + $0x48] sm:$0xff]
        %v2973 = vld [vmem:[#allocation23 + $0x50] sm:$0xff]
        %v2974 = vld [vmem:[#allocation23 + $0x58] sm:$0xff]
        %v2975 = vld [vmem:[#allocation23 + $0x60] sm:$0xff]
        %v2976 = vld [vmem:[#allocation23 + $0x68] sm:$0xff]
        %v2977 = vld [vmem:[#allocation23 + $0x70] sm:$0xff]
        %v2978 = vld [vmem:[#allocation23 + $0x78] sm:$0xff]
        %v2979 = vld [vmem:[#allocation23 + $0x80] sm:$0xff]
        %v2980 = vld [vmem:[#allocation23 + $0x88] sm:$0xff]
        %v2981 = vld [vmem:[#allocation23 + $0x90] sm:$0xff]
        %v2982 = vld [vmem:[#allocation23 + $0x98] sm:$0xff]
        %v2983 = vld [vmem:[#allocation23 + $0xa0] sm:$0xff]
        %v2984 = vld [vmem:[#allocation23 + $0xa8] sm:$0xff]
        %v2985 = vld [vmem:[#allocation23 + $0xb0] sm:$0xff]
        %v2986 = vld [vmem:[#allocation23 + $0xb8] sm:$0xff]
        %v2987 = vld [vmem:[#allocation23 + $0xc0] sm:$0xff]
        %v2988 = vld [vmem:[#allocation23 + $0xc8] sm:$0xff]
        %v2989 = vld [vmem:[#allocation23 + $0xd0] sm:$0xff]
        %v2990 = vld [vmem:[#allocation23 + $0xd8] sm:$0xff]
        %v2991 = vld [vmem:[#allocation23 + $0xe0] sm:$0xff]
        %v2992 = vld [vmem:[#allocation23 + $0xe8] sm:$0xff]
        %v2993 = vld [vmem:[#allocation23 + $0xf0] sm:$0xff]
        %v2994 = vld [vmem:[#allocation23 + $0xf8] sm:$0xff]
        %v2996 = vshrl.u32 %v2959, 16
        %v2998 = vshll.u32 %v2959, 16
        %v3000 = vrot.slane %v2998, 1
        %v3001 = vor.u32 %v2996, %v3000
        %v3003 = vshll.u32 %v2925, 16
        %v3005 = vrot.slane %v3003, 1
        %v3006 = vsel %vm1883, %v3001, %v3005
        %v3008 = vshrl.u32 %v2960, 16
        %v3010 = vshll.u32 %v2960, 16
        %v3012 = vrot.slane %v3010, 1
        %v3013 = vor.u32 %v3008, %v3012
        %v3015 = vshll.u32 %v2926, 16
        %v3017 = vrot.slane %v3015, 1
        %v3018 = vsel %vm1883, %v3013, %v3017
        %v3019 = vshrl.u32 %v2925, 16
        %v3021 = vor.u32 %v3019, %v3005
        %v3023 = vshll.u32 %v2961, 16
        %v3025 = vrot.slane %v3023, 1
        %v3026 = vsel %vm1883, %v3021, %v3025
        %v3027 = vshrl.u32 %v2926, 16
        %v3029 = vor.u32 %v3027, %v3017
        %v3031 = vshll.u32 %v2962, 16
        %v3033 = vrot.slane %v3031, 1
        %v3034 = vsel %vm1883, %v3029, %v3033
        %v3071 = vunpack.c.l.b16 %v2963
        %v3072 = vunpack.c.h.b16 %v2963
        %v3073 = vunpack.c.l.b16 %v2964
        %v3074 = vunpack.c.h.b16 %v2964
        %v3075 = vunpack.c.l.b16 %v2965
        %v3076 = vunpack.c.h.b16 %v2965
        %v3077 = vunpack.c.l.b16 %v2966
        %v3078 = vunpack.c.h.b16 %v2966
        %v3079 = vunpack.c.l.b16 %v2967
        %v3080 = vunpack.c.h.b16 %v2967
        %v3081 = vunpack.c.l.b16 %v2968
        %v3082 = vunpack.c.h.b16 %v2968
        %v3083 = vunpack.c.l.b16 %v2969
        %v3084 = vunpack.c.h.b16 %v2969
        %v3085 = vunpack.c.l.b16 %v2970
        %v3086 = vunpack.c.h.b16 %v2970
        %v3087 = vunpack.c.l.b16 %v2971
        %v3088 = vunpack.c.h.b16 %v2971
        %v3089 = vunpack.c.l.b16 %v2972
        %v3090 = vunpack.c.h.b16 %v2972
        %v3091 = vunpack.c.l.b16 %v2973
        %v3092 = vunpack.c.h.b16 %v2973
        %v3093 = vunpack.c.l.b16 %v2974
        %v3094 = vunpack.c.h.b16 %v2974
        %v3095 = vunpack.c.l.b16 %v2975
        %v3096 = vunpack.c.h.b16 %v2975
        %v3097 = vunpack.c.l.b16 %v2976
        %v3098 = vunpack.c.h.b16 %v2976
        %v3099 = vunpack.c.l.b16 %v2977
        %v3100 = vunpack.c.h.b16 %v2977
        %v3101 = vunpack.c.l.b16 %v2978
        %v3102 = vunpack.c.h.b16 %v2978
        %v3103 = vunpack.c.l.b16 %v2979
        %v3104 = vunpack.c.h.b16 %v2979
        %v3105 = vunpack.c.l.b16 %v2980
        %v3106 = vunpack.c.h.b16 %v2980
        %v3107 = vunpack.c.l.b16 %v2981
        %v3108 = vunpack.c.h.b16 %v2981
        %v3109 = vunpack.c.l.b16 %v2982
        %v3110 = vunpack.c.h.b16 %v2982
        %v3111 = vunpack.c.l.b16 %v2983
        %v3112 = vunpack.c.h.b16 %v2983
        %v3113 = vunpack.c.l.b16 %v2984
        %v3114 = vunpack.c.h.b16 %v2984
        %v3115 = vunpack.c.l.b16 %v2985
        %v3116 = vunpack.c.h.b16 %v2985
        %v3117 = vunpack.c.l.b16 %v2986
        %v3118 = vunpack.c.h.b16 %v2986
        %v3119 = vunpack.c.l.b16 %v2987
        %v3120 = vunpack.c.h.b16 %v2987
        %v3121 = vunpack.c.l.b16 %v2988
        %v3122 = vunpack.c.h.b16 %v2988
        %v3123 = vunpack.c.l.b16 %v2989
        %v3124 = vunpack.c.h.b16 %v2989
        %v3125 = vunpack.c.l.b16 %v2990
        %v3126 = vunpack.c.h.b16 %v2990
        %v3127 = vunpack.c.l.b16 %v2991
        %v3128 = vunpack.c.h.b16 %v2991
        %v3129 = vunpack.c.l.b16 %v2992
        %v3130 = vunpack.c.h.b16 %v2992
        %v3131 = vunpack.c.l.b16 %v2993
        %v3132 = vunpack.c.h.b16 %v2993
        %v3133 = vunpack.c.l.b16 %v2994
        %v3134 = vunpack.c.h.b16 %v2994
        %v3135 = vpack.c.b16 %v3073, %v3071
        %v3136 = vpack.c.b16 %v3074, %v3072
        %v3137 = vpack.c.b16 %v3077, %v3075
        %v3138 = vpack.c.b16 %v3078, %v3076
        %v3139 = vpack.c.b16 %v3081, %v3079
        %v3140 = vpack.c.b16 %v3082, %v3080
        %v3141 = vpack.c.b16 %v3085, %v3083
        %v3142 = vpack.c.b16 %v3086, %v3084
        %v3143 = vpack.c.b16 %v3089, %v3087
        %v3144 = vpack.c.b16 %v3090, %v3088
        %v3145 = vpack.c.b16 %v3093, %v3091
        %v3146 = vpack.c.b16 %v3094, %v3092
        %v3147 = vpack.c.b16 %v3097, %v3095
        %v3148 = vpack.c.b16 %v3098, %v3096
        %v3149 = vpack.c.b16 %v3101, %v3099
        %v3150 = vpack.c.b16 %v3102, %v3100
        %v3151 = vpack.c.b16 %v3105, %v3103
        %v3152 = vpack.c.b16 %v3106, %v3104
        %v3153 = vpack.c.b16 %v3109, %v3107
        %v3154 = vpack.c.b16 %v3110, %v3108
        %v3155 = vpack.c.b16 %v3113, %v3111
        %v3156 = vpack.c.b16 %v3114, %v3112
        %v3157 = vpack.c.b16 %v3117, %v3115
        %v3158 = vpack.c.b16 %v3118, %v3116
        %v3159 = vpack.c.b16 %v3121, %v3119
        %v3160 = vpack.c.b16 %v3122, %v3120
        %v3161 = vpack.c.b16 %v3125, %v3123
        %v3162 = vpack.c.b16 %v3126, %v3124
        %v3163 = vpack.c.b16 %v3129, %v3127
        %v3164 = vpack.c.b16 %v3130, %v3128
        %v3165 = vpack.c.b16 %v3133, %v3131
        %v3166 = vpack.c.b16 %v3134, %v3132
        %3199 = vmatprep.subr.bf16.mxu0 %v3150
        %3200 = vmatpush1.bf16.msra.mxu0 %v3149
        %3201 = vmatprep.subr.bf16.mxu0 %v3148
        %3202 = vmatpush1.bf16.msra.mxu0 %v3147
        %3203 = vmatprep.subr.bf16.mxu0 %v3146
        %3204 = vmatpush1.bf16.msra.mxu0 %v3145
        %3205 = vmatprep.subr.bf16.mxu0 %v3144
        %3206 = vmatpush1.bf16.msra.mxu0 %v3143
        %3207 = vmatprep.subr.bf16.mxu0 %v3142
        %3208 = vmatpush1.bf16.msra.mxu0 %v3141
        %3209 = vmatprep.subr.bf16.mxu0 %v3140
        %3210 = vmatpush1.bf16.msra.mxu0 %v3139
        %3211 = vmatprep.subr.bf16.mxu0 %v3138
        %3212 = vmatpush1.bf16.msra.mxu0 %v3137
        %3213 = vmatprep.subr.bf16.mxu0 %v3136
        %3214 = vmatpush1.bf16.msra.mxu0 %v3135
        %3215 = vmatprep.subr.bf16.mxu0 %v3166
        %3216 = vmatpush2.bf16.msra.mxu0 %v3165
        %3217 = vmatprep.subr.bf16.mxu0 %v3164
        %3218 = vmatpush2.bf16.msra.mxu0 %v3163
        %3219 = vmatprep.subr.bf16.mxu0 %v3162
        %3220 = vmatpush2.bf16.msra.mxu0 %v3161
        %3221 = vmatprep.subr.bf16.mxu0 %v3160
        %3222 = vmatpush2.bf16.msra.mxu0 %v3159
        %3223 = vmatprep.subr.bf16.mxu0 %v3158
        %3224 = vmatpush2.bf16.msra.mxu0 %v3157
        %3225 = vmatprep.subr.bf16.mxu0 %v3156
        %3226 = vmatpush2.bf16.msra.mxu0 %v3155
        %3227 = vmatprep.subr.bf16.mxu0 %v3154
        %3228 = vmatpush2.bf16.msra.mxu0 %v3153
        %3229 = vmatprep.subr.bf16.mxu0 %v3152
        %3230 = vmatpush2.bf16.msra.mxu0 %v3151
        %3231 = vmatprep.mubr.bf16.mxu0 %v3018
        %3232 = vmatmul.mubr.bf16.gmra.mxu0 %v3006
        %v3233 = vpop.f32.mrf.mxu0
        %v3234 = vadd.f32 0.0, %v3233
        %v3235 = vpop.f32.mrf.mxu0
        %v3236 = vadd.f32 0.0, %v3235
        %v3237 = vpop.f32.mrf.mxu0
        %v3238 = vadd.f32 0.0, %v3237
        %v3239 = vpop.f32.mrf.mxu0
        %v3240 = vadd.f32 0.0, %v3239
        %3241 = vmatprep.mubr.bf16.mxu0 %v3034
        %3242 = vmatmul.mubr.bf16.gmra.mxu0 %v3026
        %v3243 = vpop.f32.mrf.mxu0
        %v3244 = vadd.f32 0.0, %v3243
        %v3245 = vpop.f32.mrf.mxu0
        %v3246 = vadd.f32 0.0, %v3245
        %v3247 = vpop.f32.mrf.mxu0
        %v3248 = vadd.f32 0.0, %v3247
        %v3249 = vpop.f32.mrf.mxu0
        %v3250 = vadd.f32 0.0, %v3249
        %3251 = vdwg.mxu0
        %v3284 = vunpack.c.l.b16 %v2927
        %v3285 = vunpack.c.h.b16 %v2927
        %v3286 = vunpack.c.l.b16 %v2928
        %v3287 = vunpack.c.h.b16 %v2928
        %v3288 = vunpack.c.l.b16 %v2929
        %v3289 = vunpack.c.h.b16 %v2929
        %v3290 = vunpack.c.l.b16 %v2930
        %v3291 = vunpack.c.h.b16 %v2930
        %v3292 = vunpack.c.l.b16 %v2931
        %v3293 = vunpack.c.h.b16 %v2931
        %v3294 = vunpack.c.l.b16 %v2932
        %v3295 = vunpack.c.h.b16 %v2932
        %v3296 = vunpack.c.l.b16 %v2933
        %v3297 = vunpack.c.h.b16 %v2933
        %v3298 = vunpack.c.l.b16 %v2934
        %v3299 = vunpack.c.h.b16 %v2934
        %v3300 = vunpack.c.l.b16 %v2935
        %v3301 = vunpack.c.h.b16 %v2935
        %v3302 = vunpack.c.l.b16 %v2936
        %v3303 = vunpack.c.h.b16 %v2936
        %v3304 = vunpack.c.l.b16 %v2937
        %v3305 = vunpack.c.h.b16 %v2937
        %v3306 = vunpack.c.l.b16 %v2938
        %v3307 = vunpack.c.h.b16 %v2938
        %v3308 = vunpack.c.l.b16 %v2939
        %v3309 = vunpack.c.h.b16 %v2939
        %v3310 = vunpack.c.l.b16 %v2940
        %v3311 = vunpack.c.h.b16 %v2940
        %v3312 = vunpack.c.l.b16 %v2941
        %v3313 = vunpack.c.h.b16 %v2941
        %v3314 = vunpack.c.l.b16 %v2942
        %v3315 = vunpack.c.h.b16 %v2942
        %v3316 = vunpack.c.l.b16 %v2943
        %v3317 = vunpack.c.h.b16 %v2943
        %v3318 = vunpack.c.l.b16 %v2944
        %v3319 = vunpack.c.h.b16 %v2944
        %v3320 = vunpack.c.l.b16 %v2945
        %v3321 = vunpack.c.h.b16 %v2945
        %v3322 = vunpack.c.l.b16 %v2946
        %v3323 = vunpack.c.h.b16 %v2946
        %v3324 = vunpack.c.l.b16 %v2947
        %v3325 = vunpack.c.h.b16 %v2947
        %v3326 = vunpack.c.l.b16 %v2948
        %v3327 = vunpack.c.h.b16 %v2948
        %v3328 = vunpack.c.l.b16 %v2949
        %v3329 = vunpack.c.h.b16 %v2949
        %v3330 = vunpack.c.l.b16 %v2950
        %v3331 = vunpack.c.h.b16 %v2950
        %v3332 = vunpack.c.l.b16 %v2951
        %v3333 = vunpack.c.h.b16 %v2951
        %v3334 = vunpack.c.l.b16 %v2952
        %v3335 = vunpack.c.h.b16 %v2952
        %v3336 = vunpack.c.l.b16 %v2953
        %v3337 = vunpack.c.h.b16 %v2953
        %v3338 = vunpack.c.l.b16 %v2954
        %v3339 = vunpack.c.h.b16 %v2954
        %v3340 = vunpack.c.l.b16 %v2955
        %v3341 = vunpack.c.h.b16 %v2955
        %v3342 = vunpack.c.l.b16 %v2956
        %v3343 = vunpack.c.h.b16 %v2956
        %v3344 = vunpack.c.l.b16 %v2957
        %v3345 = vunpack.c.h.b16 %v2957
        %v3346 = vunpack.c.l.b16 %v2958
        %v3347 = vunpack.c.h.b16 %v2958
        %v3348 = vpack.c.b16 %v3286, %v3284
        %v3349 = vpack.c.b16 %v3287, %v3285
        %v3350 = vpack.c.b16 %v3290, %v3288
        %v3351 = vpack.c.b16 %v3291, %v3289
        %v3352 = vpack.c.b16 %v3294, %v3292
        %v3353 = vpack.c.b16 %v3295, %v3293
        %v3354 = vpack.c.b16 %v3298, %v3296
        %v3355 = vpack.c.b16 %v3299, %v3297
        %v3356 = vpack.c.b16 %v3302, %v3300
        %v3357 = vpack.c.b16 %v3303, %v3301
        %v3358 = vpack.c.b16 %v3306, %v3304
        %v3359 = vpack.c.b16 %v3307, %v3305
        %v3360 = vpack.c.b16 %v3310, %v3308
        %v3361 = vpack.c.b16 %v3311, %v3309
        %v3362 = vpack.c.b16 %v3314, %v3312
        %v3363 = vpack.c.b16 %v3315, %v3313
        %v3364 = vpack.c.b16 %v3318, %v3316
        %v3365 = vpack.c.b16 %v3319, %v3317
        %v3366 = vpack.c.b16 %v3322, %v3320
        %v3367 = vpack.c.b16 %v3323, %v3321
        %v3368 = vpack.c.b16 %v3326, %v3324
        %v3369 = vpack.c.b16 %v3327, %v3325
        %v3370 = vpack.c.b16 %v3330, %v3328
        %v3371 = vpack.c.b16 %v3331, %v3329
        %v3372 = vpack.c.b16 %v3334, %v3332
        %v3373 = vpack.c.b16 %v3335, %v3333
        %v3374 = vpack.c.b16 %v3338, %v3336
        %v3375 = vpack.c.b16 %v3339, %v3337
        %v3376 = vpack.c.b16 %v3342, %v3340
        %v3377 = vpack.c.b16 %v3343, %v3341
        %v3378 = vpack.c.b16 %v3346, %v3344
        %v3379 = vpack.c.b16 %v3347, %v3345
        %3412 = vmatprep.subr.bf16.mxu0 %v3363
        %3413 = vmatpush1.bf16.msra.mxu0 %v3362
        %3414 = vmatprep.subr.bf16.mxu0 %v3361
        %3415 = vmatpush1.bf16.msra.mxu0 %v3360
        %3416 = vmatprep.subr.bf16.mxu0 %v3359
        %3417 = vmatpush1.bf16.msra.mxu0 %v3358
        %3418 = vmatprep.subr.bf16.mxu0 %v3357
        %3419 = vmatpush1.bf16.msra.mxu0 %v3356
        %3420 = vmatprep.subr.bf16.mxu0 %v3355
        %3421 = vmatpush1.bf16.msra.mxu0 %v3354
        %3422 = vmatprep.subr.bf16.mxu0 %v3353
        %3423 = vmatpush1.bf16.msra.mxu0 %v3352
        %3424 = vmatprep.subr.bf16.mxu0 %v3351
        %3425 = vmatpush1.bf16.msra.mxu0 %v3350
        %3426 = vmatprep.subr.bf16.mxu0 %v3349
        %3427 = vmatpush1.bf16.msra.mxu0 %v3348
        %3428 = vmatprep.subr.bf16.mxu0 %v3379
        %3429 = vmatpush2.bf16.msra.mxu0 %v3378
        %3430 = vmatprep.subr.bf16.mxu0 %v3377
        %3431 = vmatpush2.bf16.msra.mxu0 %v3376
        %3432 = vmatprep.subr.bf16.mxu0 %v3375
        %3433 = vmatpush2.bf16.msra.mxu0 %v3374
        %3434 = vmatprep.subr.bf16.mxu0 %v3373
        %3435 = vmatpush2.bf16.msra.mxu0 %v3372
        %3436 = vmatprep.subr.bf16.mxu0 %v3371
        %3437 = vmatpush2.bf16.msra.mxu0 %v3370
        %3438 = vmatprep.subr.bf16.mxu0 %v3369
        %3439 = vmatpush2.bf16.msra.mxu0 %v3368
        %3440 = vmatprep.subr.bf16.mxu0 %v3367
        %3441 = vmatpush2.bf16.msra.mxu0 %v3366
        %3442 = vmatprep.subr.bf16.mxu0 %v3365
        %3443 = vmatpush2.bf16.msra.mxu0 %v3364
        %3444 = vmatprep.mubr.bf16.mxu0 %v2924
        %3445 = vmatmul.mubr.bf16.gmra.mxu0 %v2923
        %v3446 = vpop.f32.mrf.mxu0
        %v3447 = vadd.f32 %v3234, %v3446
        %v3448 = vpop.f32.mrf.mxu0
        %v3449 = vadd.f32 %v3236, %v3448
        %v3450 = vpop.f32.mrf.mxu0
        %v3451 = vadd.f32 %v3238, %v3450
        %v3452 = vpop.f32.mrf.mxu0
        %v3453 = vadd.f32 %v3240, %v3452
        %3454 = vmatprep.mubr.bf16.mxu0 %v2926
        %3455 = vmatmul.mubr.bf16.gmra.mxu0 %v2925
        %v3456 = vpop.f32.mrf.mxu0
        %v3457 = vadd.f32 %v3244, %v3456
        %v3458 = vpop.f32.mrf.mxu0
        %v3459 = vadd.f32 %v3246, %v3458
        %v3460 = vpop.f32.mrf.mxu0
        %v3461 = vadd.f32 %v3248, %v3460
        %v3462 = vpop.f32.mrf.mxu0
        %v3463 = vadd.f32 %v3250, %v3462
        %3464 = vdwg.mxu0
        %v3465 = vld [vmem:[#allocation5] sm:$0xfc]
        %v3466 = vld [vmem:[#allocation5 + $0x8] sm:$0xfc]
        %v3467 = vld [vmem:[#allocation5 + $0x40] sm:$0x3]
        %v3468 = vld [vmem:[#allocation5 + $0x48] sm:$0x3]
        %v3469 = vpack.c.bf16 %v2913, %v3465
        %v3470 = vpack.c.bf16 %v2914, %v3466
        %v3471 = vpack.c.bf16 %v3467, %v3467
        %v3472 = vpack.c.bf16 %v3468, %v3468
        %v3473 = vld [vmem:[#allocation24] sm:$0xff]
        %v3474 = vld [vmem:[#allocation24 + $0x8] sm:$0xff]
        %v3475 = vld [vmem:[#allocation24 + $0x10] sm:$0xff]
        %v3476 = vld [vmem:[#allocation24 + $0x18] sm:$0xff]
        %v3477 = vld [vmem:[#allocation24 + $0x20] sm:$0xff]
        %v3478 = vld [vmem:[#allocation24 + $0x28] sm:$0xff]
        %v3479 = vld [vmem:[#allocation24 + $0x30] sm:$0xff]
        %v3480 = vld [vmem:[#allocation24 + $0x38] sm:$0xff]
        %v3481 = vld [vmem:[#allocation24 + $0x40] sm:$0xff]
        %v3482 = vld [vmem:[#allocation24 + $0x48] sm:$0xff]
        %v3483 = vld [vmem:[#allocation24 + $0x50] sm:$0xff]
        %v3484 = vld [vmem:[#allocation24 + $0x58] sm:$0xff]
        %v3485 = vld [vmem:[#allocation24 + $0x60] sm:$0xff]
        %v3486 = vld [vmem:[#allocation24 + $0x68] sm:$0xff]
        %v3487 = vld [vmem:[#allocation24 + $0x70] sm:$0xff]
        %v3488 = vld [vmem:[#allocation24 + $0x78] sm:$0xff]
        %v3489 = vld [vmem:[#allocation24 + $0x80] sm:$0xff]
        %v3490 = vld [vmem:[#allocation24 + $0x88] sm:$0xff]
        %v3491 = vld [vmem:[#allocation24 + $0x90] sm:$0xff]
        %v3492 = vld [vmem:[#allocation24 + $0x98] sm:$0xff]
        %v3493 = vld [vmem:[#allocation24 + $0xa0] sm:$0xff]
        %v3494 = vld [vmem:[#allocation24 + $0xa8] sm:$0xff]
        %v3495 = vld [vmem:[#allocation24 + $0xb0] sm:$0xff]
        %v3496 = vld [vmem:[#allocation24 + $0xb8] sm:$0xff]
        %v3497 = vld [vmem:[#allocation24 + $0xc0] sm:$0xff]
        %v3498 = vld [vmem:[#allocation24 + $0xc8] sm:$0xff]
        %v3499 = vld [vmem:[#allocation24 + $0xd0] sm:$0xff]
        %v3500 = vld [vmem:[#allocation24 + $0xd8] sm:$0xff]
        %v3501 = vld [vmem:[#allocation24 + $0xe0] sm:$0xff]
        %v3502 = vld [vmem:[#allocation24 + $0xe8] sm:$0xff]
        %v3503 = vld [vmem:[#allocation24 + $0xf0] sm:$0xff]
        %v3504 = vld [vmem:[#allocation24 + $0xf8] sm:$0xff]
        %vm3511 = vcmask 1046528
        %v3512 = vrot.slane %v3469, 1
        %v3513 = vrot.slane %v2925, 1
        %v3514 = vsel %vm3511, %v3512, %v3513
        %v3515 = vrot.slane %v3470, 1
        %v3516 = vrot.slane %v2926, 1
        %v3517 = vsel %vm3511, %v3515, %v3516
        %v3518 = vrot.slane %v3471, 1
        %v3519 = vsel %vm3511, %v3513, %v3518
        %v3520 = vrot.slane %v3472, 1
        %v3521 = vsel %vm3511, %v3516, %v3520
        %v3558 = vunpack.c.l.b16 %v3473
        %v3559 = vunpack.c.h.b16 %v3473
        %v3560 = vunpack.c.l.b16 %v3474
        %v3561 = vunpack.c.h.b16 %v3474
        %v3562 = vunpack.c.l.b16 %v3475
        %v3563 = vunpack.c.h.b16 %v3475
        %v3564 = vunpack.c.l.b16 %v3476
        %v3565 = vunpack.c.h.b16 %v3476
        %v3566 = vunpack.c.l.b16 %v3477
        %v3567 = vunpack.c.h.b16 %v3477
        %v3568 = vunpack.c.l.b16 %v3478
        %v3569 = vunpack.c.h.b16 %v3478
        %v3570 = vunpack.c.l.b16 %v3479
        %v3571 = vunpack.c.h.b16 %v3479
        %v3572 = vunpack.c.l.b16 %v3480
        %v3573 = vunpack.c.h.b16 %v3480
        %v3574 = vunpack.c.l.b16 %v3481
        %v3575 = vunpack.c.h.b16 %v3481
        %v3576 = vunpack.c.l.b16 %v3482
        %v3577 = vunpack.c.h.b16 %v3482
        %v3578 = vunpack.c.l.b16 %v3483
        %v3579 = vunpack.c.h.b16 %v3483
        %v3580 = vunpack.c.l.b16 %v3484
        %v3581 = vunpack.c.h.b16 %v3484
        %v3582 = vunpack.c.l.b16 %v3485
        %v3583 = vunpack.c.h.b16 %v3485
        %v3584 = vunpack.c.l.b16 %v3486
        %v3585 = vunpack.c.h.b16 %v3486
        %v3586 = vunpack.c.l.b16 %v3487
        %v3587 = vunpack.c.h.b16 %v3487
        %v3588 = vunpack.c.l.b16 %v3488
        %v3589 = vunpack.c.h.b16 %v3488
        %v3590 = vunpack.c.l.b16 %v3489
        %v3591 = vunpack.c.h.b16 %v3489
        %v3592 = vunpack.c.l.b16 %v3490
        %v3593 = vunpack.c.h.b16 %v3490
        %v3594 = vunpack.c.l.b16 %v3491
        %v3595 = vunpack.c.h.b16 %v3491
        %v3596 = vunpack.c.l.b16 %v3492
        %v3597 = vunpack.c.h.b16 %v3492
        %v3598 = vunpack.c.l.b16 %v3493
        %v3599 = vunpack.c.h.b16 %v3493
        %v3600 = vunpack.c.l.b16 %v3494
        %v3601 = vunpack.c.h.b16 %v3494
        %v3602 = vunpack.c.l.b16 %v3495
        %v3603 = vunpack.c.h.b16 %v3495
        %v3604 = vunpack.c.l.b16 %v3496
        %v3605 = vunpack.c.h.b16 %v3496
        %v3606 = vunpack.c.l.b16 %v3497
        %v3607 = vunpack.c.h.b16 %v3497
        %v3608 = vunpack.c.l.b16 %v3498
        %v3609 = vunpack.c.h.b16 %v3498
        %v3610 = vunpack.c.l.b16 %v3499
        %v3611 = vunpack.c.h.b16 %v3499
        %v3612 = vunpack.c.l.b16 %v3500
        %v3613 = vunpack.c.h.b16 %v3500
        %v3614 = vunpack.c.l.b16 %v3501
        %v3615 = vunpack.c.h.b16 %v3501
        %v3616 = vunpack.c.l.b16 %v3502
        %v3617 = vunpack.c.h.b16 %v3502
        %v3618 = vunpack.c.l.b16 %v3503
        %v3619 = vunpack.c.h.b16 %v3503
        %v3620 = vunpack.c.l.b16 %v3504
        %v3621 = vunpack.c.h.b16 %v3504
        %v3622 = vpack.c.b16 %v3560, %v3558
        %v3623 = vpack.c.b16 %v3561, %v3559
        %v3624 = vpack.c.b16 %v3564, %v3562
        %v3625 = vpack.c.b16 %v3565, %v3563
        %v3626 = vpack.c.b16 %v3568, %v3566
        %v3627 = vpack.c.b16 %v3569, %v3567
        %v3628 = vpack.c.b16 %v3572, %v3570
        %v3629 = vpack.c.b16 %v3573, %v3571
        %v3630 = vpack.c.b16 %v3576, %v3574
        %v3631 = vpack.c.b16 %v3577, %v3575
        %v3632 = vpack.c.b16 %v3580, %v3578
        %v3633 = vpack.c.b16 %v3581, %v3579
        %v3634 = vpack.c.b16 %v3584, %v3582
        %v3635 = vpack.c.b16 %v3585, %v3583
        %v3636 = vpack.c.b16 %v3588, %v3586
        %v3637 = vpack.c.b16 %v3589, %v3587
        %v3638 = vpack.c.b16 %v3592, %v3590
        %v3639 = vpack.c.b16 %v3593, %v3591
        %v3640 = vpack.c.b16 %v3596, %v3594
        %v3641 = vpack.c.b16 %v3597, %v3595
        %v3642 = vpack.c.b16 %v3600, %v3598
        %v3643 = vpack.c.b16 %v3601, %v3599
        %v3644 = vpack.c.b16 %v3604, %v3602
        %v3645 = vpack.c.b16 %v3605, %v3603
        %v3646 = vpack.c.b16 %v3608, %v3606
        %v3647 = vpack.c.b16 %v3609, %v3607
        %v3648 = vpack.c.b16 %v3612, %v3610
        %v3649 = vpack.c.b16 %v3613, %v3611
        %v3650 = vpack.c.b16 %v3616, %v3614
        %v3651 = vpack.c.b16 %v3617, %v3615
        %v3652 = vpack.c.b16 %v3620, %v3618
        %v3653 = vpack.c.b16 %v3621, %v3619
        %3686 = vmatprep.subr.bf16.mxu0 %v3637
        %3687 = vmatpush1.bf16.msra.mxu0 %v3636
        %3688 = vmatprep.subr.bf16.mxu0 %v3635
        %3689 = vmatpush1.bf16.msra.mxu0 %v3634
        %3690 = vmatprep.subr.bf16.mxu0 %v3633
        %3691 = vmatpush1.bf16.msra.mxu0 %v3632
        %3692 = vmatprep.subr.bf16.mxu0 %v3631
        %3693 = vmatpush1.bf16.msra.mxu0 %v3630
        %3694 = vmatprep.subr.bf16.mxu0 %v3629
        %3695 = vmatpush1.bf16.msra.mxu0 %v3628
        %3696 = vmatprep.subr.bf16.mxu0 %v3627
        %3697 = vmatpush1.bf16.msra.mxu0 %v3626
        %3698 = vmatprep.subr.bf16.mxu0 %v3625
        %3699 = vmatpush1.bf16.msra.mxu0 %v3624
        %3700 = vmatprep.subr.bf16.mxu0 %v3623
        %3701 = vmatpush1.bf16.msra.mxu0 %v3622
        %3702 = vmatprep.subr.bf16.mxu0 %v3653
        %3703 = vmatpush2.bf16.msra.mxu0 %v3652
        %3704 = vmatprep.subr.bf16.mxu0 %v3651
        %3705 = vmatpush2.bf16.msra.mxu0 %v3650
        %3706 = vmatprep.subr.bf16.mxu0 %v3649
        %3707 = vmatpush2.bf16.msra.mxu0 %v3648
        %3708 = vmatprep.subr.bf16.mxu0 %v3647
        %3709 = vmatpush2.bf16.msra.mxu0 %v3646
        %3710 = vmatprep.subr.bf16.mxu0 %v3645
        %3711 = vmatpush2.bf16.msra.mxu0 %v3644
        %3712 = vmatprep.subr.bf16.mxu0 %v3643
        %3713 = vmatpush2.bf16.msra.mxu0 %v3642
        %3714 = vmatprep.subr.bf16.mxu0 %v3641
        %3715 = vmatpush2.bf16.msra.mxu0 %v3640
        %3716 = vmatprep.subr.bf16.mxu0 %v3639
        %3717 = vmatpush2.bf16.msra.mxu0 %v3638
        %3718 = vmatprep.mubr.bf16.mxu0 %v3517
        %3719 = vmatmul.mubr.bf16.gmra.mxu0 %v3514
        %v3720 = vpop.f32.mrf.mxu0
        %v3721 = vadd.f32 0.0, %v3720
        %v3722 = vpop.f32.mrf.mxu0
        %v3723 = vadd.f32 0.0, %v3722
        %v3724 = vpop.f32.mrf.mxu0
        %v3725 = vadd.f32 0.0, %v3724
        %v3726 = vpop.f32.mrf.mxu0
        %v3727 = vadd.f32 0.0, %v3726
        %3728 = vmatprep.mubr.bf16.mxu0 %v3521
        %3729 = vmatmul.mubr.bf16.gmra.mxu0 %v3519
        %v3730 = vpop.f32.mrf.mxu0
        %v3731 = vadd.f32 0.0, %v3730
        %v3732 = vpop.f32.mrf.mxu0
        %v3733 = vadd.f32 0.0, %v3732
        %v3734 = vpop.f32.mrf.mxu0
        %v3735 = vadd.f32 0.0, %v3734
        %v3736 = vpop.f32.mrf.mxu0
        %v3737 = vadd.f32 0.0, %v3736
        %3738 = vdwg.mxu0
        %v3739 = vadd.f32 %v3447, %v3721
        %v3740 = vadd.f32 %v3449, %v3723
        %v3741 = vadd.f32 %v3451, %v3725
        %v3742 = vadd.f32 %v3453, %v3727
        %v3743 = vadd.f32 %v3457, %v3731
        %v3744 = vadd.f32 %v3459, %v3733
        %v3745 = vadd.f32 %v3461, %v3735
        %v3746 = vadd.f32 %v3463, %v3737
        %v3747 = vld [vmem:[#allocation26] ss:$2 sm:$0x3]
        %v3749 = vlaneseq
        %v3750 = vshrl.u32 %v3749, 7
        %v3751 = vsub.s32 0, %v3750
        %v3752 = vrot.slane %v3747, %v3751
        %v3753 = vlaneseq
        %v3754 = vshrl.u32 %v3753, 7
        %v3755 = vsub.s32 1, %v3754
        %v3756 = vrot.slane %v3747, %v3755
        %v3759 = vadd.f32 %v3739, %v3752
        %v3760 = vadd.f32 %v3740, %v3756
        %v3761 = vadd.f32 %v3741, %v3752
        %v3762 = vadd.f32 %v3742, %v3756
        %v3763 = vadd.f32 %v3743, %v3752
        %v3764 = vadd.f32 %v3744, %v3756
        %v3765 = vadd.f32 %v3745, %v3752
        %v3766 = vadd.f32 %v3746, %v3756
        %vm3767 = vcmp.ge.f32.partialorder %v3759, 0.0
        %vm3768 = vcmp.ge.f32.partialorder %v3760, 0.0
        %vm3769 = vcmp.ge.f32.partialorder %v3761, 0.0
        %vm3770 = vcmp.ge.f32.partialorder %v3762, 0.0
        %vm3771 = vcmp.ge.f32.partialorder %v3763, 0.0
        %vm3772 = vcmp.ge.f32.partialorder %v3764, 0.0
        %vm3773 = vcmp.ge.f32.partialorder %v3765, 0.0
        %vm3774 = vcmp.ge.f32.partialorder %v3766, 0.0
        %s3775 = scalar_lea.vmem [#allocation26], 1
        %v3776 = vld [vmem:[%s3775] ss:$2 sm:$0x3]
        %v3778 = vlaneseq
        %v3779 = vshrl.u32 %v3778, 7
        %v3780 = vsub.s32 0, %v3779
        %v3781 = vrot.slane %v3776, %v3780
        %v3782 = vlaneseq
        %v3783 = vshrl.u32 %v3782, 7
        %v3784 = vsub.s32 1, %v3783
        %v3785 = vrot.slane %v3776, %v3784
        %v3788 = vmul.f32 %v3781, %v3759
        %v3789 = vmul.f32 %v3785, %v3760
        %v3790 = vmul.f32 %v3781, %v3761
        %v3791 = vmul.f32 %v3785, %v3762
        %v3792 = vmul.f32 %v3781, %v3763
        %v3793 = vmul.f32 %v3785, %v3764
        %v3794 = vmul.f32 %v3781, %v3765
        %v3795 = vmul.f32 %v3785, %v3766
        %v3796 = vsel %vm3767, %v3759, %v3788
        %v3797 = vsel %vm3768, %v3760, %v3789
        %v3798 = vsel %vm3769, %v3761, %v3790
        %v3799 = vsel %vm3770, %v3762, %v3791
        %v3800 = vsel %vm3771, %v3763, %v3792
        %v3801 = vsel %vm3772, %v3764, %v3793
        %v3802 = vsel %vm3773, %v3765, %v3794
        %v3803 = vsel %vm3774, %v3766, %v3795
        %3804 = vst.msk [vmem:[#allocation6] ss:$8 sm:$0x3] %vm1776, 0.0
        %3805 = vst.msk [vmem:[#allocation6] ss:$8 sm:$0x0] %vm1776, 0.0
        %v3814 = vrot.slane %v3796, 7
        %v3815 = vrot.slane %v3797, 7
        %v3816 = vrot.slane %v3798, 7
        %v3817 = vsel %vm1787, %v3814, %v3816
        %v3818 = vrot.slane %v3799, 7
        %v3819 = vsel %vm1787, %v3815, %v3818
        %v3820 = vrot.slane %v3800, 7
        %v3821 = vsel %vm1787, %v3816, %v3820
        %v3822 = vrot.slane %v3801, 7
        %v3823 = vsel %vm1787, %v3818, %v3822
        %v3824 = vrot.slane %v3802, 7
        %v3825 = vsel %vm1787, %v3820, %v3824
        %v3826 = vrot.slane %v3803, 7
        %v3827 = vsel %vm1787, %v3822, %v3826
        %3838 = vst [vmem:[#allocation6] sm:$0xfe] %v3814
        %3839 = vst [vmem:[#allocation6 + $0x8] sm:$0xfe] %v3815
        %3840 = vst [vmem:[#allocation6 + $0x10] sm:$0xff] %v3817
        %3841 = vst [vmem:[#allocation6 + $0x18] sm:$0xff] %v3819
        %3842 = vst [vmem:[#allocation6 + $0x20] sm:$0xff] %v3821
        %3843 = vst [vmem:[#allocation6 + $0x28] sm:$0xff] %v3823
        %3844 = vst [vmem:[#allocation6 + $0x30] sm:$0xff] %v3825
        %3845 = vst [vmem:[#allocation6 + $0x38] sm:$0xff] %v3827
        %3846 = vst [vmem:[#allocation6 + $0x40] sm:$0x1] %v3824
        %3847 = vst [vmem:[#allocation6 + $0x48] sm:$0x1] %v3826
        %s3848 = scalar_lea.vmem [#allocation6], 65
        %3849 = vst.msk [vmem:[%s3848] ss:$8 sm:$0x3] %vm1776, 0.0
        %3850 = vst.msk [vmem:[%s3848] ss:$8 sm:$0x0] %vm1776, 0.0
        %v3851 = vld [vmem:[#allocation6 + $0x8] sm:$0xff]
        %v3852 = vld [vmem:[#allocation6 + $0x18] sm:$0xff]
        %v3853 = vld [vmem:[#allocation6 + $0x28] sm:$0xff]
        %v3854 = vld [vmem:[#allocation6 + $0x38] sm:$0xff]
        %v3855 = vld [vmem:[#allocation6] sm:$0xfe]
        %v3856 = vld [vmem:[#allocation6 + $0x8] sm:$0xfe]
        %v3857 = vld [vmem:[#allocation6 + $0x10] sm:$0xff]
        %v3858 = vld [vmem:[#allocation6 + $0x20] sm:$0xff]
        %v3859 = vld [vmem:[#allocation6 + $0x30] sm:$0xff]
        %v3860 = vld [vmem:[#allocation6 + $0x40] sm:$0x1]
        %v3861 = vld [vmem:[#allocation6 + $0x48] sm:$0x1]
        %v3862 = vpack.c.bf16 %v3852, %v3851
        %v3863 = vpack.c.bf16 %v3854, %v3853
        %v3864 = vld [vmem:[#allocation27] sm:$0xff]
        %v3865 = vld [vmem:[#allocation27 + $0x8] sm:$0xff]
        %v3866 = vld [vmem:[#allocation27 + $0x10] sm:$0xff]
        %v3867 = vld [vmem:[#allocation27 + $0x18] sm:$0xff]
        %v3868 = vld [vmem:[#allocation27 + $0x20] sm:$0xff]
        %v3869 = vld [vmem:[#allocation27 + $0x28] sm:$0xff]
        %v3870 = vld [vmem:[#allocation27 + $0x30] sm:$0xff]
        %v3871 = vld [vmem:[#allocation27 + $0x38] sm:$0xff]
        %v3872 = vld [vmem:[#allocation27 + $0x40] sm:$0xff]
        %v3873 = vld [vmem:[#allocation27 + $0x48] sm:$0xff]
        %v3874 = vld [vmem:[#allocation27 + $0x50] sm:$0xff]
        %v3875 = vld [vmem:[#allocation27 + $0x58] sm:$0xff]
        %v3876 = vld [vmem:[#allocation27 + $0x60] sm:$0xff]
        %v3877 = vld [vmem:[#allocation27 + $0x68] sm:$0xff]
        %v3878 = vld [vmem:[#allocation27 + $0x70] sm:$0xff]
        %v3879 = vld [vmem:[#allocation27 + $0x78] sm:$0xff]
        %v3880 = vpack.c.bf16 %v3857, %v3855
        %v3881 = vpack.c.bf16 %v3852, %v3856
        %v3882 = vpack.c.bf16 %v3859, %v3858
        %v3883 = vpack.c.bf16 %v3860, %v3860
        %v3884 = vpack.c.bf16 %v3861, %v3861
        %v3885 = vld [vmem:[#allocation29] sm:$0xff]
        %v3886 = vld [vmem:[#allocation29 + $0x8] sm:$0xff]
        %v3887 = vld [vmem:[#allocation29 + $0x10] sm:$0xff]
        %v3888 = vld [vmem:[#allocation29 + $0x18] sm:$0xff]
        %v3889 = vld [vmem:[#allocation29 + $0x20] sm:$0xff]
        %v3890 = vld [vmem:[#allocation29 + $0x28] sm:$0xff]
        %v3891 = vld [vmem:[#allocation29 + $0x30] sm:$0xff]
        %v3892 = vld [vmem:[#allocation29 + $0x38] sm:$0xff]
        %v3893 = vld [vmem:[#allocation29 + $0x40] sm:$0xff]
        %v3894 = vld [vmem:[#allocation29 + $0x48] sm:$0xff]
        %v3895 = vld [vmem:[#allocation29 + $0x50] sm:$0xff]
        %v3896 = vld [vmem:[#allocation29 + $0x58] sm:$0xff]
        %v3897 = vld [vmem:[#allocation29 + $0x60] sm:$0xff]
        %v3898 = vld [vmem:[#allocation29 + $0x68] sm:$0xff]
        %v3899 = vld [vmem:[#allocation29 + $0x70] sm:$0xff]
        %v3900 = vld [vmem:[#allocation29 + $0x78] sm:$0xff]
        %v3901 = vld [vmem:[#allocation29 + $0x80] sm:$0xff]
        %v3902 = vld [vmem:[#allocation29 + $0x88] sm:$0xff]
        %v3903 = vld [vmem:[#allocation29 + $0x90] sm:$0xff]
        %v3904 = vld [vmem:[#allocation29 + $0x98] sm:$0xff]
        %v3905 = vld [vmem:[#allocation29 + $0xa0] sm:$0xff]
        %v3906 = vld [vmem:[#allocation29 + $0xa8] sm:$0xff]
        %v3907 = vld [vmem:[#allocation29 + $0xb0] sm:$0xff]
        %v3908 = vld [vmem:[#allocation29 + $0xb8] sm:$0xff]
        %v3909 = vld [vmem:[#allocation29 + $0xc0] sm:$0xff]
        %v3910 = vld [vmem:[#allocation29 + $0xc8] sm:$0xff]
        %v3911 = vld [vmem:[#allocation29 + $0xd0] sm:$0xff]
        %v3912 = vld [vmem:[#allocation29 + $0xd8] sm:$0xff]
        %v3913 = vld [vmem:[#allocation29 + $0xe0] sm:$0xff]
        %v3914 = vld [vmem:[#allocation29 + $0xe8] sm:$0xff]
        %v3915 = vld [vmem:[#allocation29 + $0xf0] sm:$0xff]
        %v3916 = vld [vmem:[#allocation29 + $0xf8] sm:$0xff]
        %v3918 = vshrl.u32 %v3880, 16
        %v3920 = vshll.u32 %v3880, 16
        %v3922 = vrot.slane %v3920, 1
        %v3923 = vor.u32 %v3918, %v3922
        %v3925 = vshll.u32 %v3882, 16
        %v3927 = vrot.slane %v3925, 1
        %v3928 = vsel %vm1883, %v3923, %v3927
        %v3930 = vshrl.u32 %v3881, 16
        %v3932 = vshll.u32 %v3881, 16
        %v3934 = vrot.slane %v3932, 1
        %v3935 = vor.u32 %v3930, %v3934
        %v3937 = vshll.u32 %v3863, 16
        %v3939 = vrot.slane %v3937, 1
        %v3940 = vsel %vm1883, %v3935, %v3939
        %v3941 = vshrl.u32 %v3882, 16
        %v3943 = vor.u32 %v3941, %v3927
        %v3945 = vshll.u32 %v3883, 16
        %v3947 = vrot.slane %v3945, 1
        %v3948 = vsel %vm1883, %v3943, %v3947
        %v3949 = vshrl.u32 %v3863, 16
        %v3951 = vor.u32 %v3949, %v3939
        %v3953 = vshll.u32 %v3884, 16
        %v3955 = vrot.slane %v3953, 1
        %v3956 = vsel %vm1883, %v3951, %v3955
        %v3993 = vunpack.c.l.b16 %v3885
        %v3994 = vunpack.c.h.b16 %v3885
        %v3995 = vunpack.c.l.b16 %v3886
        %v3996 = vunpack.c.h.b16 %v3886
        %v3997 = vunpack.c.l.b16 %v3887
        %v3998 = vunpack.c.h.b16 %v3887
        %v3999 = vunpack.c.l.b16 %v3888
        %v4000 = vunpack.c.h.b16 %v3888
        %v4001 = vunpack.c.l.b16 %v3889
        %v4002 = vunpack.c.h.b16 %v3889
        %v4003 = vunpack.c.l.b16 %v3890
        %v4004 = vunpack.c.h.b16 %v3890
        %v4005 = vunpack.c.l.b16 %v3891
        %v4006 = vunpack.c.h.b16 %v3891
        %v4007 = vunpack.c.l.b16 %v3892
        %v4008 = vunpack.c.h.b16 %v3892
        %v4009 = vunpack.c.l.b16 %v3893
        %v4010 = vunpack.c.h.b16 %v3893
        %v4011 = vunpack.c.l.b16 %v3894
        %v4012 = vunpack.c.h.b16 %v3894
        %v4013 = vunpack.c.l.b16 %v3895
        %v4014 = vunpack.c.h.b16 %v3895
        %v4015 = vunpack.c.l.b16 %v3896
        %v4016 = vunpack.c.h.b16 %v3896
        %v4017 = vunpack.c.l.b16 %v3897
        %v4018 = vunpack.c.h.b16 %v3897
        %v4019 = vunpack.c.l.b16 %v3898
        %v4020 = vunpack.c.h.b16 %v3898
        %v4021 = vunpack.c.l.b16 %v3899
        %v4022 = vunpack.c.h.b16 %v3899
        %v4023 = vunpack.c.l.b16 %v3900
        %v4024 = vunpack.c.h.b16 %v3900
        %v4025 = vunpack.c.l.b16 %v3901
        %v4026 = vunpack.c.h.b16 %v3901
        %v4027 = vunpack.c.l.b16 %v3902
        %v4028 = vunpack.c.h.b16 %v3902
        %v4029 = vunpack.c.l.b16 %v3903
        %v4030 = vunpack.c.h.b16 %v3903
        %v4031 = vunpack.c.l.b16 %v3904
        %v4032 = vunpack.c.h.b16 %v3904
        %v4033 = vunpack.c.l.b16 %v3905
        %v4034 = vunpack.c.h.b16 %v3905
        %v4035 = vunpack.c.l.b16 %v3906
        %v4036 = vunpack.c.h.b16 %v3906
        %v4037 = vunpack.c.l.b16 %v3907
        %v4038 = vunpack.c.h.b16 %v3907
        %v4039 = vunpack.c.l.b16 %v3908
        %v4040 = vunpack.c.h.b16 %v3908
        %v4041 = vunpack.c.l.b16 %v3909
        %v4042 = vunpack.c.h.b16 %v3909
        %v4043 = vunpack.c.l.b16 %v3910
        %v4044 = vunpack.c.h.b16 %v3910
        %v4045 = vunpack.c.l.b16 %v3911
        %v4046 = vunpack.c.h.b16 %v3911
        %v4047 = vunpack.c.l.b16 %v3912
        %v4048 = vunpack.c.h.b16 %v3912
        %v4049 = vunpack.c.l.b16 %v3913
        %v4050 = vunpack.c.h.b16 %v3913
        %v4051 = vunpack.c.l.b16 %v3914
        %v4052 = vunpack.c.h.b16 %v3914
        %v4053 = vunpack.c.l.b16 %v3915
        %v4054 = vunpack.c.h.b16 %v3915
        %v4055 = vunpack.c.l.b16 %v3916
        %v4056 = vunpack.c.h.b16 %v3916
        %v4057 = vpack.c.b16 %v3995, %v3993
        %v4058 = vpack.c.b16 %v3996, %v3994
        %v4059 = vpack.c.b16 %v3999, %v3997
        %v4060 = vpack.c.b16 %v4000, %v3998
        %v4061 = vpack.c.b16 %v4003, %v4001
        %v4062 = vpack.c.b16 %v4004, %v4002
        %v4063 = vpack.c.b16 %v4007, %v4005
        %v4064 = vpack.c.b16 %v4008, %v4006
        %v4065 = vpack.c.b16 %v4011, %v4009
        %v4066 = vpack.c.b16 %v4012, %v4010
        %v4067 = vpack.c.b16 %v4015, %v4013
        %v4068 = vpack.c.b16 %v4016, %v4014
        %v4069 = vpack.c.b16 %v4019, %v4017
        %v4070 = vpack.c.b16 %v4020, %v4018
        %v4071 = vpack.c.b16 %v4023, %v4021
        %v4072 = vpack.c.b16 %v4024, %v4022
        %v4073 = vpack.c.b16 %v4027, %v4025
        %v4074 = vpack.c.b16 %v4028, %v4026
        %v4075 = vpack.c.b16 %v4031, %v4029
        %v4076 = vpack.c.b16 %v4032, %v4030
        %v4077 = vpack.c.b16 %v4035, %v4033
        %v4078 = vpack.c.b16 %v4036, %v4034
        %v4079 = vpack.c.b16 %v4039, %v4037
        %v4080 = vpack.c.b16 %v4040, %v4038
        %v4081 = vpack.c.b16 %v4043, %v4041
        %v4082 = vpack.c.b16 %v4044, %v4042
        %v4083 = vpack.c.b16 %v4047, %v4045
        %v4084 = vpack.c.b16 %v4048, %v4046
        %v4085 = vpack.c.b16 %v4051, %v4049
        %v4086 = vpack.c.b16 %v4052, %v4050
        %v4087 = vpack.c.b16 %v4055, %v4053
        %v4088 = vpack.c.b16 %v4056, %v4054
        %4121 = vmatprep.subr.bf16.mxu0 %v4072
        %4122 = vmatpush1.bf16.msra.mxu0 %v4071
        %4123 = vmatprep.subr.bf16.mxu0 %v4070
        %4124 = vmatpush1.bf16.msra.mxu0 %v4069
        %4125 = vmatprep.subr.bf16.mxu0 %v4068
        %4126 = vmatpush1.bf16.msra.mxu0 %v4067
        %4127 = vmatprep.subr.bf16.mxu0 %v4066
        %4128 = vmatpush1.bf16.msra.mxu0 %v4065
        %4129 = vmatprep.subr.bf16.mxu0 %v4064
        %4130 = vmatpush1.bf16.msra.mxu0 %v4063
        %4131 = vmatprep.subr.bf16.mxu0 %v4062
        %4132 = vmatpush1.bf16.msra.mxu0 %v4061
        %4133 = vmatprep.subr.bf16.mxu0 %v4060
        %4134 = vmatpush1.bf16.msra.mxu0 %v4059
        %4135 = vmatprep.subr.bf16.mxu0 %v4058
        %4136 = vmatpush1.bf16.msra.mxu0 %v4057
        %4137 = vmatprep.subr.bf16.mxu0 %v4088
        %4138 = vmatpush2.bf16.msra.mxu0 %v4087
        %4139 = vmatprep.subr.bf16.mxu0 %v4086
        %4140 = vmatpush2.bf16.msra.mxu0 %v4085
        %4141 = vmatprep.subr.bf16.mxu0 %v4084
        %4142 = vmatpush2.bf16.msra.mxu0 %v4083
        %4143 = vmatprep.subr.bf16.mxu0 %v4082
        %4144 = vmatpush2.bf16.msra.mxu0 %v4081
        %4145 = vmatprep.subr.bf16.mxu0 %v4080
        %4146 = vmatpush2.bf16.msra.mxu0 %v4079
        %4147 = vmatprep.subr.bf16.mxu0 %v4078
        %4148 = vmatpush2.bf16.msra.mxu0 %v4077
        %4149 = vmatprep.subr.bf16.mxu0 %v4076
        %4150 = vmatpush2.bf16.msra.mxu0 %v4075
        %4151 = vmatprep.subr.bf16.mxu0 %v4074
        %4152 = vmatpush2.bf16.msra.mxu0 %v4073
        %4153 = vmatprep.mubr.bf16.mxu0 %v3940
        %4154 = vmatmul.mubr.bf16.gmra.mxu0 %v3928
        %v4155 = vpop.f32.mrf.mxu0
        %v4156 = vadd.f32 0.0, %v4155
        %v4157 = vpop.f32.mrf.mxu0
        %v4158 = vadd.f32 0.0, %v4157
        %v4159 = vpop.f32.mrf.mxu0
        %v4160 = vadd.f32 0.0, %v4159
        %v4161 = vpop.f32.mrf.mxu0
        %v4162 = vadd.f32 0.0, %v4161
        %4163 = vmatprep.mubr.bf16.mxu0 %v3956
        %4164 = vmatmul.mubr.bf16.gmra.mxu0 %v3948
        %v4165 = vpop.f32.mrf.mxu0
        %v4166 = vadd.f32 0.0, %v4165
        %v4167 = vpop.f32.mrf.mxu0
        %v4168 = vadd.f32 0.0, %v4167
        %v4169 = vpop.f32.mrf.mxu0
        %v4170 = vadd.f32 0.0, %v4169
        %v4171 = vpop.f32.mrf.mxu0
        %v4172 = vadd.f32 0.0, %v4171
        %4173 = vdwg.mxu0
        %v4190 = vunpack.c.l.b16 %v3864
        %v4191 = vunpack.c.h.b16 %v3864
        %v4192 = vunpack.c.l.b16 %v3865
        %v4193 = vunpack.c.h.b16 %v3865
        %v4194 = vunpack.c.l.b16 %v3866
        %v4195 = vunpack.c.h.b16 %v3866
        %v4196 = vunpack.c.l.b16 %v3867
        %v4197 = vunpack.c.h.b16 %v3867
        %v4198 = vunpack.c.l.b16 %v3868
        %v4199 = vunpack.c.h.b16 %v3868
        %v4200 = vunpack.c.l.b16 %v3869
        %v4201 = vunpack.c.h.b16 %v3869
        %v4202 = vunpack.c.l.b16 %v3870
        %v4203 = vunpack.c.h.b16 %v3870
        %v4204 = vunpack.c.l.b16 %v3871
        %v4205 = vunpack.c.h.b16 %v3871
        %v4206 = vunpack.c.l.b16 %v3872
        %v4207 = vunpack.c.h.b16 %v3872
        %v4208 = vunpack.c.l.b16 %v3873
        %v4209 = vunpack.c.h.b16 %v3873
        %v4210 = vunpack.c.l.b16 %v3874
        %v4211 = vunpack.c.h.b16 %v3874
        %v4212 = vunpack.c.l.b16 %v3875
        %v4213 = vunpack.c.h.b16 %v3875
        %v4214 = vunpack.c.l.b16 %v3876
        %v4215 = vunpack.c.h.b16 %v3876
        %v4216 = vunpack.c.l.b16 %v3877
        %v4217 = vunpack.c.h.b16 %v3877
        %v4218 = vunpack.c.l.b16 %v3878
        %v4219 = vunpack.c.h.b16 %v3878
        %v4220 = vunpack.c.l.b16 %v3879
        %v4221 = vunpack.c.h.b16 %v3879
        %v4222 = vpack.c.b16 %v4192, %v4190
        %v4223 = vpack.c.b16 %v4193, %v4191
        %v4224 = vpack.c.b16 %v4196, %v4194
        %v4225 = vpack.c.b16 %v4197, %v4195
        %v4226 = vpack.c.b16 %v4200, %v4198
        %v4227 = vpack.c.b16 %v4201, %v4199
        %v4228 = vpack.c.b16 %v4204, %v4202
        %v4229 = vpack.c.b16 %v4205, %v4203
        %v4230 = vpack.c.b16 %v4208, %v4206
        %v4231 = vpack.c.b16 %v4209, %v4207
        %v4232 = vpack.c.b16 %v4212, %v4210
        %v4233 = vpack.c.b16 %v4213, %v4211
        %v4234 = vpack.c.b16 %v4216, %v4214
        %v4235 = vpack.c.b16 %v4217, %v4215
        %v4236 = vpack.c.b16 %v4220, %v4218
        %v4237 = vpack.c.b16 %v4221, %v4219
        %4254 = vmatprep.subr.bf16.mxu0 %v4237
        %4255 = vmatpush1.bf16.msra.mxu0 %v4236
        %4256 = vmatprep.subr.bf16.mxu0 %v4235
        %4257 = vmatpush1.bf16.msra.mxu0 %v4234
        %4258 = vmatprep.subr.bf16.mxu0 %v4233
        %4259 = vmatpush1.bf16.msra.mxu0 %v4232
        %4260 = vmatprep.subr.bf16.mxu0 %v4231
        %4261 = vmatpush1.bf16.msra.mxu0 %v4230
        %4262 = vmatprep.subr.bf16.mxu0 %v4229
        %4263 = vmatpush1.bf16.msra.mxu0 %v4228
        %4264 = vmatprep.subr.bf16.mxu0 %v4227
        %4265 = vmatpush1.bf16.msra.mxu0 %v4226
        %4266 = vmatprep.subr.bf16.mxu0 %v4225
        %4267 = vmatpush1.bf16.msra.mxu0 %v4224
        %4268 = vmatprep.subr.bf16.mxu0 %v4223
        %4269 = vmatpush1.bf16.msra.mxu0 %v4222
        %4270 = vmatprep.subr.bf16.mxu0 0
        %4271 = vmatpush2.bf16.msra.mxu0 0
        %4272 = vmatprep.subr.bf16.mxu0 0
        %4273 = vmatpush2.bf16.msra.mxu0 0
        %4274 = vmatprep.subr.bf16.mxu0 0
        %4275 = vmatpush2.bf16.msra.mxu0 0
        %4276 = vmatprep.subr.bf16.mxu0 0
        %4277 = vmatpush2.bf16.msra.mxu0 0
        %4278 = vmatprep.subr.bf16.mxu0 0
        %4279 = vmatpush2.bf16.msra.mxu0 0
        %4280 = vmatprep.subr.bf16.mxu0 0
        %4281 = vmatpush2.bf16.msra.mxu0 0
        %4282 = vmatprep.subr.bf16.mxu0 0
        %4283 = vmatpush2.bf16.msra.mxu0 0
        %4284 = vmatprep.subr.bf16.mxu0 0
        %4285 = vmatpush2.bf16.msra.mxu0 0
        %4286 = vmatprep.mubr.bf16.mxu0 0
        %4287 = vmatmul.mubr.bf16.gmra.mxu0 %v3862
        %v4288 = vpop.f32.mrf.mxu0
        %v4289 = vadd.f32 %v4156, %v4288
        %v4290 = vpop.f32.mrf.mxu0
        %v4291 = vadd.f32 %v4158, %v4290
        %v4292 = vpop.f32.mrf.mxu0
        %v4293 = vadd.f32 %v4160, %v4292
        %v4294 = vpop.f32.mrf.mxu0
        %v4295 = vadd.f32 %v4162, %v4294
        %4296 = vmatprep.mubr.bf16.mxu0 0
        %4297 = vmatmul.mubr.bf16.gmra.mxu0 %v3863
        %v4298 = vpop.f32.mrf.mxu0
        %v4299 = vadd.f32 %v4166, %v4298
        %v4300 = vpop.f32.mrf.mxu0
        %v4301 = vadd.f32 %v4168, %v4300
        %v4302 = vpop.f32.mrf.mxu0
        %v4303 = vadd.f32 %v4170, %v4302
        %v4304 = vpop.f32.mrf.mxu0
        %v4305 = vadd.f32 %v4172, %v4304
        %4306 = vdwg.mxu0
        %v4307 = vld [vmem:[#allocation6] sm:$0xfc]
        %v4308 = vld [vmem:[#allocation6 + $0x10] sm:$0xff]
        %v4309 = vld [vmem:[#allocation6 + $0x20] sm:$0xff]
        %v4310 = vld [vmem:[#allocation6 + $0x30] sm:$0xff]
        %v4311 = vld [vmem:[#allocation6 + $0x40] sm:$0x3]
        %v4312 = vpack.c.bf16 %v4308, %v4307
        %v4313 = vpack.c.bf16 %v4310, %v4309
        %v4314 = vpack.c.bf16 %v4311, %v4311
        %v4315 = vld [vmem:[#allocation30] sm:$0xff]
        %v4316 = vld [vmem:[#allocation30 + $0x8] sm:$0xff]
        %v4317 = vld [vmem:[#allocation30 + $0x10] sm:$0xff]
        %v4318 = vld [vmem:[#allocation30 + $0x18] sm:$0xff]
        %v4319 = vld [vmem:[#allocation30 + $0x20] sm:$0xff]
        %v4320 = vld [vmem:[#allocation30 + $0x28] sm:$0xff]
        %v4321 = vld [vmem:[#allocation30 + $0x30] sm:$0xff]
        %v4322 = vld [vmem:[#allocation30 + $0x38] sm:$0xff]
        %v4323 = vld [vmem:[#allocation30 + $0x40] sm:$0xff]
        %v4324 = vld [vmem:[#allocation30 + $0x48] sm:$0xff]
        %v4325 = vld [vmem:[#allocation30 + $0x50] sm:$0xff]
        %v4326 = vld [vmem:[#allocation30 + $0x58] sm:$0xff]
        %v4327 = vld [vmem:[#allocation30 + $0x60] sm:$0xff]
        %v4328 = vld [vmem:[#allocation30 + $0x68] sm:$0xff]
        %v4329 = vld [vmem:[#allocation30 + $0x70] sm:$0xff]
        %v4330 = vld [vmem:[#allocation30 + $0x78] sm:$0xff]
        %v4334 = vrot.slane %v4312, 1
        %v4335 = vrot.slane %v4313, 1
        %v4336 = vsel %vm3511, %v4334, %v4335
        %v4337 = vrot.slane %v4314, 1
        %v4338 = vsel %vm3511, %v4335, %v4337
        %v4357 = vunpack.c.l.b16 %v4315
        %v4358 = vunpack.c.h.b16 %v4315
        %v4359 = vunpack.c.l.b16 %v4316
        %v4360 = vunpack.c.h.b16 %v4316
        %v4361 = vunpack.c.l.b16 %v4317
        %v4362 = vunpack.c.h.b16 %v4317
        %v4363 = vunpack.c.l.b16 %v4318
        %v4364 = vunpack.c.h.b16 %v4318
        %v4365 = vunpack.c.l.b16 %v4319
        %v4366 = vunpack.c.h.b16 %v4319
        %v4367 = vunpack.c.l.b16 %v4320
        %v4368 = vunpack.c.h.b16 %v4320
        %v4369 = vunpack.c.l.b16 %v4321
        %v4370 = vunpack.c.h.b16 %v4321
        %v4371 = vunpack.c.l.b16 %v4322
        %v4372 = vunpack.c.h.b16 %v4322
        %v4373 = vunpack.c.l.b16 %v4323
        %v4374 = vunpack.c.h.b16 %v4323
        %v4375 = vunpack.c.l.b16 %v4324
        %v4376 = vunpack.c.h.b16 %v4324
        %v4377 = vunpack.c.l.b16 %v4325
        %v4378 = vunpack.c.h.b16 %v4325
        %v4379 = vunpack.c.l.b16 %v4326
        %v4380 = vunpack.c.h.b16 %v4326
        %v4381 = vunpack.c.l.b16 %v4327
        %v4382 = vunpack.c.h.b16 %v4327
        %v4383 = vunpack.c.l.b16 %v4328
        %v4384 = vunpack.c.h.b16 %v4328
        %v4385 = vunpack.c.l.b16 %v4329
        %v4386 = vunpack.c.h.b16 %v4329
        %v4387 = vunpack.c.l.b16 %v4330
        %v4388 = vunpack.c.h.b16 %v4330
        %v4389 = vpack.c.b16 %v4359, %v4357
        %v4390 = vpack.c.b16 %v4360, %v4358
        %v4391 = vpack.c.b16 %v4363, %v4361
        %v4392 = vpack.c.b16 %v4364, %v4362
        %v4393 = vpack.c.b16 %v4367, %v4365
        %v4394 = vpack.c.b16 %v4368, %v4366
        %v4395 = vpack.c.b16 %v4371, %v4369
        %v4396 = vpack.c.b16 %v4372, %v4370
        %v4397 = vpack.c.b16 %v4375, %v4373
        %v4398 = vpack.c.b16 %v4376, %v4374
        %v4399 = vpack.c.b16 %v4379, %v4377
        %v4400 = vpack.c.b16 %v4380, %v4378
        %v4401 = vpack.c.b16 %v4383, %v4381
        %v4402 = vpack.c.b16 %v4384, %v4382
        %v4403 = vpack.c.b16 %v4387, %v4385
        %v4404 = vpack.c.b16 %v4388, %v4386
        %4421 = vmatprep.subr.bf16.mxu0 %v4404
        %4422 = vmatpush1.bf16.msra.mxu0 %v4403
        %4423 = vmatprep.subr.bf16.mxu0 %v4402
        %4424 = vmatpush1.bf16.msra.mxu0 %v4401
        %4425 = vmatprep.subr.bf16.mxu0 %v4400
        %4426 = vmatpush1.bf16.msra.mxu0 %v4399
        %4427 = vmatprep.subr.bf16.mxu0 %v4398
        %4428 = vmatpush1.bf16.msra.mxu0 %v4397
        %4429 = vmatprep.subr.bf16.mxu0 %v4396
        %4430 = vmatpush1.bf16.msra.mxu0 %v4395
        %4431 = vmatprep.subr.bf16.mxu0 %v4394
        %4432 = vmatpush1.bf16.msra.mxu0 %v4393
        %4433 = vmatprep.subr.bf16.mxu0 %v4392
        %4434 = vmatpush1.bf16.msra.mxu0 %v4391
        %4435 = vmatprep.subr.bf16.mxu0 %v4390
        %4436 = vmatpush1.bf16.msra.mxu0 %v4389
        %4437 = vmatprep.subr.bf16.mxu0 0
        %4438 = vmatpush2.bf16.msra.mxu0 0
        %4439 = vmatprep.subr.bf16.mxu0 0
        %4440 = vmatpush2.bf16.msra.mxu0 0
        %4441 = vmatprep.subr.bf16.mxu0 0
        %4442 = vmatpush2.bf16.msra.mxu0 0
        %4443 = vmatprep.subr.bf16.mxu0 0
        %4444 = vmatpush2.bf16.msra.mxu0 0
        %4445 = vmatprep.subr.bf16.mxu0 0
        %4446 = vmatpush2.bf16.msra.mxu0 0
        %4447 = vmatprep.subr.bf16.mxu0 0
        %4448 = vmatpush2.bf16.msra.mxu0 0
        %4449 = vmatprep.subr.bf16.mxu0 0
        %4450 = vmatpush2.bf16.msra.mxu0 0
        %4451 = vmatprep.subr.bf16.mxu0 0
        %4452 = vmatpush2.bf16.msra.mxu0 0
        %4453 = vmatprep.mubr.bf16.mxu0 0
        %4454 = vmatmul.mubr.bf16.gmra.mxu0 %v4336
        %v4455 = vpop.f32.mrf.mxu0
        %v4456 = vadd.f32 0.0, %v4455
        %v4457 = vpop.f32.mrf.mxu0
        %v4458 = vadd.f32 0.0, %v4457
        %v4459 = vpop.f32.mrf.mxu0
        %v4460 = vadd.f32 0.0, %v4459
        %v4461 = vpop.f32.mrf.mxu0
        %v4462 = vadd.f32 0.0, %v4461
        %4463 = vmatprep.mubr.bf16.mxu0 0
        %4464 = vmatmul.mubr.bf16.gmra.mxu0 %v4338
        %v4465 = vpop.f32.mrf.mxu0
        %v4466 = vadd.f32 0.0, %v4465
        %v4467 = vpop.f32.mrf.mxu0
        %v4468 = vadd.f32 0.0, %v4467
        %v4469 = vpop.f32.mrf.mxu0
        %v4470 = vadd.f32 0.0, %v4469
        %v4471 = vpop.f32.mrf.mxu0
        %v4472 = vadd.f32 0.0, %v4471
        %4473 = vdwg.mxu0
        %v4474 = vadd.f32 %v4289, %v4456
        %v4475 = vadd.f32 %v4291, %v4458
        %v4476 = vadd.f32 %v4293, %v4460
        %v4477 = vadd.f32 %v4295, %v4462
        %v4478 = vadd.f32 %v4299, %v4466
        %v4479 = vadd.f32 %v4301, %v4468
        %v4480 = vadd.f32 %v4303, %v4470
        %v4481 = vadd.f32 %v4305, %v4472
        %v4482 = vld [vmem:[#allocation4 + $0x8] sm:$0xff]
        %v4483 = vld [vmem:[#allocation4 + $0x18] sm:$0xff]
        %v4484 = vld [vmem:[#allocation4 + $0x28] sm:$0xff]
        %v4485 = vld [vmem:[#allocation4 + $0x38] sm:$0xff]
        %v4486 = vld [vmem:[#allocation4] sm:$0xfe]
        %v4487 = vld [vmem:[#allocation4 + $0x8] sm:$0xfe]
        %v4488 = vld [vmem:[#allocation4 + $0x10] sm:$0xff]
        %v4489 = vld [vmem:[#allocation4 + $0x20] sm:$0xff]
        %v4490 = vld [vmem:[#allocation4 + $0x30] sm:$0xff]
        %v4491 = vld [vmem:[#allocation4 + $0x40] sm:$0x1]
        %v4492 = vld [vmem:[#allocation4 + $0x48] sm:$0x1]
        %v4493 = vpack.c.bf16 %v4483, %v4482
        %v4494 = vpack.c.bf16 %v4485, %v4484
        %v4495 = vld [vmem:[#allocation32] sm:$0xff]
        %v4496 = vld [vmem:[#allocation32 + $0x8] sm:$0xff]
        %v4497 = vld [vmem:[#allocation32 + $0x10] sm:$0xff]
        %v4498 = vld [vmem:[#allocation32 + $0x18] sm:$0xff]
        %v4499 = vld [vmem:[#allocation32 + $0x20] sm:$0xff]
        %v4500 = vld [vmem:[#allocation32 + $0x28] sm:$0xff]
        %v4501 = vld [vmem:[#allocation32 + $0x30] sm:$0xff]
        %v4502 = vld [vmem:[#allocation32 + $0x38] sm:$0xff]
        %v4503 = vld [vmem:[#allocation32 + $0x40] sm:$0xff]
        %v4504 = vld [vmem:[#allocation32 + $0x48] sm:$0xff]
        %v4505 = vld [vmem:[#allocation32 + $0x50] sm:$0xff]
        %v4506 = vld [vmem:[#allocation32 + $0x58] sm:$0xff]
        %v4507 = vld [vmem:[#allocation32 + $0x60] sm:$0xff]
        %v4508 = vld [vmem:[#allocation32 + $0x68] sm:$0xff]
        %v4509 = vld [vmem:[#allocation32 + $0x70] sm:$0xff]
        %v4510 = vld [vmem:[#allocation32 + $0x78] sm:$0xff]
        %v4511 = vpack.c.bf16 %v4488, %v4486
        %v4512 = vpack.c.bf16 %v4483, %v4487
        %v4513 = vpack.c.bf16 %v4490, %v4489
        %v4514 = vpack.c.bf16 %v4491, %v4491
        %v4515 = vpack.c.bf16 %v4492, %v4492
        %v4516 = vld [vmem:[#allocation33] sm:$0xff]
        %v4517 = vld [vmem:[#allocation33 + $0x8] sm:$0xff]
        %v4518 = vld [vmem:[#allocation33 + $0x10] sm:$0xff]
        %v4519 = vld [vmem:[#allocation33 + $0x18] sm:$0xff]
        %v4520 = vld [vmem:[#allocation33 + $0x20] sm:$0xff]
        %v4521 = vld [vmem:[#allocation33 + $0x28] sm:$0xff]
        %v4522 = vld [vmem:[#allocation33 + $0x30] sm:$0xff]
        %v4523 = vld [vmem:[#allocation33 + $0x38] sm:$0xff]
        %v4524 = vld [vmem:[#allocation33 + $0x40] sm:$0xff]
        %v4525 = vld [vmem:[#allocation33 + $0x48] sm:$0xff]
        %v4526 = vld [vmem:[#allocation33 + $0x50] sm:$0xff]
        %v4527 = vld [vmem:[#allocation33 + $0x58] sm:$0xff]
        %v4528 = vld [vmem:[#allocation33 + $0x60] sm:$0xff]
        %v4529 = vld [vmem:[#allocation33 + $0x68] sm:$0xff]
        %v4530 = vld [vmem:[#allocation33 + $0x70] sm:$0xff]
        %v4531 = vld [vmem:[#allocation33 + $0x78] sm:$0xff]
        %v4532 = vld [vmem:[#allocation33 + $0x80] sm:$0xff]
        %v4533 = vld [vmem:[#allocation33 + $0x88] sm:$0xff]
        %v4534 = vld [vmem:[#allocation33 + $0x90] sm:$0xff]
        %v4535 = vld [vmem:[#allocation33 + $0x98] sm:$0xff]
        %v4536 = vld [vmem:[#allocation33 + $0xa0] sm:$0xff]
        %v4537 = vld [vmem:[#allocation33 + $0xa8] sm:$0xff]
        %v4538 = vld [vmem:[#allocation33 + $0xb0] sm:$0xff]
        %v4539 = vld [vmem:[#allocation33 + $0xb8] sm:$0xff]
        %v4540 = vld [vmem:[#allocation33 + $0xc0] sm:$0xff]
        %v4541 = vld [vmem:[#allocation33 + $0xc8] sm:$0xff]
        %v4542 = vld [vmem:[#allocation33 + $0xd0] sm:$0xff]
        %v4543 = vld [vmem:[#allocation33 + $0xd8] sm:$0xff]
        %v4544 = vld [vmem:[#allocation33 + $0xe0] sm:$0xff]
        %v4545 = vld [vmem:[#allocation33 + $0xe8] sm:$0xff]
        %v4546 = vld [vmem:[#allocation33 + $0xf0] sm:$0xff]
        %v4547 = vld [vmem:[#allocation33 + $0xf8] sm:$0xff]
        %v4549 = vshrl.u32 %v4511, 16
        %v4551 = vshll.u32 %v4511, 16
        %v4553 = vrot.slane %v4551, 1
        %v4554 = vor.u32 %v4549, %v4553
        %v4556 = vshll.u32 %v4513, 16
        %v4558 = vrot.slane %v4556, 1
        %v4559 = vsel %vm1883, %v4554, %v4558
        %v4561 = vshrl.u32 %v4512, 16
        %v4563 = vshll.u32 %v4512, 16
        %v4565 = vrot.slane %v4563, 1
        %v4566 = vor.u32 %v4561, %v4565
        %v4568 = vshll.u32 %v4494, 16
        %v4570 = vrot.slane %v4568, 1
        %v4571 = vsel %vm1883, %v4566, %v4570
        %v4572 = vshrl.u32 %v4513, 16
        %v4574 = vor.u32 %v4572, %v4558
        %v4576 = vshll.u32 %v4514, 16
        %v4578 = vrot.slane %v4576, 1
        %v4579 = vsel %vm1883, %v4574, %v4578
        %v4580 = vshrl.u32 %v4494, 16
        %v4582 = vor.u32 %v4580, %v4570
        %v4584 = vshll.u32 %v4515, 16
        %v4586 = vrot.slane %v4584, 1
        %v4587 = vsel %vm1883, %v4582, %v4586
        %v4624 = vunpack.c.l.b16 %v4516
        %v4625 = vunpack.c.h.b16 %v4516
        %v4626 = vunpack.c.l.b16 %v4517
        %v4627 = vunpack.c.h.b16 %v4517
        %v4628 = vunpack.c.l.b16 %v4518
        %v4629 = vunpack.c.h.b16 %v4518
        %v4630 = vunpack.c.l.b16 %v4519
        %v4631 = vunpack.c.h.b16 %v4519
        %v4632 = vunpack.c.l.b16 %v4520
        %v4633 = vunpack.c.h.b16 %v4520
        %v4634 = vunpack.c.l.b16 %v4521
        %v4635 = vunpack.c.h.b16 %v4521
        %v4636 = vunpack.c.l.b16 %v4522
        %v4637 = vunpack.c.h.b16 %v4522
        %v4638 = vunpack.c.l.b16 %v4523
        %v4639 = vunpack.c.h.b16 %v4523
        %v4640 = vunpack.c.l.b16 %v4524
        %v4641 = vunpack.c.h.b16 %v4524
        %v4642 = vunpack.c.l.b16 %v4525
        %v4643 = vunpack.c.h.b16 %v4525
        %v4644 = vunpack.c.l.b16 %v4526
        %v4645 = vunpack.c.h.b16 %v4526
        %v4646 = vunpack.c.l.b16 %v4527
        %v4647 = vunpack.c.h.b16 %v4527
        %v4648 = vunpack.c.l.b16 %v4528
        %v4649 = vunpack.c.h.b16 %v4528
        %v4650 = vunpack.c.l.b16 %v4529
        %v4651 = vunpack.c.h.b16 %v4529
        %v4652 = vunpack.c.l.b16 %v4530
        %v4653 = vunpack.c.h.b16 %v4530
        %v4654 = vunpack.c.l.b16 %v4531
        %v4655 = vunpack.c.h.b16 %v4531
        %v4656 = vunpack.c.l.b16 %v4532
        %v4657 = vunpack.c.h.b16 %v4532
        %v4658 = vunpack.c.l.b16 %v4533
        %v4659 = vunpack.c.h.b16 %v4533
        %v4660 = vunpack.c.l.b16 %v4534
        %v4661 = vunpack.c.h.b16 %v4534
        %v4662 = vunpack.c.l.b16 %v4535
        %v4663 = vunpack.c.h.b16 %v4535
        %v4664 = vunpack.c.l.b16 %v4536
        %v4665 = vunpack.c.h.b16 %v4536
        %v4666 = vunpack.c.l.b16 %v4537
        %v4667 = vunpack.c.h.b16 %v4537
        %v4668 = vunpack.c.l.b16 %v4538
        %v4669 = vunpack.c.h.b16 %v4538
        %v4670 = vunpack.c.l.b16 %v4539
        %v4671 = vunpack.c.h.b16 %v4539
        %v4672 = vunpack.c.l.b16 %v4540
        %v4673 = vunpack.c.h.b16 %v4540
        %v4674 = vunpack.c.l.b16 %v4541
        %v4675 = vunpack.c.h.b16 %v4541
        %v4676 = vunpack.c.l.b16 %v4542
        %v4677 = vunpack.c.h.b16 %v4542
        %v4678 = vunpack.c.l.b16 %v4543
        %v4679 = vunpack.c.h.b16 %v4543
        %v4680 = vunpack.c.l.b16 %v4544
        %v4681 = vunpack.c.h.b16 %v4544
        %v4682 = vunpack.c.l.b16 %v4545
        %v4683 = vunpack.c.h.b16 %v4545
        %v4684 = vunpack.c.l.b16 %v4546
        %v4685 = vunpack.c.h.b16 %v4546
        %v4686 = vunpack.c.l.b16 %v4547
        %v4687 = vunpack.c.h.b16 %v4547
        %v4688 = vpack.c.b16 %v4626, %v4624
        %v4689 = vpack.c.b16 %v4627, %v4625
        %v4690 = vpack.c.b16 %v4630, %v4628
        %v4691 = vpack.c.b16 %v4631, %v4629
        %v4692 = vpack.c.b16 %v4634, %v4632
        %v4693 = vpack.c.b16 %v4635, %v4633
        %v4694 = vpack.c.b16 %v4638, %v4636
        %v4695 = vpack.c.b16 %v4639, %v4637
        %v4696 = vpack.c.b16 %v4642, %v4640
        %v4697 = vpack.c.b16 %v4643, %v4641
        %v4698 = vpack.c.b16 %v4646, %v4644
        %v4699 = vpack.c.b16 %v4647, %v4645
        %v4700 = vpack.c.b16 %v4650, %v4648
        %v4701 = vpack.c.b16 %v4651, %v4649
        %v4702 = vpack.c.b16 %v4654, %v4652
        %v4703 = vpack.c.b16 %v4655, %v4653
        %v4704 = vpack.c.b16 %v4658, %v4656
        %v4705 = vpack.c.b16 %v4659, %v4657
        %v4706 = vpack.c.b16 %v4662, %v4660
        %v4707 = vpack.c.b16 %v4663, %v4661
        %v4708 = vpack.c.b16 %v4666, %v4664
        %v4709 = vpack.c.b16 %v4667, %v4665
        %v4710 = vpack.c.b16 %v4670, %v4668
        %v4711 = vpack.c.b16 %v4671, %v4669
        %v4712 = vpack.c.b16 %v4674, %v4672
        %v4713 = vpack.c.b16 %v4675, %v4673
        %v4714 = vpack.c.b16 %v4678, %v4676
        %v4715 = vpack.c.b16 %v4679, %v4677
        %v4716 = vpack.c.b16 %v4682, %v4680
        %v4717 = vpack.c.b16 %v4683, %v4681
        %v4718 = vpack.c.b16 %v4686, %v4684
        %v4719 = vpack.c.b16 %v4687, %v4685
        %4752 = vmatprep.subr.bf16.mxu0 %v4703
        %4753 = vmatpush1.bf16.msra.mxu0 %v4702
        %4754 = vmatprep.subr.bf16.mxu0 %v4701
        %4755 = vmatpush1.bf16.msra.mxu0 %v4700
        %4756 = vmatprep.subr.bf16.mxu0 %v4699
        %4757 = vmatpush1.bf16.msra.mxu0 %v4698
        %4758 = vmatprep.subr.bf16.mxu0 %v4697
        %4759 = vmatpush1.bf16.msra.mxu0 %v4696
        %4760 = vmatprep.subr.bf16.mxu0 %v4695
        %4761 = vmatpush1.bf16.msra.mxu0 %v4694
        %4762 = vmatprep.subr.bf16.mxu0 %v4693
        %4763 = vmatpush1.bf16.msra.mxu0 %v4692
        %4764 = vmatprep.subr.bf16.mxu0 %v4691
        %4765 = vmatpush1.bf16.msra.mxu0 %v4690
        %4766 = vmatprep.subr.bf16.mxu0 %v4689
        %4767 = vmatpush1.bf16.msra.mxu0 %v4688
        %4768 = vmatprep.subr.bf16.mxu0 %v4719
        %4769 = vmatpush2.bf16.msra.mxu0 %v4718
        %4770 = vmatprep.subr.bf16.mxu0 %v4717
        %4771 = vmatpush2.bf16.msra.mxu0 %v4716
        %4772 = vmatprep.subr.bf16.mxu0 %v4715
        %4773 = vmatpush2.bf16.msra.mxu0 %v4714
        %4774 = vmatprep.subr.bf16.mxu0 %v4713
        %4775 = vmatpush2.bf16.msra.mxu0 %v4712
        %4776 = vmatprep.subr.bf16.mxu0 %v4711
        %4777 = vmatpush2.bf16.msra.mxu0 %v4710
        %4778 = vmatprep.subr.bf16.mxu0 %v4709
        %4779 = vmatpush2.bf16.msra.mxu0 %v4708
        %4780 = vmatprep.subr.bf16.mxu0 %v4707
        %4781 = vmatpush2.bf16.msra.mxu0 %v4706
        %4782 = vmatprep.subr.bf16.mxu0 %v4705
        %4783 = vmatpush2.bf16.msra.mxu0 %v4704
        %4784 = vmatprep.mubr.bf16.mxu0 %v4571
        %4785 = vmatmul.mubr.bf16.gmra.mxu0 %v4559
        %v4786 = vpop.f32.mrf.mxu0
        %v4787 = vadd.f32 0.0, %v4786
        %v4788 = vpop.f32.mrf.mxu0
        %v4789 = vadd.f32 0.0, %v4788
        %v4790 = vpop.f32.mrf.mxu0
        %v4791 = vadd.f32 0.0, %v4790
        %v4792 = vpop.f32.mrf.mxu0
        %v4793 = vadd.f32 0.0, %v4792
        %4794 = vmatprep.mubr.bf16.mxu0 %v4587
        %4795 = vmatmul.mubr.bf16.gmra.mxu0 %v4579
        %v4796 = vpop.f32.mrf.mxu0
        %v4797 = vadd.f32 0.0, %v4796
        %v4798 = vpop.f32.mrf.mxu0
        %v4799 = vadd.f32 0.0, %v4798
        %v4800 = vpop.f32.mrf.mxu0
        %v4801 = vadd.f32 0.0, %v4800
        %v4802 = vpop.f32.mrf.mxu0
        %v4803 = vadd.f32 0.0, %v4802
        %4804 = vdwg.mxu0
        %v4821 = vunpack.c.l.b16 %v4495
        %v4822 = vunpack.c.h.b16 %v4495
        %v4823 = vunpack.c.l.b16 %v4496
        %v4824 = vunpack.c.h.b16 %v4496
        %v4825 = vunpack.c.l.b16 %v4497
        %v4826 = vunpack.c.h.b16 %v4497
        %v4827 = vunpack.c.l.b16 %v4498
        %v4828 = vunpack.c.h.b16 %v4498
        %v4829 = vunpack.c.l.b16 %v4499
        %v4830 = vunpack.c.h.b16 %v4499
        %v4831 = vunpack.c.l.b16 %v4500
        %v4832 = vunpack.c.h.b16 %v4500
        %v4833 = vunpack.c.l.b16 %v4501
        %v4834 = vunpack.c.h.b16 %v4501
        %v4835 = vunpack.c.l.b16 %v4502
        %v4836 = vunpack.c.h.b16 %v4502
        %v4837 = vunpack.c.l.b16 %v4503
        %v4838 = vunpack.c.h.b16 %v4503
        %v4839 = vunpack.c.l.b16 %v4504
        %v4840 = vunpack.c.h.b16 %v4504
        %v4841 = vunpack.c.l.b16 %v4505
        %v4842 = vunpack.c.h.b16 %v4505
        %v4843 = vunpack.c.l.b16 %v4506
        %v4844 = vunpack.c.h.b16 %v4506
        %v4845 = vunpack.c.l.b16 %v4507
        %v4846 = vunpack.c.h.b16 %v4507
        %v4847 = vunpack.c.l.b16 %v4508
        %v4848 = vunpack.c.h.b16 %v4508
        %v4849 = vunpack.c.l.b16 %v4509
        %v4850 = vunpack.c.h.b16 %v4509
        %v4851 = vunpack.c.l.b16 %v4510
        %v4852 = vunpack.c.h.b16 %v4510
        %v4853 = vpack.c.b16 %v4823, %v4821
        %v4854 = vpack.c.b16 %v4824, %v4822
        %v4855 = vpack.c.b16 %v4827, %v4825
        %v4856 = vpack.c.b16 %v4828, %v4826
        %v4857 = vpack.c.b16 %v4831, %v4829
        %v4858 = vpack.c.b16 %v4832, %v4830
        %v4859 = vpack.c.b16 %v4835, %v4833
        %v4860 = vpack.c.b16 %v4836, %v4834
        %v4861 = vpack.c.b16 %v4839, %v4837
        %v4862 = vpack.c.b16 %v4840, %v4838
        %v4863 = vpack.c.b16 %v4843, %v4841
        %v4864 = vpack.c.b16 %v4844, %v4842
        %v4865 = vpack.c.b16 %v4847, %v4845
        %v4866 = vpack.c.b16 %v4848, %v4846
        %v4867 = vpack.c.b16 %v4851, %v4849
        %v4868 = vpack.c.b16 %v4852, %v4850
        %4885 = vmatprep.subr.bf16.mxu0 %v4868
        %4886 = vmatpush1.bf16.msra.mxu0 %v4867
        %4887 = vmatprep.subr.bf16.mxu0 %v4866
        %4888 = vmatpush1.bf16.msra.mxu0 %v4865
        %4889 = vmatprep.subr.bf16.mxu0 %v4864
        %4890 = vmatpush1.bf16.msra.mxu0 %v4863
        %4891 = vmatprep.subr.bf16.mxu0 %v4862
        %4892 = vmatpush1.bf16.msra.mxu0 %v4861
        %4893 = vmatprep.subr.bf16.mxu0 %v4860
        %4894 = vmatpush1.bf16.msra.mxu0 %v4859
        %4895 = vmatprep.subr.bf16.mxu0 %v4858
        %4896 = vmatpush1.bf16.msra.mxu0 %v4857
        %4897 = vmatprep.subr.bf16.mxu0 %v4856
        %4898 = vmatpush1.bf16.msra.mxu0 %v4855
        %4899 = vmatprep.subr.bf16.mxu0 %v4854
        %4900 = vmatpush1.bf16.msra.mxu0 %v4853
        %4901 = vmatprep.subr.bf16.mxu0 0
        %4902 = vmatpush2.bf16.msra.mxu0 0
        %4903 = vmatprep.subr.bf16.mxu0 0
        %4904 = vmatpush2.bf16.msra.mxu0 0
        %4905 = vmatprep.subr.bf16.mxu0 0
        %4906 = vmatpush2.bf16.msra.mxu0 0
        %4907 = vmatprep.subr.bf16.mxu0 0
        %4908 = vmatpush2.bf16.msra.mxu0 0
        %4909 = vmatprep.subr.bf16.mxu0 0
        %4910 = vmatpush2.bf16.msra.mxu0 0
        %4911 = vmatprep.subr.bf16.mxu0 0
        %4912 = vmatpush2.bf16.msra.mxu0 0
        %4913 = vmatprep.subr.bf16.mxu0 0
        %4914 = vmatpush2.bf16.msra.mxu0 0
        %4915 = vmatprep.subr.bf16.mxu0 0
        %4916 = vmatpush2.bf16.msra.mxu0 0
        %4917 = vmatprep.mubr.bf16.mxu0 0
        %4918 = vmatmul.mubr.bf16.gmra.mxu0 %v4493
        %v4919 = vpop.f32.mrf.mxu0
        %v4920 = vadd.f32 %v4787, %v4919
        %v4921 = vpop.f32.mrf.mxu0
        %v4922 = vadd.f32 %v4789, %v4921
        %v4923 = vpop.f32.mrf.mxu0
        %v4924 = vadd.f32 %v4791, %v4923
        %v4925 = vpop.f32.mrf.mxu0
        %v4926 = vadd.f32 %v4793, %v4925
        %4927 = vmatprep.mubr.bf16.mxu0 0
        %4928 = vmatmul.mubr.bf16.gmra.mxu0 %v4494
        %v4929 = vpop.f32.mrf.mxu0
        %v4930 = vadd.f32 %v4797, %v4929
        %v4931 = vpop.f32.mrf.mxu0
        %v4932 = vadd.f32 %v4799, %v4931
        %v4933 = vpop.f32.mrf.mxu0
        %v4934 = vadd.f32 %v4801, %v4933
        %v4935 = vpop.f32.mrf.mxu0
        %v4936 = vadd.f32 %v4803, %v4935
        %4937 = vdwg.mxu0
        %v4938 = vld [vmem:[#allocation4] sm:$0xfc]
        %v4939 = vld [vmem:[#allocation4 + $0x10] sm:$0xff]
        %v4940 = vld [vmem:[#allocation4 + $0x20] sm:$0xff]
        %v4941 = vld [vmem:[#allocation4 + $0x30] sm:$0xff]
        %v4942 = vld [vmem:[#allocation4 + $0x40] sm:$0x3]
        %v4943 = vpack.c.bf16 %v4939, %v4938
        %v4944 = vpack.c.bf16 %v4941, %v4940
        %v4945 = vpack.c.bf16 %v4942, %v4942
        %v4946 = vld [vmem:[#allocation35] sm:$0xff]
        %v4947 = vld [vmem:[#allocation35 + $0x8] sm:$0xff]
        %v4948 = vld [vmem:[#allocation35 + $0x10] sm:$0xff]
        %v4949 = vld [vmem:[#allocation35 + $0x18] sm:$0xff]
        %v4950 = vld [vmem:[#allocation35 + $0x20] sm:$0xff]
        %v4951 = vld [vmem:[#allocation35 + $0x28] sm:$0xff]
        %v4952 = vld [vmem:[#allocation35 + $0x30] sm:$0xff]
        %v4953 = vld [vmem:[#allocation35 + $0x38] sm:$0xff]
        %v4954 = vld [vmem:[#allocation35 + $0x40] sm:$0xff]
        %v4955 = vld [vmem:[#allocation35 + $0x48] sm:$0xff]
        %v4956 = vld [vmem:[#allocation35 + $0x50] sm:$0xff]
        %v4957 = vld [vmem:[#allocation35 + $0x58] sm:$0xff]
        %v4958 = vld [vmem:[#allocation35 + $0x60] sm:$0xff]
        %v4959 = vld [vmem:[#allocation35 + $0x68] sm:$0xff]
        %v4960 = vld [vmem:[#allocation35 + $0x70] sm:$0xff]
        %v4961 = vld [vmem:[#allocation35 + $0x78] sm:$0xff]
        %v4965 = vrot.slane %v4943, 1
        %v4966 = vrot.slane %v4944, 1
        %v4967 = vsel %vm3511, %v4965, %v4966
        %v4968 = vrot.slane %v4945, 1
        %v4969 = vsel %vm3511, %v4966, %v4968
        %v4988 = vunpack.c.l.b16 %v4946
        %v4989 = vunpack.c.h.b16 %v4946
        %v4990 = vunpack.c.l.b16 %v4947
        %v4991 = vunpack.c.h.b16 %v4947
        %v4992 = vunpack.c.l.b16 %v4948
        %v4993 = vunpack.c.h.b16 %v4948
        %v4994 = vunpack.c.l.b16 %v4949
        %v4995 = vunpack.c.h.b16 %v4949
        %v4996 = vunpack.c.l.b16 %v4950
        %v4997 = vunpack.c.h.b16 %v4950
        %v4998 = vunpack.c.l.b16 %v4951
        %v4999 = vunpack.c.h.b16 %v4951
        %v5000 = vunpack.c.l.b16 %v4952
        %v5001 = vunpack.c.h.b16 %v4952
        %v5002 = vunpack.c.l.b16 %v4953
        %v5003 = vunpack.c.h.b16 %v4953
        %v5004 = vunpack.c.l.b16 %v4954
        %v5005 = vunpack.c.h.b16 %v4954
        %v5006 = vunpack.c.l.b16 %v4955
        %v5007 = vunpack.c.h.b16 %v4955
        %v5008 = vunpack.c.l.b16 %v4956
        %v5009 = vunpack.c.h.b16 %v4956
        %v5010 = vunpack.c.l.b16 %v4957
        %v5011 = vunpack.c.h.b16 %v4957
        %v5012 = vunpack.c.l.b16 %v4958
        %v5013 = vunpack.c.h.b16 %v4958
        %v5014 = vunpack.c.l.b16 %v4959
        %v5015 = vunpack.c.h.b16 %v4959
        %v5016 = vunpack.c.l.b16 %v4960
        %v5017 = vunpack.c.h.b16 %v4960
        %v5018 = vunpack.c.l.b16 %v4961
        %v5019 = vunpack.c.h.b16 %v4961
        %v5020 = vpack.c.b16 %v4990, %v4988
        %v5021 = vpack.c.b16 %v4991, %v4989
        %v5022 = vpack.c.b16 %v4994, %v4992
        %v5023 = vpack.c.b16 %v4995, %v4993
        %v5024 = vpack.c.b16 %v4998, %v4996
        %v5025 = vpack.c.b16 %v4999, %v4997
        %v5026 = vpack.c.b16 %v5002, %v5000
        %v5027 = vpack.c.b16 %v5003, %v5001
        %v5028 = vpack.c.b16 %v5006, %v5004
        %v5029 = vpack.c.b16 %v5007, %v5005
        %v5030 = vpack.c.b16 %v5010, %v5008
        %v5031 = vpack.c.b16 %v5011, %v5009
        %v5032 = vpack.c.b16 %v5014, %v5012
        %v5033 = vpack.c.b16 %v5015, %v5013
        %v5034 = vpack.c.b16 %v5018, %v5016
        %v5035 = vpack.c.b16 %v5019, %v5017
        %5052 = vmatprep.subr.bf16.mxu0 %v5035
        %5053 = vmatpush1.bf16.msra.mxu0 %v5034
        %5054 = vmatprep.subr.bf16.mxu0 %v5033
        %5055 = vmatpush1.bf16.msra.mxu0 %v5032
        %5056 = vmatprep.subr.bf16.mxu0 %v5031
        %5057 = vmatpush1.bf16.msra.mxu0 %v5030
        %5058 = vmatprep.subr.bf16.mxu0 %v5029
        %5059 = vmatpush1.bf16.msra.mxu0 %v5028
        %5060 = vmatprep.subr.bf16.mxu0 %v5027
        %5061 = vmatpush1.bf16.msra.mxu0 %v5026
        %5062 = vmatprep.subr.bf16.mxu0 %v5025
        %5063 = vmatpush1.bf16.msra.mxu0 %v5024
        %5064 = vmatprep.subr.bf16.mxu0 %v5023
        %5065 = vmatpush1.bf16.msra.mxu0 %v5022
        %5066 = vmatprep.subr.bf16.mxu0 %v5021
        %5067 = vmatpush1.bf16.msra.mxu0 %v5020
        %5068 = vmatprep.subr.bf16.mxu0 0
        %5069 = vmatpush2.bf16.msra.mxu0 0
        %5070 = vmatprep.subr.bf16.mxu0 0
        %5071 = vmatpush2.bf16.msra.mxu0 0
        %5072 = vmatprep.subr.bf16.mxu0 0
        %5073 = vmatpush2.bf16.msra.mxu0 0
        %5074 = vmatprep.subr.bf16.mxu0 0
        %5075 = vmatpush2.bf16.msra.mxu0 0
        %5076 = vmatprep.subr.bf16.mxu0 0
        %5077 = vmatpush2.bf16.msra.mxu0 0
        %5078 = vmatprep.subr.bf16.mxu0 0
        %5079 = vmatpush2.bf16.msra.mxu0 0
        %5080 = vmatprep.subr.bf16.mxu0 0
        %5081 = vmatpush2.bf16.msra.mxu0 0
        %5082 = vmatprep.subr.bf16.mxu0 0
        %5083 = vmatpush2.bf16.msra.mxu0 0
        %5084 = vmatprep.mubr.bf16.mxu0 0
        %5085 = vmatmul.mubr.bf16.gmra.mxu0 %v4967
        %v5086 = vpop.f32.mrf.mxu0
        %v5087 = vadd.f32 0.0, %v5086
        %v5088 = vpop.f32.mrf.mxu0
        %v5089 = vadd.f32 0.0, %v5088
        %v5090 = vpop.f32.mrf.mxu0
        %v5091 = vadd.f32 0.0, %v5090
        %v5092 = vpop.f32.mrf.mxu0
        %v5093 = vadd.f32 0.0, %v5092
        %5094 = vmatprep.mubr.bf16.mxu0 0
        %5095 = vmatmul.mubr.bf16.gmra.mxu0 %v4969
        %v5096 = vpop.f32.mrf.mxu0
        %v5097 = vadd.f32 0.0, %v5096
        %v5098 = vpop.f32.mrf.mxu0
        %v5099 = vadd.f32 0.0, %v5098
        %v5100 = vpop.f32.mrf.mxu0
        %v5101 = vadd.f32 0.0, %v5100
        %v5102 = vpop.f32.mrf.mxu0
        %v5103 = vadd.f32 0.0, %v5102
        %5104 = vdwg.mxu0
        %v5105 = vadd.f32 %v4920, %v5087
        %v5106 = vadd.f32 %v4922, %v5089
        %v5107 = vadd.f32 %v4924, %v5091
        %v5108 = vadd.f32 %v4926, %v5093
        %v5109 = vadd.f32 %v4930, %v5097
        %v5110 = vadd.f32 %v4932, %v5099
        %v5111 = vadd.f32 %v4934, %v5101
        %v5112 = vadd.f32 %v4936, %v5103
        %v5113 = vadd.f32 %v4474, %v5105
        %v5114 = vadd.f32 %v4475, %v5106
        %v5115 = vadd.f32 %v4476, %v5107
        %v5116 = vadd.f32 %v4477, %v5108
        %v5117 = vadd.f32 %v4478, %v5109
        %v5118 = vadd.f32 %v4479, %v5110
        %v5119 = vadd.f32 %v4480, %v5111
        %v5120 = vadd.f32 %v4481, %v5112
        %v5121 = vld [vmem:[#allocation36] ss:$2 sm:$0x3]
        %v5123 = vlaneseq
        %v5124 = vshrl.u32 %v5123, 7
        %v5125 = vsub.s32 0, %v5124
        %v5126 = vrot.slane %v5121, %v5125
        %v5127 = vlaneseq
        %v5128 = vshrl.u32 %v5127, 7
        %v5129 = vsub.s32 1, %v5128
        %v5130 = vrot.slane %v5121, %v5129
        %v5133 = vadd.f32 %v5113, %v5126
        %v5134 = vadd.f32 %v5114, %v5130
        %v5135 = vadd.f32 %v5115, %v5126
        %v5136 = vadd.f32 %v5116, %v5130
        %v5137 = vadd.f32 %v5117, %v5126
        %v5138 = vadd.f32 %v5118, %v5130
        %v5139 = vadd.f32 %v5119, %v5126
        %v5140 = vadd.f32 %v5120, %v5130
        %vm5141 = vcmp.ge.f32.partialorder %v5133, 0.0
        %vm5142 = vcmp.ge.f32.partialorder %v5134, 0.0
        %vm5143 = vcmp.ge.f32.partialorder %v5135, 0.0
        %vm5144 = vcmp.ge.f32.partialorder %v5136, 0.0
        %vm5145 = vcmp.ge.f32.partialorder %v5137, 0.0
        %vm5146 = vcmp.ge.f32.partialorder %v5138, 0.0
        %vm5147 = vcmp.ge.f32.partialorder %v5139, 0.0
        %vm5148 = vcmp.ge.f32.partialorder %v5140, 0.0
        %s5149 = scalar_lea.vmem [#allocation36], 1
        %v5150 = vld [vmem:[%s5149] ss:$2 sm:$0x3]
        %v5152 = vlaneseq
        %v5153 = vshrl.u32 %v5152, 7
        %v5154 = vsub.s32 0, %v5153
        %v5155 = vrot.slane %v5150, %v5154
        %v5156 = vlaneseq
        %v5157 = vshrl.u32 %v5156, 7
        %v5158 = vsub.s32 1, %v5157
        %v5159 = vrot.slane %v5150, %v5158
        %v5162 = vmul.f32 %v5155, %v5133
        %v5163 = vmul.f32 %v5159, %v5134
        %v5164 = vmul.f32 %v5155, %v5135
        %v5165 = vmul.f32 %v5159, %v5136
        %v5166 = vmul.f32 %v5155, %v5137
        %v5167 = vmul.f32 %v5159, %v5138
        %v5168 = vmul.f32 %v5155, %v5139
        %v5169 = vmul.f32 %v5159, %v5140
        %v5170 = vsel %vm5141, %v5133, %v5162
        %v5171 = vsel %vm5142, %v5134, %v5163
        %v5172 = vsel %vm5143, %v5135, %v5164
        %v5173 = vsel %vm5144, %v5136, %v5165
        %v5174 = vsel %vm5145, %v5137, %v5166
        %v5175 = vsel %vm5146, %v5138, %v5167
        %v5176 = vsel %vm5147, %v5139, %v5168
        %v5177 = vsel %vm5148, %v5140, %v5169
        %5178 = vst.msk [vmem:[#allocation7] ss:$8 sm:$0x3] %vm1776, 0.0
        %5179 = vst.msk [vmem:[#allocation7] ss:$8 sm:$0x0] %vm1776, 0.0
        %v5188 = vrot.slane %v5170, 7
        %v5189 = vrot.slane %v5171, 7
        %v5190 = vrot.slane %v5172, 7
        %v5191 = vsel %vm1787, %v5188, %v5190
        %v5192 = vrot.slane %v5173, 7
        %v5193 = vsel %vm1787, %v5189, %v5192
        %v5194 = vrot.slane %v5174, 7
        %v5195 = vsel %vm1787, %v5190, %v5194
        %v5196 = vrot.slane %v5175, 7
        %v5197 = vsel %vm1787, %v5192, %v5196
        %v5198 = vrot.slane %v5176, 7
        %v5199 = vsel %vm1787, %v5194, %v5198
        %v5200 = vrot.slane %v5177, 7
        %v5201 = vsel %vm1787, %v5196, %v5200
        %5212 = vst [vmem:[#allocation7] sm:$0xfe] %v5188
        %5213 = vst [vmem:[#allocation7 + $0x8] sm:$0xfe] %v5189
        %5214 = vst [vmem:[#allocation7 + $0x10] sm:$0xff] %v5191
        %5215 = vst [vmem:[#allocation7 + $0x18] sm:$0xff] %v5193
        %5216 = vst [vmem:[#allocation7 + $0x20] sm:$0xff] %v5195
        %5217 = vst [vmem:[#allocation7 + $0x28] sm:$0xff] %v5197
        %5218 = vst [vmem:[#allocation7 + $0x30] sm:$0xff] %v5199
        %5219 = vst [vmem:[#allocation7 + $0x38] sm:$0xff] %v5201
        %5220 = vst [vmem:[#allocation7 + $0x40] sm:$0x1] %v5198
        %5221 = vst [vmem:[#allocation7 + $0x48] sm:$0x1] %v5200
        %s5222 = scalar_lea.vmem [#allocation7], 65
        %5223 = vst.msk [vmem:[%s5222] ss:$8 sm:$0x3] %vm1776, 0.0
        %5224 = vst.msk [vmem:[%s5222] ss:$8 sm:$0x0] %vm1776, 0.0
        %v5225 = vld [vmem:[#allocation7 + $0x8] sm:$0xff]
        %v5226 = vld [vmem:[#allocation7 + $0x18] sm:$0xff]
        %v5227 = vld [vmem:[#allocation7 + $0x28] sm:$0xff]
        %v5228 = vld [vmem:[#allocation7 + $0x38] sm:$0xff]
        %v5229 = vld [vmem:[#allocation7] sm:$0xfe]
        %v5230 = vld [vmem:[#allocation7 + $0x8] sm:$0xfe]
        %v5231 = vld [vmem:[#allocation7 + $0x10] sm:$0xff]
        %v5232 = vld [vmem:[#allocation7 + $0x20] sm:$0xff]
        %v5233 = vld [vmem:[#allocation7 + $0x30] sm:$0xff]
        %v5234 = vld [vmem:[#allocation7 + $0x40] sm:$0x1]
        %v5235 = vld [vmem:[#allocation7 + $0x48] sm:$0x1]
        %v5236 = vpack.c.bf16 %v5226, %v5225
        %v5237 = vpack.c.bf16 %v5228, %v5227
        %v5238 = vld [vmem:[%s43] sm:$0xff]
        %v5239 = vld [vmem:[%s43 + $0x8] sm:$0xff]
        %v5240 = vld [vmem:[%s43 + $0x10] sm:$0xff]
        %v5241 = vld [vmem:[%s43 + $0x18] sm:$0xff]
        %v5242 = vld [vmem:[%s43 + $0x20] sm:$0xff]
        %v5243 = vld [vmem:[%s43 + $0x28] sm:$0xff]
        %v5244 = vld [vmem:[%s43 + $0x30] sm:$0xff]
        %v5245 = vld [vmem:[%s43 + $0x38] sm:$0xff]
        %v5246 = vpack.c.bf16 %v5231, %v5229
        %v5247 = vpack.c.bf16 %v5226, %v5230
        %v5248 = vpack.c.bf16 %v5233, %v5232
        %v5249 = vpack.c.bf16 %v5234, %v5234
        %v5250 = vpack.c.bf16 %v5235, %v5235
        %v5251 = vld [vmem:[#allocation38] sm:$0xff]
        %v5252 = vld [vmem:[#allocation38 + $0x8] sm:$0xff]
        %v5253 = vld [vmem:[#allocation38 + $0x10] sm:$0xff]
        %v5254 = vld [vmem:[#allocation38 + $0x18] sm:$0xff]
        %v5255 = vld [vmem:[#allocation38 + $0x20] sm:$0xff]
        %v5256 = vld [vmem:[#allocation38 + $0x28] sm:$0xff]
        %v5257 = vld [vmem:[#allocation38 + $0x30] sm:$0xff]
        %v5258 = vld [vmem:[#allocation38 + $0x38] sm:$0xff]
        %v5259 = vld [vmem:[#allocation38 + $0x40] sm:$0xff]
        %v5260 = vld [vmem:[#allocation38 + $0x48] sm:$0xff]
        %v5261 = vld [vmem:[#allocation38 + $0x50] sm:$0xff]
        %v5262 = vld [vmem:[#allocation38 + $0x58] sm:$0xff]
        %v5263 = vld [vmem:[#allocation38 + $0x60] sm:$0xff]
        %v5264 = vld [vmem:[#allocation38 + $0x68] sm:$0xff]
        %v5265 = vld [vmem:[#allocation38 + $0x70] sm:$0xff]
        %v5266 = vld [vmem:[#allocation38 + $0x78] sm:$0xff]
        %v5267 = vld [vmem:[#allocation38 + $0x80] sm:$0xff]
        %v5268 = vld [vmem:[#allocation38 + $0x88] sm:$0xff]
        %v5269 = vld [vmem:[#allocation38 + $0x90] sm:$0xff]
        %v5270 = vld [vmem:[#allocation38 + $0x98] sm:$0xff]
        %v5271 = vld [vmem:[#allocation38 + $0xa0] sm:$0xff]
        %v5272 = vld [vmem:[#allocation38 + $0xa8] sm:$0xff]
        %v5273 = vld [vmem:[#allocation38 + $0xb0] sm:$0xff]
        %v5274 = vld [vmem:[#allocation38 + $0xb8] sm:$0xff]
        %v5275 = vld [vmem:[#allocation38 + $0xc0] sm:$0xff]
        %v5276 = vld [vmem:[#allocation38 + $0xc8] sm:$0xff]
        %v5277 = vld [vmem:[#allocation38 + $0xd0] sm:$0xff]
        %v5278 = vld [vmem:[#allocation38 + $0xd8] sm:$0xff]
        %v5279 = vld [vmem:[#allocation38 + $0xe0] sm:$0xff]
        %v5280 = vld [vmem:[#allocation38 + $0xe8] sm:$0xff]
        %v5281 = vld [vmem:[#allocation38 + $0xf0] sm:$0xff]
        %v5282 = vld [vmem:[#allocation38 + $0xf8] sm:$0xff]
        %v5284 = vshrl.u32 %v5246, 16
        %v5286 = vshll.u32 %v5246, 16
        %v5288 = vrot.slane %v5286, 1
        %v5289 = vor.u32 %v5284, %v5288
        %v5291 = vshll.u32 %v5248, 16
        %v5293 = vrot.slane %v5291, 1
        %v5294 = vsel %vm1883, %v5289, %v5293
        %v5296 = vshrl.u32 %v5247, 16
        %v5298 = vshll.u32 %v5247, 16
        %v5300 = vrot.slane %v5298, 1
        %v5301 = vor.u32 %v5296, %v5300
        %v5303 = vshll.u32 %v5237, 16
        %v5305 = vrot.slane %v5303, 1
        %v5306 = vsel %vm1883, %v5301, %v5305
        %v5307 = vshrl.u32 %v5248, 16
        %v5309 = vor.u32 %v5307, %v5293
        %v5311 = vshll.u32 %v5249, 16
        %v5313 = vrot.slane %v5311, 1
        %v5314 = vsel %vm1883, %v5309, %v5313
        %v5315 = vshrl.u32 %v5237, 16
        %v5317 = vor.u32 %v5315, %v5305
        %v5319 = vshll.u32 %v5250, 16
        %v5321 = vrot.slane %v5319, 1
        %v5322 = vsel %vm1883, %v5317, %v5321
        %v5359 = vunpack.c.l.b16 %v5251
        %v5360 = vunpack.c.h.b16 %v5251
        %v5361 = vunpack.c.l.b16 %v5252
        %v5362 = vunpack.c.h.b16 %v5252
        %v5363 = vunpack.c.l.b16 %v5253
        %v5364 = vunpack.c.h.b16 %v5253
        %v5365 = vunpack.c.l.b16 %v5254
        %v5366 = vunpack.c.h.b16 %v5254
        %v5367 = vunpack.c.l.b16 %v5255
        %v5368 = vunpack.c.h.b16 %v5255
        %v5369 = vunpack.c.l.b16 %v5256
        %v5370 = vunpack.c.h.b16 %v5256
        %v5371 = vunpack.c.l.b16 %v5257
        %v5372 = vunpack.c.h.b16 %v5257
        %v5373 = vunpack.c.l.b16 %v5258
        %v5374 = vunpack.c.h.b16 %v5258
        %v5375 = vunpack.c.l.b16 %v5259
        %v5376 = vunpack.c.h.b16 %v5259
        %v5377 = vunpack.c.l.b16 %v5260
        %v5378 = vunpack.c.h.b16 %v5260
        %v5379 = vunpack.c.l.b16 %v5261
        %v5380 = vunpack.c.h.b16 %v5261
        %v5381 = vunpack.c.l.b16 %v5262
        %v5382 = vunpack.c.h.b16 %v5262
        %v5383 = vunpack.c.l.b16 %v5263
        %v5384 = vunpack.c.h.b16 %v5263
        %v5385 = vunpack.c.l.b16 %v5264
        %v5386 = vunpack.c.h.b16 %v5264
        %v5387 = vunpack.c.l.b16 %v5265
        %v5388 = vunpack.c.h.b16 %v5265
        %v5389 = vunpack.c.l.b16 %v5266
        %v5390 = vunpack.c.h.b16 %v5266
        %v5391 = vunpack.c.l.b16 %v5267
        %v5392 = vunpack.c.h.b16 %v5267
        %v5393 = vunpack.c.l.b16 %v5268
        %v5394 = vunpack.c.h.b16 %v5268
        %v5395 = vunpack.c.l.b16 %v5269
        %v5396 = vunpack.c.h.b16 %v5269
        %v5397 = vunpack.c.l.b16 %v5270
        %v5398 = vunpack.c.h.b16 %v5270
        %v5399 = vunpack.c.l.b16 %v5271
        %v5400 = vunpack.c.h.b16 %v5271
        %v5401 = vunpack.c.l.b16 %v5272
        %v5402 = vunpack.c.h.b16 %v5272
        %v5403 = vunpack.c.l.b16 %v5273
        %v5404 = vunpack.c.h.b16 %v5273
        %v5405 = vunpack.c.l.b16 %v5274
        %v5406 = vunpack.c.h.b16 %v5274
        %v5407 = vunpack.c.l.b16 %v5275
        %v5408 = vunpack.c.h.b16 %v5275
        %v5409 = vunpack.c.l.b16 %v5276
        %v5410 = vunpack.c.h.b16 %v5276
        %v5411 = vunpack.c.l.b16 %v5277
        %v5412 = vunpack.c.h.b16 %v5277
        %v5413 = vunpack.c.l.b16 %v5278
        %v5414 = vunpack.c.h.b16 %v5278
        %v5415 = vunpack.c.l.b16 %v5279
        %v5416 = vunpack.c.h.b16 %v5279
        %v5417 = vunpack.c.l.b16 %v5280
        %v5418 = vunpack.c.h.b16 %v5280
        %v5419 = vunpack.c.l.b16 %v5281
        %v5420 = vunpack.c.h.b16 %v5281
        %v5421 = vunpack.c.l.b16 %v5282
        %v5422 = vunpack.c.h.b16 %v5282
        %v5423 = vpack.c.b16 %v5361, %v5359
        %v5424 = vpack.c.b16 %v5362, %v5360
        %v5425 = vpack.c.b16 %v5365, %v5363
        %v5426 = vpack.c.b16 %v5366, %v5364
        %v5427 = vpack.c.b16 %v5369, %v5367
        %v5428 = vpack.c.b16 %v5370, %v5368
        %v5429 = vpack.c.b16 %v5373, %v5371
        %v5430 = vpack.c.b16 %v5374, %v5372
        %v5431 = vpack.c.b16 %v5377, %v5375
        %v5432 = vpack.c.b16 %v5378, %v5376
        %v5433 = vpack.c.b16 %v5381, %v5379
        %v5434 = vpack.c.b16 %v5382, %v5380
        %v5435 = vpack.c.b16 %v5385, %v5383
        %v5436 = vpack.c.b16 %v5386, %v5384
        %v5437 = vpack.c.b16 %v5389, %v5387
        %v5438 = vpack.c.b16 %v5390, %v5388
        %v5439 = vpack.c.b16 %v5393, %v5391
        %v5440 = vpack.c.b16 %v5394, %v5392
        %v5441 = vpack.c.b16 %v5397, %v5395
        %v5442 = vpack.c.b16 %v5398, %v5396
        %v5443 = vpack.c.b16 %v5401, %v5399
        %v5444 = vpack.c.b16 %v5402, %v5400
        %v5445 = vpack.c.b16 %v5405, %v5403
        %v5446 = vpack.c.b16 %v5406, %v5404
        %v5447 = vpack.c.b16 %v5409, %v5407
        %v5448 = vpack.c.b16 %v5410, %v5408
        %v5449 = vpack.c.b16 %v5413, %v5411
        %v5450 = vpack.c.b16 %v5414, %v5412
        %v5451 = vpack.c.b16 %v5417, %v5415
        %v5452 = vpack.c.b16 %v5418, %v5416
        %v5453 = vpack.c.b16 %v5421, %v5419
        %v5454 = vpack.c.b16 %v5422, %v5420
        %5487 = vmatprep.subr.bf16.mxu0 %v5438
        %5488 = vmatpush1.bf16.msra.mxu0 %v5437
        %5489 = vmatprep.subr.bf16.mxu0 %v5436
        %5490 = vmatpush1.bf16.msra.mxu0 %v5435
        %5491 = vmatprep.subr.bf16.mxu0 %v5434
        %5492 = vmatpush1.bf16.msra.mxu0 %v5433
        %5493 = vmatprep.subr.bf16.mxu0 %v5432
        %5494 = vmatpush1.bf16.msra.mxu0 %v5431
        %5495 = vmatprep.subr.bf16.mxu0 %v5430
        %5496 = vmatpush1.bf16.msra.mxu0 %v5429
        %5497 = vmatprep.subr.bf16.mxu0 %v5428
        %5498 = vmatpush1.bf16.msra.mxu0 %v5427
        %5499 = vmatprep.subr.bf16.mxu0 %v5426
        %5500 = vmatpush1.bf16.msra.mxu0 %v5425
        %5501 = vmatprep.subr.bf16.mxu0 %v5424
        %5502 = vmatpush1.bf16.msra.mxu0 %v5423
        %5503 = vmatprep.subr.bf16.mxu0 %v5454
        %5504 = vmatpush2.bf16.msra.mxu0 %v5453
        %5505 = vmatprep.subr.bf16.mxu0 %v5452
        %5506 = vmatpush2.bf16.msra.mxu0 %v5451
        %5507 = vmatprep.subr.bf16.mxu0 %v5450
        %5508 = vmatpush2.bf16.msra.mxu0 %v5449
        %5509 = vmatprep.subr.bf16.mxu0 %v5448
        %5510 = vmatpush2.bf16.msra.mxu0 %v5447
        %5511 = vmatprep.subr.bf16.mxu0 %v5446
        %5512 = vmatpush2.bf16.msra.mxu0 %v5445
        %5513 = vmatprep.subr.bf16.mxu0 %v5444
        %5514 = vmatpush2.bf16.msra.mxu0 %v5443
        %5515 = vmatprep.subr.bf16.mxu0 %v5442
        %5516 = vmatpush2.bf16.msra.mxu0 %v5441
        %5517 = vmatprep.subr.bf16.mxu0 %v5440
        %5518 = vmatpush2.bf16.msra.mxu0 %v5439
        %5519 = vmatprep.mubr.bf16.mxu0 %v5306
        %5520 = vmatmul.mubr.bf16.gmra.mxu0 %v5294
        %v5521 = vpop.f32.mrf.mxu0
        %v5522 = vadd.f32 0.0, %v5521
        %v5523 = vpop.f32.mrf.mxu0
        %v5524 = vadd.f32 0.0, %v5523
        %v5525 = vpop.f32.mrf.mxu0
        %v5526 = vadd.f32 0.0, %v5525
        %v5527 = vpop.f32.mrf.mxu0
        %v5528 = vadd.f32 0.0, %v5527
        %5529 = vmatprep.mubr.bf16.mxu0 %v5322
        %5530 = vmatmul.mubr.bf16.gmra.mxu0 %v5314
        %v5531 = vpop.f32.mrf.mxu0
        %v5532 = vadd.f32 0.0, %v5531
        %v5533 = vpop.f32.mrf.mxu0
        %v5534 = vadd.f32 0.0, %v5533
        %v5535 = vpop.f32.mrf.mxu0
        %v5536 = vadd.f32 0.0, %v5535
        %v5537 = vpop.f32.mrf.mxu0
        %v5538 = vadd.f32 0.0, %v5537
        %5539 = vdwg.mxu0
        %5542 = vrot.lane.b32.xlu0 %v5236, 64
        %v5543 = vpop.permute.xlu0 %5542
        %5544 = vrot.lane.b32.xlu0 %v5237, 64
        %v5545 = vpop.permute.xlu0 %5544
        %v5554 = vunpack.c.l.b16 %v5238
        %v5555 = vunpack.c.h.b16 %v5238
        %v5556 = vunpack.c.l.b16 %v5239
        %v5557 = vunpack.c.h.b16 %v5239
        %v5558 = vunpack.c.l.b16 %v5240
        %v5559 = vunpack.c.h.b16 %v5240
        %v5560 = vunpack.c.l.b16 %v5241
        %v5561 = vunpack.c.h.b16 %v5241
        %v5562 = vunpack.c.l.b16 %v5242
        %v5563 = vunpack.c.h.b16 %v5242
        %v5564 = vunpack.c.l.b16 %v5243
        %v5565 = vunpack.c.h.b16 %v5243
        %v5566 = vunpack.c.l.b16 %v5244
        %v5567 = vunpack.c.h.b16 %v5244
        %v5568 = vunpack.c.l.b16 %v5245
        %v5569 = vunpack.c.h.b16 %v5245
        %v5570 = vpack.c.b16 %v5556, %v5554
        %v5571 = vpack.c.b16 %v5557, %v5555
        %v5572 = vpack.c.b16 %v5560, %v5558
        %v5573 = vpack.c.b16 %v5561, %v5559
        %v5574 = vpack.c.b16 %v5564, %v5562
        %v5575 = vpack.c.b16 %v5565, %v5563
        %v5576 = vpack.c.b16 %v5568, %v5566
        %v5577 = vpack.c.b16 %v5569, %v5567
        %v5587 = vsel %vm2187, %v5543, 0
        %v5590 = vsel %vm2187, %v5545, 0
        %5592 = vmatprep.subr.bf16.mxu0 0
        %5593 = vmatpush1.bf16.msra.mxu0 0
        %5594 = vmatprep.subr.bf16.mxu0 0
        %5595 = vmatpush1.bf16.msra.mxu0 0
        %5596 = vmatprep.subr.bf16.mxu0 0
        %5597 = vmatpush1.bf16.msra.mxu0 0
        %5598 = vmatprep.subr.bf16.mxu0 0
        %5599 = vmatpush1.bf16.msra.mxu0 0
        %5600 = vmatprep.subr.bf16.mxu0 %v5577
        %5601 = vmatpush1.bf16.msra.mxu0 %v5576
        %5602 = vmatprep.subr.bf16.mxu0 %v5575
        %5603 = vmatpush1.bf16.msra.mxu0 %v5574
        %5604 = vmatprep.subr.bf16.mxu0 %v5573
        %5605 = vmatpush1.bf16.msra.mxu0 %v5572
        %5606 = vmatprep.subr.bf16.mxu0 %v5571
        %5607 = vmatpush1.bf16.msra.mxu0 %v5570
        %5608 = vmatprep.subr.bf16.mxu0 0
        %5609 = vmatpush2.bf16.msra.mxu0 0
        %5610 = vmatprep.subr.bf16.mxu0 0
        %5611 = vmatpush2.bf16.msra.mxu0 0
        %5612 = vmatprep.subr.bf16.mxu0 0
        %5613 = vmatpush2.bf16.msra.mxu0 0
        %5614 = vmatprep.subr.bf16.mxu0 0
        %5615 = vmatpush2.bf16.msra.mxu0 0
        %5616 = vmatprep.subr.bf16.mxu0 0
        %5617 = vmatpush2.bf16.msra.mxu0 0
        %5618 = vmatprep.subr.bf16.mxu0 0
        %5619 = vmatpush2.bf16.msra.mxu0 0
        %5620 = vmatprep.subr.bf16.mxu0 0
        %5621 = vmatpush2.bf16.msra.mxu0 0
        %5622 = vmatprep.subr.bf16.mxu0 0
        %5623 = vmatpush2.bf16.msra.mxu0 0
        %5624 = vmatprep.mubr.bf16.mxu0 0
        %5625 = vmatmul.mubr.bf16.gmra.mxu0 %v5587
        %v5626 = vpop.f32.mrf.mxu0
        %v5627 = vadd.f32 %v5522, %v5626
        %v5628 = vpop.f32.mrf.mxu0
        %v5629 = vadd.f32 %v5524, %v5628
        %v5630 = vpop.f32.mrf.mxu0
        %v5631 = vadd.f32 %v5526, %v5630
        %v5632 = vpop.f32.mrf.mxu0
        %v5633 = vadd.f32 %v5528, %v5632
        %5634 = vmatprep.mubr.bf16.mxu0 0
        %5635 = vmatmul.mubr.bf16.gmra.mxu0 %v5590
        %v5636 = vpop.f32.mrf.mxu0
        %v5637 = vadd.f32 %v5532, %v5636
        %v5638 = vpop.f32.mrf.mxu0
        %v5639 = vadd.f32 %v5534, %v5638
        %v5640 = vpop.f32.mrf.mxu0
        %v5641 = vadd.f32 %v5536, %v5640
        %v5642 = vpop.f32.mrf.mxu0
        %v5643 = vadd.f32 %v5538, %v5642
        %5644 = vdwg.mxu0
        %v5645 = vld [vmem:[#allocation7] sm:$0xfc]
        %v5646 = vld [vmem:[#allocation7 + $0x10] sm:$0xff]
        %v5647 = vld [vmem:[#allocation7 + $0x20] sm:$0xff]
        %v5648 = vld [vmem:[#allocation7 + $0x30] sm:$0xff]
        %v5649 = vld [vmem:[#allocation7 + $0x40] sm:$0x3]
        %v5650 = vpack.c.bf16 %v5646, %v5645
        %v5651 = vpack.c.bf16 %v5648, %v5647
        %v5652 = vpack.c.bf16 %v5649, %v5649
        %v5653 = vld [vmem:[#allocation39] sm:$0xff]
        %v5654 = vld [vmem:[#allocation39 + $0x8] sm:$0xff]
        %v5655 = vld [vmem:[#allocation39 + $0x10] sm:$0xff]
        %v5656 = vld [vmem:[#allocation39 + $0x18] sm:$0xff]
        %v5657 = vld [vmem:[#allocation39 + $0x20] sm:$0xff]
        %v5658 = vld [vmem:[#allocation39 + $0x28] sm:$0xff]
        %v5659 = vld [vmem:[#allocation39 + $0x30] sm:$0xff]
        %v5660 = vld [vmem:[#allocation39 + $0x38] sm:$0xff]
        %v5664 = vrot.slane %v5650, 1
        %v5665 = vrot.slane %v5651, 1
        %v5666 = vsel %vm3511, %v5664, %v5665
        %v5667 = vrot.slane %v5652, 1
        %v5668 = vsel %vm3511, %v5665, %v5667
        %v5677 = vunpack.c.l.b16 %v5653
        %v5678 = vunpack.c.h.b16 %v5653
        %v5679 = vunpack.c.l.b16 %v5654
        %v5680 = vunpack.c.h.b16 %v5654
        %v5681 = vunpack.c.l.b16 %v5655
        %v5682 = vunpack.c.h.b16 %v5655
        %v5683 = vunpack.c.l.b16 %v5656
        %v5684 = vunpack.c.h.b16 %v5656
        %v5685 = vunpack.c.l.b16 %v5657
        %v5686 = vunpack.c.h.b16 %v5657
        %v5687 = vunpack.c.l.b16 %v5658
        %v5688 = vunpack.c.h.b16 %v5658
        %v5689 = vunpack.c.l.b16 %v5659
        %v5690 = vunpack.c.h.b16 %v5659
        %v5691 = vunpack.c.l.b16 %v5660
        %v5692 = vunpack.c.h.b16 %v5660
        %v5693 = vpack.c.b16 %v5679, %v5677
        %v5694 = vpack.c.b16 %v5680, %v5678
        %v5695 = vpack.c.b16 %v5683, %v5681
        %v5696 = vpack.c.b16 %v5684, %v5682
        %v5697 = vpack.c.b16 %v5687, %v5685
        %v5698 = vpack.c.b16 %v5688, %v5686
        %v5699 = vpack.c.b16 %v5691, %v5689
        %v5700 = vpack.c.b16 %v5692, %v5690
        %v5710 = vsel %vm2187, %v5666, 0
        %v5713 = vsel %vm2187, %v5668, 0
        %5715 = vmatprep.subr.bf16.mxu0 0
        %5716 = vmatpush1.bf16.msra.mxu0 0
        %5717 = vmatprep.subr.bf16.mxu0 0
        %5718 = vmatpush1.bf16.msra.mxu0 0
        %5719 = vmatprep.subr.bf16.mxu0 0
        %5720 = vmatpush1.bf16.msra.mxu0 0
        %5721 = vmatprep.subr.bf16.mxu0 0
        %5722 = vmatpush1.bf16.msra.mxu0 0
        %5723 = vmatprep.subr.bf16.mxu0 %v5700
        %5724 = vmatpush1.bf16.msra.mxu0 %v5699
        %5725 = vmatprep.subr.bf16.mxu0 %v5698
        %5726 = vmatpush1.bf16.msra.mxu0 %v5697
        %5727 = vmatprep.subr.bf16.mxu0 %v5696
        %5728 = vmatpush1.bf16.msra.mxu0 %v5695
        %5729 = vmatprep.subr.bf16.mxu0 %v5694
        %5730 = vmatpush1.bf16.msra.mxu0 %v5693
        %5731 = vmatprep.subr.bf16.mxu0 0
        %5732 = vmatpush2.bf16.msra.mxu0 0
        %5733 = vmatprep.subr.bf16.mxu0 0
        %5734 = vmatpush2.bf16.msra.mxu0 0
        %5735 = vmatprep.subr.bf16.mxu0 0
        %5736 = vmatpush2.bf16.msra.mxu0 0
        %5737 = vmatprep.subr.bf16.mxu0 0
        %5738 = vmatpush2.bf16.msra.mxu0 0
        %5739 = vmatprep.subr.bf16.mxu0 0
        %5740 = vmatpush2.bf16.msra.mxu0 0
        %5741 = vmatprep.subr.bf16.mxu0 0
        %5742 = vmatpush2.bf16.msra.mxu0 0
        %5743 = vmatprep.subr.bf16.mxu0 0
        %5744 = vmatpush2.bf16.msra.mxu0 0
        %5745 = vmatprep.subr.bf16.mxu0 0
        %5746 = vmatpush2.bf16.msra.mxu0 0
        %5747 = vmatprep.mubr.bf16.mxu0 0
        %5748 = vmatmul.mubr.bf16.gmra.mxu0 %v5710
        %v5749 = vpop.f32.mrf.mxu0
        %v5750 = vadd.f32 0.0, %v5749
        %v5751 = vpop.f32.mrf.mxu0
        %v5752 = vadd.f32 0.0, %v5751
        %v5753 = vpop.f32.mrf.mxu0
        %v5754 = vadd.f32 0.0, %v5753
        %v5755 = vpop.f32.mrf.mxu0
        %v5756 = vadd.f32 0.0, %v5755
        %5757 = vmatprep.mubr.bf16.mxu0 0
        %5758 = vmatmul.mubr.bf16.gmra.mxu0 %v5713
        %v5759 = vpop.f32.mrf.mxu0
        %v5760 = vadd.f32 0.0, %v5759
        %v5761 = vpop.f32.mrf.mxu0
        %v5762 = vadd.f32 0.0, %v5761
        %v5763 = vpop.f32.mrf.mxu0
        %v5764 = vadd.f32 0.0, %v5763
        %v5765 = vpop.f32.mrf.mxu0
        %v5766 = vadd.f32 0.0, %v5765
        %5767 = vdwg.mxu0
        %v5768 = vadd.f32 %v5627, %v5750
        %v5769 = vadd.f32 %v5629, %v5752
        %v5770 = vadd.f32 %v5631, %v5754
        %v5771 = vadd.f32 %v5633, %v5756
        %v5772 = vadd.f32 %v5637, %v5760
        %v5773 = vadd.f32 %v5639, %v5762
        %v5774 = vadd.f32 %v5641, %v5764
        %v5775 = vadd.f32 %v5643, %v5766
        %v5776 = vld [vmem:[#allocation3 + $0x8] sm:$0xff]
        %v5777 = vld [vmem:[#allocation3 + $0x18] sm:$0xff]
        %v5778 = vld [vmem:[#allocation3 + $0x28] sm:$0xff]
        %v5779 = vld [vmem:[#allocation3 + $0x38] sm:$0xff]
        %v5780 = vld [vmem:[#allocation3] sm:$0xfe]
        %v5781 = vld [vmem:[#allocation3 + $0x8] sm:$0xfe]
        %v5782 = vld [vmem:[#allocation3 + $0x10] sm:$0xff]
        %v5783 = vld [vmem:[#allocation3 + $0x20] sm:$0xff]
        %v5784 = vld [vmem:[#allocation3 + $0x30] sm:$0xff]
        %v5785 = vld [vmem:[#allocation3 + $0x40] sm:$0x1]
        %v5786 = vld [vmem:[#allocation3 + $0x48] sm:$0x1]
        %v5787 = vpack.c.bf16 %v5777, %v5776
        %v5788 = vpack.c.bf16 %v5779, %v5778
        %v5789 = vld [vmem:[#allocation41] sm:$0xff]
        %v5790 = vld [vmem:[#allocation41 + $0x8] sm:$0xff]
        %v5791 = vld [vmem:[#allocation41 + $0x10] sm:$0xff]
        %v5792 = vld [vmem:[#allocation41 + $0x18] sm:$0xff]
        %v5793 = vld [vmem:[#allocation41 + $0x20] sm:$0xff]
        %v5794 = vld [vmem:[#allocation41 + $0x28] sm:$0xff]
        %v5795 = vld [vmem:[#allocation41 + $0x30] sm:$0xff]
        %v5796 = vld [vmem:[#allocation41 + $0x38] sm:$0xff]
        %v5797 = vpack.c.bf16 %v5782, %v5780
        %v5798 = vpack.c.bf16 %v5777, %v5781
        %v5799 = vpack.c.bf16 %v5784, %v5783
        %v5800 = vpack.c.bf16 %v5785, %v5785
        %v5801 = vpack.c.bf16 %v5786, %v5786
        %v5802 = vld [vmem:[#allocation42] sm:$0xff]
        %v5803 = vld [vmem:[#allocation42 + $0x8] sm:$0xff]
        %v5804 = vld [vmem:[#allocation42 + $0x10] sm:$0xff]
        %v5805 = vld [vmem:[#allocation42 + $0x18] sm:$0xff]
        %v5806 = vld [vmem:[#allocation42 + $0x20] sm:$0xff]
        %v5807 = vld [vmem:[#allocation42 + $0x28] sm:$0xff]
        %v5808 = vld [vmem:[#allocation42 + $0x30] sm:$0xff]
        %v5809 = vld [vmem:[#allocation42 + $0x38] sm:$0xff]
        %v5810 = vld [vmem:[#allocation42 + $0x40] sm:$0xff]
        %v5811 = vld [vmem:[#allocation42 + $0x48] sm:$0xff]
        %v5812 = vld [vmem:[#allocation42 + $0x50] sm:$0xff]
        %v5813 = vld [vmem:[#allocation42 + $0x58] sm:$0xff]
        %v5814 = vld [vmem:[#allocation42 + $0x60] sm:$0xff]
        %v5815 = vld [vmem:[#allocation42 + $0x68] sm:$0xff]
        %v5816 = vld [vmem:[#allocation42 + $0x70] sm:$0xff]
        %v5817 = vld [vmem:[#allocation42 + $0x78] sm:$0xff]
        %v5818 = vld [vmem:[#allocation42 + $0x80] sm:$0xff]
        %v5819 = vld [vmem:[#allocation42 + $0x88] sm:$0xff]
        %v5820 = vld [vmem:[#allocation42 + $0x90] sm:$0xff]
        %v5821 = vld [vmem:[#allocation42 + $0x98] sm:$0xff]
        %v5822 = vld [vmem:[#allocation42 + $0xa0] sm:$0xff]
        %v5823 = vld [vmem:[#allocation42 + $0xa8] sm:$0xff]
        %v5824 = vld [vmem:[#allocation42 + $0xb0] sm:$0xff]
        %v5825 = vld [vmem:[#allocation42 + $0xb8] sm:$0xff]
        %v5826 = vld [vmem:[#allocation42 + $0xc0] sm:$0xff]
        %v5827 = vld [vmem:[#allocation42 + $0xc8] sm:$0xff]
        %v5828 = vld [vmem:[#allocation42 + $0xd0] sm:$0xff]
        %v5829 = vld [vmem:[#allocation42 + $0xd8] sm:$0xff]
        %v5830 = vld [vmem:[#allocation42 + $0xe0] sm:$0xff]
        %v5831 = vld [vmem:[#allocation42 + $0xe8] sm:$0xff]
        %v5832 = vld [vmem:[#allocation42 + $0xf0] sm:$0xff]
        %v5833 = vld [vmem:[#allocation42 + $0xf8] sm:$0xff]
        %v5835 = vshrl.u32 %v5797, 16
        %v5837 = vshll.u32 %v5797, 16
        %v5839 = vrot.slane %v5837, 1
        %v5840 = vor.u32 %v5835, %v5839
        %v5842 = vshll.u32 %v5799, 16
        %v5844 = vrot.slane %v5842, 1
        %v5845 = vsel %vm1883, %v5840, %v5844
        %v5847 = vshrl.u32 %v5798, 16
        %v5849 = vshll.u32 %v5798, 16
        %v5851 = vrot.slane %v5849, 1
        %v5852 = vor.u32 %v5847, %v5851
        %v5854 = vshll.u32 %v5788, 16
        %v5856 = vrot.slane %v5854, 1
        %v5857 = vsel %vm1883, %v5852, %v5856
        %v5858 = vshrl.u32 %v5799, 16
        %v5860 = vor.u32 %v5858, %v5844
        %v5862 = vshll.u32 %v5800, 16
        %v5864 = vrot.slane %v5862, 1
        %v5865 = vsel %vm1883, %v5860, %v5864
        %v5866 = vshrl.u32 %v5788, 16
        %v5868 = vor.u32 %v5866, %v5856
        %v5870 = vshll.u32 %v5801, 16
        %v5872 = vrot.slane %v5870, 1
        %v5873 = vsel %vm1883, %v5868, %v5872
        %v5910 = vunpack.c.l.b16 %v5802
        %v5911 = vunpack.c.h.b16 %v5802
        %v5912 = vunpack.c.l.b16 %v5803
        %v5913 = vunpack.c.h.b16 %v5803
        %v5914 = vunpack.c.l.b16 %v5804
        %v5915 = vunpack.c.h.b16 %v5804
        %v5916 = vunpack.c.l.b16 %v5805
        %v5917 = vunpack.c.h.b16 %v5805
        %v5918 = vunpack.c.l.b16 %v5806
        %v5919 = vunpack.c.h.b16 %v5806
        %v5920 = vunpack.c.l.b16 %v5807
        %v5921 = vunpack.c.h.b16 %v5807
        %v5922 = vunpack.c.l.b16 %v5808
        %v5923 = vunpack.c.h.b16 %v5808
        %v5924 = vunpack.c.l.b16 %v5809
        %v5925 = vunpack.c.h.b16 %v5809
        %v5926 = vunpack.c.l.b16 %v5810
        %v5927 = vunpack.c.h.b16 %v5810
        %v5928 = vunpack.c.l.b16 %v5811
        %v5929 = vunpack.c.h.b16 %v5811
        %v5930 = vunpack.c.l.b16 %v5812
        %v5931 = vunpack.c.h.b16 %v5812
        %v5932 = vunpack.c.l.b16 %v5813
        %v5933 = vunpack.c.h.b16 %v5813
        %v5934 = vunpack.c.l.b16 %v5814
        %v5935 = vunpack.c.h.b16 %v5814
        %v5936 = vunpack.c.l.b16 %v5815
        %v5937 = vunpack.c.h.b16 %v5815
        %v5938 = vunpack.c.l.b16 %v5816
        %v5939 = vunpack.c.h.b16 %v5816
        %v5940 = vunpack.c.l.b16 %v5817
        %v5941 = vunpack.c.h.b16 %v5817
        %v5942 = vunpack.c.l.b16 %v5818
        %v5943 = vunpack.c.h.b16 %v5818
        %v5944 = vunpack.c.l.b16 %v5819
        %v5945 = vunpack.c.h.b16 %v5819
        %v5946 = vunpack.c.l.b16 %v5820
        %v5947 = vunpack.c.h.b16 %v5820
        %v5948 = vunpack.c.l.b16 %v5821
        %v5949 = vunpack.c.h.b16 %v5821
        %v5950 = vunpack.c.l.b16 %v5822
        %v5951 = vunpack.c.h.b16 %v5822
        %v5952 = vunpack.c.l.b16 %v5823
        %v5953 = vunpack.c.h.b16 %v5823
        %v5954 = vunpack.c.l.b16 %v5824
        %v5955 = vunpack.c.h.b16 %v5824
        %v5956 = vunpack.c.l.b16 %v5825
        %v5957 = vunpack.c.h.b16 %v5825
        %v5958 = vunpack.c.l.b16 %v5826
        %v5959 = vunpack.c.h.b16 %v5826
        %v5960 = vunpack.c.l.b16 %v5827
        %v5961 = vunpack.c.h.b16 %v5827
        %v5962 = vunpack.c.l.b16 %v5828
        %v5963 = vunpack.c.h.b16 %v5828
        %v5964 = vunpack.c.l.b16 %v5829
        %v5965 = vunpack.c.h.b16 %v5829
        %v5966 = vunpack.c.l.b16 %v5830
        %v5967 = vunpack.c.h.b16 %v5830
        %v5968 = vunpack.c.l.b16 %v5831
        %v5969 = vunpack.c.h.b16 %v5831
        %v5970 = vunpack.c.l.b16 %v5832
        %v5971 = vunpack.c.h.b16 %v5832
        %v5972 = vunpack.c.l.b16 %v5833
        %v5973 = vunpack.c.h.b16 %v5833
        %v5974 = vpack.c.b16 %v5912, %v5910
        %v5975 = vpack.c.b16 %v5913, %v5911
        %v5976 = vpack.c.b16 %v5916, %v5914
        %v5977 = vpack.c.b16 %v5917, %v5915
        %v5978 = vpack.c.b16 %v5920, %v5918
        %v5979 = vpack.c.b16 %v5921, %v5919
        %v5980 = vpack.c.b16 %v5924, %v5922
        %v5981 = vpack.c.b16 %v5925, %v5923
        %v5982 = vpack.c.b16 %v5928, %v5926
        %v5983 = vpack.c.b16 %v5929, %v5927
        %v5984 = vpack.c.b16 %v5932, %v5930
        %v5985 = vpack.c.b16 %v5933, %v5931
        %v5986 = vpack.c.b16 %v5936, %v5934
        %v5987 = vpack.c.b16 %v5937, %v5935
        %v5988 = vpack.c.b16 %v5940, %v5938
        %v5989 = vpack.c.b16 %v5941, %v5939
        %v5990 = vpack.c.b16 %v5944, %v5942
        %v5991 = vpack.c.b16 %v5945, %v5943
        %v5992 = vpack.c.b16 %v5948, %v5946
        %v5993 = vpack.c.b16 %v5949, %v5947
        %v5994 = vpack.c.b16 %v5952, %v5950
        %v5995 = vpack.c.b16 %v5953, %v5951
        %v5996 = vpack.c.b16 %v5956, %v5954
        %v5997 = vpack.c.b16 %v5957, %v5955
        %v5998 = vpack.c.b16 %v5960, %v5958
        %v5999 = vpack.c.b16 %v5961, %v5959
        %v6000 = vpack.c.b16 %v5964, %v5962
        %v6001 = vpack.c.b16 %v5965, %v5963
        %v6002 = vpack.c.b16 %v5968, %v5966
        %v6003 = vpack.c.b16 %v5969, %v5967
        %v6004 = vpack.c.b16 %v5972, %v5970
        %v6005 = vpack.c.b16 %v5973, %v5971
        %6038 = vmatprep.subr.bf16.mxu0 %v5989
        %6039 = vmatpush1.bf16.msra.mxu0 %v5988
        %6040 = vmatprep.subr.bf16.mxu0 %v5987
        %6041 = vmatpush1.bf16.msra.mxu0 %v5986
        %6042 = vmatprep.subr.bf16.mxu0 %v5985
        %6043 = vmatpush1.bf16.msra.mxu0 %v5984
        %6044 = vmatprep.subr.bf16.mxu0 %v5983
        %6045 = vmatpush1.bf16.msra.mxu0 %v5982
        %6046 = vmatprep.subr.bf16.mxu0 %v5981
        %6047 = vmatpush1.bf16.msra.mxu0 %v5980
        %6048 = vmatprep.subr.bf16.mxu0 %v5979
        %6049 = vmatpush1.bf16.msra.mxu0 %v5978
        %6050 = vmatprep.subr.bf16.mxu0 %v5977
        %6051 = vmatpush1.bf16.msra.mxu0 %v5976
        %6052 = vmatprep.subr.bf16.mxu0 %v5975
        %6053 = vmatpush1.bf16.msra.mxu0 %v5974
        %6054 = vmatprep.subr.bf16.mxu0 %v6005
        %6055 = vmatpush2.bf16.msra.mxu0 %v6004
        %6056 = vmatprep.subr.bf16.mxu0 %v6003
        %6057 = vmatpush2.bf16.msra.mxu0 %v6002
        %6058 = vmatprep.subr.bf16.mxu0 %v6001
        %6059 = vmatpush2.bf16.msra.mxu0 %v6000
        %6060 = vmatprep.subr.bf16.mxu0 %v5999
        %6061 = vmatpush2.bf16.msra.mxu0 %v5998
        %6062 = vmatprep.subr.bf16.mxu0 %v5997
        %6063 = vmatpush2.bf16.msra.mxu0 %v5996
        %6064 = vmatprep.subr.bf16.mxu0 %v5995
        %6065 = vmatpush2.bf16.msra.mxu0 %v5994
        %6066 = vmatprep.subr.bf16.mxu0 %v5993
        %6067 = vmatpush2.bf16.msra.mxu0 %v5992
        %6068 = vmatprep.subr.bf16.mxu0 %v5991
        %6069 = vmatpush2.bf16.msra.mxu0 %v5990
        %6070 = vmatprep.mubr.bf16.mxu0 %v5857
        %6071 = vmatmul.mubr.bf16.gmra.mxu0 %v5845
        %v6072 = vpop.f32.mrf.mxu0
        %v6073 = vadd.f32 0.0, %v6072
        %v6074 = vpop.f32.mrf.mxu0
        %v6075 = vadd.f32 0.0, %v6074
        %v6076 = vpop.f32.mrf.mxu0
        %v6077 = vadd.f32 0.0, %v6076
        %v6078 = vpop.f32.mrf.mxu0
        %v6079 = vadd.f32 0.0, %v6078
        %6080 = vmatprep.mubr.bf16.mxu0 %v5873
        %6081 = vmatmul.mubr.bf16.gmra.mxu0 %v5865
        %v6082 = vpop.f32.mrf.mxu0
        %v6083 = vadd.f32 0.0, %v6082
        %v6084 = vpop.f32.mrf.mxu0
        %v6085 = vadd.f32 0.0, %v6084
        %v6086 = vpop.f32.mrf.mxu0
        %v6087 = vadd.f32 0.0, %v6086
        %v6088 = vpop.f32.mrf.mxu0
        %v6089 = vadd.f32 0.0, %v6088
        %6090 = vdwg.mxu0
        %6093 = vrot.lane.b32.xlu0 %v5787, 64
        %v6094 = vpop.permute.xlu0 %6093
        %6095 = vrot.lane.b32.xlu0 %v5788, 64
        %v6096 = vpop.permute.xlu0 %6095
        %v6105 = vunpack.c.l.b16 %v5789
        %v6106 = vunpack.c.h.b16 %v5789
        %v6107 = vunpack.c.l.b16 %v5790
        %v6108 = vunpack.c.h.b16 %v5790
        %v6109 = vunpack.c.l.b16 %v5791
        %v6110 = vunpack.c.h.b16 %v5791
        %v6111 = vunpack.c.l.b16 %v5792
        %v6112 = vunpack.c.h.b16 %v5792
        %v6113 = vunpack.c.l.b16 %v5793
        %v6114 = vunpack.c.h.b16 %v5793
        %v6115 = vunpack.c.l.b16 %v5794
        %v6116 = vunpack.c.h.b16 %v5794
        %v6117 = vunpack.c.l.b16 %v5795
        %v6118 = vunpack.c.h.b16 %v5795
        %v6119 = vunpack.c.l.b16 %v5796
        %v6120 = vunpack.c.h.b16 %v5796
        %v6121 = vpack.c.b16 %v6107, %v6105
        %v6122 = vpack.c.b16 %v6108, %v6106
        %v6123 = vpack.c.b16 %v6111, %v6109
        %v6124 = vpack.c.b16 %v6112, %v6110
        %v6125 = vpack.c.b16 %v6115, %v6113
        %v6126 = vpack.c.b16 %v6116, %v6114
        %v6127 = vpack.c.b16 %v6119, %v6117
        %v6128 = vpack.c.b16 %v6120, %v6118
        %v6138 = vsel %vm2187, %v6094, 0
        %v6141 = vsel %vm2187, %v6096, 0
        %6143 = vmatprep.subr.bf16.mxu0 0
        %6144 = vmatpush1.bf16.msra.mxu0 0
        %6145 = vmatprep.subr.bf16.mxu0 0
        %6146 = vmatpush1.bf16.msra.mxu0 0
        %6147 = vmatprep.subr.bf16.mxu0 0
        %6148 = vmatpush1.bf16.msra.mxu0 0
        %6149 = vmatprep.subr.bf16.mxu0 0
        %6150 = vmatpush1.bf16.msra.mxu0 0
        %6151 = vmatprep.subr.bf16.mxu0 %v6128
        %6152 = vmatpush1.bf16.msra.mxu0 %v6127
        %6153 = vmatprep.subr.bf16.mxu0 %v6126
        %6154 = vmatpush1.bf16.msra.mxu0 %v6125
        %6155 = vmatprep.subr.bf16.mxu0 %v6124
        %6156 = vmatpush1.bf16.msra.mxu0 %v6123
        %6157 = vmatprep.subr.bf16.mxu0 %v6122
        %6158 = vmatpush1.bf16.msra.mxu0 %v6121
        %6159 = vmatprep.subr.bf16.mxu0 0
        %6160 = vmatpush2.bf16.msra.mxu0 0
        %6161 = vmatprep.subr.bf16.mxu0 0
        %6162 = vmatpush2.bf16.msra.mxu0 0
        %6163 = vmatprep.subr.bf16.mxu0 0
        %6164 = vmatpush2.bf16.msra.mxu0 0
        %6165 = vmatprep.subr.bf16.mxu0 0
        %6166 = vmatpush2.bf16.msra.mxu0 0
        %6167 = vmatprep.subr.bf16.mxu0 0
        %6168 = vmatpush2.bf16.msra.mxu0 0
        %6169 = vmatprep.subr.bf16.mxu0 0
        %6170 = vmatpush2.bf16.msra.mxu0 0
        %6171 = vmatprep.subr.bf16.mxu0 0
        %6172 = vmatpush2.bf16.msra.mxu0 0
        %6173 = vmatprep.subr.bf16.mxu0 0
        %6174 = vmatpush2.bf16.msra.mxu0 0
        %6175 = vmatprep.mubr.bf16.mxu0 0
        %6176 = vmatmul.mubr.bf16.gmra.mxu0 %v6138
        %v6177 = vpop.f32.mrf.mxu0
        %v6178 = vadd.f32 %v6073, %v6177
        %v6179 = vpop.f32.mrf.mxu0
        %v6180 = vadd.f32 %v6075, %v6179
        %v6181 = vpop.f32.mrf.mxu0
        %v6182 = vadd.f32 %v6077, %v6181
        %v6183 = vpop.f32.mrf.mxu0
        %v6184 = vadd.f32 %v6079, %v6183
        %6185 = vmatprep.mubr.bf16.mxu0 0
        %6186 = vmatmul.mubr.bf16.gmra.mxu0 %v6141
        %v6187 = vpop.f32.mrf.mxu0
        %v6188 = vadd.f32 %v6083, %v6187
        %v6189 = vpop.f32.mrf.mxu0
        %v6190 = vadd.f32 %v6085, %v6189
        %v6191 = vpop.f32.mrf.mxu0
        %v6192 = vadd.f32 %v6087, %v6191
        %v6193 = vpop.f32.mrf.mxu0
        %v6194 = vadd.f32 %v6089, %v6193
        %6195 = vdwg.mxu0
        %v6196 = vld [vmem:[#allocation3] sm:$0xfc]
        %v6197 = vld [vmem:[#allocation3 + $0x10] sm:$0xff]
        %v6198 = vld [vmem:[#allocation3 + $0x20] sm:$0xff]
        %v6199 = vld [vmem:[#allocation3 + $0x30] sm:$0xff]
        %v6200 = vld [vmem:[#allocation3 + $0x40] sm:$0x3]
        %v6201 = vpack.c.bf16 %v6197, %v6196
        %v6202 = vpack.c.bf16 %v6199, %v6198
        %v6203 = vpack.c.bf16 %v6200, %v6200
        %v6204 = vld [vmem:[#allocation44] sm:$0xff]
        %v6205 = vld [vmem:[#allocation44 + $0x8] sm:$0xff]
        %v6206 = vld [vmem:[#allocation44 + $0x10] sm:$0xff]
        %v6207 = vld [vmem:[#allocation44 + $0x18] sm:$0xff]
        %v6208 = vld [vmem:[#allocation44 + $0x20] sm:$0xff]
        %v6209 = vld [vmem:[#allocation44 + $0x28] sm:$0xff]
        %v6210 = vld [vmem:[#allocation44 + $0x30] sm:$0xff]
        %v6211 = vld [vmem:[#allocation44 + $0x38] sm:$0xff]
        %v6215 = vrot.slane %v6201, 1
        %v6216 = vrot.slane %v6202, 1
        %v6217 = vsel %vm3511, %v6215, %v6216
        %v6218 = vrot.slane %v6203, 1
        %v6219 = vsel %vm3511, %v6216, %v6218
        %v6228 = vunpack.c.l.b16 %v6204
        %v6229 = vunpack.c.h.b16 %v6204
        %v6230 = vunpack.c.l.b16 %v6205
        %v6231 = vunpack.c.h.b16 %v6205
        %v6232 = vunpack.c.l.b16 %v6206
        %v6233 = vunpack.c.h.b16 %v6206
        %v6234 = vunpack.c.l.b16 %v6207
        %v6235 = vunpack.c.h.b16 %v6207
        %v6236 = vunpack.c.l.b16 %v6208
        %v6237 = vunpack.c.h.b16 %v6208
        %v6238 = vunpack.c.l.b16 %v6209
        %v6239 = vunpack.c.h.b16 %v6209
        %v6240 = vunpack.c.l.b16 %v6210
        %v6241 = vunpack.c.h.b16 %v6210
        %v6242 = vunpack.c.l.b16 %v6211
        %v6243 = vunpack.c.h.b16 %v6211
        %v6244 = vpack.c.b16 %v6230, %v6228
        %v6245 = vpack.c.b16 %v6231, %v6229
        %v6246 = vpack.c.b16 %v6234, %v6232
        %v6247 = vpack.c.b16 %v6235, %v6233
        %v6248 = vpack.c.b16 %v6238, %v6236
        %v6249 = vpack.c.b16 %v6239, %v6237
        %v6250 = vpack.c.b16 %v6242, %v6240
        %v6251 = vpack.c.b16 %v6243, %v6241
        %v6261 = vsel %vm2187, %v6217, 0
        %v6264 = vsel %vm2187, %v6219, 0
        %6266 = vmatprep.subr.bf16.mxu0 0
        %6267 = vmatpush1.bf16.msra.mxu0 0
        %6268 = vmatprep.subr.bf16.mxu0 0
        %6269 = vmatpush1.bf16.msra.mxu0 0
        %6270 = vmatprep.subr.bf16.mxu0 0
        %6271 = vmatpush1.bf16.msra.mxu0 0
        %6272 = vmatprep.subr.bf16.mxu0 0
        %6273 = vmatpush1.bf16.msra.mxu0 0
        %6274 = vmatprep.subr.bf16.mxu0 %v6251
        %6275 = vmatpush1.bf16.msra.mxu0 %v6250
        %6276 = vmatprep.subr.bf16.mxu0 %v6249
        %6277 = vmatpush1.bf16.msra.mxu0 %v6248
        %6278 = vmatprep.subr.bf16.mxu0 %v6247
        %6279 = vmatpush1.bf16.msra.mxu0 %v6246
        %6280 = vmatprep.subr.bf16.mxu0 %v6245
        %6281 = vmatpush1.bf16.msra.mxu0 %v6244
        %6282 = vmatprep.subr.bf16.mxu0 0
        %6283 = vmatpush2.bf16.msra.mxu0 0
        %6284 = vmatprep.subr.bf16.mxu0 0
        %6285 = vmatpush2.bf16.msra.mxu0 0
        %6286 = vmatprep.subr.bf16.mxu0 0
        %6287 = vmatpush2.bf16.msra.mxu0 0
        %6288 = vmatprep.subr.bf16.mxu0 0
        %6289 = vmatpush2.bf16.msra.mxu0 0
        %6290 = vmatprep.subr.bf16.mxu0 0
        %6291 = vmatpush2.bf16.msra.mxu0 0
        %6292 = vmatprep.subr.bf16.mxu0 0
        %6293 = vmatpush2.bf16.msra.mxu0 0
        %6294 = vmatprep.subr.bf16.mxu0 0
        %6295 = vmatpush2.bf16.msra.mxu0 0
        %6296 = vmatprep.subr.bf16.mxu0 0
        %6297 = vmatpush2.bf16.msra.mxu0 0
        %6298 = vmatprep.mubr.bf16.mxu0 0
        %6299 = vmatmul.mubr.bf16.gmra.mxu0 %v6261
        %v6300 = vpop.f32.mrf.mxu0
        %v6301 = vadd.f32 0.0, %v6300
        %v6302 = vpop.f32.mrf.mxu0
        %v6303 = vadd.f32 0.0, %v6302
        %v6304 = vpop.f32.mrf.mxu0
        %v6305 = vadd.f32 0.0, %v6304
        %v6306 = vpop.f32.mrf.mxu0
        %v6307 = vadd.f32 0.0, %v6306
        %6308 = vmatprep.mubr.bf16.mxu0 0
        %6309 = vmatmul.mubr.bf16.gmra.mxu0 %v6264
        %v6310 = vpop.f32.mrf.mxu0
        %v6311 = vadd.f32 0.0, %v6310
        %v6312 = vpop.f32.mrf.mxu0
        %v6313 = vadd.f32 0.0, %v6312
        %v6314 = vpop.f32.mrf.mxu0
        %v6315 = vadd.f32 0.0, %v6314
        %v6316 = vpop.f32.mrf.mxu0
        %v6317 = vadd.f32 0.0, %v6316
        %6318 = vdwg.mxu0
        %v6319 = vadd.f32 %v6178, %v6301
        %v6320 = vadd.f32 %v6180, %v6303
        %v6321 = vadd.f32 %v6182, %v6305
        %v6322 = vadd.f32 %v6184, %v6307
        %v6323 = vadd.f32 %v6188, %v6311
        %v6324 = vadd.f32 %v6190, %v6313
        %v6325 = vadd.f32 %v6192, %v6315
        %v6326 = vadd.f32 %v6194, %v6317
        %v6327 = vadd.f32 %v5768, %v6319
        %v6328 = vadd.f32 %v5769, %v6320
        %v6329 = vadd.f32 %v5770, %v6321
        %v6330 = vadd.f32 %v5771, %v6322
        %v6331 = vadd.f32 %v5772, %v6323
        %v6332 = vadd.f32 %v5773, %v6324
        %v6333 = vadd.f32 %v5774, %v6325
        %v6334 = vadd.f32 %v5775, %v6326
        %v6335 = vld [vmem:[#allocation45] ss:$2 sm:$0x3]
        %v6337 = vlaneseq
        %v6338 = vshrl.u32 %v6337, 7
        %v6339 = vsub.s32 0, %v6338
        %v6340 = vrot.slane %v6335, %v6339
        %v6341 = vlaneseq
        %v6342 = vshrl.u32 %v6341, 7
        %v6343 = vsub.s32 1, %v6342
        %v6344 = vrot.slane %v6335, %v6343
        %v6347 = vadd.f32 %v6327, %v6340
        %v6348 = vadd.f32 %v6328, %v6344
        %v6349 = vadd.f32 %v6329, %v6340
        %v6350 = vadd.f32 %v6330, %v6344
        %v6351 = vadd.f32 %v6331, %v6340
        %v6352 = vadd.f32 %v6332, %v6344
        %v6353 = vadd.f32 %v6333, %v6340
        %v6354 = vadd.f32 %v6334, %v6344
        %vm6355 = vcmp.ge.f32.partialorder %v6347, 0.0
        %vm6356 = vcmp.ge.f32.partialorder %v6348, 0.0
        %vm6357 = vcmp.ge.f32.partialorder %v6349, 0.0
        %vm6358 = vcmp.ge.f32.partialorder %v6350, 0.0
        %vm6359 = vcmp.ge.f32.partialorder %v6351, 0.0
        %vm6360 = vcmp.ge.f32.partialorder %v6352, 0.0
        %vm6361 = vcmp.ge.f32.partialorder %v6353, 0.0
        %vm6362 = vcmp.ge.f32.partialorder %v6354, 0.0
        %s6363 = scalar_lea.vmem [#allocation45], 1
        %v6364 = vld [vmem:[%s6363] ss:$2 sm:$0x3]
        %v6366 = vlaneseq
        %v6367 = vshrl.u32 %v6366, 7
        %v6368 = vsub.s32 0, %v6367
        %v6369 = vrot.slane %v6364, %v6368
        %v6370 = vlaneseq
        %v6371 = vshrl.u32 %v6370, 7
        %v6372 = vsub.s32 1, %v6371
        %v6373 = vrot.slane %v6364, %v6372
        %v6376 = vmul.f32 %v6369, %v6347
        %v6377 = vmul.f32 %v6373, %v6348
        %v6378 = vmul.f32 %v6369, %v6349
        %v6379 = vmul.f32 %v6373, %v6350
        %v6380 = vmul.f32 %v6369, %v6351
        %v6381 = vmul.f32 %v6373, %v6352
        %v6382 = vmul.f32 %v6369, %v6353
        %v6383 = vmul.f32 %v6373, %v6354
        %v6384 = vsel %vm6355, %v6347, %v6376
        %v6385 = vsel %vm6356, %v6348, %v6377
        %v6386 = vsel %vm6357, %v6349, %v6378
        %v6387 = vsel %vm6358, %v6350, %v6379
        %v6388 = vsel %vm6359, %v6351, %v6380
        %v6389 = vsel %vm6360, %v6352, %v6381
        %v6390 = vsel %vm6361, %v6353, %v6382
        %v6391 = vsel %vm6362, %v6354, %v6383
        %6392 = vst.msk [vmem:[#allocation8] ss:$8 sm:$0x3] %vm1776, 0.0
        %6393 = vst.msk [vmem:[#allocation8] ss:$8 sm:$0x0] %vm1776, 0.0
        %v6402 = vrot.slane %v6384, 7
        %v6403 = vrot.slane %v6385, 7
        %v6404 = vrot.slane %v6386, 7
        %v6405 = vsel %vm1787, %v6402, %v6404
        %v6406 = vrot.slane %v6387, 7
        %v6407 = vsel %vm1787, %v6403, %v6406
        %v6408 = vrot.slane %v6388, 7
        %v6409 = vsel %vm1787, %v6404, %v6408
        %v6410 = vrot.slane %v6389, 7
        %v6411 = vsel %vm1787, %v6406, %v6410
        %v6412 = vrot.slane %v6390, 7
        %v6413 = vsel %vm1787, %v6408, %v6412
        %v6414 = vrot.slane %v6391, 7
        %v6415 = vsel %vm1787, %v6410, %v6414
        %6426 = vst [vmem:[#allocation8] sm:$0xfe] %v6402
        %6427 = vst [vmem:[#allocation8 + $0x8] sm:$0xfe] %v6403
        %6428 = vst [vmem:[#allocation8 + $0x10] sm:$0xff] %v6405
        %6429 = vst [vmem:[#allocation8 + $0x18] sm:$0xff] %v6407
        %6430 = vst [vmem:[#allocation8 + $0x20] sm:$0xff] %v6409
        %6431 = vst [vmem:[#allocation8 + $0x28] sm:$0xff] %v6411
        %6432 = vst [vmem:[#allocation8 + $0x30] sm:$0xff] %v6413
        %6433 = vst [vmem:[#allocation8 + $0x38] sm:$0xff] %v6415
        %6434 = vst [vmem:[#allocation8 + $0x40] sm:$0x1] %v6412
        %6435 = vst [vmem:[#allocation8 + $0x48] sm:$0x1] %v6414
        %s6436 = scalar_lea.vmem [#allocation8], 65
        %6437 = vst.msk [vmem:[%s6436] ss:$8 sm:$0x3] %vm1776, 0.0
        %6438 = vst.msk [vmem:[%s6436] ss:$8 sm:$0x0] %vm1776, 0.0
        %v6439 = vld [vmem:[#allocation8 + $0x8] sm:$0xff]
        %v6440 = vld [vmem:[#allocation8 + $0x18] sm:$0xff]
        %v6441 = vld [vmem:[#allocation8 + $0x28] sm:$0xff]
        %v6442 = vld [vmem:[#allocation8 + $0x38] sm:$0xff]
        %v6443 = vld [vmem:[#allocation8] sm:$0xfe]
        %v6444 = vld [vmem:[#allocation8 + $0x8] sm:$0xfe]
        %v6445 = vld [vmem:[#allocation8 + $0x10] sm:$0xff]
        %v6446 = vld [vmem:[#allocation8 + $0x20] sm:$0xff]
        %v6447 = vld [vmem:[#allocation8 + $0x30] sm:$0xff]
        %v6448 = vld [vmem:[#allocation8 + $0x40] sm:$0x1]
        %v6449 = vld [vmem:[#allocation8 + $0x48] sm:$0x1]
        %v6450 = vpack.c.bf16 %v6440, %v6439
        %v6451 = vpack.c.bf16 %v6442, %v6441
        %v6452 = vld [vmem:[%s57] sm:$0xf]
        %v6453 = vld [vmem:[%s57 + $0x4] sm:$0xf]
        %v6454 = vld [vmem:[%s57 + $0x8] sm:$0xf]
        %v6455 = vld [vmem:[%s57 + $0xc] sm:$0xf]
        %v6456 = vpack.c.bf16 %v6445, %v6443
        %v6457 = vpack.c.bf16 %v6440, %v6444
        %v6458 = vpack.c.bf16 %v6447, %v6446
        %v6459 = vpack.c.bf16 %v6448, %v6448
        %v6460 = vpack.c.bf16 %v6449, %v6449
        %v6461 = vld [vmem:[%s59] sm:$0xf]
        %v6462 = vld [vmem:[%s59 + $0x4] sm:$0xf]
        %v6463 = vld [vmem:[%s59 + $0x8] sm:$0xf]
        %v6464 = vld [vmem:[%s59 + $0xc] sm:$0xf]
        %v6465 = vld [vmem:[%s59 + $0x10] sm:$0xf]
        %v6466 = vld [vmem:[%s59 + $0x14] sm:$0xf]
        %v6467 = vld [vmem:[%s59 + $0x18] sm:$0xf]
        %v6468 = vld [vmem:[%s59 + $0x1c] sm:$0xf]
        %v6469 = vld [vmem:[%s59 + $0x20] sm:$0xf]
        %v6470 = vld [vmem:[%s59 + $0x24] sm:$0xf]
        %v6471 = vld [vmem:[%s59 + $0x28] sm:$0xf]
        %v6472 = vld [vmem:[%s59 + $0x2c] sm:$0xf]
        %v6473 = vld [vmem:[%s59 + $0x30] sm:$0xf]
        %v6474 = vld [vmem:[%s59 + $0x34] sm:$0xf]
        %v6475 = vld [vmem:[%s59 + $0x38] sm:$0xf]
        %v6476 = vld [vmem:[%s59 + $0x3c] sm:$0xf]
        %v6477 = vld [vmem:[%s59 + $0x40] sm:$0xf]
        %v6478 = vld [vmem:[%s59 + $0x44] sm:$0xf]
        %v6479 = vld [vmem:[%s59 + $0x48] sm:$0xf]
        %v6480 = vld [vmem:[%s59 + $0x4c] sm:$0xf]
        %v6481 = vld [vmem:[%s59 + $0x50] sm:$0xf]
        %v6482 = vld [vmem:[%s59 + $0x54] sm:$0xf]
        %v6483 = vld [vmem:[%s59 + $0x58] sm:$0xf]
        %v6484 = vld [vmem:[%s59 + $0x5c] sm:$0xf]
        %v6485 = vld [vmem:[%s59 + $0x60] sm:$0xf]
        %v6486 = vld [vmem:[%s59 + $0x64] sm:$0xf]
        %v6487 = vld [vmem:[%s59 + $0x68] sm:$0xf]
        %v6488 = vld [vmem:[%s59 + $0x6c] sm:$0xf]
        %v6489 = vld [vmem:[%s59 + $0x70] sm:$0xf]
        %v6490 = vld [vmem:[%s59 + $0x74] sm:$0xf]
        %v6491 = vld [vmem:[%s59 + $0x78] sm:$0xf]
        %v6492 = vld [vmem:[%s59 + $0x7c] sm:$0xf]
        %v6494 = vshrl.u32 %v6456, 16
        %v6496 = vshll.u32 %v6456, 16
        %v6498 = vrot.slane %v6496, 1
        %v6499 = vor.u32 %v6494, %v6498
        %v6501 = vshll.u32 %v6458, 16
        %v6503 = vrot.slane %v6501, 1
        %v6504 = vsel %vm1883, %v6499, %v6503
        %v6506 = vshrl.u32 %v6457, 16
        %v6508 = vshll.u32 %v6457, 16
        %v6510 = vrot.slane %v6508, 1
        %v6511 = vor.u32 %v6506, %v6510
        %v6513 = vshll.u32 %v6451, 16
        %v6515 = vrot.slane %v6513, 1
        %v6516 = vsel %vm1883, %v6511, %v6515
        %v6517 = vshrl.u32 %v6458, 16
        %v6519 = vor.u32 %v6517, %v6503
        %v6521 = vshll.u32 %v6459, 16
        %v6523 = vrot.slane %v6521, 1
        %v6524 = vsel %vm1883, %v6519, %v6523
        %v6525 = vshrl.u32 %v6451, 16
        %v6527 = vor.u32 %v6525, %v6515
        %v6529 = vshll.u32 %v6460, 16
        %v6531 = vrot.slane %v6529, 1
        %v6532 = vsel %vm1883, %v6527, %v6531
        %v6569 = vunpack.c.l.b16 %v6461
        %v6570 = vunpack.c.l.b16 %v6462
        %v6571 = vunpack.c.l.b16 %v6463
        %v6572 = vunpack.c.l.b16 %v6464
        %v6573 = vunpack.c.l.b16 %v6465
        %v6574 = vunpack.c.l.b16 %v6466
        %v6575 = vunpack.c.l.b16 %v6467
        %v6576 = vunpack.c.l.b16 %v6468
        %v6577 = vunpack.c.l.b16 %v6469
        %v6578 = vunpack.c.l.b16 %v6470
        %v6579 = vunpack.c.l.b16 %v6471
        %v6580 = vunpack.c.l.b16 %v6472
        %v6581 = vunpack.c.l.b16 %v6473
        %v6582 = vunpack.c.l.b16 %v6474
        %v6583 = vunpack.c.l.b16 %v6475
        %v6584 = vunpack.c.l.b16 %v6476
        %v6585 = vunpack.c.l.b16 %v6477
        %v6586 = vunpack.c.l.b16 %v6478
        %v6587 = vunpack.c.l.b16 %v6479
        %v6588 = vunpack.c.l.b16 %v6480
        %v6589 = vunpack.c.l.b16 %v6481
        %v6590 = vunpack.c.l.b16 %v6482
        %v6591 = vunpack.c.l.b16 %v6483
        %v6592 = vunpack.c.l.b16 %v6484
        %v6593 = vunpack.c.l.b16 %v6485
        %v6594 = vunpack.c.l.b16 %v6486
        %v6595 = vunpack.c.l.b16 %v6487
        %v6596 = vunpack.c.l.b16 %v6488
        %v6597 = vunpack.c.l.b16 %v6489
        %v6598 = vunpack.c.l.b16 %v6490
        %v6599 = vunpack.c.l.b16 %v6491
        %v6600 = vunpack.c.l.b16 %v6492
        %v6601 = vpack.c.b16 %v6570, %v6569
        %v6602 = vpack.c.b16 %v6572, %v6571
        %v6603 = vpack.c.b16 %v6574, %v6573
        %v6604 = vpack.c.b16 %v6576, %v6575
        %v6605 = vpack.c.b16 %v6578, %v6577
        %v6606 = vpack.c.b16 %v6580, %v6579
        %v6607 = vpack.c.b16 %v6582, %v6581
        %v6608 = vpack.c.b16 %v6584, %v6583
        %v6609 = vpack.c.b16 %v6586, %v6585
        %v6610 = vpack.c.b16 %v6588, %v6587
        %v6611 = vpack.c.b16 %v6590, %v6589
        %v6612 = vpack.c.b16 %v6592, %v6591
        %v6613 = vpack.c.b16 %v6594, %v6593
        %v6614 = vpack.c.b16 %v6596, %v6595
        %v6615 = vpack.c.b16 %v6598, %v6597
        %v6616 = vpack.c.b16 %v6600, %v6599
        %6633 = vmatprep.subr.bf16.mxu0 0
        %6634 = vmatpush1.bf16.msra.mxu0 %v6608
        %6635 = vmatprep.subr.bf16.mxu0 0
        %6636 = vmatpush1.bf16.msra.mxu0 %v6607
        %6637 = vmatprep.subr.bf16.mxu0 0
        %6638 = vmatpush1.bf16.msra.mxu0 %v6606
        %6639 = vmatprep.subr.bf16.mxu0 0
        %6640 = vmatpush1.bf16.msra.mxu0 %v6605
        %6641 = vmatprep.subr.bf16.mxu0 0
        %6642 = vmatpush1.bf16.msra.mxu0 %v6604
        %6643 = vmatprep.subr.bf16.mxu0 0
        %6644 = vmatpush1.bf16.msra.mxu0 %v6603
        %6645 = vmatprep.subr.bf16.mxu0 0
        %6646 = vmatpush1.bf16.msra.mxu0 %v6602
        %6647 = vmatprep.subr.bf16.mxu0 0
        %6648 = vmatpush1.bf16.msra.mxu0 %v6601
        %6649 = vmatprep.subr.bf16.mxu0 0
        %6650 = vmatpush2.bf16.msra.mxu0 %v6616
        %6651 = vmatprep.subr.bf16.mxu0 0
        %6652 = vmatpush2.bf16.msra.mxu0 %v6615
        %6653 = vmatprep.subr.bf16.mxu0 0
        %6654 = vmatpush2.bf16.msra.mxu0 %v6614
        %6655 = vmatprep.subr.bf16.mxu0 0
        %6656 = vmatpush2.bf16.msra.mxu0 %v6613
        %6657 = vmatprep.subr.bf16.mxu0 0
        %6658 = vmatpush2.bf16.msra.mxu0 %v6612
        %6659 = vmatprep.subr.bf16.mxu0 0
        %6660 = vmatpush2.bf16.msra.mxu0 %v6611
        %6661 = vmatprep.subr.bf16.mxu0 0
        %6662 = vmatpush2.bf16.msra.mxu0 %v6610
        %6663 = vmatprep.subr.bf16.mxu0 0
        %6664 = vmatpush2.bf16.msra.mxu0 %v6609
        %6665 = vmatprep.mubr.bf16.mxu0 %v6516
        %6666 = vmatmul.mubr.bf16.gmra.mxu0 %v6504
        %v6667 = vpop.f32.mrf.mxu0
        %v6668 = vadd.f32 0.0, %v6667
        %v6669 = vpop.f32.mrf.mxu0
        %v6670 = vpop.f32.mrf.mxu0
        %v6671 = vadd.f32 0.0, %v6670
        %v6672 = vpop.f32.mrf.mxu0
        %6673 = vmatprep.mubr.bf16.mxu0 %v6532
        %6674 = vmatmul.mubr.bf16.gmra.mxu0 %v6524
        %v6675 = vpop.f32.mrf.mxu0
        %v6676 = vadd.f32 0.0, %v6675
        %v6677 = vpop.f32.mrf.mxu0
        %v6678 = vpop.f32.mrf.mxu0
        %v6679 = vadd.f32 0.0, %v6678
        %v6680 = vpop.f32.mrf.mxu0
        %6681 = vdwg.mxu0
        %6684 = vrot.lane.b32.xlu0 %v6450, 32
        %v6685 = vpop.permute.xlu0 %6684
        %6686 = vrot.lane.b32.xlu0 %v6451, 32
        %v6687 = vpop.permute.xlu0 %6686
        %v6692 = vunpack.c.l.b16 %v6452
        %v6693 = vunpack.c.l.b16 %v6453
        %v6694 = vunpack.c.l.b16 %v6454
        %v6695 = vunpack.c.l.b16 %v6455
        %v6696 = vpack.c.b16 %v6693, %v6692
        %v6697 = vpack.c.b16 %v6695, %v6694
        %vm6700 = vcmask 261120
        %v6702 = vsel %vm6700, %v6685, 0
        %v6705 = vsel %vm6700, %v6687, 0
        %6707 = vmatprep.subr.bf16.mxu0 0
        %6708 = vmatpush1.bf16.msra.mxu0 0
        %6709 = vmatprep.subr.bf16.mxu0 0
        %6710 = vmatpush1.bf16.msra.mxu0 0
        %6711 = vmatprep.subr.bf16.mxu0 0
        %6712 = vmatpush1.bf16.msra.mxu0 0
        %6713 = vmatprep.subr.bf16.mxu0 0
        %6714 = vmatpush1.bf16.msra.mxu0 0
        %6715 = vmatprep.subr.bf16.mxu0 0
        %6716 = vmatpush1.bf16.msra.mxu0 0
        %6717 = vmatprep.subr.bf16.mxu0 0
        %6718 = vmatpush1.bf16.msra.mxu0 0
        %6719 = vmatprep.subr.bf16.mxu0 0
        %6720 = vmatpush1.bf16.msra.mxu0 %v6697
        %6721 = vmatprep.subr.bf16.mxu0 0
        %6722 = vmatpush1.bf16.msra.mxu0 %v6696
        %6723 = vmatprep.subr.bf16.mxu0 0
        %6724 = vmatpush2.bf16.msra.mxu0 0
        %6725 = vmatprep.subr.bf16.mxu0 0
        %6726 = vmatpush2.bf16.msra.mxu0 0
        %6727 = vmatprep.subr.bf16.mxu0 0
        %6728 = vmatpush2.bf16.msra.mxu0 0
        %6729 = vmatprep.subr.bf16.mxu0 0
        %6730 = vmatpush2.bf16.msra.mxu0 0
        %6731 = vmatprep.subr.bf16.mxu0 0
        %6732 = vmatpush2.bf16.msra.mxu0 0
        %6733 = vmatprep.subr.bf16.mxu0 0
        %6734 = vmatpush2.bf16.msra.mxu0 0
        %6735 = vmatprep.subr.bf16.mxu0 0
        %6736 = vmatpush2.bf16.msra.mxu0 0
        %6737 = vmatprep.subr.bf16.mxu0 0
        %6738 = vmatpush2.bf16.msra.mxu0 0
        %6739 = vmatprep.mubr.bf16.mxu0 0
        %6740 = vmatmul.mubr.bf16.gmra.mxu0 %v6702
        %v6741 = vpop.f32.mrf.mxu0
        %v6742 = vadd.f32 %v6668, %v6741
        %v6743 = vpop.f32.mrf.mxu0
        %v6744 = vpop.f32.mrf.mxu0
        %v6745 = vadd.f32 %v6671, %v6744
        %v6746 = vpop.f32.mrf.mxu0
        %6747 = vmatprep.mubr.bf16.mxu0 0
        %6748 = vmatmul.mubr.bf16.gmra.mxu0 %v6705
        %v6749 = vpop.f32.mrf.mxu0
        %v6750 = vadd.f32 %v6676, %v6749
        %v6751 = vpop.f32.mrf.mxu0
        %v6752 = vpop.f32.mrf.mxu0
        %v6753 = vadd.f32 %v6679, %v6752
        %v6754 = vpop.f32.mrf.mxu0
        %6755 = vdwg.mxu0
        %v6756 = vld [vmem:[#allocation8] sm:$0xfc]
        %v6757 = vld [vmem:[#allocation8 + $0x10] sm:$0xff]
        %v6758 = vld [vmem:[#allocation8 + $0x20] sm:$0xff]
        %v6759 = vld [vmem:[#allocation8 + $0x30] sm:$0xff]
        %v6760 = vld [vmem:[#allocation8 + $0x40] sm:$0x3]
        %v6761 = vpack.c.bf16 %v6757, %v6756
        %v6762 = vpack.c.bf16 %v6759, %v6758
        %v6763 = vpack.c.bf16 %v6760, %v6760
        %v6764 = vld [vmem:[%s61] sm:$0xf]
        %v6765 = vld [vmem:[%s61 + $0x4] sm:$0xf]
        %v6766 = vld [vmem:[%s61 + $0x8] sm:$0xf]
        %v6767 = vld [vmem:[%s61 + $0xc] sm:$0xf]
        %v6771 = vrot.slane %v6761, 1
        %v6772 = vrot.slane %v6762, 1
        %v6773 = vsel %vm3511, %v6771, %v6772
        %v6774 = vrot.slane %v6763, 1
        %v6775 = vsel %vm3511, %v6772, %v6774
        %v6780 = vunpack.c.l.b16 %v6764
        %v6781 = vunpack.c.l.b16 %v6765
        %v6782 = vunpack.c.l.b16 %v6766
        %v6783 = vunpack.c.l.b16 %v6767
        %v6784 = vpack.c.b16 %v6781, %v6780
        %v6785 = vpack.c.b16 %v6783, %v6782
        %v6789 = vsel %vm6700, %v6773, 0
        %v6792 = vsel %vm6700, %v6775, 0
        %6794 = vmatprep.subr.bf16.mxu0 0
        %6795 = vmatpush1.bf16.msra.mxu0 0
        %6796 = vmatprep.subr.bf16.mxu0 0
        %6797 = vmatpush1.bf16.msra.mxu0 0
        %6798 = vmatprep.subr.bf16.mxu0 0
        %6799 = vmatpush1.bf16.msra.mxu0 0
        %6800 = vmatprep.subr.bf16.mxu0 0
        %6801 = vmatpush1.bf16.msra.mxu0 0
        %6802 = vmatprep.subr.bf16.mxu0 0
        %6803 = vmatpush1.bf16.msra.mxu0 0
        %6804 = vmatprep.subr.bf16.mxu0 0
        %6805 = vmatpush1.bf16.msra.mxu0 0
        %6806 = vmatprep.subr.bf16.mxu0 0
        %6807 = vmatpush1.bf16.msra.mxu0 %v6785
        %6808 = vmatprep.subr.bf16.mxu0 0
        %6809 = vmatpush1.bf16.msra.mxu0 %v6784
        %6810 = vmatprep.subr.bf16.mxu0 0
        %6811 = vmatpush2.bf16.msra.mxu0 0
        %6812 = vmatprep.subr.bf16.mxu0 0
        %6813 = vmatpush2.bf16.msra.mxu0 0
        %6814 = vmatprep.subr.bf16.mxu0 0
        %6815 = vmatpush2.bf16.msra.mxu0 0
        %6816 = vmatprep.subr.bf16.mxu0 0
        %6817 = vmatpush2.bf16.msra.mxu0 0
        %6818 = vmatprep.subr.bf16.mxu0 0
        %6819 = vmatpush2.bf16.msra.mxu0 0
        %6820 = vmatprep.subr.bf16.mxu0 0
        %6821 = vmatpush2.bf16.msra.mxu0 0
        %6822 = vmatprep.subr.bf16.mxu0 0
        %6823 = vmatpush2.bf16.msra.mxu0 0
        %6824 = vmatprep.subr.bf16.mxu0 0
        %6825 = vmatpush2.bf16.msra.mxu0 0
        %6826 = vmatprep.mubr.bf16.mxu0 0
        %6827 = vmatmul.mubr.bf16.gmra.mxu0 %v6789
        %v6828 = vpop.f32.mrf.mxu0
        %v6829 = vadd.f32 0.0, %v6828
        %v6830 = vpop.f32.mrf.mxu0
        %v6831 = vpop.f32.mrf.mxu0
        %v6832 = vadd.f32 0.0, %v6831
        %v6833 = vpop.f32.mrf.mxu0
        %6834 = vmatprep.mubr.bf16.mxu0 0
        %6835 = vmatmul.mubr.bf16.gmra.mxu0 %v6792
        %v6836 = vpop.f32.mrf.mxu0
        %v6837 = vadd.f32 0.0, %v6836
        %v6838 = vpop.f32.mrf.mxu0
        %v6839 = vpop.f32.mrf.mxu0
        %v6840 = vadd.f32 0.0, %v6839
        %v6841 = vpop.f32.mrf.mxu0
        %6842 = vdwg.mxu0
        %v6843 = vadd.f32 %v6742, %v6829
        %v6844 = vadd.f32 %v6745, %v6832
        %v6845 = vadd.f32 %v6750, %v6837
        %v6846 = vadd.f32 %v6753, %v6840
        %v6847 = vld [vmem:[#allocation47] sm:$0x1]
        %v6848 = vlaneseq
        %v6849 = vshrl.u32 %v6848, 7
        %v6850 = vsub.s32 0, %v6849
        %v6851 = vrot.slane %v6847, %v6850
        %v6852 = vadd.f32 %v6843, %v6851
        %v6853 = vadd.f32 %v6844, %v6851
        %v6854 = vadd.f32 %v6845, %v6851
        %v6855 = vadd.f32 %v6846, %v6851
        %vm6856 = vcmp.ge.f32.partialorder %v6852, 0.0
        %vm6857 = vcmp.ge.f32.partialorder %v6853, 0.0
        %vm6858 = vcmp.ge.f32.partialorder %v6854, 0.0
        %vm6859 = vcmp.ge.f32.partialorder %v6855, 0.0
        %v6860 = vld [vmem:[#allocation47 + $0x1] sm:$0x1]
        %v6861 = vlaneseq
        %v6862 = vshrl.u32 %v6861, 7
        %v6863 = vsub.s32 0, %v6862
        %v6864 = vrot.slane %v6860, %v6863
        %v6865 = vmul.f32 %v6864, %v6852
        %v6866 = vmul.f32 %v6864, %v6853
        %v6867 = vmul.f32 %v6864, %v6854
        %v6868 = vmul.f32 %v6864, %v6855
        %v6869 = vsel %vm6856, %v6852, %v6865
        %v6870 = vsel %vm6857, %v6853, %v6866
        %v6871 = vsel %vm6858, %v6854, %v6867
        %v6872 = vsel %vm6859, %v6855, %v6868
        %v6873 = vld [vmem:[#allocation48] sm:$0xff]
        %v6874 = vld [vmem:[#allocation48 + $0x8] sm:$0xff]
        %v6875 = vld [vmem:[#allocation48 + $0x10] sm:$0xff]
        %v6876 = vld [vmem:[#allocation48 + $0x18] sm:$0xff]
        %v6877 = vld [vmem:[#allocation48 + $0x20] sm:$0xff]
        %v6878 = vld [vmem:[#allocation48 + $0x28] sm:$0xff]
        %v6879 = vld [vmem:[#allocation48 + $0x30] sm:$0xff]
        %v6880 = vld [vmem:[#allocation48 + $0x38] sm:$0xff]
        %v6881 = vld [vmem:[#allocation48 + $0x40] sm:$0xff]
        %v6882 = vld [vmem:[#allocation48 + $0x48] sm:$0xff]
        %v6883 = vld [vmem:[#allocation48 + $0x50] sm:$0xff]
        %v6884 = vld [vmem:[#allocation48 + $0x58] sm:$0xff]
        %v6885 = vld [vmem:[#allocation48 + $0x60] sm:$0xff]
        %v6886 = vld [vmem:[#allocation48 + $0x68] sm:$0xff]
        %v6887 = vld [vmem:[#allocation48 + $0x70] sm:$0xff]
        %v6888 = vld [vmem:[#allocation48 + $0x78] sm:$0xff]
        %6890 = vset.pattern.permute.xlu0 0
        %6891 = vperm.xlu0 %6890, %v6869
        %v6892 = vpop.permute.xlu0 %6891
        %6895 = vset.pattern.permute.xlu0 0
        %6896 = vperm.xlu0 %6895, %v6870
        %v6897 = vpop.permute.xlu0 %6896
        %6900 = vset.pattern.permute.xlu0 0
        %6901 = vperm.xlu0 %6900, %v6871
        %v6902 = vpop.permute.xlu0 %6901
        %6905 = vset.pattern.permute.xlu0 0
        %6906 = vperm.xlu0 %6905, %v6872
        %v6907 = vpop.permute.xlu0 %6906
        %v6909 = vmul.f32 %v6892, %v6873
        %v6910 = vmul.f32 %v6892, %v6874
        %v6911 = vmul.f32 %v6892, %v6875
        %v6912 = vmul.f32 %v6892, %v6876
        %v6913 = vmul.f32 %v6897, %v6877
        %v6914 = vmul.f32 %v6897, %v6878
        %v6915 = vmul.f32 %v6897, %v6879
        %v6916 = vmul.f32 %v6897, %v6880
        %v6917 = vmul.f32 %v6902, %v6881
        %v6918 = vmul.f32 %v6902, %v6882
        %v6919 = vmul.f32 %v6902, %v6883
        %v6920 = vmul.f32 %v6902, %v6884
        %v6921 = vmul.f32 %v6907, %v6885
        %v6922 = vmul.f32 %v6907, %v6886
        %v6923 = vmul.f32 %v6907, %v6887
        %v6924 = vmul.f32 %v6907, %v6888
        %s6925 = scalar_lea.vmem [#allocation48], 128
        %v6926 = vld [vmem:[%s6925] sm:$0xff]
        %v6927 = vld [vmem:[%s6925 + $0x8] sm:$0xff]
        %v6928 = vld [vmem:[%s6925 + $0x10] sm:$0xff]
        %v6929 = vld [vmem:[%s6925 + $0x18] sm:$0xff]
        %v6930 = vld [vmem:[%s6925 + $0x20] sm:$0xff]
        %v6931 = vld [vmem:[%s6925 + $0x28] sm:$0xff]
        %v6932 = vld [vmem:[%s6925 + $0x30] sm:$0xff]
        %v6933 = vld [vmem:[%s6925 + $0x38] sm:$0xff]
        %v6934 = vld [vmem:[%s6925 + $0x40] sm:$0xff]
        %v6935 = vld [vmem:[%s6925 + $0x48] sm:$0xff]
        %v6936 = vld [vmem:[%s6925 + $0x50] sm:$0xff]
        %v6937 = vld [vmem:[%s6925 + $0x58] sm:$0xff]
        %v6938 = vld [vmem:[%s6925 + $0x60] sm:$0xff]
        %v6939 = vld [vmem:[%s6925 + $0x68] sm:$0xff]
        %v6940 = vld [vmem:[%s6925 + $0x70] sm:$0xff]
        %v6941 = vld [vmem:[%s6925 + $0x78] sm:$0xff]
        %6942 = vset.pattern.permute.xlu0 1
        %6943 = vperm.xlu0 %6942, %v6869
        %v6944 = vpop.permute.xlu0 %6943
        %6946 = vset.pattern.permute.xlu0 1
        %6947 = vperm.xlu0 %6946, %v6870
        %v6948 = vpop.permute.xlu0 %6947
        %6950 = vset.pattern.permute.xlu0 1
        %6951 = vperm.xlu0 %6950, %v6871
        %v6952 = vpop.permute.xlu0 %6951
        %6954 = vset.pattern.permute.xlu0 1
        %6955 = vperm.xlu0 %6954, %v6872
        %v6956 = vpop.permute.xlu0 %6955
        %v6958 = vmul.f32 %v6944, %v6926
        %v6959 = vmul.f32 %v6944, %v6927
        %v6960 = vmul.f32 %v6944, %v6928
        %v6961 = vmul.f32 %v6944, %v6929
        %v6962 = vmul.f32 %v6948, %v6930
        %v6963 = vmul.f32 %v6948, %v6931
        %v6964 = vmul.f32 %v6948, %v6932
        %v6965 = vmul.f32 %v6948, %v6933
        %v6966 = vmul.f32 %v6952, %v6934
        %v6967 = vmul.f32 %v6952, %v6935
        %v6968 = vmul.f32 %v6952, %v6936
        %v6969 = vmul.f32 %v6952, %v6937
        %v6970 = vmul.f32 %v6956, %v6938
        %v6971 = vmul.f32 %v6956, %v6939
        %v6972 = vmul.f32 %v6956, %v6940
        %v6973 = vmul.f32 %v6956, %v6941
        %v6974 = vadd.f32 %v6909, %v6958
        %v6975 = vadd.f32 %v6910, %v6959
        %v6976 = vadd.f32 %v6911, %v6960
        %v6977 = vadd.f32 %v6912, %v6961
        %v6978 = vadd.f32 %v6913, %v6962
        %v6979 = vadd.f32 %v6914, %v6963
        %v6980 = vadd.f32 %v6915, %v6964
        %v6981 = vadd.f32 %v6916, %v6965
        %v6982 = vadd.f32 %v6917, %v6966
        %v6983 = vadd.f32 %v6918, %v6967
        %v6984 = vadd.f32 %v6919, %v6968
        %v6985 = vadd.f32 %v6920, %v6969
        %v6986 = vadd.f32 %v6921, %v6970
        %v6987 = vadd.f32 %v6922, %v6971
        %v6988 = vadd.f32 %v6923, %v6972
        %v6989 = vadd.f32 %v6924, %v6973
        %s6990 = scalar_lea.vmem [#allocation48], 256
        %v6991 = vld [vmem:[%s6990] sm:$0xff]
        %v6992 = vld [vmem:[%s6990 + $0x8] sm:$0xff]
        %v6993 = vld [vmem:[%s6990 + $0x10] sm:$0xff]
        %v6994 = vld [vmem:[%s6990 + $0x18] sm:$0xff]
        %v6995 = vld [vmem:[%s6990 + $0x20] sm:$0xff]
        %v6996 = vld [vmem:[%s6990 + $0x28] sm:$0xff]
        %v6997 = vld [vmem:[%s6990 + $0x30] sm:$0xff]
        %v6998 = vld [vmem:[%s6990 + $0x38] sm:$0xff]
        %v6999 = vld [vmem:[%s6990 + $0x40] sm:$0xff]
        %v7000 = vld [vmem:[%s6990 + $0x48] sm:$0xff]
        %v7001 = vld [vmem:[%s6990 + $0x50] sm:$0xff]
        %v7002 = vld [vmem:[%s6990 + $0x58] sm:$0xff]
        %v7003 = vld [vmem:[%s6990 + $0x60] sm:$0xff]
        %v7004 = vld [vmem:[%s6990 + $0x68] sm:$0xff]
        %v7005 = vld [vmem:[%s6990 + $0x70] sm:$0xff]
        %v7006 = vld [vmem:[%s6990 + $0x78] sm:$0xff]
        %7007 = vset.pattern.permute.xlu0 2
        %7008 = vperm.xlu0 %7007, %v6869
        %v7009 = vpop.permute.xlu0 %7008
        %7011 = vset.pattern.permute.xlu0 2
        %7012 = vperm.xlu0 %7011, %v6870
        %v7013 = vpop.permute.xlu0 %7012
        %7015 = vset.pattern.permute.xlu0 2
        %7016 = vperm.xlu0 %7015, %v6871
        %v7017 = vpop.permute.xlu0 %7016
        %7019 = vset.pattern.permute.xlu0 2
        %7020 = vperm.xlu0 %7019, %v6872
        %v7021 = vpop.permute.xlu0 %7020
        %v7023 = vmul.f32 %v7009, %v6991
        %v7024 = vmul.f32 %v7009, %v6992
        %v7025 = vmul.f32 %v7009, %v6993
        %v7026 = vmul.f32 %v7009, %v6994
        %v7027 = vmul.f32 %v7013, %v6995
        %v7028 = vmul.f32 %v7013, %v6996
        %v7029 = vmul.f32 %v7013, %v6997
        %v7030 = vmul.f32 %v7013, %v6998
        %v7031 = vmul.f32 %v7017, %v6999
        %v7032 = vmul.f32 %v7017, %v7000
        %v7033 = vmul.f32 %v7017, %v7001
        %v7034 = vmul.f32 %v7017, %v7002
        %v7035 = vmul.f32 %v7021, %v7003
        %v7036 = vmul.f32 %v7021, %v7004
        %v7037 = vmul.f32 %v7021, %v7005
        %v7038 = vmul.f32 %v7021, %v7006
        %v7039 = vadd.f32 %v6974, %v7023
        %v7040 = vadd.f32 %v6975, %v7024
        %v7041 = vadd.f32 %v6976, %v7025
        %v7042 = vadd.f32 %v6977, %v7026
        %v7043 = vadd.f32 %v6978, %v7027
        %v7044 = vadd.f32 %v6979, %v7028
        %v7045 = vadd.f32 %v6980, %v7029
        %v7046 = vadd.f32 %v6981, %v7030
        %v7047 = vadd.f32 %v6982, %v7031
        %v7048 = vadd.f32 %v6983, %v7032
        %v7049 = vadd.f32 %v6984, %v7033
        %v7050 = vadd.f32 %v6985, %v7034
        %v7051 = vadd.f32 %v6986, %v7035
        %v7052 = vadd.f32 %v6987, %v7036
        %v7053 = vadd.f32 %v6988, %v7037
        %v7054 = vadd.f32 %v6989, %v7038
        %s7055 = scalar_lea.vmem [#allocation48], 384
        %v7056 = vld [vmem:[%s7055] sm:$0xff]
        %v7057 = vld [vmem:[%s7055 + $0x8] sm:$0xff]
        %v7058 = vld [vmem:[%s7055 + $0x10] sm:$0xff]
        %v7059 = vld [vmem:[%s7055 + $0x18] sm:$0xff]
        %v7060 = vld [vmem:[%s7055 + $0x20] sm:$0xff]
        %v7061 = vld [vmem:[%s7055 + $0x28] sm:$0xff]
        %v7062 = vld [vmem:[%s7055 + $0x30] sm:$0xff]
        %v7063 = vld [vmem:[%s7055 + $0x38] sm:$0xff]
        %v7064 = vld [vmem:[%s7055 + $0x40] sm:$0xff]
        %v7065 = vld [vmem:[%s7055 + $0x48] sm:$0xff]
        %v7066 = vld [vmem:[%s7055 + $0x50] sm:$0xff]
        %v7067 = vld [vmem:[%s7055 + $0x58] sm:$0xff]
        %v7068 = vld [vmem:[%s7055 + $0x60] sm:$0xff]
        %v7069 = vld [vmem:[%s7055 + $0x68] sm:$0xff]
        %v7070 = vld [vmem:[%s7055 + $0x70] sm:$0xff]
        %v7071 = vld [vmem:[%s7055 + $0x78] sm:$0xff]
        %7072 = vset.pattern.permute.xlu0 3
        %7073 = vperm.xlu0 %7072, %v6869
        %v7074 = vpop.permute.xlu0 %7073
        %7076 = vset.pattern.permute.xlu0 3
        %7077 = vperm.xlu0 %7076, %v6870
        %v7078 = vpop.permute.xlu0 %7077
        %7080 = vset.pattern.permute.xlu0 3
        %7081 = vperm.xlu0 %7080, %v6871
        %v7082 = vpop.permute.xlu0 %7081
        %7084 = vset.pattern.permute.xlu0 3
        %7085 = vperm.xlu0 %7084, %v6872
        %v7086 = vpop.permute.xlu0 %7085
        %v7088 = vmul.f32 %v7074, %v7056
        %v7089 = vmul.f32 %v7074, %v7057
        %v7090 = vmul.f32 %v7074, %v7058
        %v7091 = vmul.f32 %v7074, %v7059
        %v7092 = vmul.f32 %v7078, %v7060
        %v7093 = vmul.f32 %v7078, %v7061
        %v7094 = vmul.f32 %v7078, %v7062
        %v7095 = vmul.f32 %v7078, %v7063
        %v7096 = vmul.f32 %v7082, %v7064
        %v7097 = vmul.f32 %v7082, %v7065
        %v7098 = vmul.f32 %v7082, %v7066
        %v7099 = vmul.f32 %v7082, %v7067
        %v7100 = vmul.f32 %v7086, %v7068
        %v7101 = vmul.f32 %v7086, %v7069
        %v7102 = vmul.f32 %v7086, %v7070
        %v7103 = vmul.f32 %v7086, %v7071
        %v7104 = vadd.f32 %v7039, %v7088
        %v7105 = vadd.f32 %v7040, %v7089
        %v7106 = vadd.f32 %v7041, %v7090
        %v7107 = vadd.f32 %v7042, %v7091
        %v7108 = vadd.f32 %v7043, %v7092
        %v7109 = vadd.f32 %v7044, %v7093
        %v7110 = vadd.f32 %v7045, %v7094
        %v7111 = vadd.f32 %v7046, %v7095
        %v7112 = vadd.f32 %v7047, %v7096
        %v7113 = vadd.f32 %v7048, %v7097
        %v7114 = vadd.f32 %v7049, %v7098
        %v7115 = vadd.f32 %v7050, %v7099
        %v7116 = vadd.f32 %v7051, %v7100
        %v7117 = vadd.f32 %v7052, %v7101
        %v7118 = vadd.f32 %v7053, %v7102
        %v7119 = vadd.f32 %v7054, %v7103
        %s7120 = scalar_lea.vmem [#allocation48], 512
        %v7121 = vld [vmem:[%s7120] sm:$0xff]
        %v7122 = vld [vmem:[%s7120 + $0x8] sm:$0xff]
        %v7123 = vld [vmem:[%s7120 + $0x10] sm:$0xff]
        %v7124 = vld [vmem:[%s7120 + $0x18] sm:$0xff]
        %v7125 = vld [vmem:[%s7120 + $0x20] sm:$0xff]
        %v7126 = vld [vmem:[%s7120 + $0x28] sm:$0xff]
        %v7127 = vld [vmem:[%s7120 + $0x30] sm:$0xff]
        %v7128 = vld [vmem:[%s7120 + $0x38] sm:$0xff]
        %v7129 = vld [vmem:[%s7120 + $0x40] sm:$0xff]
        %v7130 = vld [vmem:[%s7120 + $0x48] sm:$0xff]
        %v7131 = vld [vmem:[%s7120 + $0x50] sm:$0xff]
        %v7132 = vld [vmem:[%s7120 + $0x58] sm:$0xff]
        %v7133 = vld [vmem:[%s7120 + $0x60] sm:$0xff]
        %v7134 = vld [vmem:[%s7120 + $0x68] sm:$0xff]
        %v7135 = vld [vmem:[%s7120 + $0x70] sm:$0xff]
        %v7136 = vld [vmem:[%s7120 + $0x78] sm:$0xff]
        %7137 = vset.pattern.permute.xlu0 4
        %7138 = vperm.xlu0 %7137, %v6869
        %v7139 = vpop.permute.xlu0 %7138
        %7141 = vset.pattern.permute.xlu0 4
        %7142 = vperm.xlu0 %7141, %v6870
        %v7143 = vpop.permute.xlu0 %7142
        %7145 = vset.pattern.permute.xlu0 4
        %7146 = vperm.xlu0 %7145, %v6871
        %v7147 = vpop.permute.xlu0 %7146
        %7149 = vset.pattern.permute.xlu0 4
        %7150 = vperm.xlu0 %7149, %v6872
        %v7151 = vpop.permute.xlu0 %7150
        %v7153 = vmul.f32 %v7139, %v7121
        %v7154 = vmul.f32 %v7139, %v7122
        %v7155 = vmul.f32 %v7139, %v7123
        %v7156 = vmul.f32 %v7139, %v7124
        %v7157 = vmul.f32 %v7143, %v7125
        %v7158 = vmul.f32 %v7143, %v7126
        %v7159 = vmul.f32 %v7143, %v7127
        %v7160 = vmul.f32 %v7143, %v7128
        %v7161 = vmul.f32 %v7147, %v7129
        %v7162 = vmul.f32 %v7147, %v7130
        %v7163 = vmul.f32 %v7147, %v7131
        %v7164 = vmul.f32 %v7147, %v7132
        %v7165 = vmul.f32 %v7151, %v7133
        %v7166 = vmul.f32 %v7151, %v7134
        %v7167 = vmul.f32 %v7151, %v7135
        %v7168 = vmul.f32 %v7151, %v7136
        %v7169 = vadd.f32 %v7104, %v7153
        %v7170 = vadd.f32 %v7105, %v7154
        %v7171 = vadd.f32 %v7106, %v7155
        %v7172 = vadd.f32 %v7107, %v7156
        %v7173 = vadd.f32 %v7108, %v7157
        %v7174 = vadd.f32 %v7109, %v7158
        %v7175 = vadd.f32 %v7110, %v7159
        %v7176 = vadd.f32 %v7111, %v7160
        %v7177 = vadd.f32 %v7112, %v7161
        %v7178 = vadd.f32 %v7113, %v7162
        %v7179 = vadd.f32 %v7114, %v7163
        %v7180 = vadd.f32 %v7115, %v7164
        %v7181 = vadd.f32 %v7116, %v7165
        %v7182 = vadd.f32 %v7117, %v7166
        %v7183 = vadd.f32 %v7118, %v7167
        %v7184 = vadd.f32 %v7119, %v7168
        %s7185 = scalar_lea.vmem [#allocation48], 640
        %v7186 = vld [vmem:[%s7185] sm:$0xff]
        %v7187 = vld [vmem:[%s7185 + $0x8] sm:$0xff]
        %v7188 = vld [vmem:[%s7185 + $0x10] sm:$0xff]
        %v7189 = vld [vmem:[%s7185 + $0x18] sm:$0xff]
        %v7190 = vld [vmem:[%s7185 + $0x20] sm:$0xff]
        %v7191 = vld [vmem:[%s7185 + $0x28] sm:$0xff]
        %v7192 = vld [vmem:[%s7185 + $0x30] sm:$0xff]
        %v7193 = vld [vmem:[%s7185 + $0x38] sm:$0xff]
        %v7194 = vld [vmem:[%s7185 + $0x40] sm:$0xff]
        %v7195 = vld [vmem:[%s7185 + $0x48] sm:$0xff]
        %v7196 = vld [vmem:[%s7185 + $0x50] sm:$0xff]
        %v7197 = vld [vmem:[%s7185 + $0x58] sm:$0xff]
        %v7198 = vld [vmem:[%s7185 + $0x60] sm:$0xff]
        %v7199 = vld [vmem:[%s7185 + $0x68] sm:$0xff]
        %v7200 = vld [vmem:[%s7185 + $0x70] sm:$0xff]
        %v7201 = vld [vmem:[%s7185 + $0x78] sm:$0xff]
        %7202 = vset.pattern.permute.xlu0 5
        %7203 = vperm.xlu0 %7202, %v6869
        %v7204 = vpop.permute.xlu0 %7203
        %7206 = vset.pattern.permute.xlu0 5
        %7207 = vperm.xlu0 %7206, %v6870
        %v7208 = vpop.permute.xlu0 %7207
        %7210 = vset.pattern.permute.xlu0 5
        %7211 = vperm.xlu0 %7210, %v6871
        %v7212 = vpop.permute.xlu0 %7211
        %7214 = vset.pattern.permute.xlu0 5
        %7215 = vperm.xlu0 %7214, %v6872
        %v7216 = vpop.permute.xlu0 %7215
        %v7218 = vmul.f32 %v7204, %v7186
        %v7219 = vmul.f32 %v7204, %v7187
        %v7220 = vmul.f32 %v7204, %v7188
        %v7221 = vmul.f32 %v7204, %v7189
        %v7222 = vmul.f32 %v7208, %v7190
        %v7223 = vmul.f32 %v7208, %v7191
        %v7224 = vmul.f32 %v7208, %v7192
        %v7225 = vmul.f32 %v7208, %v7193
        %v7226 = vmul.f32 %v7212, %v7194
        %v7227 = vmul.f32 %v7212, %v7195
        %v7228 = vmul.f32 %v7212, %v7196
        %v7229 = vmul.f32 %v7212, %v7197
        %v7230 = vmul.f32 %v7216, %v7198
        %v7231 = vmul.f32 %v7216, %v7199
        %v7232 = vmul.f32 %v7216, %v7200
        %v7233 = vmul.f32 %v7216, %v7201
        %v7234 = vadd.f32 %v7169, %v7218
        %v7235 = vadd.f32 %v7170, %v7219
        %v7236 = vadd.f32 %v7171, %v7220
        %v7237 = vadd.f32 %v7172, %v7221
        %v7238 = vadd.f32 %v7173, %v7222
        %v7239 = vadd.f32 %v7174, %v7223
        %v7240 = vadd.f32 %v7175, %v7224
        %v7241 = vadd.f32 %v7176, %v7225
        %v7242 = vadd.f32 %v7177, %v7226
        %v7243 = vadd.f32 %v7178, %v7227
        %v7244 = vadd.f32 %v7179, %v7228
        %v7245 = vadd.f32 %v7180, %v7229
        %v7246 = vadd.f32 %v7181, %v7230
        %v7247 = vadd.f32 %v7182, %v7231
        %v7248 = vadd.f32 %v7183, %v7232
        %v7249 = vadd.f32 %v7184, %v7233
        %s7250 = scalar_lea.vmem [#allocation48], 768
        %v7251 = vld [vmem:[%s7250] sm:$0xff]
        %v7252 = vld [vmem:[%s7250 + $0x8] sm:$0xff]
        %v7253 = vld [vmem:[%s7250 + $0x10] sm:$0xff]
        %v7254 = vld [vmem:[%s7250 + $0x18] sm:$0xff]
        %v7255 = vld [vmem:[%s7250 + $0x20] sm:$0xff]
        %v7256 = vld [vmem:[%s7250 + $0x28] sm:$0xff]
        %v7257 = vld [vmem:[%s7250 + $0x30] sm:$0xff]
        %v7258 = vld [vmem:[%s7250 + $0x38] sm:$0xff]
        %v7259 = vld [vmem:[%s7250 + $0x40] sm:$0xff]
        %v7260 = vld [vmem:[%s7250 + $0x48] sm:$0xff]
        %v7261 = vld [vmem:[%s7250 + $0x50] sm:$0xff]
        %v7262 = vld [vmem:[%s7250 + $0x58] sm:$0xff]
        %v7263 = vld [vmem:[%s7250 + $0x60] sm:$0xff]
        %v7264 = vld [vmem:[%s7250 + $0x68] sm:$0xff]
        %v7265 = vld [vmem:[%s7250 + $0x70] sm:$0xff]
        %v7266 = vld [vmem:[%s7250 + $0x78] sm:$0xff]
        %7267 = vset.pattern.permute.xlu0 6
        %7268 = vperm.xlu0 %7267, %v6869
        %v7269 = vpop.permute.xlu0 %7268
        %7271 = vset.pattern.permute.xlu0 6
        %7272 = vperm.xlu0 %7271, %v6870
        %v7273 = vpop.permute.xlu0 %7272
        %7275 = vset.pattern.permute.xlu0 6
        %7276 = vperm.xlu0 %7275, %v6871
        %v7277 = vpop.permute.xlu0 %7276
        %7279 = vset.pattern.permute.xlu0 6
        %7280 = vperm.xlu0 %7279, %v6872
        %v7281 = vpop.permute.xlu0 %7280
        %v7283 = vmul.f32 %v7269, %v7251
        %v7284 = vmul.f32 %v7269, %v7252
        %v7285 = vmul.f32 %v7269, %v7253
        %v7286 = vmul.f32 %v7269, %v7254
        %v7287 = vmul.f32 %v7273, %v7255
        %v7288 = vmul.f32 %v7273, %v7256
        %v7289 = vmul.f32 %v7273, %v7257
        %v7290 = vmul.f32 %v7273, %v7258
        %v7291 = vmul.f32 %v7277, %v7259
        %v7292 = vmul.f32 %v7277, %v7260
        %v7293 = vmul.f32 %v7277, %v7261
        %v7294 = vmul.f32 %v7277, %v7262
        %v7295 = vmul.f32 %v7281, %v7263
        %v7296 = vmul.f32 %v7281, %v7264
        %v7297 = vmul.f32 %v7281, %v7265
        %v7298 = vmul.f32 %v7281, %v7266
        %v7299 = vadd.f32 %v7234, %v7283
        %v7300 = vadd.f32 %v7235, %v7284
        %v7301 = vadd.f32 %v7236, %v7285
        %v7302 = vadd.f32 %v7237, %v7286
        %v7303 = vadd.f32 %v7238, %v7287
        %v7304 = vadd.f32 %v7239, %v7288
        %v7305 = vadd.f32 %v7240, %v7289
        %v7306 = vadd.f32 %v7241, %v7290
        %v7307 = vadd.f32 %v7242, %v7291
        %v7308 = vadd.f32 %v7243, %v7292
        %v7309 = vadd.f32 %v7244, %v7293
        %v7310 = vadd.f32 %v7245, %v7294
        %v7311 = vadd.f32 %v7246, %v7295
        %v7312 = vadd.f32 %v7247, %v7296
        %v7313 = vadd.f32 %v7248, %v7297
        %v7314 = vadd.f32 %v7249, %v7298
        %s7315 = scalar_lea.vmem [#allocation48], 896
        %v7316 = vld [vmem:[%s7315] sm:$0xff]
        %v7317 = vld [vmem:[%s7315 + $0x8] sm:$0xff]
        %v7318 = vld [vmem:[%s7315 + $0x10] sm:$0xff]
        %v7319 = vld [vmem:[%s7315 + $0x18] sm:$0xff]
        %v7320 = vld [vmem:[%s7315 + $0x20] sm:$0xff]
        %v7321 = vld [vmem:[%s7315 + $0x28] sm:$0xff]
        %v7322 = vld [vmem:[%s7315 + $0x30] sm:$0xff]
        %v7323 = vld [vmem:[%s7315 + $0x38] sm:$0xff]
        %v7324 = vld [vmem:[%s7315 + $0x40] sm:$0xff]
        %v7325 = vld [vmem:[%s7315 + $0x48] sm:$0xff]
        %v7326 = vld [vmem:[%s7315 + $0x50] sm:$0xff]
        %v7327 = vld [vmem:[%s7315 + $0x58] sm:$0xff]
        %v7328 = vld [vmem:[%s7315 + $0x60] sm:$0xff]
        %v7329 = vld [vmem:[%s7315 + $0x68] sm:$0xff]
        %v7330 = vld [vmem:[%s7315 + $0x70] sm:$0xff]
        %v7331 = vld [vmem:[%s7315 + $0x78] sm:$0xff]
        %7332 = vset.pattern.permute.xlu0 7
        %7333 = vperm.xlu0 %7332, %v6869
        %v7334 = vpop.permute.xlu0 %7333
        %7336 = vset.pattern.permute.xlu0 7
        %7337 = vperm.xlu0 %7336, %v6870
        %v7338 = vpop.permute.xlu0 %7337
        %7340 = vset.pattern.permute.xlu0 7
        %7341 = vperm.xlu0 %7340, %v6871
        %v7342 = vpop.permute.xlu0 %7341
        %7344 = vset.pattern.permute.xlu0 7
        %7345 = vperm.xlu0 %7344, %v6872
        %v7346 = vpop.permute.xlu0 %7345
        %v7348 = vmul.f32 %v7334, %v7316
        %v7349 = vmul.f32 %v7334, %v7317
        %v7350 = vmul.f32 %v7334, %v7318
        %v7351 = vmul.f32 %v7334, %v7319
        %v7352 = vmul.f32 %v7338, %v7320
        %v7353 = vmul.f32 %v7338, %v7321
        %v7354 = vmul.f32 %v7338, %v7322
        %v7355 = vmul.f32 %v7338, %v7323
        %v7356 = vmul.f32 %v7342, %v7324
        %v7357 = vmul.f32 %v7342, %v7325
        %v7358 = vmul.f32 %v7342, %v7326
        %v7359 = vmul.f32 %v7342, %v7327
        %v7360 = vmul.f32 %v7346, %v7328
        %v7361 = vmul.f32 %v7346, %v7329
        %v7362 = vmul.f32 %v7346, %v7330
        %v7363 = vmul.f32 %v7346, %v7331
        %v7364 = vadd.f32 %v7299, %v7348
        %v7365 = vadd.f32 %v7300, %v7349
        %v7366 = vadd.f32 %v7301, %v7350
        %v7367 = vadd.f32 %v7302, %v7351
        %v7368 = vadd.f32 %v7303, %v7352
        %v7369 = vadd.f32 %v7304, %v7353
        %v7370 = vadd.f32 %v7305, %v7354
        %v7371 = vadd.f32 %v7306, %v7355
        %v7372 = vadd.f32 %v7307, %v7356
        %v7373 = vadd.f32 %v7308, %v7357
        %v7374 = vadd.f32 %v7309, %v7358
        %v7375 = vadd.f32 %v7310, %v7359
        %v7376 = vadd.f32 %v7311, %v7360
        %v7377 = vadd.f32 %v7312, %v7361
        %v7378 = vadd.f32 %v7313, %v7362
        %v7379 = vadd.f32 %v7314, %v7363
        %s7380 = scalar_lea.vmem [#allocation48], 1024
        %v7381 = vld [vmem:[%s7380] sm:$0xff]
        %v7382 = vld [vmem:[%s7380 + $0x8] sm:$0xff]
        %v7383 = vld [vmem:[%s7380 + $0x10] sm:$0xff]
        %v7384 = vld [vmem:[%s7380 + $0x18] sm:$0xff]
        %v7385 = vld [vmem:[%s7380 + $0x20] sm:$0xff]
        %v7386 = vld [vmem:[%s7380 + $0x28] sm:$0xff]
        %v7387 = vld [vmem:[%s7380 + $0x30] sm:$0xff]
        %v7388 = vld [vmem:[%s7380 + $0x38] sm:$0xff]
        %v7389 = vld [vmem:[%s7380 + $0x40] sm:$0xff]
        %v7390 = vld [vmem:[%s7380 + $0x48] sm:$0xff]
        %v7391 = vld [vmem:[%s7380 + $0x50] sm:$0xff]
        %v7392 = vld [vmem:[%s7380 + $0x58] sm:$0xff]
        %v7393 = vld [vmem:[%s7380 + $0x60] sm:$0xff]
        %v7394 = vld [vmem:[%s7380 + $0x68] sm:$0xff]
        %v7395 = vld [vmem:[%s7380 + $0x70] sm:$0xff]
        %v7396 = vld [vmem:[%s7380 + $0x78] sm:$0xff]
        %7397 = vset.pattern.permute.xlu0 8
        %7398 = vperm.xlu0 %7397, %v6869
        %v7399 = vpop.permute.xlu0 %7398
        %7401 = vset.pattern.permute.xlu0 8
        %7402 = vperm.xlu0 %7401, %v6870
        %v7403 = vpop.permute.xlu0 %7402
        %7405 = vset.pattern.permute.xlu0 8
        %7406 = vperm.xlu0 %7405, %v6871
        %v7407 = vpop.permute.xlu0 %7406
        %7409 = vset.pattern.permute.xlu0 8
        %7410 = vperm.xlu0 %7409, %v6872
        %v7411 = vpop.permute.xlu0 %7410
        %v7413 = vmul.f32 %v7399, %v7381
        %v7414 = vmul.f32 %v7399, %v7382
        %v7415 = vmul.f32 %v7399, %v7383
        %v7416 = vmul.f32 %v7399, %v7384
        %v7417 = vmul.f32 %v7403, %v7385
        %v7418 = vmul.f32 %v7403, %v7386
        %v7419 = vmul.f32 %v7403, %v7387
        %v7420 = vmul.f32 %v7403, %v7388
        %v7421 = vmul.f32 %v7407, %v7389
        %v7422 = vmul.f32 %v7407, %v7390
        %v7423 = vmul.f32 %v7407, %v7391
        %v7424 = vmul.f32 %v7407, %v7392
        %v7425 = vmul.f32 %v7411, %v7393
        %v7426 = vmul.f32 %v7411, %v7394
        %v7427 = vmul.f32 %v7411, %v7395
        %v7428 = vmul.f32 %v7411, %v7396
        %v7429 = vadd.f32 %v7364, %v7413
        %v7430 = vadd.f32 %v7365, %v7414
        %v7431 = vadd.f32 %v7366, %v7415
        %v7432 = vadd.f32 %v7367, %v7416
        %v7433 = vadd.f32 %v7368, %v7417
        %v7434 = vadd.f32 %v7369, %v7418
        %v7435 = vadd.f32 %v7370, %v7419
        %v7436 = vadd.f32 %v7371, %v7420
        %v7437 = vadd.f32 %v7372, %v7421
        %v7438 = vadd.f32 %v7373, %v7422
        %v7439 = vadd.f32 %v7374, %v7423
        %v7440 = vadd.f32 %v7375, %v7424
        %v7441 = vadd.f32 %v7376, %v7425
        %v7442 = vadd.f32 %v7377, %v7426
        %v7443 = vadd.f32 %v7378, %v7427
        %v7444 = vadd.f32 %v7379, %v7428
        %s7445 = scalar_lea.vmem [#allocation48], 1152
        %v7446 = vld [vmem:[%s7445] sm:$0xff]
        %v7447 = vld [vmem:[%s7445 + $0x8] sm:$0xff]
        %v7448 = vld [vmem:[%s7445 + $0x10] sm:$0xff]
        %v7449 = vld [vmem:[%s7445 + $0x18] sm:$0xff]
        %v7450 = vld [vmem:[%s7445 + $0x20] sm:$0xff]
        %v7451 = vld [vmem:[%s7445 + $0x28] sm:$0xff]
        %v7452 = vld [vmem:[%s7445 + $0x30] sm:$0xff]
        %v7453 = vld [vmem:[%s7445 + $0x38] sm:$0xff]
        %v7454 = vld [vmem:[%s7445 + $0x40] sm:$0xff]
        %v7455 = vld [vmem:[%s7445 + $0x48] sm:$0xff]
        %v7456 = vld [vmem:[%s7445 + $0x50] sm:$0xff]
        %v7457 = vld [vmem:[%s7445 + $0x58] sm:$0xff]
        %v7458 = vld [vmem:[%s7445 + $0x60] sm:$0xff]
        %v7459 = vld [vmem:[%s7445 + $0x68] sm:$0xff]
        %v7460 = vld [vmem:[%s7445 + $0x70] sm:$0xff]
        %v7461 = vld [vmem:[%s7445 + $0x78] sm:$0xff]
        %7462 = vset.pattern.permute.xlu0 9
        %7463 = vperm.xlu0 %7462, %v6869
        %v7464 = vpop.permute.xlu0 %7463
        %7466 = vset.pattern.permute.xlu0 9
        %7467 = vperm.xlu0 %7466, %v6870
        %v7468 = vpop.permute.xlu0 %7467
        %7470 = vset.pattern.permute.xlu0 9
        %7471 = vperm.xlu0 %7470, %v6871
        %v7472 = vpop.permute.xlu0 %7471
        %7474 = vset.pattern.permute.xlu0 9
        %7475 = vperm.xlu0 %7474, %v6872
        %v7476 = vpop.permute.xlu0 %7475
        %v7478 = vmul.f32 %v7464, %v7446
        %v7479 = vmul.f32 %v7464, %v7447
        %v7480 = vmul.f32 %v7464, %v7448
        %v7481 = vmul.f32 %v7464, %v7449
        %v7482 = vmul.f32 %v7468, %v7450
        %v7483 = vmul.f32 %v7468, %v7451
        %v7484 = vmul.f32 %v7468, %v7452
        %v7485 = vmul.f32 %v7468, %v7453
        %v7486 = vmul.f32 %v7472, %v7454
        %v7487 = vmul.f32 %v7472, %v7455
        %v7488 = vmul.f32 %v7472, %v7456
        %v7489 = vmul.f32 %v7472, %v7457
        %v7490 = vmul.f32 %v7476, %v7458
        %v7491 = vmul.f32 %v7476, %v7459
        %v7492 = vmul.f32 %v7476, %v7460
        %v7493 = vmul.f32 %v7476, %v7461
        %v7494 = vadd.f32 %v7429, %v7478
        %v7495 = vadd.f32 %v7430, %v7479
        %v7496 = vadd.f32 %v7431, %v7480
        %v7497 = vadd.f32 %v7432, %v7481
        %v7498 = vadd.f32 %v7433, %v7482
        %v7499 = vadd.f32 %v7434, %v7483
        %v7500 = vadd.f32 %v7435, %v7484
        %v7501 = vadd.f32 %v7436, %v7485
        %v7502 = vadd.f32 %v7437, %v7486
        %v7503 = vadd.f32 %v7438, %v7487
        %v7504 = vadd.f32 %v7439, %v7488
        %v7505 = vadd.f32 %v7440, %v7489
        %v7506 = vadd.f32 %v7441, %v7490
        %v7507 = vadd.f32 %v7442, %v7491
        %v7508 = vadd.f32 %v7443, %v7492
        %v7509 = vadd.f32 %v7444, %v7493
        %s7510 = scalar_lea.vmem [#allocation48], 1280
        %v7511 = vld [vmem:[%s7510] sm:$0xff]
        %v7512 = vld [vmem:[%s7510 + $0x8] sm:$0xff]
        %v7513 = vld [vmem:[%s7510 + $0x10] sm:$0xff]
        %v7514 = vld [vmem:[%s7510 + $0x18] sm:$0xff]
        %v7515 = vld [vmem:[%s7510 + $0x20] sm:$0xff]
        %v7516 = vld [vmem:[%s7510 + $0x28] sm:$0xff]
        %v7517 = vld [vmem:[%s7510 + $0x30] sm:$0xff]
        %v7518 = vld [vmem:[%s7510 + $0x38] sm:$0xff]
        %v7519 = vld [vmem:[%s7510 + $0x40] sm:$0xff]
        %v7520 = vld [vmem:[%s7510 + $0x48] sm:$0xff]
        %v7521 = vld [vmem:[%s7510 + $0x50] sm:$0xff]
        %v7522 = vld [vmem:[%s7510 + $0x58] sm:$0xff]
        %v7523 = vld [vmem:[%s7510 + $0x60] sm:$0xff]
        %v7524 = vld [vmem:[%s7510 + $0x68] sm:$0xff]
        %v7525 = vld [vmem:[%s7510 + $0x70] sm:$0xff]
        %v7526 = vld [vmem:[%s7510 + $0x78] sm:$0xff]
        %7527 = vset.pattern.permute.xlu0 10
        %7528 = vperm.xlu0 %7527, %v6869
        %v7529 = vpop.permute.xlu0 %7528
        %7531 = vset.pattern.permute.xlu0 10
        %7532 = vperm.xlu0 %7531, %v6870
        %v7533 = vpop.permute.xlu0 %7532
        %7535 = vset.pattern.permute.xlu0 10
        %7536 = vperm.xlu0 %7535, %v6871
        %v7537 = vpop.permute.xlu0 %7536
        %7539 = vset.pattern.permute.xlu0 10
        %7540 = vperm.xlu0 %7539, %v6872
        %v7541 = vpop.permute.xlu0 %7540
        %v7543 = vmul.f32 %v7529, %v7511
        %v7544 = vmul.f32 %v7529, %v7512
        %v7545 = vmul.f32 %v7529, %v7513
        %v7546 = vmul.f32 %v7529, %v7514
        %v7547 = vmul.f32 %v7533, %v7515
        %v7548 = vmul.f32 %v7533, %v7516
        %v7549 = vmul.f32 %v7533, %v7517
        %v7550 = vmul.f32 %v7533, %v7518
        %v7551 = vmul.f32 %v7537, %v7519
        %v7552 = vmul.f32 %v7537, %v7520
        %v7553 = vmul.f32 %v7537, %v7521
        %v7554 = vmul.f32 %v7537, %v7522
        %v7555 = vmul.f32 %v7541, %v7523
        %v7556 = vmul.f32 %v7541, %v7524
        %v7557 = vmul.f32 %v7541, %v7525
        %v7558 = vmul.f32 %v7541, %v7526
        %v7559 = vadd.f32 %v7494, %v7543
        %v7560 = vadd.f32 %v7495, %v7544
        %v7561 = vadd.f32 %v7496, %v7545
        %v7562 = vadd.f32 %v7497, %v7546
        %v7563 = vadd.f32 %v7498, %v7547
        %v7564 = vadd.f32 %v7499, %v7548
        %v7565 = vadd.f32 %v7500, %v7549
        %v7566 = vadd.f32 %v7501, %v7550
        %v7567 = vadd.f32 %v7502, %v7551
        %v7568 = vadd.f32 %v7503, %v7552
        %v7569 = vadd.f32 %v7504, %v7553
        %v7570 = vadd.f32 %v7505, %v7554
        %v7571 = vadd.f32 %v7506, %v7555
        %v7572 = vadd.f32 %v7507, %v7556
        %v7573 = vadd.f32 %v7508, %v7557
        %v7574 = vadd.f32 %v7509, %v7558
        %s7575 = scalar_lea.vmem [#allocation48], 1408
        %v7576 = vld [vmem:[%s7575] sm:$0xff]
        %v7577 = vld [vmem:[%s7575 + $0x8] sm:$0xff]
        %v7578 = vld [vmem:[%s7575 + $0x10] sm:$0xff]
        %v7579 = vld [vmem:[%s7575 + $0x18] sm:$0xff]
        %v7580 = vld [vmem:[%s7575 + $0x20] sm:$0xff]
        %v7581 = vld [vmem:[%s7575 + $0x28] sm:$0xff]
        %v7582 = vld [vmem:[%s7575 + $0x30] sm:$0xff]
        %v7583 = vld [vmem:[%s7575 + $0x38] sm:$0xff]
        %v7584 = vld [vmem:[%s7575 + $0x40] sm:$0xff]
        %v7585 = vld [vmem:[%s7575 + $0x48] sm:$0xff]
        %v7586 = vld [vmem:[%s7575 + $0x50] sm:$0xff]
        %v7587 = vld [vmem:[%s7575 + $0x58] sm:$0xff]
        %v7588 = vld [vmem:[%s7575 + $0x60] sm:$0xff]
        %v7589 = vld [vmem:[%s7575 + $0x68] sm:$0xff]
        %v7590 = vld [vmem:[%s7575 + $0x70] sm:$0xff]
        %v7591 = vld [vmem:[%s7575 + $0x78] sm:$0xff]
        %7592 = vset.pattern.permute.xlu0 11
        %7593 = vperm.xlu0 %7592, %v6869
        %v7594 = vpop.permute.xlu0 %7593
        %7596 = vset.pattern.permute.xlu0 11
        %7597 = vperm.xlu0 %7596, %v6870
        %v7598 = vpop.permute.xlu0 %7597
        %7600 = vset.pattern.permute.xlu0 11
        %7601 = vperm.xlu0 %7600, %v6871
        %v7602 = vpop.permute.xlu0 %7601
        %7604 = vset.pattern.permute.xlu0 11
        %7605 = vperm.xlu0 %7604, %v6872
        %v7606 = vpop.permute.xlu0 %7605
        %v7608 = vmul.f32 %v7594, %v7576
        %v7609 = vmul.f32 %v7594, %v7577
        %v7610 = vmul.f32 %v7594, %v7578
        %v7611 = vmul.f32 %v7594, %v7579
        %v7612 = vmul.f32 %v7598, %v7580
        %v7613 = vmul.f32 %v7598, %v7581
        %v7614 = vmul.f32 %v7598, %v7582
        %v7615 = vmul.f32 %v7598, %v7583
        %v7616 = vmul.f32 %v7602, %v7584
        %v7617 = vmul.f32 %v7602, %v7585
        %v7618 = vmul.f32 %v7602, %v7586
        %v7619 = vmul.f32 %v7602, %v7587
        %v7620 = vmul.f32 %v7606, %v7588
        %v7621 = vmul.f32 %v7606, %v7589
        %v7622 = vmul.f32 %v7606, %v7590
        %v7623 = vmul.f32 %v7606, %v7591
        %v7624 = vadd.f32 %v7559, %v7608
        %v7625 = vadd.f32 %v7560, %v7609
        %v7626 = vadd.f32 %v7561, %v7610
        %v7627 = vadd.f32 %v7562, %v7611
        %v7628 = vadd.f32 %v7563, %v7612
        %v7629 = vadd.f32 %v7564, %v7613
        %v7630 = vadd.f32 %v7565, %v7614
        %v7631 = vadd.f32 %v7566, %v7615
        %v7632 = vadd.f32 %v7567, %v7616
        %v7633 = vadd.f32 %v7568, %v7617
        %v7634 = vadd.f32 %v7569, %v7618
        %v7635 = vadd.f32 %v7570, %v7619
        %v7636 = vadd.f32 %v7571, %v7620
        %v7637 = vadd.f32 %v7572, %v7621
        %v7638 = vadd.f32 %v7573, %v7622
        %v7639 = vadd.f32 %v7574, %v7623
        %s7640 = scalar_lea.vmem [#allocation48], 1536
        %v7641 = vld [vmem:[%s7640] sm:$0xff]
        %v7642 = vld [vmem:[%s7640 + $0x8] sm:$0xff]
        %v7643 = vld [vmem:[%s7640 + $0x10] sm:$0xff]
        %v7644 = vld [vmem:[%s7640 + $0x18] sm:$0xff]
        %v7645 = vld [vmem:[%s7640 + $0x20] sm:$0xff]
        %v7646 = vld [vmem:[%s7640 + $0x28] sm:$0xff]
        %v7647 = vld [vmem:[%s7640 + $0x30] sm:$0xff]
        %v7648 = vld [vmem:[%s7640 + $0x38] sm:$0xff]
        %v7649 = vld [vmem:[%s7640 + $0x40] sm:$0xff]
        %v7650 = vld [vmem:[%s7640 + $0x48] sm:$0xff]
        %v7651 = vld [vmem:[%s7640 + $0x50] sm:$0xff]
        %v7652 = vld [vmem:[%s7640 + $0x58] sm:$0xff]
        %v7653 = vld [vmem:[%s7640 + $0x60] sm:$0xff]
        %v7654 = vld [vmem:[%s7640 + $0x68] sm:$0xff]
        %v7655 = vld [vmem:[%s7640 + $0x70] sm:$0xff]
        %v7656 = vld [vmem:[%s7640 + $0x78] sm:$0xff]
        %7657 = vset.pattern.permute.xlu0 12
        %7658 = vperm.xlu0 %7657, %v6869
        %v7659 = vpop.permute.xlu0 %7658
        %7661 = vset.pattern.permute.xlu0 12
        %7662 = vperm.xlu0 %7661, %v6870
        %v7663 = vpop.permute.xlu0 %7662
        %7665 = vset.pattern.permute.xlu0 12
        %7666 = vperm.xlu0 %7665, %v6871
        %v7667 = vpop.permute.xlu0 %7666
        %7669 = vset.pattern.permute.xlu0 12
        %7670 = vperm.xlu0 %7669, %v6872
        %v7671 = vpop.permute.xlu0 %7670
        %v7673 = vmul.f32 %v7659, %v7641
        %v7674 = vmul.f32 %v7659, %v7642
        %v7675 = vmul.f32 %v7659, %v7643
        %v7676 = vmul.f32 %v7659, %v7644
        %v7677 = vmul.f32 %v7663, %v7645
        %v7678 = vmul.f32 %v7663, %v7646
        %v7679 = vmul.f32 %v7663, %v7647
        %v7680 = vmul.f32 %v7663, %v7648
        %v7681 = vmul.f32 %v7667, %v7649
        %v7682 = vmul.f32 %v7667, %v7650
        %v7683 = vmul.f32 %v7667, %v7651
        %v7684 = vmul.f32 %v7667, %v7652
        %v7685 = vmul.f32 %v7671, %v7653
        %v7686 = vmul.f32 %v7671, %v7654
        %v7687 = vmul.f32 %v7671, %v7655
        %v7688 = vmul.f32 %v7671, %v7656
        %v7689 = vadd.f32 %v7624, %v7673
        %v7690 = vadd.f32 %v7625, %v7674
        %v7691 = vadd.f32 %v7626, %v7675
        %v7692 = vadd.f32 %v7627, %v7676
        %v7693 = vadd.f32 %v7628, %v7677
        %v7694 = vadd.f32 %v7629, %v7678
        %v7695 = vadd.f32 %v7630, %v7679
        %v7696 = vadd.f32 %v7631, %v7680
        %v7697 = vadd.f32 %v7632, %v7681
        %v7698 = vadd.f32 %v7633, %v7682
        %v7699 = vadd.f32 %v7634, %v7683
        %v7700 = vadd.f32 %v7635, %v7684
        %v7701 = vadd.f32 %v7636, %v7685
        %v7702 = vadd.f32 %v7637, %v7686
        %v7703 = vadd.f32 %v7638, %v7687
        %v7704 = vadd.f32 %v7639, %v7688
        %s7705 = scalar_lea.vmem [#allocation48], 1664
        %v7706 = vld [vmem:[%s7705] sm:$0xff]
        %v7707 = vld [vmem:[%s7705 + $0x8] sm:$0xff]
        %v7708 = vld [vmem:[%s7705 + $0x10] sm:$0xff]
        %v7709 = vld [vmem:[%s7705 + $0x18] sm:$0xff]
        %v7710 = vld [vmem:[%s7705 + $0x20] sm:$0xff]
        %v7711 = vld [vmem:[%s7705 + $0x28] sm:$0xff]
        %v7712 = vld [vmem:[%s7705 + $0x30] sm:$0xff]
        %v7713 = vld [vmem:[%s7705 + $0x38] sm:$0xff]
        %v7714 = vld [vmem:[%s7705 + $0x40] sm:$0xff]
        %v7715 = vld [vmem:[%s7705 + $0x48] sm:$0xff]
        %v7716 = vld [vmem:[%s7705 + $0x50] sm:$0xff]
        %v7717 = vld [vmem:[%s7705 + $0x58] sm:$0xff]
        %v7718 = vld [vmem:[%s7705 + $0x60] sm:$0xff]
        %v7719 = vld [vmem:[%s7705 + $0x68] sm:$0xff]
        %v7720 = vld [vmem:[%s7705 + $0x70] sm:$0xff]
        %v7721 = vld [vmem:[%s7705 + $0x78] sm:$0xff]
        %7722 = vset.pattern.permute.xlu0 13
        %7723 = vperm.xlu0 %7722, %v6869
        %v7724 = vpop.permute.xlu0 %7723
        %7726 = vset.pattern.permute.xlu0 13
        %7727 = vperm.xlu0 %7726, %v6870
        %v7728 = vpop.permute.xlu0 %7727
        %7730 = vset.pattern.permute.xlu0 13
        %7731 = vperm.xlu0 %7730, %v6871
        %v7732 = vpop.permute.xlu0 %7731
        %7734 = vset.pattern.permute.xlu0 13
        %7735 = vperm.xlu0 %7734, %v6872
        %v7736 = vpop.permute.xlu0 %7735
        %v7738 = vmul.f32 %v7724, %v7706
        %v7739 = vmul.f32 %v7724, %v7707
        %v7740 = vmul.f32 %v7724, %v7708
        %v7741 = vmul.f32 %v7724, %v7709
        %v7742 = vmul.f32 %v7728, %v7710
        %v7743 = vmul.f32 %v7728, %v7711
        %v7744 = vmul.f32 %v7728, %v7712
        %v7745 = vmul.f32 %v7728, %v7713
        %v7746 = vmul.f32 %v7732, %v7714
        %v7747 = vmul.f32 %v7732, %v7715
        %v7748 = vmul.f32 %v7732, %v7716
        %v7749 = vmul.f32 %v7732, %v7717
        %v7750 = vmul.f32 %v7736, %v7718
        %v7751 = vmul.f32 %v7736, %v7719
        %v7752 = vmul.f32 %v7736, %v7720
        %v7753 = vmul.f32 %v7736, %v7721
        %v7754 = vadd.f32 %v7689, %v7738
        %v7755 = vadd.f32 %v7690, %v7739
        %v7756 = vadd.f32 %v7691, %v7740
        %v7757 = vadd.f32 %v7692, %v7741
        %v7758 = vadd.f32 %v7693, %v7742
        %v7759 = vadd.f32 %v7694, %v7743
        %v7760 = vadd.f32 %v7695, %v7744
        %v7761 = vadd.f32 %v7696, %v7745
        %v7762 = vadd.f32 %v7697, %v7746
        %v7763 = vadd.f32 %v7698, %v7747
        %v7764 = vadd.f32 %v7699, %v7748
        %v7765 = vadd.f32 %v7700, %v7749
        %v7766 = vadd.f32 %v7701, %v7750
        %v7767 = vadd.f32 %v7702, %v7751
        %v7768 = vadd.f32 %v7703, %v7752
        %v7769 = vadd.f32 %v7704, %v7753
        %s7770 = scalar_lea.vmem [#allocation48], 1792
        %v7771 = vld [vmem:[%s7770] sm:$0xff]
        %v7772 = vld [vmem:[%s7770 + $0x8] sm:$0xff]
        %v7773 = vld [vmem:[%s7770 + $0x10] sm:$0xff]
        %v7774 = vld [vmem:[%s7770 + $0x18] sm:$0xff]
        %v7775 = vld [vmem:[%s7770 + $0x20] sm:$0xff]
        %v7776 = vld [vmem:[%s7770 + $0x28] sm:$0xff]
        %v7777 = vld [vmem:[%s7770 + $0x30] sm:$0xff]
        %v7778 = vld [vmem:[%s7770 + $0x38] sm:$0xff]
        %v7779 = vld [vmem:[%s7770 + $0x40] sm:$0xff]
        %v7780 = vld [vmem:[%s7770 + $0x48] sm:$0xff]
        %v7781 = vld [vmem:[%s7770 + $0x50] sm:$0xff]
        %v7782 = vld [vmem:[%s7770 + $0x58] sm:$0xff]
        %v7783 = vld [vmem:[%s7770 + $0x60] sm:$0xff]
        %v7784 = vld [vmem:[%s7770 + $0x68] sm:$0xff]
        %v7785 = vld [vmem:[%s7770 + $0x70] sm:$0xff]
        %v7786 = vld [vmem:[%s7770 + $0x78] sm:$0xff]
        %7787 = vset.pattern.permute.xlu0 14
        %7788 = vperm.xlu0 %7787, %v6869
        %v7789 = vpop.permute.xlu0 %7788
        %7791 = vset.pattern.permute.xlu0 14
        %7792 = vperm.xlu0 %7791, %v6870
        %v7793 = vpop.permute.xlu0 %7792
        %7795 = vset.pattern.permute.xlu0 14
        %7796 = vperm.xlu0 %7795, %v6871
        %v7797 = vpop.permute.xlu0 %7796
        %7799 = vset.pattern.permute.xlu0 14
        %7800 = vperm.xlu0 %7799, %v6872
        %v7801 = vpop.permute.xlu0 %7800
        %v7803 = vmul.f32 %v7789, %v7771
        %v7804 = vmul.f32 %v7789, %v7772
        %v7805 = vmul.f32 %v7789, %v7773
        %v7806 = vmul.f32 %v7789, %v7774
        %v7807 = vmul.f32 %v7793, %v7775
        %v7808 = vmul.f32 %v7793, %v7776
        %v7809 = vmul.f32 %v7793, %v7777
        %v7810 = vmul.f32 %v7793, %v7778
        %v7811 = vmul.f32 %v7797, %v7779
        %v7812 = vmul.f32 %v7797, %v7780
        %v7813 = vmul.f32 %v7797, %v7781
        %v7814 = vmul.f32 %v7797, %v7782
        %v7815 = vmul.f32 %v7801, %v7783
        %v7816 = vmul.f32 %v7801, %v7784
        %v7817 = vmul.f32 %v7801, %v7785
        %v7818 = vmul.f32 %v7801, %v7786
        %v7819 = vadd.f32 %v7754, %v7803
        %v7820 = vadd.f32 %v7755, %v7804
        %v7821 = vadd.f32 %v7756, %v7805
        %v7822 = vadd.f32 %v7757, %v7806
        %v7823 = vadd.f32 %v7758, %v7807
        %v7824 = vadd.f32 %v7759, %v7808
        %v7825 = vadd.f32 %v7760, %v7809
        %v7826 = vadd.f32 %v7761, %v7810
        %v7827 = vadd.f32 %v7762, %v7811
        %v7828 = vadd.f32 %v7763, %v7812
        %v7829 = vadd.f32 %v7764, %v7813
        %v7830 = vadd.f32 %v7765, %v7814
        %v7831 = vadd.f32 %v7766, %v7815
        %v7832 = vadd.f32 %v7767, %v7816
        %v7833 = vadd.f32 %v7768, %v7817
        %v7834 = vadd.f32 %v7769, %v7818
        %s7835 = scalar_lea.vmem [#allocation48], 1920
        %v7836 = vld [vmem:[%s7835] sm:$0xff]
        %v7837 = vld [vmem:[%s7835 + $0x8] sm:$0xff]
        %v7838 = vld [vmem:[%s7835 + $0x10] sm:$0xff]
        %v7839 = vld [vmem:[%s7835 + $0x18] sm:$0xff]
        %v7840 = vld [vmem:[%s7835 + $0x20] sm:$0xff]
        %v7841 = vld [vmem:[%s7835 + $0x28] sm:$0xff]
        %v7842 = vld [vmem:[%s7835 + $0x30] sm:$0xff]
        %v7843 = vld [vmem:[%s7835 + $0x38] sm:$0xff]
        %v7844 = vld [vmem:[%s7835 + $0x40] sm:$0xff]
        %v7845 = vld [vmem:[%s7835 + $0x48] sm:$0xff]
        %v7846 = vld [vmem:[%s7835 + $0x50] sm:$0xff]
        %v7847 = vld [vmem:[%s7835 + $0x58] sm:$0xff]
        %v7848 = vld [vmem:[%s7835 + $0x60] sm:$0xff]
        %v7849 = vld [vmem:[%s7835 + $0x68] sm:$0xff]
        %v7850 = vld [vmem:[%s7835 + $0x70] sm:$0xff]
        %v7851 = vld [vmem:[%s7835 + $0x78] sm:$0xff]
        %7852 = vset.pattern.permute.xlu0 15
        %7853 = vperm.xlu0 %7852, %v6869
        %v7854 = vpop.permute.xlu0 %7853
        %7856 = vset.pattern.permute.xlu0 15
        %7857 = vperm.xlu0 %7856, %v6870
        %v7858 = vpop.permute.xlu0 %7857
        %7860 = vset.pattern.permute.xlu0 15
        %7861 = vperm.xlu0 %7860, %v6871
        %v7862 = vpop.permute.xlu0 %7861
        %7864 = vset.pattern.permute.xlu0 15
        %7865 = vperm.xlu0 %7864, %v6872
        %v7866 = vpop.permute.xlu0 %7865
        %v7868 = vmul.f32 %v7854, %v7836
        %v7869 = vmul.f32 %v7854, %v7837
        %v7870 = vmul.f32 %v7854, %v7838
        %v7871 = vmul.f32 %v7854, %v7839
        %v7872 = vmul.f32 %v7858, %v7840
        %v7873 = vmul.f32 %v7858, %v7841
        %v7874 = vmul.f32 %v7858, %v7842
        %v7875 = vmul.f32 %v7858, %v7843
        %v7876 = vmul.f32 %v7862, %v7844
        %v7877 = vmul.f32 %v7862, %v7845
        %v7878 = vmul.f32 %v7862, %v7846
        %v7879 = vmul.f32 %v7862, %v7847
        %v7880 = vmul.f32 %v7866, %v7848
        %v7881 = vmul.f32 %v7866, %v7849
        %v7882 = vmul.f32 %v7866, %v7850
        %v7883 = vmul.f32 %v7866, %v7851
        %v7884 = vadd.f32 %v7819, %v7868
        %v7885 = vadd.f32 %v7820, %v7869
        %v7886 = vadd.f32 %v7821, %v7870
        %v7887 = vadd.f32 %v7822, %v7871
        %v7888 = vadd.f32 %v7823, %v7872
        %v7889 = vadd.f32 %v7824, %v7873
        %v7890 = vadd.f32 %v7825, %v7874
        %v7891 = vadd.f32 %v7826, %v7875
        %v7892 = vadd.f32 %v7827, %v7876
        %v7893 = vadd.f32 %v7828, %v7877
        %v7894 = vadd.f32 %v7829, %v7878
        %v7895 = vadd.f32 %v7830, %v7879
        %v7896 = vadd.f32 %v7831, %v7880
        %v7897 = vadd.f32 %v7832, %v7881
        %v7898 = vadd.f32 %v7833, %v7882
        %v7899 = vadd.f32 %v7834, %v7883
        %v7900 = vadd.f32 %v7884, %v7888
        %v7901 = vadd.f32 %v7900, %v7892
        %v7902 = vadd.f32 %v7901, %v7896
        %v7903 = vrot.slane %v7902, 4
        %v7904 = vadd.f32 %v7902, %v7903
        %v7905 = vrot.slane %v7904, 2
        %v7906 = vadd.f32 %v7904, %v7905
        %v7907 = vrot.slane %v7906, 1
        %v7908 = vadd.f32 %v7906, %v7907
        %v7909 = vadd.f32 %v7885, %v7889
        %v7910 = vadd.f32 %v7909, %v7893
        %v7911 = vadd.f32 %v7910, %v7897
        %v7912 = vrot.slane %v7911, 4
        %v7913 = vadd.f32 %v7911, %v7912
        %v7914 = vrot.slane %v7913, 2
        %v7915 = vadd.f32 %v7913, %v7914
        %v7916 = vrot.slane %v7915, 1
        %v7917 = vadd.f32 %v7915, %v7916
        %v7918 = vadd.f32 %v7886, %v7890
        %v7919 = vadd.f32 %v7918, %v7894
        %v7920 = vadd.f32 %v7919, %v7898
        %v7921 = vrot.slane %v7920, 4
        %v7922 = vadd.f32 %v7920, %v7921
        %v7923 = vrot.slane %v7922, 2
        %v7924 = vadd.f32 %v7922, %v7923
        %v7925 = vrot.slane %v7924, 1
        %v7926 = vadd.f32 %v7924, %v7925
        %v7927 = vadd.f32 %v7887, %v7891
        %v7928 = vadd.f32 %v7927, %v7895
        %v7929 = vadd.f32 %v7928, %v7899
        %v7930 = vrot.slane %v7929, 4
        %v7931 = vadd.f32 %v7929, %v7930
        %v7932 = vrot.slane %v7931, 2
        %v7933 = vadd.f32 %v7931, %v7932
        %v7934 = vrot.slane %v7933, 1
        %v7935 = vadd.f32 %v7933, %v7934
        %v7936 = vld [vmem:[#allocation50] ss:$2 sm:$0xf]
        %v7938 = vlaneseq
        %v7939 = vshrl.u32 %v7938, 7
        %v7940 = vsub.s32 0, %v7939
        %v7941 = vrot.slane %v7936, %v7940
        %v7942 = vlaneseq
        %v7943 = vshrl.u32 %v7942, 7
        %v7944 = vsub.s32 1, %v7943
        %v7945 = vrot.slane %v7936, %v7944
        %v7946 = vlaneseq
        %v7947 = vshrl.u32 %v7946, 7
        %v7948 = vsub.s32 2, %v7947
        %v7949 = vrot.slane %v7936, %v7948
        %v7950 = vlaneseq
        %v7951 = vshrl.u32 %v7950, 7
        %v7952 = vsub.s32 3, %v7951
        %v7953 = vrot.slane %v7936, %v7952
        %v7958 = vadd.f32 %v7908, %v7941
        %v7959 = vadd.f32 %v7917, %v7945
        %v7960 = vadd.f32 %v7926, %v7949
        %v7961 = vadd.f32 %v7935, %v7953
        %vm7962 = vcmp.ge.f32.partialorder %v7958, 0.0
        %vm7963 = vcmp.ge.f32.partialorder %v7959, 0.0
        %vm7964 = vcmp.ge.f32.partialorder %v7960, 0.0
        %vm7965 = vcmp.ge.f32.partialorder %v7961, 0.0
        %s7966 = scalar_lea.vmem [#allocation50], 1
        %v7967 = vld [vmem:[%s7966] ss:$2 sm:$0xf]
        %v7972 = vcombine.low %v7958, %v7959
        %v7973 = vcombine.low %v7960, %v7961
        %v7975 = vunpack.c.l.s4 1966171168
        %v7976 = vunpack.c.0.s8 %v7975
        %v7977 = vlaneseq
        %v7978 = vshrl.u32 %v7977, 7
        %v7979 = vsub.s32 %v7976, %v7978
        %v7980 = vrot.slane %v7972, %v7979
        %v7982 = vunpack.c.l.s4 1966171168
        %v7983 = vunpack.c.0.s8 %v7982
        %v7984 = vlaneseq
        %v7985 = vshrl.u32 %v7984, 7
        %v7986 = vsub.s32 %v7983, %v7985
        %v7987 = vrot.slane %v7973, %v7986
        %v7988 = vcombine.low %v7980, %v7987
        %v7990 = vunpack.c.l.s4 1966171168
        %v7991 = vunpack.c.0.s8 %v7990
        %v7992 = vlaneseq
        %v7993 = vshrl.u32 %v7992, 7
        %v7994 = vsub.s32 %v7991, %v7993
        %v7995 = vrot.slane %v7988, %v7994
        %v7997 = vmul.f32 %v7967, %v7995
        %v7999 = vlaneseq
        %v8000 = vshrl.u32 %v7999, 7
        %v8001 = vsub.s32 0, %v8000
        %v8002 = vrot.slane %v7997, %v8001
        %v8003 = vlaneseq
        %v8004 = vshrl.u32 %v8003, 7
        %v8005 = vsub.s32 1, %v8004
        %v8006 = vrot.slane %v7997, %v8005
        %v8007 = vlaneseq
        %v8008 = vshrl.u32 %v8007, 7
        %v8009 = vsub.s32 2, %v8008
        %v8010 = vrot.slane %v7997, %v8009
        %v8011 = vlaneseq
        %v8012 = vshrl.u32 %v8011, 7
        %v8013 = vsub.s32 3, %v8012
        %v8014 = vrot.slane %v7997, %v8013
        %v8019 = vsel %vm7962, %v7958, %v8002
        %v8020 = vsel %vm7963, %v7959, %v8006
        %v8021 = vsel %vm7964, %v7960, %v8010
        %v8022 = vsel %vm7965, %v7961, %v8014
        %v8023 = vpack.c.bf16 %v8019, %v8019
        %v8024 = vpack.c.bf16 %v8020, %v8020
        %v8025 = vpack.c.bf16 %v8021, %v8021
        %v8026 = vpack.c.bf16 %v8022, %v8022
        %v8027 = vld [vmem:[#allocation51] sm:$0xff]
        %v8028 = vld [vmem:[#allocation51 + $0x8] sm:$0xff]
        %v8029 = vld [vmem:[#allocation51 + $0x10] sm:$0xff]
        %v8030 = vld [vmem:[#allocation51 + $0x18] sm:$0xff]
        %v8031 = vld [vmem:[#allocation51 + $0x20] sm:$0xff]
        %v8032 = vld [vmem:[#allocation51 + $0x28] sm:$0xff]
        %v8033 = vld [vmem:[#allocation51 + $0x30] sm:$0xff]
        %v8034 = vld [vmem:[#allocation51 + $0x38] sm:$0xff]
        %v8035 = vld [vmem:[#allocation51 + $0x40] sm:$0xff]
        %v8036 = vld [vmem:[#allocation51 + $0x48] sm:$0xff]
        %v8037 = vld [vmem:[#allocation51 + $0x50] sm:$0xff]
        %v8038 = vld [vmem:[#allocation51 + $0x58] sm:$0xff]
        %v8039 = vld [vmem:[#allocation51 + $0x60] sm:$0xff]
        %v8040 = vld [vmem:[#allocation51 + $0x68] sm:$0xff]
        %v8041 = vld [vmem:[#allocation51 + $0x70] sm:$0xff]
        %v8042 = vld [vmem:[#allocation51 + $0x78] sm:$0xff]
        %v8043 = vld [vmem:[#allocation51 + $0x80] sm:$0xff]
        %v8044 = vld [vmem:[#allocation51 + $0x88] sm:$0xff]
        %v8045 = vld [vmem:[#allocation51 + $0x90] sm:$0xff]
        %v8046 = vld [vmem:[#allocation51 + $0x98] sm:$0xff]
        %v8047 = vld [vmem:[#allocation51 + $0xa0] sm:$0xff]
        %v8048 = vld [vmem:[#allocation51 + $0xa8] sm:$0xff]
        %v8049 = vld [vmem:[#allocation51 + $0xb0] sm:$0xff]
        %v8050 = vld [vmem:[#allocation51 + $0xb8] sm:$0xff]
        %v8051 = vld [vmem:[#allocation51 + $0xc0] sm:$0xff]
        %v8052 = vld [vmem:[#allocation51 + $0xc8] sm:$0xff]
        %v8053 = vld [vmem:[#allocation51 + $0xd0] sm:$0xff]
        %v8054 = vld [vmem:[#allocation51 + $0xd8] sm:$0xff]
        %v8055 = vld [vmem:[#allocation51 + $0xe0] sm:$0xff]
        %v8056 = vld [vmem:[#allocation51 + $0xe8] sm:$0xff]
        %v8057 = vld [vmem:[#allocation51 + $0xf0] sm:$0xff]
        %v8058 = vld [vmem:[#allocation51 + $0xf8] sm:$0xff]
        %v8059 = vld [vmem:[#allocation51 + $0x100] sm:$0xff]
        %v8060 = vld [vmem:[#allocation51 + $0x108] sm:$0xff]
        %v8061 = vld [vmem:[#allocation51 + $0x110] sm:$0xff]
        %v8062 = vld [vmem:[#allocation51 + $0x118] sm:$0xff]
        %v8063 = vld [vmem:[#allocation51 + $0x120] sm:$0xff]
        %v8064 = vld [vmem:[#allocation51 + $0x128] sm:$0xff]
        %v8065 = vld [vmem:[#allocation51 + $0x130] sm:$0xff]
        %v8066 = vld [vmem:[#allocation51 + $0x138] sm:$0xff]
        %v8067 = vld [vmem:[#allocation51 + $0x140] sm:$0xff]
        %v8068 = vld [vmem:[#allocation51 + $0x148] sm:$0xff]
        %v8069 = vld [vmem:[#allocation51 + $0x150] sm:$0xff]
        %v8070 = vld [vmem:[#allocation51 + $0x158] sm:$0xff]
        %v8071 = vld [vmem:[#allocation51 + $0x160] sm:$0xff]
        %v8072 = vld [vmem:[#allocation51 + $0x168] sm:$0xff]
        %v8073 = vld [vmem:[#allocation51 + $0x170] sm:$0xff]
        %v8074 = vld [vmem:[#allocation51 + $0x178] sm:$0xff]
        %v8075 = vld [vmem:[#allocation51 + $0x180] sm:$0xff]
        %v8076 = vld [vmem:[#allocation51 + $0x188] sm:$0xff]
        %v8077 = vld [vmem:[#allocation51 + $0x190] sm:$0xff]
        %v8078 = vld [vmem:[#allocation51 + $0x198] sm:$0xff]
        %v8079 = vld [vmem:[#allocation51 + $0x1a0] sm:$0xff]
        %v8080 = vld [vmem:[#allocation51 + $0x1a8] sm:$0xff]
        %v8081 = vld [vmem:[#allocation51 + $0x1b0] sm:$0xff]
        %v8082 = vld [vmem:[#allocation51 + $0x1b8] sm:$0xff]
        %v8083 = vld [vmem:[#allocation51 + $0x1c0] sm:$0xff]
        %v8084 = vld [vmem:[#allocation51 + $0x1c8] sm:$0xff]
        %v8085 = vld [vmem:[#allocation51 + $0x1d0] sm:$0xff]
        %v8086 = vld [vmem:[#allocation51 + $0x1d8] sm:$0xff]
        %v8087 = vld [vmem:[#allocation51 + $0x1e0] sm:$0xff]
        %v8088 = vld [vmem:[#allocation51 + $0x1e8] sm:$0xff]
        %v8089 = vld [vmem:[#allocation51 + $0x1f0] sm:$0xff]
        %v8090 = vld [vmem:[#allocation51 + $0x1f8] sm:$0xff]
        %v8091 = vld [vmem:[#allocation51 + $0x200] sm:$0xff]
        %v8092 = vld [vmem:[#allocation51 + $0x208] sm:$0xff]
        %v8093 = vld [vmem:[#allocation51 + $0x210] sm:$0xff]
        %v8094 = vld [vmem:[#allocation51 + $0x218] sm:$0xff]
        %v8095 = vld [vmem:[#allocation51 + $0x220] sm:$0xff]
        %v8096 = vld [vmem:[#allocation51 + $0x228] sm:$0xff]
        %v8097 = vld [vmem:[#allocation51 + $0x230] sm:$0xff]
        %v8098 = vld [vmem:[#allocation51 + $0x238] sm:$0xff]
        %v8099 = vld [vmem:[#allocation51 + $0x240] sm:$0xff]
        %v8100 = vld [vmem:[#allocation51 + $0x248] sm:$0xff]
        %v8101 = vld [vmem:[#allocation51 + $0x250] sm:$0xff]
        %v8102 = vld [vmem:[#allocation51 + $0x258] sm:$0xff]
        %v8103 = vld [vmem:[#allocation51 + $0x260] sm:$0xff]
        %v8104 = vld [vmem:[#allocation51 + $0x268] sm:$0xff]
        %v8105 = vld [vmem:[#allocation51 + $0x270] sm:$0xff]
        %v8106 = vld [vmem:[#allocation51 + $0x278] sm:$0xff]
        %v8107 = vld [vmem:[#allocation51 + $0x280] sm:$0xff]
        %v8108 = vld [vmem:[#allocation51 + $0x288] sm:$0xff]
        %v8109 = vld [vmem:[#allocation51 + $0x290] sm:$0xff]
        %v8110 = vld [vmem:[#allocation51 + $0x298] sm:$0xff]
        %v8111 = vld [vmem:[#allocation51 + $0x2a0] sm:$0xff]
        %v8112 = vld [vmem:[#allocation51 + $0x2a8] sm:$0xff]
        %v8113 = vld [vmem:[#allocation51 + $0x2b0] sm:$0xff]
        %v8114 = vld [vmem:[#allocation51 + $0x2b8] sm:$0xff]
        %v8115 = vld [vmem:[#allocation51 + $0x2c0] sm:$0xff]
        %v8116 = vld [vmem:[#allocation51 + $0x2c8] sm:$0xff]
        %v8117 = vld [vmem:[#allocation51 + $0x2d0] sm:$0xff]
        %v8118 = vld [vmem:[#allocation51 + $0x2d8] sm:$0xff]
        %v8119 = vld [vmem:[#allocation51 + $0x2e0] sm:$0xff]
        %v8120 = vld [vmem:[#allocation51 + $0x2e8] sm:$0xff]
        %v8121 = vld [vmem:[#allocation51 + $0x2f0] sm:$0xff]
        %v8122 = vld [vmem:[#allocation51 + $0x2f8] sm:$0xff]
        %v8123 = vld [vmem:[#allocation51 + $0x300] sm:$0xff]
        %v8124 = vld [vmem:[#allocation51 + $0x308] sm:$0xff]
        %v8125 = vld [vmem:[#allocation51 + $0x310] sm:$0xff]
        %v8126 = vld [vmem:[#allocation51 + $0x318] sm:$0xff]
        %v8127 = vld [vmem:[#allocation51 + $0x320] sm:$0xff]
        %v8128 = vld [vmem:[#allocation51 + $0x328] sm:$0xff]
        %v8129 = vld [vmem:[#allocation51 + $0x330] sm:$0xff]
        %v8130 = vld [vmem:[#allocation51 + $0x338] sm:$0xff]
        %v8131 = vld [vmem:[#allocation51 + $0x340] sm:$0xff]
        %v8132 = vld [vmem:[#allocation51 + $0x348] sm:$0xff]
        %v8133 = vld [vmem:[#allocation51 + $0x350] sm:$0xff]
        %v8134 = vld [vmem:[#allocation51 + $0x358] sm:$0xff]
        %v8135 = vld [vmem:[#allocation51 + $0x360] sm:$0xff]
        %v8136 = vld [vmem:[#allocation51 + $0x368] sm:$0xff]
        %v8137 = vld [vmem:[#allocation51 + $0x370] sm:$0xff]
        %v8138 = vld [vmem:[#allocation51 + $0x378] sm:$0xff]
        %v8139 = vld [vmem:[#allocation51 + $0x380] sm:$0xff]
        %v8140 = vld [vmem:[#allocation51 + $0x388] sm:$0xff]
        %v8141 = vld [vmem:[#allocation51 + $0x390] sm:$0xff]
        %v8142 = vld [vmem:[#allocation51 + $0x398] sm:$0xff]
        %v8143 = vld [vmem:[#allocation51 + $0x3a0] sm:$0xff]
        %v8144 = vld [vmem:[#allocation51 + $0x3a8] sm:$0xff]
        %v8145 = vld [vmem:[#allocation51 + $0x3b0] sm:$0xff]
        %v8146 = vld [vmem:[#allocation51 + $0x3b8] sm:$0xff]
        %v8147 = vld [vmem:[#allocation51 + $0x3c0] sm:$0xff]
        %v8148 = vld [vmem:[#allocation51 + $0x3c8] sm:$0xff]
        %v8149 = vld [vmem:[#allocation51 + $0x3d0] sm:$0xff]
        %v8150 = vld [vmem:[#allocation51 + $0x3d8] sm:$0xff]
        %v8151 = vld [vmem:[#allocation51 + $0x3e0] sm:$0xff]
        %v8152 = vld [vmem:[#allocation51 + $0x3e8] sm:$0xff]
        %v8153 = vld [vmem:[#allocation51 + $0x3f0] sm:$0xff]
        %v8154 = vld [vmem:[#allocation51 + $0x3f8] sm:$0xff]
        %v8155 = vld [vmem:[#allocation53] ss:$2 sm:$0xf]
        %v8284 = vunpack.c.l.b16 %v8027
        %v8285 = vunpack.c.h.b16 %v8027
        %v8286 = vunpack.c.l.b16 %v8028
        %v8287 = vunpack.c.h.b16 %v8028
        %v8288 = vunpack.c.l.b16 %v8029
        %v8289 = vunpack.c.h.b16 %v8029
        %v8290 = vunpack.c.l.b16 %v8030
        %v8291 = vunpack.c.h.b16 %v8030
        %v8292 = vunpack.c.l.b16 %v8031
        %v8293 = vunpack.c.h.b16 %v8031
        %v8294 = vunpack.c.l.b16 %v8032
        %v8295 = vunpack.c.h.b16 %v8032
        %v8296 = vunpack.c.l.b16 %v8033
        %v8297 = vunpack.c.h.b16 %v8033
        %v8298 = vunpack.c.l.b16 %v8034
        %v8299 = vunpack.c.h.b16 %v8034
        %v8300 = vunpack.c.l.b16 %v8035
        %v8301 = vunpack.c.h.b16 %v8035
        %v8302 = vunpack.c.l.b16 %v8036
        %v8303 = vunpack.c.h.b16 %v8036
        %v8304 = vunpack.c.l.b16 %v8037
        %v8305 = vunpack.c.h.b16 %v8037
        %v8306 = vunpack.c.l.b16 %v8038
        %v8307 = vunpack.c.h.b16 %v8038
        %v8308 = vunpack.c.l.b16 %v8039
        %v8309 = vunpack.c.h.b16 %v8039
        %v8310 = vunpack.c.l.b16 %v8040
        %v8311 = vunpack.c.h.b16 %v8040
        %v8312 = vunpack.c.l.b16 %v8041
        %v8313 = vunpack.c.h.b16 %v8041
        %v8314 = vunpack.c.l.b16 %v8042
        %v8315 = vunpack.c.h.b16 %v8042
        %v8316 = vunpack.c.l.b16 %v8043
        %v8317 = vunpack.c.h.b16 %v8043
        %v8318 = vunpack.c.l.b16 %v8044
        %v8319 = vunpack.c.h.b16 %v8044
        %v8320 = vunpack.c.l.b16 %v8045
        %v8321 = vunpack.c.h.b16 %v8045
        %v8322 = vunpack.c.l.b16 %v8046
        %v8323 = vunpack.c.h.b16 %v8046
        %v8324 = vunpack.c.l.b16 %v8047
        %v8325 = vunpack.c.h.b16 %v8047
        %v8326 = vunpack.c.l.b16 %v8048
        %v8327 = vunpack.c.h.b16 %v8048
        %v8328 = vunpack.c.l.b16 %v8049
        %v8329 = vunpack.c.h.b16 %v8049
        %v8330 = vunpack.c.l.b16 %v8050
        %v8331 = vunpack.c.h.b16 %v8050
        %v8332 = vunpack.c.l.b16 %v8051
        %v8333 = vunpack.c.h.b16 %v8051
        %v8334 = vunpack.c.l.b16 %v8052
        %v8335 = vunpack.c.h.b16 %v8052
        %v8336 = vunpack.c.l.b16 %v8053
        %v8337 = vunpack.c.h.b16 %v8053
        %v8338 = vunpack.c.l.b16 %v8054
        %v8339 = vunpack.c.h.b16 %v8054
        %v8340 = vunpack.c.l.b16 %v8055
        %v8341 = vunpack.c.h.b16 %v8055
        %v8342 = vunpack.c.l.b16 %v8056
        %v8343 = vunpack.c.h.b16 %v8056
        %v8344 = vunpack.c.l.b16 %v8057
        %v8345 = vunpack.c.h.b16 %v8057
        %v8346 = vunpack.c.l.b16 %v8058
        %v8347 = vunpack.c.h.b16 %v8058
        %v8348 = vunpack.c.l.b16 %v8059
        %v8349 = vunpack.c.h.b16 %v8059
        %v8350 = vunpack.c.l.b16 %v8060
        %v8351 = vunpack.c.h.b16 %v8060
        %v8352 = vunpack.c.l.b16 %v8061
        %v8353 = vunpack.c.h.b16 %v8061
        %v8354 = vunpack.c.l.b16 %v8062
        %v8355 = vunpack.c.h.b16 %v8062
        %v8356 = vunpack.c.l.b16 %v8063
        %v8357 = vunpack.c.h.b16 %v8063
        %v8358 = vunpack.c.l.b16 %v8064
        %v8359 = vunpack.c.h.b16 %v8064
        %v8360 = vunpack.c.l.b16 %v8065
        %v8361 = vunpack.c.h.b16 %v8065
        %v8362 = vunpack.c.l.b16 %v8066
        %v8363 = vunpack.c.h.b16 %v8066
        %v8364 = vunpack.c.l.b16 %v8067
        %v8365 = vunpack.c.h.b16 %v8067
        %v8366 = vunpack.c.l.b16 %v8068
        %v8367 = vunpack.c.h.b16 %v8068
        %v8368 = vunpack.c.l.b16 %v8069
        %v8369 = vunpack.c.h.b16 %v8069
        %v8370 = vunpack.c.l.b16 %v8070
        %v8371 = vunpack.c.h.b16 %v8070
        %v8372 = vunpack.c.l.b16 %v8071
        %v8373 = vunpack.c.h.b16 %v8071
        %v8374 = vunpack.c.l.b16 %v8072
        %v8375 = vunpack.c.h.b16 %v8072
        %v8376 = vunpack.c.l.b16 %v8073
        %v8377 = vunpack.c.h.b16 %v8073
        %v8378 = vunpack.c.l.b16 %v8074
        %v8379 = vunpack.c.h.b16 %v8074
        %v8380 = vunpack.c.l.b16 %v8075
        %v8381 = vunpack.c.h.b16 %v8075
        %v8382 = vunpack.c.l.b16 %v8076
        %v8383 = vunpack.c.h.b16 %v8076
        %v8384 = vunpack.c.l.b16 %v8077
        %v8385 = vunpack.c.h.b16 %v8077
        %v8386 = vunpack.c.l.b16 %v8078
        %v8387 = vunpack.c.h.b16 %v8078
        %v8388 = vunpack.c.l.b16 %v8079
        %v8389 = vunpack.c.h.b16 %v8079
        %v8390 = vunpack.c.l.b16 %v8080
        %v8391 = vunpack.c.h.b16 %v8080
        %v8392 = vunpack.c.l.b16 %v8081
        %v8393 = vunpack.c.h.b16 %v8081
        %v8394 = vunpack.c.l.b16 %v8082
        %v8395 = vunpack.c.h.b16 %v8082
        %v8396 = vunpack.c.l.b16 %v8083
        %v8397 = vunpack.c.h.b16 %v8083
        %v8398 = vunpack.c.l.b16 %v8084
        %v8399 = vunpack.c.h.b16 %v8084
        %v8400 = vunpack.c.l.b16 %v8085
        %v8401 = vunpack.c.h.b16 %v8085
        %v8402 = vunpack.c.l.b16 %v8086
        %v8403 = vunpack.c.h.b16 %v8086
        %v8404 = vunpack.c.l.b16 %v8087
        %v8405 = vunpack.c.h.b16 %v8087
        %v8406 = vunpack.c.l.b16 %v8088
        %v8407 = vunpack.c.h.b16 %v8088
        %v8408 = vunpack.c.l.b16 %v8089
        %v8409 = vunpack.c.h.b16 %v8089
        %v8410 = vunpack.c.l.b16 %v8090
        %v8411 = vunpack.c.h.b16 %v8090
        %v8412 = vunpack.c.l.b16 %v8091
        %v8413 = vunpack.c.h.b16 %v8091
        %v8414 = vunpack.c.l.b16 %v8092
        %v8415 = vunpack.c.h.b16 %v8092
        %v8416 = vunpack.c.l.b16 %v8093
        %v8417 = vunpack.c.h.b16 %v8093
        %v8418 = vunpack.c.l.b16 %v8094
        %v8419 = vunpack.c.h.b16 %v8094
        %v8420 = vunpack.c.l.b16 %v8095
        %v8421 = vunpack.c.h.b16 %v8095
        %v8422 = vunpack.c.l.b16 %v8096
        %v8423 = vunpack.c.h.b16 %v8096
        %v8424 = vunpack.c.l.b16 %v8097
        %v8425 = vunpack.c.h.b16 %v8097
        %v8426 = vunpack.c.l.b16 %v8098
        %v8427 = vunpack.c.h.b16 %v8098
        %v8428 = vunpack.c.l.b16 %v8099
        %v8429 = vunpack.c.h.b16 %v8099
        %v8430 = vunpack.c.l.b16 %v8100
        %v8431 = vunpack.c.h.b16 %v8100
        %v8432 = vunpack.c.l.b16 %v8101
        %v8433 = vunpack.c.h.b16 %v8101
        %v8434 = vunpack.c.l.b16 %v8102
        %v8435 = vunpack.c.h.b16 %v8102
        %v8436 = vunpack.c.l.b16 %v8103
        %v8437 = vunpack.c.h.b16 %v8103
        %v8438 = vunpack.c.l.b16 %v8104
        %v8439 = vunpack.c.h.b16 %v8104
        %v8440 = vunpack.c.l.b16 %v8105
        %v8441 = vunpack.c.h.b16 %v8105
        %v8442 = vunpack.c.l.b16 %v8106
        %v8443 = vunpack.c.h.b16 %v8106
        %v8444 = vunpack.c.l.b16 %v8107
        %v8445 = vunpack.c.h.b16 %v8107
        %v8446 = vunpack.c.l.b16 %v8108
        %v8447 = vunpack.c.h.b16 %v8108
        %v8448 = vunpack.c.l.b16 %v8109
        %v8449 = vunpack.c.h.b16 %v8109
        %v8450 = vunpack.c.l.b16 %v8110
        %v8451 = vunpack.c.h.b16 %v8110
        %v8452 = vunpack.c.l.b16 %v8111
        %v8453 = vunpack.c.h.b16 %v8111
        %v8454 = vunpack.c.l.b16 %v8112
        %v8455 = vunpack.c.h.b16 %v8112
        %v8456 = vunpack.c.l.b16 %v8113
        %v8457 = vunpack.c.h.b16 %v8113
        %v8458 = vunpack.c.l.b16 %v8114
        %v8459 = vunpack.c.h.b16 %v8114
        %v8460 = vunpack.c.l.b16 %v8115
        %v8461 = vunpack.c.h.b16 %v8115
        %v8462 = vunpack.c.l.b16 %v8116
        %v8463 = vunpack.c.h.b16 %v8116
        %v8464 = vunpack.c.l.b16 %v8117
        %v8465 = vunpack.c.h.b16 %v8117
        %v8466 = vunpack.c.l.b16 %v8118
        %v8467 = vunpack.c.h.b16 %v8118
        %v8468 = vunpack.c.l.b16 %v8119
        %v8469 = vunpack.c.h.b16 %v8119
        %v8470 = vunpack.c.l.b16 %v8120
        %v8471 = vunpack.c.h.b16 %v8120
        %v8472 = vunpack.c.l.b16 %v8121
        %v8473 = vunpack.c.h.b16 %v8121
        %v8474 = vunpack.c.l.b16 %v8122
        %v8475 = vunpack.c.h.b16 %v8122
        %v8476 = vunpack.c.l.b16 %v8123
        %v8477 = vunpack.c.h.b16 %v8123
        %v8478 = vunpack.c.l.b16 %v8124
        %v8479 = vunpack.c.h.b16 %v8124
        %v8480 = vunpack.c.l.b16 %v8125
        %v8481 = vunpack.c.h.b16 %v8125
        %v8482 = vunpack.c.l.b16 %v8126
        %v8483 = vunpack.c.h.b16 %v8126
        %v8484 = vunpack.c.l.b16 %v8127
        %v8485 = vunpack.c.h.b16 %v8127
        %v8486 = vunpack.c.l.b16 %v8128
        %v8487 = vunpack.c.h.b16 %v8128
        %v8488 = vunpack.c.l.b16 %v8129
        %v8489 = vunpack.c.h.b16 %v8129
        %v8490 = vunpack.c.l.b16 %v8130
        %v8491 = vunpack.c.h.b16 %v8130
        %v8492 = vunpack.c.l.b16 %v8131
        %v8493 = vunpack.c.h.b16 %v8131
        %v8494 = vunpack.c.l.b16 %v8132
        %v8495 = vunpack.c.h.b16 %v8132
        %v8496 = vunpack.c.l.b16 %v8133
        %v8497 = vunpack.c.h.b16 %v8133
        %v8498 = vunpack.c.l.b16 %v8134
        %v8499 = vunpack.c.h.b16 %v8134
        %v8500 = vunpack.c.l.b16 %v8135
        %v8501 = vunpack.c.h.b16 %v8135
        %v8502 = vunpack.c.l.b16 %v8136
        %v8503 = vunpack.c.h.b16 %v8136
        %v8504 = vunpack.c.l.b16 %v8137
        %v8505 = vunpack.c.h.b16 %v8137
        %v8506 = vunpack.c.l.b16 %v8138
        %v8507 = vunpack.c.h.b16 %v8138
        %v8508 = vunpack.c.l.b16 %v8139
        %v8509 = vunpack.c.h.b16 %v8139
        %v8510 = vunpack.c.l.b16 %v8140
        %v8511 = vunpack.c.h.b16 %v8140
        %v8512 = vunpack.c.l.b16 %v8141
        %v8513 = vunpack.c.h.b16 %v8141
        %v8514 = vunpack.c.l.b16 %v8142
        %v8515 = vunpack.c.h.b16 %v8142
        %v8516 = vunpack.c.l.b16 %v8143
        %v8517 = vunpack.c.h.b16 %v8143
        %v8518 = vunpack.c.l.b16 %v8144
        %v8519 = vunpack.c.h.b16 %v8144
        %v8520 = vunpack.c.l.b16 %v8145
        %v8521 = vunpack.c.h.b16 %v8145
        %v8522 = vunpack.c.l.b16 %v8146
        %v8523 = vunpack.c.h.b16 %v8146
        %v8524 = vunpack.c.l.b16 %v8147
        %v8525 = vunpack.c.h.b16 %v8147
        %v8526 = vunpack.c.l.b16 %v8148
        %v8527 = vunpack.c.h.b16 %v8148
        %v8528 = vunpack.c.l.b16 %v8149
        %v8529 = vunpack.c.h.b16 %v8149
        %v8530 = vunpack.c.l.b16 %v8150
        %v8531 = vunpack.c.h.b16 %v8150
        %v8532 = vunpack.c.l.b16 %v8151
        %v8533 = vunpack.c.h.b16 %v8151
        %v8534 = vunpack.c.l.b16 %v8152
        %v8535 = vunpack.c.h.b16 %v8152
        %v8536 = vunpack.c.l.b16 %v8153
        %v8537 = vunpack.c.h.b16 %v8153
        %v8538 = vunpack.c.l.b16 %v8154
        %v8539 = vunpack.c.h.b16 %v8154
        %v8540 = vpack.c.b16 %v8288, %v8284
        %v8541 = vpack.c.b16 %v8289, %v8285
        %v8542 = vpack.c.b16 %v8290, %v8286
        %v8543 = vpack.c.b16 %v8291, %v8287
        %v8544 = vpack.c.b16 %v8296, %v8292
        %v8545 = vpack.c.b16 %v8297, %v8293
        %v8546 = vpack.c.b16 %v8298, %v8294
        %v8547 = vpack.c.b16 %v8299, %v8295
        %v8548 = vpack.c.b16 %v8304, %v8300
        %v8549 = vpack.c.b16 %v8305, %v8301
        %v8550 = vpack.c.b16 %v8306, %v8302
        %v8551 = vpack.c.b16 %v8307, %v8303
        %v8552 = vpack.c.b16 %v8312, %v8308
        %v8553 = vpack.c.b16 %v8313, %v8309
        %v8554 = vpack.c.b16 %v8314, %v8310
        %v8555 = vpack.c.b16 %v8315, %v8311
        %v8556 = vpack.c.b16 %v8320, %v8316
        %v8557 = vpack.c.b16 %v8321, %v8317
        %v8558 = vpack.c.b16 %v8322, %v8318
        %v8559 = vpack.c.b16 %v8323, %v8319
        %v8560 = vpack.c.b16 %v8328, %v8324
        %v8561 = vpack.c.b16 %v8329, %v8325
        %v8562 = vpack.c.b16 %v8330, %v8326
        %v8563 = vpack.c.b16 %v8331, %v8327
        %v8564 = vpack.c.b16 %v8336, %v8332
        %v8565 = vpack.c.b16 %v8337, %v8333
        %v8566 = vpack.c.b16 %v8338, %v8334
        %v8567 = vpack.c.b16 %v8339, %v8335
        %v8568 = vpack.c.b16 %v8344, %v8340
        %v8569 = vpack.c.b16 %v8345, %v8341
        %v8570 = vpack.c.b16 %v8346, %v8342
        %v8571 = vpack.c.b16 %v8347, %v8343
        %v8572 = vpack.c.b16 %v8352, %v8348
        %v8573 = vpack.c.b16 %v8353, %v8349
        %v8574 = vpack.c.b16 %v8354, %v8350
        %v8575 = vpack.c.b16 %v8355, %v8351
        %v8576 = vpack.c.b16 %v8360, %v8356
        %v8577 = vpack.c.b16 %v8361, %v8357
        %v8578 = vpack.c.b16 %v8362, %v8358
        %v8579 = vpack.c.b16 %v8363, %v8359
        %v8580 = vpack.c.b16 %v8368, %v8364
        %v8581 = vpack.c.b16 %v8369, %v8365
        %v8582 = vpack.c.b16 %v8370, %v8366
        %v8583 = vpack.c.b16 %v8371, %v8367
        %v8584 = vpack.c.b16 %v8376, %v8372
        %v8585 = vpack.c.b16 %v8377, %v8373
        %v8586 = vpack.c.b16 %v8378, %v8374
        %v8587 = vpack.c.b16 %v8379, %v8375
        %v8588 = vpack.c.b16 %v8384, %v8380
        %v8589 = vpack.c.b16 %v8385, %v8381
        %v8590 = vpack.c.b16 %v8386, %v8382
        %v8591 = vpack.c.b16 %v8387, %v8383
        %v8592 = vpack.c.b16 %v8392, %v8388
        %v8593 = vpack.c.b16 %v8393, %v8389
        %v8594 = vpack.c.b16 %v8394, %v8390
        %v8595 = vpack.c.b16 %v8395, %v8391
        %v8596 = vpack.c.b16 %v8400, %v8396
        %v8597 = vpack.c.b16 %v8401, %v8397
        %v8598 = vpack.c.b16 %v8402, %v8398
        %v8599 = vpack.c.b16 %v8403, %v8399
        %v8600 = vpack.c.b16 %v8408, %v8404
        %v8601 = vpack.c.b16 %v8409, %v8405
        %v8602 = vpack.c.b16 %v8410, %v8406
        %v8603 = vpack.c.b16 %v8411, %v8407
        %v8604 = vpack.c.b16 %v8416, %v8412
        %v8605 = vpack.c.b16 %v8417, %v8413
        %v8606 = vpack.c.b16 %v8418, %v8414
        %v8607 = vpack.c.b16 %v8419, %v8415
        %v8608 = vpack.c.b16 %v8424, %v8420
        %v8609 = vpack.c.b16 %v8425, %v8421
        %v8610 = vpack.c.b16 %v8426, %v8422
        %v8611 = vpack.c.b16 %v8427, %v8423
        %v8612 = vpack.c.b16 %v8432, %v8428
        %v8613 = vpack.c.b16 %v8433, %v8429
        %v8614 = vpack.c.b16 %v8434, %v8430
        %v8615 = vpack.c.b16 %v8435, %v8431
        %v8616 = vpack.c.b16 %v8440, %v8436
        %v8617 = vpack.c.b16 %v8441, %v8437
        %v8618 = vpack.c.b16 %v8442, %v8438
        %v8619 = vpack.c.b16 %v8443, %v8439
        %v8620 = vpack.c.b16 %v8448, %v8444
        %v8621 = vpack.c.b16 %v8449, %v8445
        %v8622 = vpack.c.b16 %v8450, %v8446
        %v8623 = vpack.c.b16 %v8451, %v8447
        %v8624 = vpack.c.b16 %v8456, %v8452
        %v8625 = vpack.c.b16 %v8457, %v8453
        %v8626 = vpack.c.b16 %v8458, %v8454
        %v8627 = vpack.c.b16 %v8459, %v8455
        %v8628 = vpack.c.b16 %v8464, %v8460
        %v8629 = vpack.c.b16 %v8465, %v8461
        %v8630 = vpack.c.b16 %v8466, %v8462
        %v8631 = vpack.c.b16 %v8467, %v8463
        %v8632 = vpack.c.b16 %v8472, %v8468
        %v8633 = vpack.c.b16 %v8473, %v8469
        %v8634 = vpack.c.b16 %v8474, %v8470
        %v8635 = vpack.c.b16 %v8475, %v8471
        %v8636 = vpack.c.b16 %v8480, %v8476
        %v8637 = vpack.c.b16 %v8481, %v8477
        %v8638 = vpack.c.b16 %v8482, %v8478
        %v8639 = vpack.c.b16 %v8483, %v8479
        %v8640 = vpack.c.b16 %v8488, %v8484
        %v8641 = vpack.c.b16 %v8489, %v8485
        %v8642 = vpack.c.b16 %v8490, %v8486
        %v8643 = vpack.c.b16 %v8491, %v8487
        %v8644 = vpack.c.b16 %v8496, %v8492
        %v8645 = vpack.c.b16 %v8497, %v8493
        %v8646 = vpack.c.b16 %v8498, %v8494
        %v8647 = vpack.c.b16 %v8499, %v8495
        %v8648 = vpack.c.b16 %v8504, %v8500
        %v8649 = vpack.c.b16 %v8505, %v8501
        %v8650 = vpack.c.b16 %v8506, %v8502
        %v8651 = vpack.c.b16 %v8507, %v8503
        %v8652 = vpack.c.b16 %v8512, %v8508
        %v8653 = vpack.c.b16 %v8513, %v8509
        %v8654 = vpack.c.b16 %v8514, %v8510
        %v8655 = vpack.c.b16 %v8515, %v8511
        %v8656 = vpack.c.b16 %v8520, %v8516
        %v8657 = vpack.c.b16 %v8521, %v8517
        %v8658 = vpack.c.b16 %v8522, %v8518
        %v8659 = vpack.c.b16 %v8523, %v8519
        %v8660 = vpack.c.b16 %v8528, %v8524
        %v8661 = vpack.c.b16 %v8529, %v8525
        %v8662 = vpack.c.b16 %v8530, %v8526
        %v8663 = vpack.c.b16 %v8531, %v8527
        %v8664 = vpack.c.b16 %v8536, %v8532
        %v8665 = vpack.c.b16 %v8537, %v8533
        %v8666 = vpack.c.b16 %v8538, %v8534
        %v8667 = vpack.c.b16 %v8539, %v8535
        %v8797 = vlaneseq
        %v8798 = vshrl.u32 %v8797, 7
        %v8799 = vsub.s32 0, %v8798
        %v8800 = vrot.slane %v8155, %v8799
        %v8801 = vlaneseq
        %v8802 = vshrl.u32 %v8801, 7
        %v8803 = vsub.s32 1, %v8802
        %v8804 = vrot.slane %v8155, %v8803
        %v8805 = vlaneseq
        %v8806 = vshrl.u32 %v8805, 7
        %v8807 = vsub.s32 2, %v8806
        %v8808 = vrot.slane %v8155, %v8807
        %v8809 = vlaneseq
        %v8810 = vshrl.u32 %v8809, 7
        %v8811 = vsub.s32 3, %v8810
        %v8812 = vrot.slane %v8155, %v8811
        %8817 = vmatprep.subr.bf16.mxu0 %v8569
        %8818 = vmatpush1.bf16.msra.mxu0 %v8568
        %8819 = vmatprep.subr.bf16.mxu0 %v8565
        %8820 = vmatpush1.bf16.msra.mxu0 %v8564
        %8821 = vmatprep.subr.bf16.mxu0 %v8561
        %8822 = vmatpush1.bf16.msra.mxu0 %v8560
        %8823 = vmatprep.subr.bf16.mxu0 %v8557
        %8824 = vmatpush1.bf16.msra.mxu0 %v8556
        %8825 = vmatprep.subr.bf16.mxu0 %v8553
        %8826 = vmatpush1.bf16.msra.mxu0 %v8552
        %8827 = vmatprep.subr.bf16.mxu0 %v8549
        %8828 = vmatpush1.bf16.msra.mxu0 %v8548
        %8829 = vmatprep.subr.bf16.mxu0 %v8545
        %8830 = vmatpush1.bf16.msra.mxu0 %v8544
        %8831 = vmatprep.subr.bf16.mxu0 %v8541
        %8832 = vmatpush1.bf16.msra.mxu0 %v8540
        %8833 = vmatprep.subr.bf16.mxu0 %v8601
        %8834 = vmatpush2.bf16.msra.mxu0 %v8600
        %8835 = vmatprep.subr.bf16.mxu0 %v8597
        %8836 = vmatpush2.bf16.msra.mxu0 %v8596
        %8837 = vmatprep.subr.bf16.mxu0 %v8593
        %8838 = vmatpush2.bf16.msra.mxu0 %v8592
        %8839 = vmatprep.subr.bf16.mxu0 %v8589
        %8840 = vmatpush2.bf16.msra.mxu0 %v8588
        %8841 = vmatprep.subr.bf16.mxu0 %v8585
        %8842 = vmatpush2.bf16.msra.mxu0 %v8584
        %8843 = vmatprep.subr.bf16.mxu0 %v8581
        %8844 = vmatpush2.bf16.msra.mxu0 %v8580
        %8845 = vmatprep.subr.bf16.mxu0 %v8577
        %8846 = vmatpush2.bf16.msra.mxu0 %v8576
        %8847 = vmatprep.subr.bf16.mxu0 %v8573
        %8848 = vmatpush2.bf16.msra.mxu0 %v8572
        %8849 = vmatprep.mubr.bf16.mxu0 %v8024
        %8850 = vmatmul.mubr.bf16.gmra.mxu0 %v8023
        %v8851 = vpop.f32.mrf.mxu0
        %v8852 = vadd.f32 %v8800, %v8851
        %v8853 = vpop.f32.mrf.mxu0
        %v8854 = vadd.f32 %v8804, %v8853
        %v8855 = vpop.f32.mrf.mxu0
        %v8856 = vpop.f32.mrf.mxu0
        %8857 = vdwg.mxu0
        %8858 = vmatprep.subr.bf16.mxu0 %v8633
        %8859 = vmatpush1.bf16.msra.mxu0 %v8632
        %8860 = vmatprep.subr.bf16.mxu0 %v8629
        %8861 = vmatpush1.bf16.msra.mxu0 %v8628
        %8862 = vmatprep.subr.bf16.mxu0 %v8625
        %8863 = vmatpush1.bf16.msra.mxu0 %v8624
        %8864 = vmatprep.subr.bf16.mxu0 %v8621
        %8865 = vmatpush1.bf16.msra.mxu0 %v8620
        %8866 = vmatprep.subr.bf16.mxu0 %v8617
        %8867 = vmatpush1.bf16.msra.mxu0 %v8616
        %8868 = vmatprep.subr.bf16.mxu0 %v8613
        %8869 = vmatpush1.bf16.msra.mxu0 %v8612
        %8870 = vmatprep.subr.bf16.mxu0 %v8609
        %8871 = vmatpush1.bf16.msra.mxu0 %v8608
        %8872 = vmatprep.subr.bf16.mxu0 %v8605
        %8873 = vmatpush1.bf16.msra.mxu0 %v8604
        %8874 = vmatprep.subr.bf16.mxu0 %v8665
        %8875 = vmatpush2.bf16.msra.mxu0 %v8664
        %8876 = vmatprep.subr.bf16.mxu0 %v8661
        %8877 = vmatpush2.bf16.msra.mxu0 %v8660
        %8878 = vmatprep.subr.bf16.mxu0 %v8657
        %8879 = vmatpush2.bf16.msra.mxu0 %v8656
        %8880 = vmatprep.subr.bf16.mxu0 %v8653
        %8881 = vmatpush2.bf16.msra.mxu0 %v8652
        %8882 = vmatprep.subr.bf16.mxu0 %v8649
        %8883 = vmatpush2.bf16.msra.mxu0 %v8648
        %8884 = vmatprep.subr.bf16.mxu0 %v8645
        %8885 = vmatpush2.bf16.msra.mxu0 %v8644
        %8886 = vmatprep.subr.bf16.mxu0 %v8641
        %8887 = vmatpush2.bf16.msra.mxu0 %v8640
        %8888 = vmatprep.subr.bf16.mxu0 %v8637
        %8889 = vmatpush2.bf16.msra.mxu0 %v8636
        %8890 = vmatprep.mubr.bf16.mxu0 %v8026
        %8891 = vmatmul.mubr.bf16.gmra.mxu0 %v8025
        %v8892 = vpop.f32.mrf.mxu0
        %v8893 = vadd.f32 %v8852, %v8892
        %v8894 = vpop.f32.mrf.mxu0
        %v8895 = vadd.f32 %v8854, %v8894
        %v8896 = vpop.f32.mrf.mxu0
        %v8897 = vpop.f32.mrf.mxu0
        %8898 = vdwg.mxu0
        %8899 = vmatprep.subr.bf16.mxu0 %v8571
        %8900 = vmatpush1.bf16.msra.mxu0 %v8570
        %8901 = vmatprep.subr.bf16.mxu0 %v8567
        %8902 = vmatpush1.bf16.msra.mxu0 %v8566
        %8903 = vmatprep.subr.bf16.mxu0 %v8563
        %8904 = vmatpush1.bf16.msra.mxu0 %v8562
        %8905 = vmatprep.subr.bf16.mxu0 %v8559
        %8906 = vmatpush1.bf16.msra.mxu0 %v8558
        %8907 = vmatprep.subr.bf16.mxu0 %v8555
        %8908 = vmatpush1.bf16.msra.mxu0 %v8554
        %8909 = vmatprep.subr.bf16.mxu0 %v8551
        %8910 = vmatpush1.bf16.msra.mxu0 %v8550
        %8911 = vmatprep.subr.bf16.mxu0 %v8547
        %8912 = vmatpush1.bf16.msra.mxu0 %v8546
        %8913 = vmatprep.subr.bf16.mxu0 %v8543
        %8914 = vmatpush1.bf16.msra.mxu0 %v8542
        %8915 = vmatprep.subr.bf16.mxu0 %v8603
        %8916 = vmatpush2.bf16.msra.mxu0 %v8602
        %8917 = vmatprep.subr.bf16.mxu0 %v8599
        %8918 = vmatpush2.bf16.msra.mxu0 %v8598
        %8919 = vmatprep.subr.bf16.mxu0 %v8595
        %8920 = vmatpush2.bf16.msra.mxu0 %v8594
        %8921 = vmatprep.subr.bf16.mxu0 %v8591
        %8922 = vmatpush2.bf16.msra.mxu0 %v8590
        %8923 = vmatprep.subr.bf16.mxu0 %v8587
        %8924 = vmatpush2.bf16.msra.mxu0 %v8586
        %8925 = vmatprep.subr.bf16.mxu0 %v8583
        %8926 = vmatpush2.bf16.msra.mxu0 %v8582
        %8927 = vmatprep.subr.bf16.mxu0 %v8579
        %8928 = vmatpush2.bf16.msra.mxu0 %v8578
        %8929 = vmatprep.subr.bf16.mxu0 %v8575
        %8930 = vmatpush2.bf16.msra.mxu0 %v8574
        %8931 = vmatprep.mubr.bf16.mxu0 %v8024
        %8932 = vmatmul.mubr.bf16.gmra.mxu0 %v8023
        %v8933 = vpop.f32.mrf.mxu0
        %v8934 = vadd.f32 %v8808, %v8933
        %v8935 = vpop.f32.mrf.mxu0
        %v8936 = vadd.f32 %v8812, %v8935
        %v8937 = vpop.f32.mrf.mxu0
        %v8938 = vpop.f32.mrf.mxu0
        %8939 = vdwg.mxu0
        %8940 = vmatprep.subr.bf16.mxu0 %v8635
        %8941 = vmatpush1.bf16.msra.mxu0 %v8634
        %8942 = vmatprep.subr.bf16.mxu0 %v8631
        %8943 = vmatpush1.bf16.msra.mxu0 %v8630
        %8944 = vmatprep.subr.bf16.mxu0 %v8627
        %8945 = vmatpush1.bf16.msra.mxu0 %v8626
        %8946 = vmatprep.subr.bf16.mxu0 %v8623
        %8947 = vmatpush1.bf16.msra.mxu0 %v8622
        %8948 = vmatprep.subr.bf16.mxu0 %v8619
        %8949 = vmatpush1.bf16.msra.mxu0 %v8618
        %8950 = vmatprep.subr.bf16.mxu0 %v8615
        %8951 = vmatpush1.bf16.msra.mxu0 %v8614
        %8952 = vmatprep.subr.bf16.mxu0 %v8611
        %8953 = vmatpush1.bf16.msra.mxu0 %v8610
        %8954 = vmatprep.subr.bf16.mxu0 %v8607
        %8955 = vmatpush1.bf16.msra.mxu0 %v8606
        %8956 = vmatprep.subr.bf16.mxu0 %v8667
        %8957 = vmatpush2.bf16.msra.mxu0 %v8666
        %8958 = vmatprep.subr.bf16.mxu0 %v8663
        %8959 = vmatpush2.bf16.msra.mxu0 %v8662
        %8960 = vmatprep.subr.bf16.mxu0 %v8659
        %8961 = vmatpush2.bf16.msra.mxu0 %v8658
        %8962 = vmatprep.subr.bf16.mxu0 %v8655
        %8963 = vmatpush2.bf16.msra.mxu0 %v8654
        %8964 = vmatprep.subr.bf16.mxu0 %v8651
        %8965 = vmatpush2.bf16.msra.mxu0 %v8650
        %8966 = vmatprep.subr.bf16.mxu0 %v8647
        %8967 = vmatpush2.bf16.msra.mxu0 %v8646
        %8968 = vmatprep.subr.bf16.mxu0 %v8643
        %8969 = vmatpush2.bf16.msra.mxu0 %v8642
        %8970 = vmatprep.subr.bf16.mxu0 %v8639
        %8971 = vmatpush2.bf16.msra.mxu0 %v8638
        %8972 = vmatprep.mubr.bf16.mxu0 %v8026
        %8973 = vmatmul.mubr.bf16.gmra.mxu0 %v8025
        %v8974 = vpop.f32.mrf.mxu0
        %v8975 = vadd.f32 %v8934, %v8974
        %v8976 = vpop.f32.mrf.mxu0
        %v8977 = vadd.f32 %v8936, %v8976
        %v8978 = vpop.f32.mrf.mxu0
        %v8979 = vpop.f32.mrf.mxu0
        %8980 = vdwg.mxu0
        %vm8981 = vcmp.ge.f32.partialorder %v8893, 0.0
        %vm8982 = vcmp.ge.f32.partialorder %v8895, 0.0
        %vm8983 = vcmp.ge.f32.partialorder %v8975, 0.0
        %vm8984 = vcmp.ge.f32.partialorder %v8977, 0.0
        %s8985 = scalar_lea.vmem [#allocation53], 1
        %v8986 = vld [vmem:[%s8985] ss:$2 sm:$0xf]
        %v8991 = vcombine.low %v8893, %v8895
        %v8992 = vcombine.low %v8975, %v8977
        %v8994 = vunpack.c.l.s4 1966171168
        %v8995 = vunpack.c.0.s8 %v8994
        %v8996 = vlaneseq
        %v8997 = vshrl.u32 %v8996, 7
        %v8998 = vsub.s32 %v8995, %v8997
        %v8999 = vrot.slane %v8991, %v8998
        %v9001 = vunpack.c.l.s4 1966171168
        %v9002 = vunpack.c.0.s8 %v9001
        %v9003 = vlaneseq
        %v9004 = vshrl.u32 %v9003, 7
        %v9005 = vsub.s32 %v9002, %v9004
        %v9006 = vrot.slane %v8992, %v9005
        %v9007 = vcombine.low %v8999, %v9006
        %v9009 = vunpack.c.l.s4 1966171168
        %v9010 = vunpack.c.0.s8 %v9009
        %v9011 = vlaneseq
        %v9012 = vshrl.u32 %v9011, 7
        %v9013 = vsub.s32 %v9010, %v9012
        %v9014 = vrot.slane %v9007, %v9013
        %v9016 = vmul.f32 %v8986, %v9014
        %v9018 = vlaneseq
        %v9019 = vshrl.u32 %v9018, 7
        %v9020 = vsub.s32 0, %v9019
        %v9021 = vrot.slane %v9016, %v9020
        %v9022 = vlaneseq
        %v9023 = vshrl.u32 %v9022, 7
        %v9024 = vsub.s32 1, %v9023
        %v9025 = vrot.slane %v9016, %v9024
        %v9026 = vlaneseq
        %v9027 = vshrl.u32 %v9026, 7
        %v9028 = vsub.s32 2, %v9027
        %v9029 = vrot.slane %v9016, %v9028
        %v9030 = vlaneseq
        %v9031 = vshrl.u32 %v9030, 7
        %v9032 = vsub.s32 3, %v9031
        %v9033 = vrot.slane %v9016, %v9032
        %v9038 = vsel %vm8981, %v8893, %v9021
        %v9039 = vsel %vm8982, %v8895, %v9025
        %v9040 = vsel %vm8983, %v8975, %v9029
        %v9041 = vsel %vm8984, %v8977, %v9033
        %v9042 = vpack.c.bf16 %v9038, %v9038
        %v9043 = vpack.c.bf16 %v9039, %v9039
        %v9044 = vpack.c.bf16 %v9040, %v9040
        %v9045 = vpack.c.bf16 %v9041, %v9041
        %v9046 = vld [vmem:[%s73] sm:$0xf]
        %v9047 = vld [vmem:[%s73 + $0x4] sm:$0xf]
        %v9048 = vld [vmem:[%s73 + $0x8] sm:$0xf]
        %v9049 = vld [vmem:[%s73 + $0xc] sm:$0xf]
        %v9050 = vld [vmem:[%s73 + $0x10] sm:$0xf]
        %v9051 = vld [vmem:[%s73 + $0x14] sm:$0xf]
        %v9052 = vld [vmem:[%s73 + $0x18] sm:$0xf]
        %v9053 = vld [vmem:[%s73 + $0x1c] sm:$0xf]
        %v9054 = vld [vmem:[%s73 + $0x20] sm:$0xf]
        %v9055 = vld [vmem:[%s73 + $0x24] sm:$0xf]
        %v9056 = vld [vmem:[%s73 + $0x28] sm:$0xf]
        %v9057 = vld [vmem:[%s73 + $0x2c] sm:$0xf]
        %v9058 = vld [vmem:[%s73 + $0x30] sm:$0xf]
        %v9059 = vld [vmem:[%s73 + $0x34] sm:$0xf]
        %v9060 = vld [vmem:[%s73 + $0x38] sm:$0xf]
        %v9061 = vld [vmem:[%s73 + $0x3c] sm:$0xf]
        %v9062 = vld [vmem:[%s73 + $0x40] sm:$0xf]
        %v9063 = vld [vmem:[%s73 + $0x44] sm:$0xf]
        %v9064 = vld [vmem:[%s73 + $0x48] sm:$0xf]
        %v9065 = vld [vmem:[%s73 + $0x4c] sm:$0xf]
        %v9066 = vld [vmem:[%s73 + $0x50] sm:$0xf]
        %v9067 = vld [vmem:[%s73 + $0x54] sm:$0xf]
        %v9068 = vld [vmem:[%s73 + $0x58] sm:$0xf]
        %v9069 = vld [vmem:[%s73 + $0x5c] sm:$0xf]
        %v9070 = vld [vmem:[%s73 + $0x60] sm:$0xf]
        %v9071 = vld [vmem:[%s73 + $0x64] sm:$0xf]
        %v9072 = vld [vmem:[%s73 + $0x68] sm:$0xf]
        %v9073 = vld [vmem:[%s73 + $0x6c] sm:$0xf]
        %v9074 = vld [vmem:[%s73 + $0x70] sm:$0xf]
        %v9075 = vld [vmem:[%s73 + $0x74] sm:$0xf]
        %v9076 = vld [vmem:[%s73 + $0x78] sm:$0xf]
        %v9077 = vld [vmem:[%s73 + $0x7c] sm:$0xf]
        %v9078 = vld [vmem:[%s73 + $0x80] sm:$0xf]
        %v9079 = vld [vmem:[%s73 + $0x84] sm:$0xf]
        %v9080 = vld [vmem:[%s73 + $0x88] sm:$0xf]
        %v9081 = vld [vmem:[%s73 + $0x8c] sm:$0xf]
        %v9082 = vld [vmem:[%s73 + $0x90] sm:$0xf]
        %v9083 = vld [vmem:[%s73 + $0x94] sm:$0xf]
        %v9084 = vld [vmem:[%s73 + $0x98] sm:$0xf]
        %v9085 = vld [vmem:[%s73 + $0x9c] sm:$0xf]
        %v9086 = vld [vmem:[%s73 + $0xa0] sm:$0xf]
        %v9087 = vld [vmem:[%s73 + $0xa4] sm:$0xf]
        %v9088 = vld [vmem:[%s73 + $0xa8] sm:$0xf]
        %v9089 = vld [vmem:[%s73 + $0xac] sm:$0xf]
        %v9090 = vld [vmem:[%s73 + $0xb0] sm:$0xf]
        %v9091 = vld [vmem:[%s73 + $0xb4] sm:$0xf]
        %v9092 = vld [vmem:[%s73 + $0xb8] sm:$0xf]
        %v9093 = vld [vmem:[%s73 + $0xbc] sm:$0xf]
        %v9094 = vld [vmem:[%s73 + $0xc0] sm:$0xf]
        %v9095 = vld [vmem:[%s73 + $0xc4] sm:$0xf]
        %v9096 = vld [vmem:[%s73 + $0xc8] sm:$0xf]
        %v9097 = vld [vmem:[%s73 + $0xcc] sm:$0xf]
        %v9098 = vld [vmem:[%s73 + $0xd0] sm:$0xf]
        %v9099 = vld [vmem:[%s73 + $0xd4] sm:$0xf]
        %v9100 = vld [vmem:[%s73 + $0xd8] sm:$0xf]
        %v9101 = vld [vmem:[%s73 + $0xdc] sm:$0xf]
        %v9102 = vld [vmem:[%s73 + $0xe0] sm:$0xf]
        %v9103 = vld [vmem:[%s73 + $0xe4] sm:$0xf]
        %v9104 = vld [vmem:[%s73 + $0xe8] sm:$0xf]
        %v9105 = vld [vmem:[%s73 + $0xec] sm:$0xf]
        %v9106 = vld [vmem:[%s73 + $0xf0] sm:$0xf]
        %v9107 = vld [vmem:[%s73 + $0xf4] sm:$0xf]
        %v9108 = vld [vmem:[%s73 + $0xf8] sm:$0xf]
        %v9109 = vld [vmem:[%s73 + $0xfc] sm:$0xf]
        %v9110 = vld [vmem:[#allocation54] sm:$0x1]
        %v9175 = vunpack.c.l.b16 %v9046
        %v9176 = vunpack.c.l.b16 %v9047
        %v9177 = vunpack.c.l.b16 %v9048
        %v9178 = vunpack.c.l.b16 %v9049
        %v9179 = vunpack.c.l.b16 %v9050
        %v9180 = vunpack.c.l.b16 %v9051
        %v9181 = vunpack.c.l.b16 %v9052
        %v9182 = vunpack.c.l.b16 %v9053
        %v9183 = vunpack.c.l.b16 %v9054
        %v9184 = vunpack.c.l.b16 %v9055
        %v9185 = vunpack.c.l.b16 %v9056
        %v9186 = vunpack.c.l.b16 %v9057
        %v9187 = vunpack.c.l.b16 %v9058
        %v9188 = vunpack.c.l.b16 %v9059
        %v9189 = vunpack.c.l.b16 %v9060
        %v9190 = vunpack.c.l.b16 %v9061
        %v9191 = vunpack.c.l.b16 %v9062
        %v9192 = vunpack.c.l.b16 %v9063
        %v9193 = vunpack.c.l.b16 %v9064
        %v9194 = vunpack.c.l.b16 %v9065
        %v9195 = vunpack.c.l.b16 %v9066
        %v9196 = vunpack.c.l.b16 %v9067
        %v9197 = vunpack.c.l.b16 %v9068
        %v9198 = vunpack.c.l.b16 %v9069
        %v9199 = vunpack.c.l.b16 %v9070
        %v9200 = vunpack.c.l.b16 %v9071
        %v9201 = vunpack.c.l.b16 %v9072
        %v9202 = vunpack.c.l.b16 %v9073
        %v9203 = vunpack.c.l.b16 %v9074
        %v9204 = vunpack.c.l.b16 %v9075
        %v9205 = vunpack.c.l.b16 %v9076
        %v9206 = vunpack.c.l.b16 %v9077
        %v9207 = vunpack.c.l.b16 %v9078
        %v9208 = vunpack.c.l.b16 %v9079
        %v9209 = vunpack.c.l.b16 %v9080
        %v9210 = vunpack.c.l.b16 %v9081
        %v9211 = vunpack.c.l.b16 %v9082
        %v9212 = vunpack.c.l.b16 %v9083
        %v9213 = vunpack.c.l.b16 %v9084
        %v9214 = vunpack.c.l.b16 %v9085
        %v9215 = vunpack.c.l.b16 %v9086
        %v9216 = vunpack.c.l.b16 %v9087
        %v9217 = vunpack.c.l.b16 %v9088
        %v9218 = vunpack.c.l.b16 %v9089
        %v9219 = vunpack.c.l.b16 %v9090
        %v9220 = vunpack.c.l.b16 %v9091
        %v9221 = vunpack.c.l.b16 %v9092
        %v9222 = vunpack.c.l.b16 %v9093
        %v9223 = vunpack.c.l.b16 %v9094
        %v9224 = vunpack.c.l.b16 %v9095
        %v9225 = vunpack.c.l.b16 %v9096
        %v9226 = vunpack.c.l.b16 %v9097
        %v9227 = vunpack.c.l.b16 %v9098
        %v9228 = vunpack.c.l.b16 %v9099
        %v9229 = vunpack.c.l.b16 %v9100
        %v9230 = vunpack.c.l.b16 %v9101
        %v9231 = vunpack.c.l.b16 %v9102
        %v9232 = vunpack.c.l.b16 %v9103
        %v9233 = vunpack.c.l.b16 %v9104
        %v9234 = vunpack.c.l.b16 %v9105
        %v9235 = vunpack.c.l.b16 %v9106
        %v9236 = vunpack.c.l.b16 %v9107
        %v9237 = vunpack.c.l.b16 %v9108
        %v9238 = vunpack.c.l.b16 %v9109
        %v9239 = vpack.c.b16 %v9176, %v9175
        %v9240 = vpack.c.b16 %v9178, %v9177
        %v9241 = vpack.c.b16 %v9180, %v9179
        %v9242 = vpack.c.b16 %v9182, %v9181
        %v9243 = vpack.c.b16 %v9184, %v9183
        %v9244 = vpack.c.b16 %v9186, %v9185
        %v9245 = vpack.c.b16 %v9188, %v9187
        %v9246 = vpack.c.b16 %v9190, %v9189
        %v9247 = vpack.c.b16 %v9192, %v9191
        %v9248 = vpack.c.b16 %v9194, %v9193
        %v9249 = vpack.c.b16 %v9196, %v9195
        %v9250 = vpack.c.b16 %v9198, %v9197
        %v9251 = vpack.c.b16 %v9200, %v9199
        %v9252 = vpack.c.b16 %v9202, %v9201
        %v9253 = vpack.c.b16 %v9204, %v9203
        %v9254 = vpack.c.b16 %v9206, %v9205
        %v9255 = vpack.c.b16 %v9208, %v9207
        %v9256 = vpack.c.b16 %v9210, %v9209
        %v9257 = vpack.c.b16 %v9212, %v9211
        %v9258 = vpack.c.b16 %v9214, %v9213
        %v9259 = vpack.c.b16 %v9216, %v9215
        %v9260 = vpack.c.b16 %v9218, %v9217
        %v9261 = vpack.c.b16 %v9220, %v9219
        %v9262 = vpack.c.b16 %v9222, %v9221
        %v9263 = vpack.c.b16 %v9224, %v9223
        %v9264 = vpack.c.b16 %v9226, %v9225
        %v9265 = vpack.c.b16 %v9228, %v9227
        %v9266 = vpack.c.b16 %v9230, %v9229
        %v9267 = vpack.c.b16 %v9232, %v9231
        %v9268 = vpack.c.b16 %v9234, %v9233
        %v9269 = vpack.c.b16 %v9236, %v9235
        %v9270 = vpack.c.b16 %v9238, %v9237
        %9303 = vmatprep.subr.bf16.mxu0 0
        %9304 = vmatpush1.bf16.msra.mxu0 %v9246
        %9305 = vmatprep.subr.bf16.mxu0 0
        %9306 = vmatpush1.bf16.msra.mxu0 %v9245
        %9307 = vmatprep.subr.bf16.mxu0 0
        %9308 = vmatpush1.bf16.msra.mxu0 %v9244
        %9309 = vmatprep.subr.bf16.mxu0 0
        %9310 = vmatpush1.bf16.msra.mxu0 %v9243
        %9311 = vmatprep.subr.bf16.mxu0 0
        %9312 = vmatpush1.bf16.msra.mxu0 %v9242
        %9313 = vmatprep.subr.bf16.mxu0 0
        %9314 = vmatpush1.bf16.msra.mxu0 %v9241
        %9315 = vmatprep.subr.bf16.mxu0 0
        %9316 = vmatpush1.bf16.msra.mxu0 %v9240
        %9317 = vmatprep.subr.bf16.mxu0 0
        %9318 = vmatpush1.bf16.msra.mxu0 %v9239
        %9319 = vmatprep.subr.bf16.mxu0 0
        %9320 = vmatpush2.bf16.msra.mxu0 %v9254
        %9321 = vmatprep.subr.bf16.mxu0 0
        %9322 = vmatpush2.bf16.msra.mxu0 %v9253
        %9323 = vmatprep.subr.bf16.mxu0 0
        %9324 = vmatpush2.bf16.msra.mxu0 %v9252
        %9325 = vmatprep.subr.bf16.mxu0 0
        %9326 = vmatpush2.bf16.msra.mxu0 %v9251
        %9327 = vmatprep.subr.bf16.mxu0 0
        %9328 = vmatpush2.bf16.msra.mxu0 %v9250
        %9329 = vmatprep.subr.bf16.mxu0 0
        %9330 = vmatpush2.bf16.msra.mxu0 %v9249
        %9331 = vmatprep.subr.bf16.mxu0 0
        %9332 = vmatpush2.bf16.msra.mxu0 %v9248
        %9333 = vmatprep.subr.bf16.mxu0 0
        %9334 = vmatpush2.bf16.msra.mxu0 %v9247
        %9335 = vmatprep.mubr.bf16.mxu0 %v9043
        %9336 = vmatmul.mubr.bf16.gmra.mxu0 %v9042
        %v9337 = vpop.f32.mrf.mxu0
        %v9338 = vadd.f32 %v9110, %v9337
        %v9339 = vpop.f32.mrf.mxu0
        %v9340 = vpop.f32.mrf.mxu0
        %v9341 = vpop.f32.mrf.mxu0
        %9342 = vdwg.mxu0
        %9343 = vmatprep.subr.bf16.mxu0 0
        %9344 = vmatpush1.bf16.msra.mxu0 %v9262
        %9345 = vmatprep.subr.bf16.mxu0 0
        %9346 = vmatpush1.bf16.msra.mxu0 %v9261
        %9347 = vmatprep.subr.bf16.mxu0 0
        %9348 = vmatpush1.bf16.msra.mxu0 %v9260
        %9349 = vmatprep.subr.bf16.mxu0 0
        %9350 = vmatpush1.bf16.msra.mxu0 %v9259
        %9351 = vmatprep.subr.bf16.mxu0 0
        %9352 = vmatpush1.bf16.msra.mxu0 %v9258
        %9353 = vmatprep.subr.bf16.mxu0 0
        %9354 = vmatpush1.bf16.msra.mxu0 %v9257
        %9355 = vmatprep.subr.bf16.mxu0 0
        %9356 = vmatpush1.bf16.msra.mxu0 %v9256
        %9357 = vmatprep.subr.bf16.mxu0 0
        %9358 = vmatpush1.bf16.msra.mxu0 %v9255
        %9359 = vmatprep.subr.bf16.mxu0 0
        %9360 = vmatpush2.bf16.msra.mxu0 %v9270
        %9361 = vmatprep.subr.bf16.mxu0 0
        %9362 = vmatpush2.bf16.msra.mxu0 %v9269
        %9363 = vmatprep.subr.bf16.mxu0 0
        %9364 = vmatpush2.bf16.msra.mxu0 %v9268
        %9365 = vmatprep.subr.bf16.mxu0 0
        %9366 = vmatpush2.bf16.msra.mxu0 %v9267
        %9367 = vmatprep.subr.bf16.mxu0 0
        %9368 = vmatpush2.bf16.msra.mxu0 %v9266
        %9369 = vmatprep.subr.bf16.mxu0 0
        %9370 = vmatpush2.bf16.msra.mxu0 %v9265
        %9371 = vmatprep.subr.bf16.mxu0 0
        %9372 = vmatpush2.bf16.msra.mxu0 %v9264
        %9373 = vmatprep.subr.bf16.mxu0 0
        %9374 = vmatpush2.bf16.msra.mxu0 %v9263
        %9375 = vmatprep.mubr.bf16.mxu0 %v9045
        %9376 = vmatmul.mubr.bf16.gmra.mxu0 %v9044
        %v9377 = vpop.f32.mrf.mxu0
        %v9378 = vadd.f32 %v9338, %v9377
        %v9379 = vpop.f32.mrf.mxu0
        %v9380 = vpop.f32.mrf.mxu0
        %v9381 = vpop.f32.mrf.mxu0
        %9382 = vdwg.mxu0
        %v9383 = vxor.u32 %v9378, 2147483648
        %v9384 = vmul.f32 %v9383, 1.442695
        %v9385 = vpow.pop %v9384
        %v9386 = vadd.f32 %v9385, 1.0
        %v9387 = vrcp.pop %v9386
        %v9388 = vmul.f32 1.0, %v9387
        %vm9389 = vcmask 73728
        %9390 = vst.msk [vmem:[%s1558] sm:$0x1] %vm9389, %v9388
        %s9391 = sand.u32 %s918, 1
        %s9392 = scalar_lea.sflag [#allocation11], %s9391
        %s9393 = sand.u32 %s918, 1
        %s9394 = scalar_lea.vmem [#allocation56], %s9393
        // Predicated region
        $region293: #{forward.1} parent=171 // pred_check
          %p9395 = pneg %p928
        $region294: #{forward.1} parent=171 // pred_check_branch
          %9397 = sbr.rel (%p9395) target = $region296
        $region295: #{forward.1} parent=171 // pred_region
          %s9399 = ssub.s32 16, 16
          %9400 = vsyncadd %s9392, %s9399
          %s9401 = smul.addr %s107, 16
          %s9402 = scalar_lea.hbm %s77, %s9401
          %s9404 = sshll.u32 %s9394, 4
          %s9405 = int_to_ptr.vmem [resolvable:$true] %s9404
          %9407 = dma.vmem_to_hbm [thread:$0]  %s9405, 16, %s9402, %s9392
        $region296: #{forward.1} parent=171 // pred_fallthru
          _
      $region172: #{forward.1} parent=5 // pred_fallthru
        _
      %p9408 = scmp.le.s32.totalorder 2, %s102
      // Predicated region
      $region297: #{forward.1} parent=5 // pred_check
        %p9409 = pneg %p9408
      $region298: #{forward.1} parent=5 // pred_check_branch
        %9411 = sbr.rel (%p9409) target = $region300
      $region299: #{forward.1} parent=5 // pred_region
        %s9412 = ssub.s32 %s102, 2
        // Predicated region
        $region301: #{forward.1} parent=299 // pred_check
          %p9413 = pneg %p934
        $region302: #{forward.1} parent=299 // pred_check_branch
          %9415 = sbr.rel (%p9413) target = $region304
        $region303: #{forward.1} parent=299 // pred_region
          %s9416 = sand.u32 %s919, 1
          %s9417 = scalar_lea.sflag [#allocation11], %s9416
          %s9418 = sand.u32 %s919, 1
          %s9419 = scalar_lea.vmem [#allocation56], %s9418
          %9420 = dma.done %s9417, 16
        $region304: #{forward.1} parent=299 // pred_fallthru
          _
      $region300: #{forward.1} parent=5 // pred_fallthru
        _
    $region6: #{forward.1} parent=1 // loop_footer
      %s106 = sadd.s32 1, %s102
    $region7: #{forward.1} parent=1 // loop_footer_branch
      %101 = sbr.rel target = $region3
    $region8: #{forward.1} parent=1 // loop_exit
      _
    %9421 = vsyncpa [#allocation10], 1
    %s9422 = scalar_lea.sflag [#allocation10], 1
    %9423 = vsyncpa %s9422, 1
    %9424 = vsyncpa [#allocation13], 1
    %9425 = vsyncpa [#allocation16], 1
    %9426 = vsyncpa [#allocation19], 1
    %9427 = vsyncpa [#allocation22], 1
    %9428 = vsyncpa [#allocation25], 1
    %9429 = vsyncpa [#allocation28], 1
    %9430 = vsyncpa [#allocation31], 1
    %9431 = vsyncpa [#allocation34], 1
    %9432 = vsyncpa [#allocation37], 1
    %9433 = vsyncpa [#allocation40], 1
    %9434 = vsyncpa [#allocation43], 1
    %9435 = vsyncpa [#allocation46], 1
    %9436 = vsyncpa [#allocation49], 1
    %9437 = vsyncpa [#allocation52], 1
    %9438 = vsyncpa [#allocation55], 1
    %9439 = vsyncpa [#allocation11], 1
    %s9440 = scalar_lea.sflag [#allocation11], 1
    %9441 = vsyncpa %s9440, 1

</llo_original>
